<compile_context>
chip_gen: v5e
topology: v5e:2x2
jax: 0.10.0
libtpu: 0.0.40
codegen_flags: <defaults>
</compile_context>

<pallas_src>
import functools

import jax
import jax.numpy as jnp
from jax.experimental import pallas as pl
from jax.experimental.pallas import tpu as pltpu


_BN_EPS = 1e-5
_VMEM = functools.partial(pl.BlockSpec, memory_space=pltpu.MemorySpace.VMEM)
_CONV_PARAMS = pltpu.CompilerParams(dimension_semantics=("parallel",))


# ----------------------------------------------------------------------------
# Pallas kernels
# ----------------------------------------------------------------------------

def _conv_bn_act_kernel(p_ref, w_ref, s_ref, b_ref, o_ref, *, slope):
    # out = act( (patches @ w) * scale + bias )
    acc = jnp.dot(p_ref[...], w_ref[...], preferred_element_type=jnp.float32)
    y = acc * s_ref[...] + b_ref[...]
    o_ref[...] = jnp.where(y >= 0.0, y, slope * y)


def _conv_res_bn_act_kernel(p_ref, w_ref, r_ref, s_ref, b_ref, o_ref, *, slope):
    # out = act( ((patches @ w) + residual) * scale + bias )
    acc = jnp.dot(p_ref[...], w_ref[...], preferred_element_type=jnp.float32)
    acc = acc + r_ref[...]
    y = acc * s_ref[...] + b_ref[...]
    o_ref[...] = jnp.where(y >= 0.0, y, slope * y)


def _conv_sc_bn_act_kernel(p_ref, w_ref, ps_ref, ws_ref, s_ref, b_ref, o_ref, *, slope):
    # out = act( ((patches @ w) + (sc_patches @ sc_w)) * scale + bias )
    acc = jnp.dot(p_ref[...], w_ref[...], preferred_element_type=jnp.float32)
    acc = acc + jnp.dot(ps_ref[...], ws_ref[...], preferred_element_type=jnp.float32)
    y = acc * s_ref[...] + b_ref[...]
    o_ref[...] = jnp.where(y >= 0.0, y, slope * y)


def _head_kernel(*refs):
    """Entire MLP head in one kernel: pool(+fc), inputLayer, fcnblock1..3, outbn, outLayer."""
    (feat, poolm, x2,
     fcw, fcb, inw, inb,
     s11, t11, w11, c11, s12, t12, w12, c12,
     s21a, t21a, s21b, t21b, w21a, w21b, c21, s22, t22, w22, c22,
     s31a, t31a, s31b, t31b, s31c, t31c, w31a, w31b, w31c, c31, s32, t32, w32, c32,
     so, to, outw, outb,
     o_ref) = refs

    def leaky(y, sl):
        return jnp.where(y >= 0.0, y, sl * y)

    def dot(a, b):
        return jnp.dot(a, b, preferred_element_type=jnp.float32)

    # avg_pool2d(8) folded into a tiny block-diagonal averaging matmul.
    pooled = dot(poolm[...], feat[...])                       # (B, C)
    out1 = dot(pooled, fcw[...]) + fcb[...]                   # fc
    out2 = dot(x2[...], inw[...]) + inb[...]                  # inputLayer

    # fcnblock1: bn1 + LeakyReLU -> fc1 -> bn2 + LeakyReLU -> fc2
    h = leaky(out2 * s11[...] + t11[...], 0.01)
    h = dot(h, w11[...]) + c11[...]
    h = leaky(h * s12[...] + t12[...], 0.01)
    out2 = dot(h, w12[...]) + c12[...]

    # fcnblock2 on torch.cat((out1, out2)); concat realized via split affines/weights.
    ha = leaky(out1 * s21a[...] + t21a[...], 0.01)
    hb = leaky(out2 * s21b[...] + t21b[...], 0.01)
    h = dot(ha, w21a[...]) + dot(hb, w21b[...]) + c21[...]
    h = leaky(h * s22[...] + t22[...], 0.01)
    out3 = dot(h, w22[...]) + c22[...]

    # fcnblock3 on torch.cat((out1, out2, out3))
    ha = leaky(out1 * s31a[...] + t31a[...], 0.01)
    hb = leaky(out2 * s31b[...] + t31b[...], 0.01)
    hc = leaky(out3 * s31c[...] + t31c[...], 0.01)
    h = dot(ha, w31a[...]) + dot(hb, w31b[...]) + dot(hc, w31c[...]) + c31[...]
    h = leaky(h * s32[...] + t32[...], 0.01)
    out4 = dot(h, w32[...]) + c32[...]

    # outbn + LeakyReLU(0.2) + outLayer
    h = leaky(out4 * so[...] + to[...], 0.2)
    o_ref[...] = dot(h, outw[...]) + outb[...]


# ----------------------------------------------------------------------------
# Kernel launchers
# ----------------------------------------------------------------------------

def _tile_m(m, cap=512):
    if m <= cap:
        return m
    for tm in range(cap, 7, -8):
        if m % tm == 0:
            return tm
    return m


def conv_bn_act(patches, wmat, scale, bias, slope=0.0):
    M, K = patches.shape
    cout = wmat.shape[1]
    tm = _tile_m(M)
    kern = functools.partial(_conv_bn_act_kernel, slope=float(slope))
    return pl.pallas_call(
        kern,
        out_shape=jax.ShapeDtypeStruct((M, cout), jnp.float32),
        grid=(M // tm,),
        in_specs=[
            pl.BlockSpec((tm, K), lambda i: (i, 0)),
            pl.BlockSpec((K, cout), lambda i: (0, 0)),
            pl.BlockSpec((1, cout), lambda i: (0, 0)),
            pl.BlockSpec((1, cout), lambda i: (0, 0)),
        ],
        out_specs=pl.BlockSpec((tm, cout), lambda i: (i, 0)),
        compiler_params=_CONV_PARAMS,
    )(patches, wmat, scale, bias)


def conv_res_bn_act(patches, wmat, residual, scale, bias, slope=0.0):
    M, K = patches.shape
    cout = wmat.shape[1]
    tm = _tile_m(M)
    kern = functools.partial(_conv_res_bn_act_kernel, slope=float(slope))
    return pl.pallas_call(
        kern,
        out_shape=jax.ShapeDtypeStruct((M, cout), jnp.float32),
        grid=(M // tm,),
        in_specs=[
            pl.BlockSpec((tm, K), lambda i: (i, 0)),
            pl.BlockSpec((K, cout), lambda i: (0, 0)),
            pl.BlockSpec((tm, cout), lambda i: (i, 0)),
            pl.BlockSpec((1, cout), lambda i: (0, 0)),
            pl.BlockSpec((1, cout), lambda i: (0, 0)),
        ],
        out_specs=pl.BlockSpec((tm, cout), lambda i: (i, 0)),
        compiler_params=_CONV_PARAMS,
    )(patches, wmat, residual, scale, bias)


def conv_sc_bn_act(patches, wmat, sc_patches, sc_wmat, scale, bias, slope=0.0):
    M, K = patches.shape
    cout = wmat.shape[1]
    Ks = sc_patches.shape[1]
    tm = _tile_m(M)
    kern = functools.partial(_conv_sc_bn_act_kernel, slope=float(slope))
    return pl.pallas_call(
        kern,
        out_shape=jax.ShapeDtypeStruct((M, cout), jnp.float32),
        grid=(M // tm,),
        in_specs=[
            pl.BlockSpec((tm, K), lambda i: (i, 0)),
            pl.BlockSpec((K, cout), lambda i: (0, 0)),
            pl.BlockSpec((tm, Ks), lambda i: (i, 0)),
            pl.BlockSpec((Ks, cout), lambda i: (0, 0)),
            pl.BlockSpec((1, cout), lambda i: (0, 0)),
            pl.BlockSpec((1, cout), lambda i: (0, 0)),
        ],
        out_specs=pl.BlockSpec((tm, cout), lambda i: (i, 0)),
        compiler_params=_CONV_PARAMS,
    )(patches, wmat, sc_patches, sc_wmat, scale, bias)


# ----------------------------------------------------------------------------
# JAX-side glue (im2col / BN folding / forward)
# ----------------------------------------------------------------------------

def fold_bn(bn):
    gamma, beta, mean, var = bn
    s = gamma / jnp.sqrt(var + _BN_EPS)
    b = beta - mean * s
    return s.reshape(1, -1).astype(jnp.float32), b.reshape(1, -1).astype(jnp.float32)


def im2col_bf16(x_nhwc, kh, kw, stride, pad):
    """Shifted-window patches (bf16 MXU operand) for a conv with no bias."""
    N, H, W, C = x_nhwc.shape
    Ho = (H + 2 * pad - kh) // stride + 1
    Wo = (W + 2 * pad - kw) // stride + 1
    xp = jnp.pad(x_nhwc, ((0, 0), (pad, pad), (pad, pad), (0, 0))) if pad else x_nhwc
    cols = []
    for dy in range(kh):
        for dx in range(kw):
            cols.append(xp[:, dy: dy + (Ho - 1) * stride + 1: stride,
                           dx: dx + (Wo - 1) * stride + 1: stride, :])
    patches = jnp.concatenate(cols, axis=-1).reshape(N * Ho * Wo, kh * kw * C)
    return patches.astype(jnp.bfloat16), (N, Ho, Wo)


def trunk_forward(params, x1_nchw):
    x = jnp.transpose(x1_nchw.astype(jnp.float32), (0, 2, 3, 1))     # NHWC
    N = x.shape[0]
    b1, b2, b3 = params["block1"], params["block2"], params["block3"]

    # conv1 (epilogue: block1.bn1 + relu)  ->  pre1 = relu(bn1_1(conv1(x)))
    p, (_, H1, W1) = im2col_bf16(x, 3, 3, 1, 1)
    s, t = fold_bn(b1["bn1"])
    pre1 = conv_bn_act(p, params["conv1_w"], s, t)                   # (N*H1*W1, 16)

    # ---- block1: 16 -> 16, stride 1; residual is relu(bn1(x)) per module semantics ----
    p, _ = im2col_bf16(pre1.reshape(N, H1, W1, -1), 3, 3, 1, 1)
    s, t = fold_bn(b1["bn2"])
    q1 = conv_bn_act(p, b1["conv1_w"], s, t)                         # relu(bn2(conv1(pre1)))
    p, _ = im2col_bf16(q1.reshape(N, H1, W1, -1), 3, 3, 1, 1)
    s, t = fold_bn(b2["bn1"])                                        # next block's bn1 fused
    pre2 = conv_res_bn_act(p, b1["conv2_w"], pre1, s, t)             # (N*H1*W1, 16)

    # ---- block2: 16 -> 32, stride 2, 1x1-conv shortcut ----
    p, (_, H2, W2) = im2col_bf16(pre2.reshape(N, H1, W1, -1), 3, 3, 2, 1)
    s, t = fold_bn(b2["bn2"])
    q2 = conv_bn_act(p, b2["conv1_w"], s, t)                         # (N*H2*W2, 32)
    p, _ = im2col_bf16(q2.reshape(N, H2, W2, -1), 3, 3, 1, 1)
    psc, _ = im2col_bf16(pre2.reshape(N, H1, W1, -1), 1, 1, 2, 0)    # shortcut patches
    s, t = fold_bn(b3["bn1"])
    pre3 = conv_sc_bn_act(p, b2["conv2_w"], psc, b2["shortcut_w"], s, t)   # (N*H2*W2, 32)

    # ---- block3: 32 -> 64, stride 2, 1x1-conv shortcut ----
    p, (_, H3, W3) = im2col_bf16(pre3.reshape(N, H2, W2, -1), 3, 3, 2, 1)
    s, t = fold_bn(b3["bn2"])
    q3 = conv_bn_act(p, b3["conv1_w"], s, t)                         # (N*H3*W3, 64)
    p, _ = im2col_bf16(q3.reshape(N, H3, W3, -1), 3, 3, 1, 1)
    psc, _ = im2col_bf16(pre3.reshape(N, H2, W2, -1), 1, 1, 2, 0)
    s, t = fold_bn(params["bn"])                                     # trunk-final bn fused
    feat = conv_sc_bn_act(p, b3["conv2_w"], psc, b3["shortcut_w"], s, t)   # (N*H3*W3, 64)
    return feat, (H3, W3)


def head_forward(params, feat, x2, batch, hw):
    H3, W3 = hw
    win = H3 * W3
    # avg_pool2d(8): with 32x32 inputs the pooled map is 1x1, so pooling is a per-sample
    # mean over all H3*W3 rows of `feat`, realized as a tiny averaging matmul in-kernel.
    assert H3 == 8 and W3 == 8, "head assumes INPUT_H == INPUT_W == 32 (pooled map is 1x1)"
    # TODO(synk): generalize the pooling fold for pooled maps larger than 1x1.
    poolm = jnp.kron(jnp.eye(batch, dtype=jnp.float32),
                     jnp.full((1, win), 1.0 / win, jnp.float32))      # (B, B*win)

    f1, f2, f3 = params["fcnblock1"], params["fcnblock2"], params["fcnblock3"]
    d1 = params["fc_b"].shape[1]          # fcnChannels[0]
    d2 = f1["fc2_b"].shape[1]             # fcnChannels[1]

    s11, t11 = fold_bn(f1["bn1"]); s12, t12 = fold_bn(f1["bn2"])
    s21, t21 = fold_bn(f2["bn1"]); s22, t22 = fold_bn(f2["bn2"])
    s31, t31 = fold_bn(f3["bn1"]); s32, t32 = fold_bn(f3["bn2"])
    so, to = fold_bn(params["outbn"])

    # torch.cat feeding fcnblock2/3 handled by splitting BN affines / fc1 weights
    # per concatenated part (trace-time; avoids in-kernel concatenate).
    s21a, s21b = s21[:, :d1], s21[:, d1:]
    t21a, t21b = t21[:, :d1], t21[:, d1:]
    w21a, w21b = f2["fc1_w"][:d1], f2["fc1_w"][d1:]
    s31a, s31b, s31c = s31[:, :d1], s31[:, d1:d1 + d2], s31[:, d1 + d2:]
    t31a, t31b, t31c = t31[:, :d1], t31[:, d1:d1 + d2], t31[:, d1 + d2:]
    w31a, w31b, w31c = f3["fc1_w"][:d1], f3["fc1_w"][d1:d1 + d2], f3["fc1_w"][d1 + d2:]

    args = (
        feat, poolm, x2.astype(jnp.float32),
        params["fc_w"], params["fc_b"], params["in_w"], params["in_b"],
        s11, t11, f1["fc1_w"], f1["fc1_b"], s12, t12, f1["fc2_w"], f1["fc2_b"],
        s21a, t21a, s21b, t21b, w21a, w21b, f2["fc1_b"], s22, t22, f2["fc2_w"], f2["fc2_b"],
        s31a, t31a, s31b, t31b, s31c, t31c, w31a, w31b, w31c, f3["fc1_b"],
        s32, t32, f3["fc2_w"], f3["fc2_b"],
        so, to, params["out_w"], params["out_b"],
    )
    num_classes = params["out_b"].shape[1]
    return pl.pallas_call(
        _head_kernel,
        out_shape=jax.ShapeDtypeStruct((batch, num_classes), jnp.float32),
        in_specs=[_VMEM()] * len(args),
        out_specs=_VMEM(),
    )(*args)


def wide_resnet_forward(params, x1_nchw, x2):
    feat, hw = trunk_forward(params, x1_nchw)
    return head_forward(params, feat, x2, batch=x1_nchw.shape[0], hw=hw)


# ----------------------------------------------------------------------------
# Deterministic parameter construction (shapes from WideResNet.__init__)
# ----------------------------------------------------------------------------

def make_params(key, depth=10, widen=1, num_classes=4, res_factor=5,
                input_ch=3, input_h=32, input_w=32, input_multi=8):
    n_ch = [16, 16 * widen, 32 * widen, 64 * widen]
    fcn = [3 * res_factor, 2 * res_factor]
    assert (depth - 4) % 6 == 0
    n = (depth - 4) // 6
    assert n == 1, "this script instantiates depth=10 (one BasicBlock per group)"

    keys = iter(jax.random.split(key, 64))

    def bn(c):  # (gamma, beta, running_mean, running_var) — fresh eval-mode stats
        return (jnp.ones((c,), jnp.float32), jnp.zeros((c,), jnp.float32),
                jnp.zeros((c,), jnp.float32), jnp.ones((c,), jnp.float32))

    def conv_w(cin, cout, k):
        # kaiming_normal_ on OIHW weight, pre-transposed once to (k*k*cin, cout)
        # matmul layout and stored bf16 (MXU operand; f32 accumulation in-kernel).
        fan_in = cin * k * k
        std = (2.0 / fan_in) ** 0.5
        w = std * jax.random.normal(next(keys), (cout, cin, k, k), jnp.float32)
        return jnp.transpose(w, (2, 3, 1, 0)).reshape(k * k * cin, cout).astype(jnp.bfloat16)

    def lin(cin, cout):  # kaiming_uniform_ weight stored as (in, out) + default bias
        wb = (6.0 / cin) ** 0.5
        w = jax.random.uniform(next(keys), (cin, cout), jnp.float32, -wb, wb)
        bb = (1.0 / cin) ** 0.5
        b = jax.random.uniform(next(keys), (1, cout), jnp.float32, -bb, bb)
        return w, b

    def block_p(cin, cout):
        p = {"bn1": bn(cin), "conv1_w": conv_w(cin, cout, 3),
             "bn2": bn(cout), "conv2_w": conv_w(cout, cout, 3)}
        if cin != cout:
            p["shortcut_w"] = conv_w(cin, cout, 1)
        return p

    def mlp_p(cin, cout):
        w1, b1 = lin(cin, cout)
        w2, b2 = lin(cout, cout)
        return {"bn1": bn(cin), "fc1_w": w1, "fc1_b": b1,
                "bn2": bn(cout), "fc2_w": w2, "fc2_b": b2}

    h = input_h // 2 // 2 // 8
    w = input_w // 2 // 2 // 8

    params = {
        "conv1_w": conv_w(input_ch, n_ch[0], 3),
        "block1": block_p(n_ch[0], n_ch[1]),
        "block2": block_p(n_ch[1], n_ch[2]),
        "block3": block_p(n_ch[2], n_ch[3]),
        "bn": bn(n_ch[3]),
    }
    params["fc_w"], params["fc_b"] = lin(n_ch[3] * h * w, fcn[0])
    params["in_w"], params["in_b"] = lin(input_multi, fcn[0])
    params["fcnblock1"] = mlp_p(fcn[0], fcn[1])
    params["fcnblock2"] = mlp_p(fcn[0] + fcn[1], fcn[1])
    params["fcnblock3"] = mlp_p(fcn[0] + 2 * fcn[1], fcn[1])
    params["outbn"] = bn(fcn[1])
    params["out_w"], params["out_b"] = lin(fcn[1], num_classes)
    return params


# ----------------------------------------------------------------------------
# Main
# ----------------------------------------------------------------------------

if __name__ == "__main__":
    key = jax.random.PRNGKey(0)
    kp, kx1, kx2 = jax.random.split(key, 3)

    # cfg.INPUT_CH=3, cfg.INPUT_H=cfg.INPUT_W=32 (minimal size consistent with the
    # two stride-2 stages followed by avg_pool2d(8)), cfg.INPUT_MULTI=8.
    params = make_params(kp, depth=10, widen=1, num_classes=4, res_factor=5,
                         input_ch=3, input_h=32, input_w=32, input_multi=8)

    x1 = jax.random.normal(kx1, (2, 3, 32, 32), jnp.float32)   # NCHW, like PyTorch
    x2 = jax.random.normal(kx2, (2, 8), jnp.float32)

    fwd = jax.jit(wide_resnet_forward)
    out = fwd(params, x1, x2)
    jax.block_until_ready(out)

    assert out.shape == (2, 4) and out.dtype == jnp.float32
    print("KERNEL_OK")
</pallas_src>

<mosaic_0001>
module attributes {stable_mosaic.version = 11 : i64} {
  func.func @_conv_bn_act_kernel(%arg0: i32, %arg1: memref<512x27xbf16, #tpu.memory_space<vmem>>, %arg2: memref<27x16xbf16, #tpu.memory_space<vmem>>, %arg3: memref<1x16xf32, #tpu.memory_space<vmem>>, %arg4: memref<1x16xf32, #tpu.memory_space<vmem>>, %arg5: memref<512x16xf32, #tpu.memory_space<vmem>>) attributes {dimension_semantics = [#tpu.dimension_semantics<parallel>], iteration_bounds = array<i64: 4>, scalar_prefetch = 0 : i64, scratch_operands = 0 : i64, tpu.core_type = #tpu.core_type<tc>, window_params = [{transform_indices = @transform_0, window_bounds = array<i64: 512, 27>}, {pipeline_mode = #tpu.pipeline_mode<synchronous>, transform_indices = @transform_1, window_bounds = array<i64: 27, 16>}, {pipeline_mode = #tpu.pipeline_mode<synchronous>, transform_indices = @transform_2, window_bounds = array<i64: 1, 16>}, {pipeline_mode = #tpu.pipeline_mode<synchronous>, transform_indices = @transform_3, window_bounds = array<i64: 1, 16>}, {transform_indices = @transform_4, window_bounds = array<i64: 512, 16>}]} {
    %c0 = arith.constant 0 : index
    %c0_0 = arith.constant 0 : index
    %0 = vector.load %arg1[%c0, %c0_0] : memref<512x27xbf16, #tpu.memory_space<vmem>>, vector<512x27xbf16>
    %c0_1 = arith.constant 0 : index
    %c0_2 = arith.constant 0 : index
    %1 = vector.load %arg2[%c0_1, %c0_2] : memref<27x16xbf16, #tpu.memory_space<vmem>>, vector<27x16xbf16>
    %cst = arith.constant dense<0.000000e+00> : vector<512x16xf32>
    %2 = tpu.matmul %0, %1, %cst {dimension_numbers = #tpu.dot_dimension_numbers<[1], [0], [0], [1], [0, 0, 1, 1], [], []>} : vector<512x27xbf16>, vector<27x16xbf16>, vector<512x16xf32> -> vector<512x16xf32>
    %c0_3 = arith.constant 0 : index
    %c0_4 = arith.constant 0 : index
    %3 = vector.load %arg3[%c0_3, %c0_4] : memref<1x16xf32, #tpu.memory_space<vmem>>, vector<1x16xf32>
    %4 = vector.broadcast %3 : vector<1x16xf32> to vector<512x16xf32>
    %5 = arith.mulf %2, %4 : vector<512x16xf32>
    %c0_5 = arith.constant 0 : index
    %c0_6 = arith.constant 0 : index
    %6 = vector.load %arg4[%c0_5, %c0_6] : memref<1x16xf32, #tpu.memory_space<vmem>>, vector<1x16xf32>
    %7 = vector.broadcast %6 : vector<1x16xf32> to vector<512x16xf32>
    %8 = arith.addf %5, %7 : vector<512x16xf32>
    %cst_7 = arith.constant 0.000000e+00 : f32
    %9 = vector.broadcast %cst_7 : f32 to vector<512x16xf32>
    %10 = arith.cmpf oge, %8, %9 : vector<512x16xf32>
    %cst_8 = arith.constant 0.000000e+00 : f32
    %11 = vector.broadcast %cst_8 : f32 to vector<512x16xf32>
    %12 = arith.mulf %11, %8 : vector<512x16xf32>
    %13 = arith.select %10, %8, %12 : vector<512x16xi1>, vector<512x16xf32>
    %c0_9 = arith.constant 0 : index
    %c0_10 = arith.constant 0 : index
    %14 = vector.load %arg5[%c0_9, %c0_10] : memref<512x16xf32, #tpu.memory_space<vmem>>, vector<512x16xf32>
    tpu.vector_store %arg5[%c0_9, %c0_10], %13 {strides = array<i32>} : memref<512x16xf32, #tpu.memory_space<vmem>>, vector<512x16xf32>,
    return
  }
  func.func @transform_0(%arg0: i32) -> (i32, i32) {
    %c0_i32 = arith.constant 0 : i32
    %c0_i32_0 = arith.constant 0 : i32
    return %arg0, %c0_i32 : i32, i32
  }
  func.func @transform_1(%arg0: i32) -> (i32, i32) {
    %c0_i32 = arith.constant 0 : i32
    %c0_i32_0 = arith.constant 0 : i32
    %c0_i32_1 = arith.constant 0 : i32
    return %c0_i32, %c0_i32_0 : i32, i32
  }
  func.func @transform_2(%arg0: i32) -> (i32, i32) {
    %c0_i32 = arith.constant 0 : i32
    %c0_i32_0 = arith.constant 0 : i32
    %c0_i32_1 = arith.constant 0 : i32
    return %c0_i32, %c0_i32_0 : i32, i32
  }
  func.func @transform_3(%arg0: i32) -> (i32, i32) {
    %c0_i32 = arith.constant 0 : i32
    %c0_i32_0 = arith.constant 0 : i32
    %c0_i32_1 = arith.constant 0 : i32
    return %c0_i32, %c0_i32_0 : i32, i32
  }
  func.func @transform_4(%arg0: i32) -> (i32, i32) {
    %c0_i32 = arith.constant 0 : i32
    %c0_i32_0 = arith.constant 0 : i32
    return %arg0, %c0_i32 : i32, i32
  }
}

module attributes {stable_mosaic.version = 11 : i64} {
  func.func @_conv_bn_act_kernel(%arg0: i32, %arg1: memref<512x144xbf16, #tpu.memory_space<vmem>>, %arg2: memref<144x16xbf16, #tpu.memory_space<vmem>>, %arg3: memref<1x16xf32, #tpu.memory_space<vmem>>, %arg4: memref<1x16xf32, #tpu.memory_space<vmem>>, %arg5: memref<512x16xf32, #tpu.memory_space<vmem>>) attributes {dimension_semantics = [#tpu.dimension_semantics<parallel>], iteration_bounds = array<i64: 4>, scalar_prefetch = 0 : i64, scratch_operands = 0 : i64, tpu.core_type = #tpu.core_type<tc>, window_params = [{transform_indices = @transform_0, window_bounds = array<i64: 512, 144>}, {pipeline_mode = #tpu.pipeline_mode<synchronous>, transform_indices = @transform_1, window_bounds = array<i64: 144, 16>}, {pipeline_mode = #tpu.pipeline_mode<synchronous>, transform_indices = @transform_2, window_bounds = array<i64: 1, 16>}, {pipeline_mode = #tpu.pipeline_mode<synchronous>, transform_indices = @transform_3, window_bounds = array<i64: 1, 16>}, {transform_indices = @transform_4, window_bounds = array<i64: 512, 16>}]} {
    %c0 = arith.constant 0 : index
    %c0_0 = arith.constant 0 : index
    %0 = vector.load %arg1[%c0, %c0_0] : memref<512x144xbf16, #tpu.memory_space<vmem>>, vector<512x144xbf16>
    %c0_1 = arith.constant 0 : index
    %c0_2 = arith.constant 0 : index
    %1 = vector.load %arg2[%c0_1, %c0_2] : memref<144x16xbf16, #tpu.memory_space<vmem>>, vector<144x16xbf16>
    %cst = arith.constant dense<0.000000e+00> : vector<512x16xf32>
    %2 = tpu.matmul %0, %1, %cst {dimension_numbers = #tpu.dot_dimension_numbers<[1], [0], [0], [1], [0, 0, 1, 1], [], []>} : vector<512x144xbf16>, vector<144x16xbf16>, vector<512x16xf32> -> vector<512x16xf32>
    %c0_3 = arith.constant 0 : index
    %c0_4 = arith.constant 0 : index
    %3 = vector.load %arg3[%c0_3, %c0_4] : memref<1x16xf32, #tpu.memory_space<vmem>>, vector<1x16xf32>
    %4 = vector.broadcast %3 : vector<1x16xf32> to vector<512x16xf32>
    %5 = arith.mulf %2, %4 : vector<512x16xf32>
    %c0_5 = arith.constant 0 : index
    %c0_6 = arith.constant 0 : index
    %6 = vector.load %arg4[%c0_5, %c0_6] : memref<1x16xf32, #tpu.memory_space<vmem>>, vector<1x16xf32>
    %7 = vector.broadcast %6 : vector<1x16xf32> to vector<512x16xf32>
    %8 = arith.addf %5, %7 : vector<512x16xf32>
    %cst_7 = arith.constant 0.000000e+00 : f32
    %9 = vector.broadcast %cst_7 : f32 to vector<512x16xf32>
    %10 = arith.cmpf oge, %8, %9 : vector<512x16xf32>
    %cst_8 = arith.constant 0.000000e+00 : f32
    %11 = vector.broadcast %cst_8 : f32 to vector<512x16xf32>
    %12 = arith.mulf %11, %8 : vector<512x16xf32>
    %13 = arith.select %10, %8, %12 : vector<512x16xi1>, vector<512x16xf32>
    %c0_9 = arith.constant 0 : index
    %c0_10 = arith.constant 0 : index
    %14 = vector.load %arg5[%c0_9, %c0_10] : memref<512x16xf32, #tpu.memory_space<vmem>>, vector<512x16xf32>
    tpu.vector_store %arg5[%c0_9, %c0_10], %13 {strides = array<i32>} : memref<512x16xf32, #tpu.memory_space<vmem>>, vector<512x16xf32>,
    return
  }
  func.func @transform_0(%arg0: i32) -> (i32, i32) {
    %c0_i32 = arith.constant 0 : i32
    %c0_i32_0 = arith.constant 0 : i32
    return %arg0, %c0_i32 : i32, i32
  }
  func.func @transform_1(%arg0: i32) -> (i32, i32) {
    %c0_i32 = arith.constant 0 : i32
    %c0_i32_0 = arith.constant 0 : i32
    %c0_i32_1 = arith.constant 0 : i32
    return %c0_i32, %c0_i32_0 : i32, i32
  }
  func.func @transform_2(%arg0: i32) -> (i32, i32) {
    %c0_i32 = arith.constant 0 : i32
    %c0_i32_0 = arith.constant 0 : i32
    %c0_i32_1 = arith.constant 0 : i32
    return %c0_i32, %c0_i32_0 : i32, i32
  }
  func.func @transform_3(%arg0: i32) -> (i32, i32) {
    %c0_i32 = arith.constant 0 : i32
    %c0_i32_0 = arith.constant 0 : i32
    %c0_i32_1 = arith.constant 0 : i32
    return %c0_i32, %c0_i32_0 : i32, i32
  }
  func.func @transform_4(%arg0: i32) -> (i32, i32) {
    %c0_i32 = arith.constant 0 : i32
    %c0_i32_0 = arith.constant 0 : i32
    return %arg0, %c0_i32 : i32, i32
  }
}

module attributes {stable_mosaic.version = 11 : i64} {
  func.func @_conv_res_bn_act_kernel(%arg0: i32, %arg1: memref<512x144xbf16, #tpu.memory_space<vmem>>, %arg2: memref<144x16xbf16, #tpu.memory_space<vmem>>, %arg3: memref<512x16xf32, #tpu.memory_space<vmem>>, %arg4: memref<1x16xf32, #tpu.memory_space<vmem>>, %arg5: memref<1x16xf32, #tpu.memory_space<vmem>>, %arg6: memref<512x16xf32, #tpu.memory_space<vmem>>) attributes {dimension_semantics = [#tpu.dimension_semantics<parallel>], iteration_bounds = array<i64: 4>, scalar_prefetch = 0 : i64, scratch_operands = 0 : i64, tpu.core_type = #tpu.core_type<tc>, window_params = [{transform_indices = @transform_0, window_bounds = array<i64: 512, 144>}, {pipeline_mode = #tpu.pipeline_mode<synchronous>, transform_indices = @transform_1, window_bounds = array<i64: 144, 16>}, {transform_indices = @transform_2, window_bounds = array<i64: 512, 16>}, {pipeline_mode = #tpu.pipeline_mode<synchronous>, transform_indices = @transform_3, window_bounds = array<i64: 1, 16>}, {pipeline_mode = #tpu.pipeline_mode<synchronous>, transform_indices = @transform_4, window_bounds = array<i64: 1, 16>}, {transform_indices = @transform_5, window_bounds = array<i64: 512, 16>}]} {
    %c0 = arith.constant 0 : index
    %c0_0 = arith.constant 0 : index
    %0 = vector.load %arg1[%c0, %c0_0] : memref<512x144xbf16, #tpu.memory_space<vmem>>, vector<512x144xbf16>
    %c0_1 = arith.constant 0 : index
    %c0_2 = arith.constant 0 : index
    %1 = vector.load %arg2[%c0_1, %c0_2] : memref<144x16xbf16, #tpu.memory_space<vmem>>, vector<144x16xbf16>
    %cst = arith.constant dense<0.000000e+00> : vector<512x16xf32>
    %2 = tpu.matmul %0, %1, %cst {dimension_numbers = #tpu.dot_dimension_numbers<[1], [0], [0], [1], [0, 0, 1, 1], [], []>} : vector<512x144xbf16>, vector<144x16xbf16>, vector<512x16xf32> -> vector<512x16xf32>
    %c0_3 = arith.constant 0 : index
    %c0_4 = arith.constant 0 : index
    %3 = vector.load %arg3[%c0_3, %c0_4] : memref<512x16xf32, #tpu.memory_space<vmem>>, vector<512x16xf32>
    %4 = arith.addf %2, %3 : vector<512x16xf32>
    %c0_5 = arith.constant 0 : index
    %c0_6 = arith.constant 0 : index
    %5 = vector.load %arg4[%c0_5, %c0_6] : memref<1x16xf32, #tpu.memory_space<vmem>>, vector<1x16xf32>
    %6 = vector.broadcast %5 : vector<1x16xf32> to vector<512x16xf32>
    %7 = arith.mulf %4, %6 : vector<512x16xf32>
    %c0_7 = arith.constant 0 : index
    %c0_8 = arith.constant 0 : index
    %8 = vector.load %arg5[%c0_7, %c0_8] : memref<1x16xf32, #tpu.memory_space<vmem>>, vector<1x16xf32>
    %9 = vector.broadcast %8 : vector<1x16xf32> to vector<512x16xf32>
    %10 = arith.addf %7, %9 : vector<512x16xf32>
    %cst_9 = arith.constant 0.000000e+00 : f32
    %11 = vector.broadcast %cst_9 : f32 to vector<512x16xf32>
    %12 = arith.cmpf oge, %10, %11 : vector<512x16xf32>
    %cst_10 = arith.constant 0.000000e+00 : f32
    %13 = vector.broadcast %cst_10 : f32 to vector<512x16xf32>
    %14 = arith.mulf %13, %10 : vector<512x16xf32>
    %15 = arith.select %12, %10, %14 : vector<512x16xi1>, vector<512x16xf32>
    %c0_11 = arith.constant 0 : index
    %c0_12 = arith.constant 0 : index
    %16 = vector.load %arg6[%c0_11, %c0_12] : memref<512x16xf32, #tpu.memory_space<vmem>>, vector<512x16xf32>
    tpu.vector_store %arg6[%c0_11, %c0_12], %15 {strides = array<i32>} : memref<512x16xf32, #tpu.memory_space<vmem>>, vector<512x16xf32>,
    return
  }
  func.func @transform_0(%arg0: i32) -> (i32, i32) {
    %c0_i32 = arith.constant 0 : i32
    %c0_i32_0 = arith.constant 0 : i32
    return %arg0, %c0_i32 : i32, i32
  }
  func.func @transform_1(%arg0: i32) -> (i32, i32) {
    %c0_i32 = arith.constant 0 : i32
    %c0_i32_0 = arith.constant 0 : i32
    %c0_i32_1 = arith.constant 0 : i32
    return %c0_i32, %c0_i32_0 : i32, i32
  }
  func.func @transform_2(%arg0: i32) -> (i32, i32) {
    %c0_i32 = arith.constant 0 : i32
    %c0_i32_0 = arith.constant 0 : i32
    return %arg0, %c0_i32 : i32, i32
  }
  func.func @transform_3(%arg0: i32) -> (i32, i32) {
    %c0_i32 = arith.constant 0 : i32
    %c0_i32_0 = arith.constant 0 : i32
    %c0_i32_1 = arith.constant 0 : i32
    return %c0_i32, %c0_i32_0 : i32, i32
  }
  func.func @transform_4(%arg0: i32) -> (i32, i32) {
    %c0_i32 = arith.constant 0 : i32
    %c0_i32_0 = arith.constant 0 : i32
    %c0_i32_1 = arith.constant 0 : i32
    return %c0_i32, %c0_i32_0 : i32, i32
  }
  func.func @transform_5(%arg0: i32) -> (i32, i32) {
    %c0_i32 = arith.constant 0 : i32
    %c0_i32_0 = arith.constant 0 : i32
    return %arg0, %c0_i32 : i32, i32
  }
}

module attributes {stable_mosaic.version = 11 : i64} {
  func.func @_conv_bn_act_kernel(%arg0: i32, %arg1: memref<512x144xbf16, #tpu.memory_space<vmem>>, %arg2: memref<144x32xbf16, #tpu.memory_space<vmem>>, %arg3: memref<1x32xf32, #tpu.memory_space<vmem>>, %arg4: memref<1x32xf32, #tpu.memory_space<vmem>>, %arg5: memref<512x32xf32, #tpu.memory_space<vmem>>) attributes {dimension_semantics = [#tpu.dimension_semantics<parallel>], iteration_bounds = array<i64: 1>, scalar_prefetch = 0 : i64, scratch_operands = 0 : i64, tpu.core_type = #tpu.core_type<tc>, window_params = [{transform_indices = @transform_0, window_bounds = array<i64: 512, 144>}, {pipeline_mode = #tpu.pipeline_mode<synchronous>, transform_indices = @transform_1, window_bounds = array<i64: 144, 32>}, {pipeline_mode = #tpu.pipeline_mode<synchronous>, transform_indices = @transform_2, window_bounds = array<i64: 1, 32>}, {pipeline_mode = #tpu.pipeline_mode<synchronous>, transform_indices = @transform_3, window_bounds = array<i64: 1, 32>}, {transform_indices = @transform_4, window_bounds = array<i64: 512, 32>}]} {
    %c0 = arith.constant 0 : index
    %c0_0 = arith.constant 0 : index
    %0 = vector.load %arg1[%c0, %c0_0] : memref<512x144xbf16, #tpu.memory_space<vmem>>, vector<512x144xbf16>
    %c0_1 = arith.constant 0 : index
    %c0_2 = arith.constant 0 : index
    %1 = vector.load %arg2[%c0_1, %c0_2] : memref<144x32xbf16, #tpu.memory_space<vmem>>, vector<144x32xbf16>
    %cst = arith.constant dense<0.000000e+00> : vector<512x32xf32>
    %2 = tpu.matmul %0, %1, %cst {dimension_numbers = #tpu.dot_dimension_numbers<[1], [0], [0], [1], [0, 0, 1, 1], [], []>} : vector<512x144xbf16>, vector<144x32xbf16>, vector<512x32xf32> -> vector<512x32xf32>
    %c0_3 = arith.constant 0 : index
    %c0_4 = arith.constant 0 : index
    %3 = vector.load %arg3[%c0_3, %c0_4] : memref<1x32xf32, #tpu.memory_space<vmem>>, vector<1x32xf32>
    %4 = vector.broadcast %3 : vector<1x32xf32> to vector<512x32xf32>
    %5 = arith.mulf %2, %4 : vector<512x32xf32>
    %c0_5 = arith.constant 0 : index
    %c0_6 = arith.constant 0 : index
    %6 = vector.load %arg4[%c0_5, %c0_6] : memref<1x32xf32, #tpu.memory_space<vmem>>, vector<1x32xf32>
    %7 = vector.broadcast %6 : vector<1x32xf32> to vector<512x32xf32>
    %8 = arith.addf %5, %7 : vector<512x32xf32>
    %cst_7 = arith.constant 0.000000e+00 : f32
    %9 = vector.broadcast %cst_7 : f32 to vector<512x32xf32>
    %10 = arith.cmpf oge, %8, %9 : vector<512x32xf32>
    %cst_8 = arith.constant 0.000000e+00 : f32
    %11 = vector.broadcast %cst_8 : f32 to vector<512x32xf32>
    %12 = arith.mulf %11, %8 : vector<512x32xf32>
    %13 = arith.select %10, %8, %12 : vector<512x32xi1>, vector<512x32xf32>
    %c0_9 = arith.constant 0 : index
    %c0_10 = arith.constant 0 : index
    %14 = vector.load %arg5[%c0_9, %c0_10] : memref<512x32xf32, #tpu.memory_space<vmem>>, vector<512x32xf32>
    tpu.vector_store %arg5[%c0_9, %c0_10], %13 {strides = array<i32>} : memref<512x32xf32, #tpu.memory_space<vmem>>, vector<512x32xf32>,
    return
  }
  func.func @transform_0(%arg0: i32) -> (i32, i32) {
    %c0_i32 = arith.constant 0 : i32
    %c0_i32_0 = arith.constant 0 : i32
    return %arg0, %c0_i32 : i32, i32
  }
  func.func @transform_1(%arg0: i32) -> (i32, i32) {
    %c0_i32 = arith.constant 0 : i32
    %c0_i32_0 = arith.constant 0 : i32
    %c0_i32_1 = arith.constant 0 : i32
    return %c0_i32, %c0_i32_0 : i32, i32
  }
  func.func @transform_2(%arg0: i32) -> (i32, i32) {
    %c0_i32 = arith.constant 0 : i32
    %c0_i32_0 = arith.constant 0 : i32
    %c0_i32_1 = arith.constant 0 : i32
    return %c0_i32, %c0_i32_0 : i32, i32
  }
  func.func @transform_3(%arg0: i32) -> (i32, i32) {
    %c0_i32 = arith.constant 0 : i32
    %c0_i32_0 = arith.constant 0 : i32
    %c0_i32_1 = arith.constant 0 : i32
    return %c0_i32, %c0_i32_0 : i32, i32
  }
  func.func @transform_4(%arg0: i32) -> (i32, i32) {
    %c0_i32 = arith.constant 0 : i32
    %c0_i32_0 = arith.constant 0 : i32
    return %arg0, %c0_i32 : i32, i32
  }
}

module attributes {stable_mosaic.version = 11 : i64} {
  func.func @_conv_sc_bn_act_kernel(%arg0: i32, %arg1: memref<512x288xbf16, #tpu.memory_space<vmem>>, %arg2: memref<288x32xbf16, #tpu.memory_space<vmem>>, %arg3: memref<512x16xbf16, #tpu.memory_space<vmem>>, %arg4: memref<16x32xbf16, #tpu.memory_space<vmem>>, %arg5: memref<1x32xf32, #tpu.memory_space<vmem>>, %arg6: memref<1x32xf32, #tpu.memory_space<vmem>>, %arg7: memref<512x32xf32, #tpu.memory_space<vmem>>) attributes {dimension_semantics = [#tpu.dimension_semantics<parallel>], iteration_bounds = array<i64: 1>, scalar_prefetch = 0 : i64, scratch_operands = 0 : i64, tpu.core_type = #tpu.core_type<tc>, window_params = [{transform_indices = @transform_0, window_bounds = array<i64: 512, 288>}, {pipeline_mode = #tpu.pipeline_mode<synchronous>, transform_indices = @transform_1, window_bounds = array<i64: 288, 32>}, {transform_indices = @transform_2, window_bounds = array<i64: 512, 16>}, {pipeline_mode = #tpu.pipeline_mode<synchronous>, transform_indices = @transform_3, window_bounds = array<i64: 16, 32>}, {pipeline_mode = #tpu.pipeline_mode<synchronous>, transform_indices = @transform_4, window_bounds = array<i64: 1, 32>}, {pipeline_mode = #tpu.pipeline_mode<synchronous>, transform_indices = @transform_5, window_bounds = array<i64: 1, 32>}, {transform_indices = @transform_6, window_bounds = array<i64: 512, 32>}]} {
    %c0 = arith.constant 0 : index
    %c0_0 = arith.constant 0 : index
    %0 = vector.load %arg1[%c0, %c0_0] : memref<512x288xbf16, #tpu.memory_space<vmem>>, vector<512x288xbf16>
    %c0_1 = arith.constant 0 : index
    %c0_2 = arith.constant 0 : index
    %1 = vector.load %arg2[%c0_1, %c0_2] : memref<288x32xbf16, #tpu.memory_space<vmem>>, vector<288x32xbf16>
    %cst = arith.constant dense<0.000000e+00> : vector<512x32xf32>
    %2 = tpu.matmul %0, %1, %cst {dimension_numbers = #tpu.dot_dimension_numbers<[1], [0], [0], [1], [0, 0, 1, 1], [], []>} : vector<512x288xbf16>, vector<288x32xbf16>, vector<512x32xf32> -> vector<512x32xf32>
    %c0_3 = arith.constant 0 : index
    %c0_4 = arith.constant 0 : index
    %3 = vector.load %arg3[%c0_3, %c0_4] : memref<512x16xbf16, #tpu.memory_space<vmem>>, vector<512x16xbf16>
    %c0_5 = arith.constant 0 : index
    %c0_6 = arith.constant 0 : index
    %4 = vector.load %arg4[%c0_5, %c0_6] : memref<16x32xbf16, #tpu.memory_space<vmem>>, vector<16x32xbf16>
    %cst_7 = arith.constant dense<0.000000e+00> : vector<512x32xf32>
    %5 = tpu.matmul %3, %4, %cst_7 {dimension_numbers = #tpu.dot_dimension_numbers<[1], [0], [0], [1], [0, 0, 1, 1], [], []>} : vector<512x16xbf16>, vector<16x32xbf16>, vector<512x32xf32> -> vector<512x32xf32>
    %6 = arith.addf %2, %5 : vector<512x32xf32>
    %c0_8 = arith.constant 0 : index
    %c0_9 = arith.constant 0 : index
    %7 = vector.load %arg5[%c0_8, %c0_9] : memref<1x32xf32, #tpu.memory_space<vmem>>, vector<1x32xf32>
    %8 = vector.broadcast %7 : vector<1x32xf32> to vector<512x32xf32>
    %9 = arith.mulf %6, %8 : vector<512x32xf32>
    %c0_10 = arith.constant 0 : index
    %c0_11 = arith.constant 0 : index
    %10 = vector.load %arg6[%c0_10, %c0_11] : memref<1x32xf32, #tpu.memory_space<vmem>>, vector<1x32xf32>
    %11 = vector.broadcast %10 : vector<1x32xf32> to vector<512x32xf32>
    %12 = arith.addf %9, %11 : vector<512x32xf32>
    %cst_12 = arith.constant 0.000000e+00 : f32
    %13 = vector.broadcast %cst_12 : f32 to vector<512x32xf32>
    %14 = arith.cmpf oge, %12, %13 : vector<512x32xf32>
    %cst_13 = arith.constant 0.000000e+00 : f32
    %15 = vector.broadcast %cst_13 : f32 to vector<512x32xf32>
    %16 = arith.mulf %15, %12 : vector<512x32xf32>
    %17 = arith.select %14, %12, %16 : vector<512x32xi1>, vector<512x32xf32>
    %c0_14 = arith.constant 0 : index
    %c0_15 = arith.constant 0 : index
    %18 = vector.load %arg7[%c0_14, %c0_15] : memref<512x32xf32, #tpu.memory_space<vmem>>, vector<512x32xf32>
    tpu.vector_store %arg7[%c0_14, %c0_15], %17 {strides = array<i32>} : memref<512x32xf32, #tpu.memory_space<vmem>>, vector<512x32xf32>,
    return
  }
  func.func @transform_0(%arg0: i32) -> (i32, i32) {
    %c0_i32 = arith.constant 0 : i32
    %c0_i32_0 = arith.constant 0 : i32
    return %arg0, %c0_i32 : i32, i32
  }
  func.func @transform_1(%arg0: i32) -> (i32, i32) {
    %c0_i32 = arith.constant 0 : i32
    %c0_i32_0 = arith.constant 0 : i32
    %c0_i32_1 = arith.constant 0 : i32
    return %c0_i32, %c0_i32_0 : i32, i32
  }
  func.func @transform_2(%arg0: i32) -> (i32, i32) {
    %c0_i32 = arith.constant 0 : i32
    %c0_i32_0 = arith.constant 0 : i32
    return %arg0, %c0_i32 : i32, i32
  }
  func.func @transform_3(%arg0: i32) -> (i32, i32) {
    %c0_i32 = arith.constant 0 : i32
    %c0_i32_0 = arith.constant 0 : i32
    %c0_i32_1 = arith.constant 0 : i32
    return %c0_i32, %c0_i32_0 : i32, i32
  }
  func.func @transform_4(%arg0: i32) -> (i32, i32) {
    %c0_i32 = arith.constant 0 : i32
    %c0_i32_0 = arith.constant 0 : i32
    %c0_i32_1 = arith.constant 0 : i32
    return %c0_i32, %c0_i32_0 : i32, i32
  }
  func.func @transform_5(%arg0: i32) -> (i32, i32) {
    %c0_i32 = arith.constant 0 : i32
    %c0_i32_0 = arith.constant 0 : i32
    %c0_i32_1 = arith.constant 0 : i32
    return %c0_i32, %c0_i32_0 : i32, i32
  }
  func.func @transform_6(%arg0: i32) -> (i32, i32) {
    %c0_i32 = arith.constant 0 : i32
    %c0_i32_0 = arith.constant 0 : i32
    return %arg0, %c0_i32 : i32, i32
  }
}

module attributes {stable_mosaic.version = 11 : i64} {
  func.func @_conv_bn_act_kernel(%arg0: i32, %arg1: memref<128x288xbf16, #tpu.memory_space<vmem>>, %arg2: memref<288x64xbf16, #tpu.memory_space<vmem>>, %arg3: memref<1x64xf32, #tpu.memory_space<vmem>>, %arg4: memref<1x64xf32, #tpu.memory_space<vmem>>, %arg5: memref<128x64xf32, #tpu.memory_space<vmem>>) attributes {dimension_semantics = [#tpu.dimension_semantics<parallel>], iteration_bounds = array<i64: 1>, scalar_prefetch = 0 : i64, scratch_operands = 0 : i64, tpu.core_type = #tpu.core_type<tc>, window_params = [{transform_indices = @transform_0, window_bounds = array<i64: 128, 288>}, {pipeline_mode = #tpu.pipeline_mode<synchronous>, transform_indices = @transform_1, window_bounds = array<i64: 288, 64>}, {pipeline_mode = #tpu.pipeline_mode<synchronous>, transform_indices = @transform_2, window_bounds = array<i64: 1, 64>}, {pipeline_mode = #tpu.pipeline_mode<synchronous>, transform_indices = @transform_3, window_bounds = array<i64: 1, 64>}, {transform_indices = @transform_4, window_bounds = array<i64: 128, 64>}]} {
    %c0 = arith.constant 0 : index
    %c0_0 = arith.constant 0 : index
    %0 = vector.load %arg1[%c0, %c0_0] : memref<128x288xbf16, #tpu.memory_space<vmem>>, vector<128x288xbf16>
    %c0_1 = arith.constant 0 : index
    %c0_2 = arith.constant 0 : index
    %1 = vector.load %arg2[%c0_1, %c0_2] : memref<288x64xbf16, #tpu.memory_space<vmem>>, vector<288x64xbf16>
    %cst = arith.constant dense<0.000000e+00> : vector<128x64xf32>
    %2 = tpu.matmul %0, %1, %cst {dimension_numbers = #tpu.dot_dimension_numbers<[1], [0], [0], [1], [0, 0, 1, 1], [], []>} : vector<128x288xbf16>, vector<288x64xbf16>, vector<128x64xf32> -> vector<128x64xf32>
    %c0_3 = arith.constant 0 : index
    %c0_4 = arith.constant 0 : index
    %3 = vector.load %arg3[%c0_3, %c0_4] : memref<1x64xf32, #tpu.memory_space<vmem>>, vector<1x64xf32>
    %4 = vector.broadcast %3 : vector<1x64xf32> to vector<128x64xf32>
    %5 = arith.mulf %2, %4 : vector<128x64xf32>
    %c0_5 = arith.constant 0 : index
    %c0_6 = arith.constant 0 : index
    %6 = vector.load %arg4[%c0_5, %c0_6] : memref<1x64xf32, #tpu.memory_space<vmem>>, vector<1x64xf32>
    %7 = vector.broadcast %6 : vector<1x64xf32> to vector<128x64xf32>
    %8 = arith.addf %5, %7 : vector<128x64xf32>
    %cst_7 = arith.constant 0.000000e+00 : f32
    %9 = vector.broadcast %cst_7 : f32 to vector<128x64xf32>
    %10 = arith.cmpf oge, %8, %9 : vector<128x64xf32>
    %cst_8 = arith.constant 0.000000e+00 : f32
    %11 = vector.broadcast %cst_8 : f32 to vector<128x64xf32>
    %12 = arith.mulf %11, %8 : vector<128x64xf32>
    %13 = arith.select %10, %8, %12 : vector<128x64xi1>, vector<128x64xf32>
    %c0_9 = arith.constant 0 : index
    %c0_10 = arith.constant 0 : index
    %14 = vector.load %arg5[%c0_9, %c0_10] : memref<128x64xf32, #tpu.memory_space<vmem>>, vector<128x64xf32>
    tpu.vector_store %arg5[%c0_9, %c0_10], %13 {strides = array<i32>} : memref<128x64xf32, #tpu.memory_space<vmem>>, vector<128x64xf32>,
    return
  }
  func.func @transform_0(%arg0: i32) -> (i32, i32) {
    %c0_i32 = arith.constant 0 : i32
    %c0_i32_0 = arith.constant 0 : i32
    return %arg0, %c0_i32 : i32, i32
  }
  func.func @transform_1(%arg0: i32) -> (i32, i32) {
    %c0_i32 = arith.constant 0 : i32
    %c0_i32_0 = arith.constant 0 : i32
    %c0_i32_1 = arith.constant 0 : i32
    return %c0_i32, %c0_i32_0 : i32, i32
  }
  func.func @transform_2(%arg0: i32) -> (i32, i32) {
    %c0_i32 = arith.constant 0 : i32
    %c0_i32_0 = arith.constant 0 : i32
    %c0_i32_1 = arith.constant 0 : i32
    return %c0_i32, %c0_i32_0 : i32, i32
  }
  func.func @transform_3(%arg0: i32) -> (i32, i32) {
    %c0_i32 = arith.constant 0 : i32
    %c0_i32_0 = arith.constant 0 : i32
    %c0_i32_1 = arith.constant 0 : i32
    return %c0_i32, %c0_i32_0 : i32, i32
  }
  func.func @transform_4(%arg0: i32) -> (i32, i32) {
    %c0_i32 = arith.constant 0 : i32
    %c0_i32_0 = arith.constant 0 : i32
    return %arg0, %c0_i32 : i32, i32
  }
}

module attributes {stable_mosaic.version = 11 : i64} {
  func.func @_conv_sc_bn_act_kernel(%arg0: i32, %arg1: memref<128x576xbf16, #tpu.memory_space<vmem>>, %arg2: memref<576x64xbf16, #tpu.memory_space<vmem>>, %arg3: memref<128x32xbf16, #tpu.memory_space<vmem>>, %arg4: memref<32x64xbf16, #tpu.memory_space<vmem>>, %arg5: memref<1x64xf32, #tpu.memory_space<vmem>>, %arg6: memref<1x64xf32, #tpu.memory_space<vmem>>, %arg7: memref<128x64xf32, #tpu.memory_space<vmem>>) attributes {dimension_semantics = [#tpu.dimension_semantics<parallel>], iteration_bounds = array<i64: 1>, scalar_prefetch = 0 : i64, scratch_operands = 0 : i64, tpu.core_type = #tpu.core_type<tc>, window_params = [{transform_indices = @transform_0, window_bounds = array<i64: 128, 576>}, {pipeline_mode = #tpu.pipeline_mode<synchronous>, transform_indices = @transform_1, window_bounds = array<i64: 576, 64>}, {transform_indices = @transform_2, window_bounds = array<i64: 128, 32>}, {pipeline_mode = #tpu.pipeline_mode<synchronous>, transform_indices = @transform_3, window_bounds = array<i64: 32, 64>}, {pipeline_mode = #tpu.pipeline_mode<synchronous>, transform_indices = @transform_4, window_bounds = array<i64: 1, 64>}, {pipeline_mode = #tpu.pipeline_mode<synchronous>, transform_indices = @transform_5, window_bounds = array<i64: 1, 64>}, {transform_indices = @transform_6, window_bounds = array<i64: 128, 64>}]} {
    %c0 = arith.constant 0 : index
    %c0_0 = arith.constant 0 : index
    %0 = vector.load %arg1[%c0, %c0_0] : memref<128x576xbf16, #tpu.memory_space<vmem>>, vector<128x576xbf16>
    %c0_1 = arith.constant 0 : index
    %c0_2 = arith.constant 0 : index
    %1 = vector.load %arg2[%c0_1, %c0_2] : memref<576x64xbf16, #tpu.memory_space<vmem>>, vector<576x64xbf16>
    %cst = arith.constant dense<0.000000e+00> : vector<128x64xf32>
    %2 = tpu.matmul %0, %1, %cst {dimension_numbers = #tpu.dot_dimension_numbers<[1], [0], [0], [1], [0, 0, 1, 1], [], []>} : vector<128x576xbf16>, vector<576x64xbf16>, vector<128x64xf32> -> vector<128x64xf32>
    %c0_3 = arith.constant 0 : index
    %c0_4 = arith.constant 0 : index
    %3 = vector.load %arg3[%c0_3, %c0_4] : memref<128x32xbf16, #tpu.memory_space<vmem>>, vector<128x32xbf16>
    %c0_5 = arith.constant 0 : index
    %c0_6 = arith.constant 0 : index
    %4 = vector.load %arg4[%c0_5, %c0_6] : memref<32x64xbf16, #tpu.memory_space<vmem>>, vector<32x64xbf16>
    %cst_7 = arith.constant dense<0.000000e+00> : vector<128x64xf32>
    %5 = tpu.matmul %3, %4, %cst_7 {dimension_numbers = #tpu.dot_dimension_numbers<[1], [0], [0], [1], [0, 0, 1, 1], [], []>} : vector<128x32xbf16>, vector<32x64xbf16>, vector<128x64xf32> -> vector<128x64xf32>
    %6 = arith.addf %2, %5 : vector<128x64xf32>
    %c0_8 = arith.constant 0 : index
    %c0_9 = arith.constant 0 : index
    %7 = vector.load %arg5[%c0_8, %c0_9] : memref<1x64xf32, #tpu.memory_space<vmem>>, vector<1x64xf32>
    %8 = vector.broadcast %7 : vector<1x64xf32> to vector<128x64xf32>
    %9 = arith.mulf %6, %8 : vector<128x64xf32>
    %c0_10 = arith.constant 0 : index
    %c0_11 = arith.constant 0 : index
    %10 = vector.load %arg6[%c0_10, %c0_11] : memref<1x64xf32, #tpu.memory_space<vmem>>, vector<1x64xf32>
    %11 = vector.broadcast %10 : vector<1x64xf32> to vector<128x64xf32>
    %12 = arith.addf %9, %11 : vector<128x64xf32>
    %cst_12 = arith.constant 0.000000e+00 : f32
    %13 = vector.broadcast %cst_12 : f32 to vector<128x64xf32>
    %14 = arith.cmpf oge, %12, %13 : vector<128x64xf32>
    %cst_13 = arith.constant 0.000000e+00 : f32
    %15 = vector.broadcast %cst_13 : f32 to vector<128x64xf32>
    %16 = arith.mulf %15, %12 : vector<128x64xf32>
    %17 = arith.select %14, %12, %16 : vector<128x64xi1>, vector<128x64xf32>
    %c0_14 = arith.constant 0 : index
    %c0_15 = arith.constant 0 : index
    %18 = vector.load %arg7[%c0_14, %c0_15] : memref<128x64xf32, #tpu.memory_space<vmem>>, vector<128x64xf32>
    tpu.vector_store %arg7[%c0_14, %c0_15], %17 {strides = array<i32>} : memref<128x64xf32, #tpu.memory_space<vmem>>, vector<128x64xf32>,
    return
  }
  func.func @transform_0(%arg0: i32) -> (i32, i32) {
    %c0_i32 = arith.constant 0 : i32
    %c0_i32_0 = arith.constant 0 : i32
    return %arg0, %c0_i32 : i32, i32
  }
  func.func @transform_1(%arg0: i32) -> (i32, i32) {
    %c0_i32 = arith.constant 0 : i32
    %c0_i32_0 = arith.constant 0 : i32
    %c0_i32_1 = arith.constant 0 : i32
    return %c0_i32, %c0_i32_0 : i32, i32
  }
  func.func @transform_2(%arg0: i32) -> (i32, i32) {
    %c0_i32 = arith.constant 0 : i32
    %c0_i32_0 = arith.constant 0 : i32
    return %arg0, %c0_i32 : i32, i32
  }
  func.func @transform_3(%arg0: i32) -> (i32, i32) {
    %c0_i32 = arith.constant 0 : i32
    %c0_i32_0 = arith.constant 0 : i32
    %c0_i32_1 = arith.constant 0 : i32
    return %c0_i32, %c0_i32_0 : i32, i32
  }
  func.func @transform_4(%arg0: i32) -> (i32, i32) {
    %c0_i32 = arith.constant 0 : i32
    %c0_i32_0 = arith.constant 0 : i32
    %c0_i32_1 = arith.constant 0 : i32
    return %c0_i32, %c0_i32_0 : i32, i32
  }
  func.func @transform_5(%arg0: i32) -> (i32, i32) {
    %c0_i32 = arith.constant 0 : i32
    %c0_i32_0 = arith.constant 0 : i32
    %c0_i32_1 = arith.constant 0 : i32
    return %c0_i32, %c0_i32_0 : i32, i32
  }
  func.func @transform_6(%arg0: i32) -> (i32, i32) {
    %c0_i32 = arith.constant 0 : i32
    %c0_i32_0 = arith.constant 0 : i32
    return %arg0, %c0_i32 : i32, i32
  }
}

module attributes {stable_mosaic.version = 11 : i64} {
  func.func @_head_kernel(%arg0: memref<128x64xf32, #tpu.memory_space<vmem>>, %arg1: memref<2x128xf32, #tpu.memory_space<vmem>>, %arg2: memref<2x8xf32, #tpu.memory_space<vmem>>, %arg3: memref<64x15xf32, #tpu.memory_space<vmem>>, %arg4: memref<1x15xf32, #tpu.memory_space<vmem>>, %arg5: memref<8x15xf32, #tpu.memory_space<vmem>>, %arg6: memref<1x15xf32, #tpu.memory_space<vmem>>, %arg7: memref<1x15xf32, #tpu.memory_space<vmem>>, %arg8: memref<1x15xf32, #tpu.memory_space<vmem>>, %arg9: memref<15x10xf32, #tpu.memory_space<vmem>>, %arg10: memref<1x10xf32, #tpu.memory_space<vmem>>, %arg11: memref<1x10xf32, #tpu.memory_space<vmem>>, %arg12: memref<1x10xf32, #tpu.memory_space<vmem>>, %arg13: memref<10x10xf32, #tpu.memory_space<vmem>>, %arg14: memref<1x10xf32, #tpu.memory_space<vmem>>, %arg15: memref<1x15xf32, #tpu.memory_space<vmem>>, %arg16: memref<1x15xf32, #tpu.memory_space<vmem>>, %arg17: memref<1x10xf32, #tpu.memory_space<vmem>>, %arg18: memref<1x10xf32, #tpu.memory_space<vmem>>, %arg19: memref<15x10xf32, #tpu.memory_space<vmem>>, %arg20: memref<10x10xf32, #tpu.memory_space<vmem>>, %arg21: memref<1x10xf32, #tpu.memory_space<vmem>>, %arg22: memref<1x10xf32, #tpu.memory_space<vmem>>, %arg23: memref<1x10xf32, #tpu.memory_space<vmem>>, %arg24: memref<10x10xf32, #tpu.memory_space<vmem>>, %arg25: memref<1x10xf32, #tpu.memory_space<vmem>>, %arg26: memref<1x15xf32, #tpu.memory_space<vmem>>, %arg27: memref<1x15xf32, #tpu.memory_space<vmem>>, %arg28: memref<1x10xf32, #tpu.memory_space<vmem>>, %arg29: memref<1x10xf32, #tpu.memory_space<vmem>>, %arg30: memref<1x10xf32, #tpu.memory_space<vmem>>, %arg31: memref<1x10xf32, #tpu.memory_space<vmem>>, %arg32: memref<15x10xf32, #tpu.memory_space<vmem>>, %arg33: memref<10x10xf32, #tpu.memory_space<vmem>>, %arg34: memref<10x10xf32, #tpu.memory_space<vmem>>, %arg35: memref<1x10xf32, #tpu.memory_space<vmem>>, %arg36: memref<1x10xf32, #tpu.memory_space<vmem>>, %arg37: memref<1x10xf32, #tpu.memory_space<vmem>>, %arg38: memref<10x10xf32, #tpu.memory_space<vmem>>, %arg39: memref<1x10xf32, #tpu.memory_space<vmem>>, %arg40: memref<1x10xf32, #tpu.memory_space<vmem>>, %arg41: memref<1x10xf32, #tpu.memory_space<vmem>>, %arg42: memref<10x4xf32, #tpu.memory_space<vmem>>, %arg43: memref<1x4xf32, #tpu.memory_space<vmem>>, %arg44: memref<2x4xf32, #tpu.memory_space<vmem>>) attributes {dimension_semantics = [], scalar_prefetch = 0 : i64, scratch_operands = 0 : i64, tpu.core_type = #tpu.core_type<tc>} {
    %c0 = arith.constant 0 : index
    %c0_0 = arith.constant 0 : index
    %0 = vector.load %arg1[%c0, %c0_0] : memref<2x128xf32, #tpu.memory_space<vmem>>, vector<2x128xf32>
    %c0_1 = arith.constant 0 : index
    %c0_2 = arith.constant 0 : index
    %1 = vector.load %arg0[%c0_1, %c0_2] : memref<128x64xf32, #tpu.memory_space<vmem>>, vector<128x64xf32>
    %cst = arith.constant dense<0.000000e+00> : vector<2x64xf32>
    %2 = tpu.matmul %0, %1, %cst {dimension_numbers = #tpu.dot_dimension_numbers<[1], [0], [0], [1], [0, 0, 1, 1], [], []>} : vector<2x128xf32>, vector<128x64xf32>, vector<2x64xf32> -> vector<2x64xf32>
    %c0_3 = arith.constant 0 : index
    %c0_4 = arith.constant 0 : index
    %3 = vector.load %arg3[%c0_3, %c0_4] : memref<64x15xf32, #tpu.memory_space<vmem>>, vector<64x15xf32>
    %cst_5 = arith.constant dense<0.000000e+00> : vector<2x15xf32>
    %4 = tpu.matmul %2, %3, %cst_5 {dimension_numbers = #tpu.dot_dimension_numbers<[1], [0], [0], [1], [0, 0, 1, 1], [], []>} : vector<2x64xf32>, vector<64x15xf32>, vector<2x15xf32> -> vector<2x15xf32>
    %c0_6 = arith.constant 0 : index
    %c0_7 = arith.constant 0 : index
    %5 = vector.load %arg4[%c0_6, %c0_7] : memref<1x15xf32, #tpu.memory_space<vmem>>, vector<1x15xf32>
    %6 = vector.broadcast %5 : vector<1x15xf32> to vector<2x15xf32>
    %7 = arith.addf %4, %6 : vector<2x15xf32>
    %c0_8 = arith.constant 0 : index
    %c0_9 = arith.constant 0 : index
    %8 = vector.load %arg2[%c0_8, %c0_9] : memref<2x8xf32, #tpu.memory_space<vmem>>, vector<2x8xf32>
    %c0_10 = arith.constant 0 : index
    %c0_11 = arith.constant 0 : index
    %9 = vector.load %arg5[%c0_10, %c0_11] : memref<8x15xf32, #tpu.memory_space<vmem>>, vector<8x15xf32>
    %cst_12 = arith.constant dense<0.000000e+00> : vector<2x15xf32>
    %10 = tpu.matmul %8, %9, %cst_12 {dimension_numbers = #tpu.dot_dimension_numbers<[1], [0], [0], [1], [0, 0, 1, 1], [], []>} : vector<2x8xf32>, vector<8x15xf32>, vector<2x15xf32> -> vector<2x15xf32>
    %c0_13 = arith.constant 0 : index
    %c0_14 = arith.constant 0 : index
    %11 = vector.load %arg6[%c0_13, %c0_14] : memref<1x15xf32, #tpu.memory_space<vmem>>, vector<1x15xf32>
    %12 = vector.broadcast %11 : vector<1x15xf32> to vector<2x15xf32>
    %13 = arith.addf %10, %12 : vector<2x15xf32>
    %c0_15 = arith.constant 0 : index
    %c0_16 = arith.constant 0 : index
    %14 = vector.load %arg7[%c0_15, %c0_16] : memref<1x15xf32, #tpu.memory_space<vmem>>, vector<1x15xf32>
    %15 = vector.broadcast %14 : vector<1x15xf32> to vector<2x15xf32>
    %16 = arith.mulf %13, %15 : vector<2x15xf32>
    %c0_17 = arith.constant 0 : index
    %c0_18 = arith.constant 0 : index
    %17 = vector.load %arg8[%c0_17, %c0_18] : memref<1x15xf32, #tpu.memory_space<vmem>>, vector<1x15xf32>
    %18 = vector.broadcast %17 : vector<1x15xf32> to vector<2x15xf32>
    %19 = arith.addf %16, %18 : vector<2x15xf32>
    %cst_19 = arith.constant 0.000000e+00 : f32
    %20 = vector.broadcast %cst_19 : f32 to vector<2x15xf32>
    %21 = arith.cmpf oge, %19, %20 : vector<2x15xf32>
    %cst_20 = arith.constant 0.00999999977 : f32
    %22 = vector.broadcast %cst_20 : f32 to vector<2x15xf32>
    %23 = arith.mulf %22, %19 : vector<2x15xf32>
    %24 = arith.select %21, %19, %23 : vector<2x15xi1>, vector<2x15xf32>
    %c0_21 = arith.constant 0 : index
    %c0_22 = arith.constant 0 : index
    %25 = vector.load %arg9[%c0_21, %c0_22] : memref<15x10xf32, #tpu.memory_space<vmem>>, vector<15x10xf32>
    %cst_23 = arith.constant dense<0.000000e+00> : vector<2x10xf32>
    %26 = tpu.matmul %24, %25, %cst_23 {dimension_numbers = #tpu.dot_dimension_numbers<[1], [0], [0], [1], [0, 0, 1, 1], [], []>} : vector<2x15xf32>, vector<15x10xf32>, vector<2x10xf32> -> vector<2x10xf32>
    %c0_24 = arith.constant 0 : index
    %c0_25 = arith.constant 0 : index
    %27 = vector.load %arg10[%c0_24, %c0_25] : memref<1x10xf32, #tpu.memory_space<vmem>>, vector<1x10xf32>
    %28 = vector.broadcast %27 : vector<1x10xf32> to vector<2x10xf32>
    %29 = arith.addf %26, %28 : vector<2x10xf32>
    %c0_26 = arith.constant 0 : index
    %c0_27 = arith.constant 0 : index
    %30 = vector.load %arg11[%c0_26, %c0_27] : memref<1x10xf32, #tpu.memory_space<vmem>>, vector<1x10xf32>
    %31 = vector.broadcast %30 : vector<1x10xf32> to vector<2x10xf32>
    %32 = arith.mulf %29, %31 : vector<2x10xf32>
    %c0_28 = arith.constant 0 : index
    %c0_29 = arith.constant 0 : index
    %33 = vector.load %arg12[%c0_28, %c0_29] : memref<1x10xf32, #tpu.memory_space<vmem>>, vector<1x10xf32>
    %34 = vector.broadcast %33 : vector<1x10xf32> to vector<2x10xf32>
    %35 = arith.addf %32, %34 : vector<2x10xf32>
    %cst_30 = arith.constant 0.000000e+00 : f32
    %36 = vector.broadcast %cst_30 : f32 to vector<2x10xf32>
    %37 = arith.cmpf oge, %35, %36 : vector<2x10xf32>
    %cst_31 = arith.constant 0.00999999977 : f32
    %38 = vector.broadcast %cst_31 : f32 to vector<2x10xf32>
    %39 = arith.mulf %38, %35 : vector<2x10xf32>
    %40 = arith.select %37, %35, %39 : vector<2x10xi1>, vector<2x10xf32>
    %c0_32 = arith.constant 0 : index
    %c0_33 = arith.constant 0 : index
    %41 = vector.load %arg13[%c0_32, %c0_33] : memref<10x10xf32, #tpu.memory_space<vmem>>, vector<10x10xf32>
    %cst_34 = arith.constant dense<0.000000e+00> : vector<2x10xf32>
    %42 = tpu.matmul %40, %41, %cst_34 {dimension_numbers = #tpu.dot_dimension_numbers<[1], [0], [0], [1], [0, 0, 1, 1], [], []>} : vector<2x10xf32>, vector<10x10xf32>, vector<2x10xf32> -> vector<2x10xf32>
    %c0_35 = arith.constant 0 : index
    %c0_36 = arith.constant 0 : index
    %43 = vector.load %arg14[%c0_35, %c0_36] : memref<1x10xf32, #tpu.memory_space<vmem>>, vector<1x10xf32>
    %44 = vector.broadcast %43 : vector<1x10xf32> to vector<2x10xf32>
    %45 = arith.addf %42, %44 : vector<2x10xf32>
    %c0_37 = arith.constant 0 : index
    %c0_38 = arith.constant 0 : index
    %46 = vector.load %arg15[%c0_37, %c0_38] : memref<1x15xf32, #tpu.memory_space<vmem>>, vector<1x15xf32>
    %47 = vector.broadcast %46 : vector<1x15xf32> to vector<2x15xf32>
    %48 = arith.mulf %7, %47 : vector<2x15xf32>
    %c0_39 = arith.constant 0 : index
    %c0_40 = arith.constant 0 : index
    %49 = vector.load %arg16[%c0_39, %c0_40] : memref<1x15xf32, #tpu.memory_space<vmem>>, vector<1x15xf32>
    %50 = vector.broadcast %49 : vector<1x15xf32> to vector<2x15xf32>
    %51 = arith.addf %48, %50 : vector<2x15xf32>
    %cst_41 = arith.constant 0.000000e+00 : f32
    %52 = vector.broadcast %cst_41 : f32 to vector<2x15xf32>
    %53 = arith.cmpf oge, %51, %52 : vector<2x15xf32>
    %cst_42 = arith.constant 0.00999999977 : f32
    %54 = vector.broadcast %cst_42 : f32 to vector<2x15xf32>
    %55 = arith.mulf %54, %51 : vector<2x15xf32>
    %56 = arith.select %53, %51, %55 : vector<2x15xi1>, vector<2x15xf32>
    %c0_43 = arith.constant 0 : index
    %c0_44 = arith.constant 0 : index
    %57 = vector.load %arg17[%c0_43, %c0_44] : memref<1x10xf32, #tpu.memory_space<vmem>>, vector<1x10xf32>
    %58 = vector.broadcast %57 : vector<1x10xf32> to vector<2x10xf32>
    %59 = arith.mulf %45, %58 : vector<2x10xf32>
    %c0_45 = arith.constant 0 : index
    %c0_46 = arith.constant 0 : index
    %60 = vector.load %arg18[%c0_45, %c0_46] : memref<1x10xf32, #tpu.memory_space<vmem>>, vector<1x10xf32>
    %61 = vector.broadcast %60 : vector<1x10xf32> to vector<2x10xf32>
    %62 = arith.addf %59, %61 : vector<2x10xf32>
    %cst_47 = arith.constant 0.000000e+00 : f32
    %63 = vector.broadcast %cst_47 : f32 to vector<2x10xf32>
    %64 = arith.cmpf oge, %62, %63 : vector<2x10xf32>
    %cst_48 = arith.constant 0.00999999977 : f32
    %65 = vector.broadcast %cst_48 : f32 to vector<2x10xf32>
    %66 = arith.mulf %65, %62 : vector<2x10xf32>
    %67 = arith.select %64, %62, %66 : vector<2x10xi1>, vector<2x10xf32>
    %c0_49 = arith.constant 0 : index
    %c0_50 = arith.constant 0 : index
    %68 = vector.load %arg19[%c0_49, %c0_50] : memref<15x10xf32, #tpu.memory_space<vmem>>, vector<15x10xf32>
    %cst_51 = arith.constant dense<0.000000e+00> : vector<2x10xf32>
    %69 = tpu.matmul %56, %68, %cst_51 {dimension_numbers = #tpu.dot_dimension_numbers<[1], [0], [0], [1], [0, 0, 1, 1], [], []>} : vector<2x15xf32>, vector<15x10xf32>, vector<2x10xf32> -> vector<2x10xf32>
    %c0_52 = arith.constant 0 : index
    %c0_53 = arith.constant 0 : index
    %70 = vector.load %arg20[%c0_52, %c0_53] : memref<10x10xf32, #tpu.memory_space<vmem>>, vector<10x10xf32>
    %cst_54 = arith.constant dense<0.000000e+00> : vector<2x10xf32>
    %71 = tpu.matmul %67, %70, %cst_54 {dimension_numbers = #tpu.dot_dimension_numbers<[1], [0], [0], [1], [0, 0, 1, 1], [], []>} : vector<2x10xf32>, vector<10x10xf32>, vector<2x10xf32> -> vector<2x10xf32>
    %72 = arith.addf %69, %71 : vector<2x10xf32>
    %c0_55 = arith.constant 0 : index
    %c0_56 = arith.constant 0 : index
    %73 = vector.load %arg21[%c0_55, %c0_56] : memref<1x10xf32, #tpu.memory_space<vmem>>, vector<1x10xf32>
    %74 = vector.broadcast %73 : vector<1x10xf32> to vector<2x10xf32>
    %75 = arith.addf %72, %74 : vector<2x10xf32>
    %c0_57 = arith.constant 0 : index
    %c0_58 = arith.constant 0 : index
    %76 = vector.load %arg22[%c0_57, %c0_58] : memref<1x10xf32, #tpu.memory_space<vmem>>, vector<1x10xf32>
    %77 = vector.broadcast %76 : vector<1x10xf32> to vector<2x10xf32>
    %78 = arith.mulf %75, %77 : vector<2x10xf32>
    %c0_59 = arith.constant 0 : index
    %c0_60 = arith.constant 0 : index
    %79 = vector.load %arg23[%c0_59, %c0_60] : memref<1x10xf32, #tpu.memory_space<vmem>>, vector<1x10xf32>
    %80 = vector.broadcast %79 : vector<1x10xf32> to vector<2x10xf32>
    %81 = arith.addf %78, %80 : vector<2x10xf32>
    %cst_61 = arith.constant 0.000000e+00 : f32
    %82 = vector.broadcast %cst_61 : f32 to vector<2x10xf32>
    %83 = arith.cmpf oge, %81, %82 : vector<2x10xf32>
    %cst_62 = arith.constant 0.00999999977 : f32
    %84 = vector.broadcast %cst_62 : f32 to vector<2x10xf32>
    %85 = arith.mulf %84, %81 : vector<2x10xf32>
    %86 = arith.select %83, %81, %85 : vector<2x10xi1>, vector<2x10xf32>
    %c0_63 = arith.constant 0 : index
    %c0_64 = arith.constant 0 : index
    %87 = vector.load %arg24[%c0_63, %c0_64] : memref<10x10xf32, #tpu.memory_space<vmem>>, vector<10x10xf32>
    %cst_65 = arith.constant dense<0.000000e+00> : vector<2x10xf32>
    %88 = tpu.matmul %86, %87, %cst_65 {dimension_numbers = #tpu.dot_dimension_numbers<[1], [0], [0], [1], [0, 0, 1, 1], [], []>} : vector<2x10xf32>, vector<10x10xf32>, vector<2x10xf32> -> vector<2x10xf32>
    %c0_66 = arith.constant 0 : index
    %c0_67 = arith.constant 0 : index
    %89 = vector.load %arg25[%c0_66, %c0_67] : memref<1x10xf32, #tpu.memory_space<vmem>>, vector<1x10xf32>
    %90 = vector.broadcast %89 : vector<1x10xf32> to vector<2x10xf32>
    %91 = arith.addf %88, %90 : vector<2x10xf32>
    %c0_68 = arith.constant 0 : index
    %c0_69 = arith.constant 0 : index
    %92 = vector.load %arg26[%c0_68, %c0_69] : memref<1x15xf32, #tpu.memory_space<vmem>>, vector<1x15xf32>
    %93 = vector.broadcast %92 : vector<1x15xf32> to vector<2x15xf32>
    %94 = arith.mulf %7, %93 : vector<2x15xf32>
    %c0_70 = arith.constant 0 : index
    %c0_71 = arith.constant 0 : index
    %95 = vector.load %arg27[%c0_70, %c0_71] : memref<1x15xf32, #tpu.memory_space<vmem>>, vector<1x15xf32>
    %96 = vector.broadcast %95 : vector<1x15xf32> to vector<2x15xf32>
    %97 = arith.addf %94, %96 : vector<2x15xf32>
    %cst_72 = arith.constant 0.000000e+00 : f32
    %98 = vector.broadcast %cst_72 : f32 to vector<2x15xf32>
    %99 = arith.cmpf oge, %97, %98 : vector<2x15xf32>
    %cst_73 = arith.constant 0.00999999977 : f32
    %100 = vector.broadcast %cst_73 : f32 to vector<2x15xf32>
    %101 = arith.mulf %100, %97 : vector<2x15xf32>
    %102 = arith.select %99, %97, %101 : vector<2x15xi1>, vector<2x15xf32>
    %c0_74 = arith.constant 0 : index
    %c0_75 = arith.constant 0 : index
    %103 = vector.load %arg28[%c0_74, %c0_75] : memref<1x10xf32, #tpu.memory_space<vmem>>, vector<1x10xf32>
    %104 = vector.broadcast %103 : vector<1x10xf32> to vector<2x10xf32>
    %105 = arith.mulf %45, %104 : vector<2x10xf32>
    %c0_76 = arith.constant 0 : index
    %c0_77 = arith.constant 0 : index
    %106 = vector.load %arg29[%c0_76, %c0_77] : memref<1x10xf32, #tpu.memory_space<vmem>>, vector<1x10xf32>
    %107 = vector.broadcast %106 : vector<1x10xf32> to vector<2x10xf32>
    %108 = arith.addf %105, %107 : vector<2x10xf32>
    %cst_78 = arith.constant 0.000000e+00 : f32
    %109 = vector.broadcast %cst_78 : f32 to vector<2x10xf32>
    %110 = arith.cmpf oge, %108, %109 : vector<2x10xf32>
    %cst_79 = arith.constant 0.00999999977 : f32
    %111 = vector.broadcast %cst_79 : f32 to vector<2x10xf32>
    %112 = arith.mulf %111, %108 : vector<2x10xf32>
    %113 = arith.select %110, %108, %112 : vector<2x10xi1>, vector<2x10xf32>
    %c0_80 = arith.constant 0 : index
    %c0_81 = arith.constant 0 : index
    %114 = vector.load %arg30[%c0_80, %c0_81] : memref<1x10xf32, #tpu.memory_space<vmem>>, vector<1x10xf32>
    %115 = vector.broadcast %114 : vector<1x10xf32> to vector<2x10xf32>
    %116 = arith.mulf %91, %115 : vector<2x10xf32>
    %c0_82 = arith.constant 0 : index
    %c0_83 = arith.constant 0 : index
    %117 = vector.load %arg31[%c0_82, %c0_83] : memref<1x10xf32, #tpu.memory_space<vmem>>, vector<1x10xf32>
    %118 = vector.broadcast %117 : vector<1x10xf32> to vector<2x10xf32>
    %119 = arith.addf %116, %118 : vector<2x10xf32>
    %cst_84 = arith.constant 0.000000e+00 : f32
    %120 = vector.broadcast %cst_84 : f32 to vector<2x10xf32>
    %121 = arith.cmpf oge, %119, %120 : vector<2x10xf32>
    %cst_85 = arith.constant 0.00999999977 : f32
    %122 = vector.broadcast %cst_85 : f32 to vector<2x10xf32>
    %123 = arith.mulf %122, %119 : vector<2x10xf32>
    %124 = arith.select %121, %119, %123 : vector<2x10xi1>, vector<2x10xf32>
    %c0_86 = arith.constant 0 : index
    %c0_87 = arith.constant 0 : index
    %125 = vector.load %arg32[%c0_86, %c0_87] : memref<15x10xf32, #tpu.memory_space<vmem>>, vector<15x10xf32>
    %cst_88 = arith.constant dense<0.000000e+00> : vector<2x10xf32>
    %126 = tpu.matmul %102, %125, %cst_88 {dimension_numbers = #tpu.dot_dimension_numbers<[1], [0], [0], [1], [0, 0, 1, 1], [], []>} : vector<2x15xf32>, vector<15x10xf32>, vector<2x10xf32> -> vector<2x10xf32>
    %c0_89 = arith.constant 0 : index
    %c0_90 = arith.constant 0 : index
    %127 = vector.load %arg33[%c0_89, %c0_90] : memref<10x10xf32, #tpu.memory_space<vmem>>, vector<10x10xf32>
    %cst_91 = arith.constant dense<0.000000e+00> : vector<2x10xf32>
    %128 = tpu.matmul %113, %127, %cst_91 {dimension_numbers = #tpu.dot_dimension_numbers<[1], [0], [0], [1], [0, 0, 1, 1], [], []>} : vector<2x10xf32>, vector<10x10xf32>, vector<2x10xf32> -> vector<2x10xf32>
    %129 = arith.addf %126, %128 : vector<2x10xf32>
    %c0_92 = arith.constant 0 : index
    %c0_93 = arith.constant 0 : index
    %130 = vector.load %arg34[%c0_92, %c0_93] : memref<10x10xf32, #tpu.memory_space<vmem>>, vector<10x10xf32>
    %cst_94 = arith.constant dense<0.000000e+00> : vector<2x10xf32>
    %131 = tpu.matmul %124, %130, %cst_94 {dimension_numbers = #tpu.dot_dimension_numbers<[1], [0], [0], [1], [0, 0, 1, 1], [], []>} : vector<2x10xf32>, vector<10x10xf32>, vector<2x10xf32> -> vector<2x10xf32>
    %132 = arith.addf %129, %131 : vector<2x10xf32>
    %c0_95 = arith.constant 0 : index
    %c0_96 = arith.constant 0 : index
    %133 = vector.load %arg35[%c0_95, %c0_96] : memref<1x10xf32, #tpu.memory_space<vmem>>, vector<1x10xf32>
    %134 = vector.broadcast %133 : vector<1x10xf32> to vector<2x10xf32>
    %135 = arith.addf %132, %134 : vector<2x10xf32>
    %c0_97 = arith.constant 0 : index
    %c0_98 = arith.constant 0 : index
    %136 = vector.load %arg36[%c0_97, %c0_98] : memref<1x10xf32, #tpu.memory_space<vmem>>, vector<1x10xf32>
    %137 = vector.broadcast %136 : vector<1x10xf32> to vector<2x10xf32>
    %138 = arith.mulf %135, %137 : vector<2x10xf32>
    %c0_99 = arith.constant 0 : index
    %c0_100 = arith.constant 0 : index
    %139 = vector.load %arg37[%c0_99, %c0_100] : memref<1x10xf32, #tpu.memory_space<vmem>>, vector<1x10xf32>
    %140 = vector.broadcast %139 : vector<1x10xf32> to vector<2x10xf32>
    %141 = arith.addf %138, %140 : vector<2x10xf32>
    %cst_101 = arith.constant 0.000000e+00 : f32
    %142 = vector.broadcast %cst_101 : f32 to vector<2x10xf32>
    %143 = arith.cmpf oge, %141, %142 : vector<2x10xf32>
    %cst_102 = arith.constant 0.00999999977 : f32
    %144 = vector.broadcast %cst_102 : f32 to vector<2x10xf32>
    %145 = arith.mulf %144, %141 : vector<2x10xf32>
    %146 = arith.select %143, %141, %145 : vector<2x10xi1>, vector<2x10xf32>
    %c0_103 = arith.constant 0 : index
    %c0_104 = arith.constant 0 : index
    %147 = vector.load %arg38[%c0_103, %c0_104] : memref<10x10xf32, #tpu.memory_space<vmem>>, vector<10x10xf32>
    %cst_105 = arith.constant dense<0.000000e+00> : vector<2x10xf32>
    %148 = tpu.matmul %146, %147, %cst_105 {dimension_numbers = #tpu.dot_dimension_numbers<[1], [0], [0], [1], [0, 0, 1, 1], [], []>} : vector<2x10xf32>, vector<10x10xf32>, vector<2x10xf32> -> vector<2x10xf32>
    %c0_106 = arith.constant 0 : index
    %c0_107 = arith.constant 0 : index
    %149 = vector.load %arg39[%c0_106, %c0_107] : memref<1x10xf32, #tpu.memory_space<vmem>>, vector<1x10xf32>
    %150 = vector.broadcast %149 : vector<1x10xf32> to vector<2x10xf32>
    %151 = arith.addf %148, %150 : vector<2x10xf32>
    %c0_108 = arith.constant 0 : index
    %c0_109 = arith.constant 0 : index
    %152 = vector.load %arg40[%c0_108, %c0_109] : memref<1x10xf32, #tpu.memory_space<vmem>>, vector<1x10xf32>
    %153 = vector.broadcast %152 : vector<1x10xf32> to vector<2x10xf32>
    %154 = arith.mulf %151, %153 : vector<2x10xf32>
    %c0_110 = arith.constant 0 : index
    %c0_111 = arith.constant 0 : index
    %155 = vector.load %arg41[%c0_110, %c0_111] : memref<1x10xf32, #tpu.memory_space<vmem>>, vector<1x10xf32>
    %156 = vector.broadcast %155 : vector<1x10xf32> to vector<2x10xf32>
    %157 = arith.addf %154, %156 : vector<2x10xf32>
    %cst_112 = arith.constant 0.000000e+00 : f32
    %158 = vector.broadcast %cst_112 : f32 to vector<2x10xf32>
    %159 = arith.cmpf oge, %157, %158 : vector<2x10xf32>
    %cst_113 = arith.constant 2.000000e-01 : f32
    %160 = vector.broadcast %cst_113 : f32 to vector<2x10xf32>
    %161 = arith.mulf %160, %157 : vector<2x10xf32>
    %162 = arith.select %159, %157, %161 : vector<2x10xi1>, vector<2x10xf32>
    %c0_114 = arith.constant 0 : index
    %c0_115 = arith.constant 0 : index
    %163 = vector.load %arg42[%c0_114, %c0_115] : memref<10x4xf32, #tpu.memory_space<vmem>>, vector<10x4xf32>
    %cst_116 = arith.constant dense<0.000000e+00> : vector<2x4xf32>
    %164 = tpu.matmul %162, %163, %cst_116 {dimension_numbers = #tpu.dot_dimension_numbers<[1], [0], [0], [1], [0, 0, 1, 1], [], []>} : vector<2x10xf32>, vector<10x4xf32>, vector<2x4xf32> -> vector<2x4xf32>
    %c0_117 = arith.constant 0 : index
    %c0_118 = arith.constant 0 : index
    %165 = vector.load %arg43[%c0_117, %c0_118] : memref<1x4xf32, #tpu.memory_space<vmem>>, vector<1x4xf32>
    %166 = vector.broadcast %165 : vector<1x4xf32> to vector<2x4xf32>
    %167 = arith.addf %164, %166 : vector<2x4xf32>
    %c0_119 = arith.constant 0 : index
    %c0_120 = arith.constant 0 : index
    %168 = vector.load %arg44[%c0_119, %c0_120] : memref<2x4xf32, #tpu.memory_space<vmem>>, vector<2x4xf32>
    tpu.vector_store %arg44[%c0_119, %c0_120], %167 {strides = array<i32>} : memref<2x4xf32, #tpu.memory_space<vmem>>, vector<2x4xf32>,
    return
  }
}

</mosaic_0001>

<llo_original>
// kernel: wide_resnet_forward.8
$region0: #{wide_resnet_forward.8}
  #allocation0 [shape = 'u32[]', space=smem, size = 0x4, offset = 0x4, fixed_abs, tag = 'smem constant byte address 0x4 - core index']
  #allocation1 [shape = 'u32[72,128]{1,0:T(1,128)}', space=vmem, size = 0x9000, scoped, tag = 'internal scratch']
  %s0 = inlined_call_operand.vmem [shape: bf16[2048,27], index: 0, kind: input, shape index: {}]
  %s1 = inlined_call_operand.vmem [shape: bf16[27,16], index: 1, kind: input, shape index: {}]
  %s2 = inlined_call_operand.vmem [shape: f32[1,16], index: 2, kind: input, shape index: {}]
  %s3 = inlined_call_operand.vmem [shape: f32[1,16], index: 3, kind: input, shape index: {}]
  %s4 = inlined_call_operand.vmem [shape: f32[2048,16], index: 4, kind: output, shape index: {}]
  %s5 = sld [smem:[#allocation0]]
  $region49: #{wide_resnet_forward.8} parent=0
    _
  %s7 = ssub.s32 1, %s5
  %s8 = scalar_select 0, %s7, %s5
  loop: start=0, step=1, limit=6
  $region2: #{wide_resnet_forward.8} parent=0 // loop_pre_header
    _
  $region3: #{wide_resnet_forward.8} parent=0 // loop_header
    %s10 = sphi 0, %s14
    %p11 = scmp.ge.s32.totalorder %s10, 6
    %s20 = sphi 0, %s22
    %s23 = sphi 0, %s20
    %s24 = sphi 0, %s23
    %s40 = sphi 0, %s24
    %s44 = sphi 0, %s44
    %s46 = sphi 0, %s44
    %s47 = sphi 0, %s46
    %s61 = sphi 0, %s47
    %s65 = sphi 0, %s65
    %s67 = sphi 0, %s65
    %s68 = sphi 0, %s67
    %s82 = sphi 0, %s68
    %s86 = sphi 0, %s86
    %s88 = sphi 0, %s86
    %s89 = sphi 0, %s88
    %s103 = sphi 0, %s89
    %s109 = sphi 0, %s111
    %s112 = sphi 0, %s109
    %s113 = sphi 0, %s112
    %s129 = sphi 0, %s113
  $region4: #{wide_resnet_forward.8} parent=0 // loop_header_branch
    %13 = sbr.rel (%p11) target = $region8
  $region5: #{wide_resnet_forward.8} parent=0 // loop_body
    %s15 = ssub.s32 %s10, 1
    %s16 = ssub.s32 %s10, 2
    %s17 = sadd.s32 %s10, 1
    %s18 = ssub.s32 %s10, %s17
    %p19 = scmp.eq.s32.totalorder %s18, 0
    %s21 = sadd.s32 %s20, 1
    %s22 = scalar_select %p19, %s20, %s21
    %p25 = pneg %p19
    %p26 = scmp.eq.s32.totalorder %s10, 3
    %p27 = por %p25, %p26
    %p28 = scmp.ne.s32.totalorder %s20, %s23
    %p29 = scmp.eq.s32.totalorder %s10, 0
    %p30 = por %p28, %p29
    %p31 = scmp.ne.s32.totalorder %s20, %s23
    %p32 = scmp.eq.s32.totalorder %s15, 3
    %p33 = por %p31, %p32
    %p34 = scmp.ne.s32.totalorder %s23, %s24
    %p35 = scmp.eq.s32.totalorder %s15, 0
    %p36 = por %p34, %p35
    %p37 = scmp.ne.s32.totalorder %s23, %s24
    %p38 = scmp.eq.s32.totalorder %s16, 3
    %p39 = por %p37, %p38
    %p41 = scmp.ne.s32.totalorder %s24, %s40
    %p42 = scmp.eq.s32.totalorder %s16, 0
    %p43 = por %p41, %p42
    %s45 = sadd.s32 %s44, 1
    %p48 = scmp.eq.s32.totalorder %s10, 3
    %p49 = scmp.ne.s32.totalorder %s44, %s46
    %p50 = scmp.eq.s32.totalorder %s10, 0
    %p51 = por %p49, %p50
    %p52 = scmp.ne.s32.totalorder %s44, %s46
    %p53 = scmp.eq.s32.totalorder %s15, 3
    %p54 = por %p52, %p53
    %p55 = scmp.ne.s32.totalorder %s46, %s47
    %p56 = scmp.eq.s32.totalorder %s15, 0
    %p57 = por %p55, %p56
    %p58 = scmp.ne.s32.totalorder %s46, %s47
    %p59 = scmp.eq.s32.totalorder %s16, 3
    %p60 = por %p58, %p59
    %p62 = scmp.ne.s32.totalorder %s47, %s61
    %p63 = scmp.eq.s32.totalorder %s16, 0
    %p64 = por %p62, %p63
    %s66 = sadd.s32 %s65, 1
    %p69 = scmp.eq.s32.totalorder %s10, 3
    %p70 = scmp.ne.s32.totalorder %s65, %s67
    %p71 = scmp.eq.s32.totalorder %s10, 0
    %p72 = por %p70, %p71
    %p73 = scmp.ne.s32.totalorder %s65, %s67
    %p74 = scmp.eq.s32.totalorder %s15, 3
    %p75 = por %p73, %p74
    %p76 = scmp.ne.s32.totalorder %s67, %s68
    %p77 = scmp.eq.s32.totalorder %s15, 0
    %p78 = por %p76, %p77
    %p79 = scmp.ne.s32.totalorder %s67, %s68
    %p80 = scmp.eq.s32.totalorder %s16, 3
    %p81 = por %p79, %p80
    %p83 = scmp.ne.s32.totalorder %s68, %s82
    %p84 = scmp.eq.s32.totalorder %s16, 0
    %p85 = por %p83, %p84
    %s87 = sadd.s32 %s86, 1
    %p90 = scmp.eq.s32.totalorder %s10, 3
    %p91 = scmp.ne.s32.totalorder %s86, %s88
    %p92 = scmp.eq.s32.totalorder %s10, 0
    %p93 = por %p91, %p92
    %p94 = scmp.ne.s32.totalorder %s86, %s88
    %p95 = scmp.eq.s32.totalorder %s15, 3
    %p96 = por %p94, %p95
    %p97 = scmp.ne.s32.totalorder %s88, %s89
    %p98 = scmp.eq.s32.totalorder %s15, 0
    %p99 = por %p97, %p98
    %p100 = scmp.ne.s32.totalorder %s88, %s89
    %p101 = scmp.eq.s32.totalorder %s16, 3
    %p102 = por %p100, %p101
    %p104 = scmp.ne.s32.totalorder %s89, %s103
    %p105 = scmp.eq.s32.totalorder %s16, 0
    %p106 = por %p104, %p105
    %s107 = ssub.s32 %s10, %s17
    %p108 = scmp.eq.s32.totalorder %s107, 0
    %s110 = sadd.s32 %s109, 1
    %s111 = scalar_select %p108, %s109, %s110
    %p114 = pneg %p108
    %p115 = scmp.eq.s32.totalorder %s10, 3
    %p116 = por %p114, %p115
    %p117 = scmp.ne.s32.totalorder %s109, %s112
    %p118 = scmp.eq.s32.totalorder %s10, 0
    %p119 = por %p117, %p118
    %p120 = scmp.ne.s32.totalorder %s109, %s112
    %p121 = scmp.eq.s32.totalorder %s15, 3
    %p122 = por %p120, %p121
    %p123 = scmp.ne.s32.totalorder %s112, %s113
    %p124 = scmp.eq.s32.totalorder %s15, 0
    %p125 = por %p123, %p124
    %p126 = scmp.ne.s32.totalorder %s112, %s113
    %p127 = scmp.eq.s32.totalorder %s16, 3
    %p128 = por %p126, %p127
    %p130 = scmp.ne.s32.totalorder %s113, %s129
    %p131 = scmp.eq.s32.totalorder %s16, 0
    %p132 = por %p130, %p131
    %p133 = scmp.le.s32.totalorder 1, %s10
    %p134 = scmp.lt.s32.totalorder %s10, 5
    %p135 = pnand %p133, %p134
    %p136 = pneg %p135
    // Predicated region
    $region9: #{wide_resnet_forward.8} parent=5 // pred_check
      _
    $region10: #{wide_resnet_forward.8} parent=5 // pred_check_branch
      %138 = sbr.rel (%p135) target = $region12
    $region11: #{wide_resnet_forward.8} parent=5 // pred_region
      %s139 = ssub.s32 %s10, 1
      // Predicated region
      $region13: #{wide_resnet_forward.8} parent=11 // pred_check
        %p140 = pneg %p57
      $region14: #{wide_resnet_forward.8} parent=11 // pred_check_branch
        %142 = sbr.rel (%p140) target = $region16
      $region15: #{wide_resnet_forward.8} parent=11 // pred_region
        _
      $region16: #{wide_resnet_forward.8} parent=11 // pred_fallthru
        _
      // Predicated region
      $region17: #{wide_resnet_forward.8} parent=11 // pred_check
        %p143 = pneg %p78
      $region18: #{wide_resnet_forward.8} parent=11 // pred_check_branch
        %145 = sbr.rel (%p143) target = $region20
      $region19: #{wide_resnet_forward.8} parent=11 // pred_region
        _
      $region20: #{wide_resnet_forward.8} parent=11 // pred_fallthru
        _
      // Predicated region
      $region21: #{wide_resnet_forward.8} parent=11 // pred_check
        %p146 = pneg %p99
      $region22: #{wide_resnet_forward.8} parent=11 // pred_check_branch
        %148 = sbr.rel (%p146) target = $region24
      $region23: #{wide_resnet_forward.8} parent=11 // pred_region
        _
      $region24: #{wide_resnet_forward.8} parent=11 // pred_fallthru
        _
    $region12: #{wide_resnet_forward.8} parent=5 // pred_fallthru
      _
    %p149 = scmp.lt.s32.totalorder %s10, 4
    // Predicated region
    $region25: #{wide_resnet_forward.8} parent=5 // pred_check
      %p150 = pneg %p149
    $region26: #{wide_resnet_forward.8} parent=5 // pred_check_branch
      %152 = sbr.rel (%p150) target = $region28
    $region27: #{wide_resnet_forward.8} parent=5 // pred_region
      // Predicated region
      $region29: #{wide_resnet_forward.8} parent=27 // pred_check
        %p153 = pneg %p30
      $region30: #{wide_resnet_forward.8} parent=27 // pred_check_branch
        %155 = sbr.rel (%p153) target = $region32
      $region31: #{wide_resnet_forward.8} parent=27 // pred_region
        %s156 = smul.u32 64, %s10
        %p157 = scmp.lt.s32.totalorder %s156, 255
        %s158 = scalar_select %p157, %s156, 255
        %s159 = smul.addr %s158, 4
        %s160 = scalar_lea.vmem %s0, %s159
        %s161 = smul.u32 64, %s10
      $region32: #{wide_resnet_forward.8} parent=27 // pred_fallthru
        _
    $region28: #{wide_resnet_forward.8} parent=5 // pred_fallthru
      _
    %p162 = scmp.le.s32.totalorder 1, %s10
    %p163 = scmp.lt.s32.totalorder %s10, 5
    %p164 = pnand %p162, %p163
    %p165 = pneg %p164
    // Predicated region
    $region33: #{wide_resnet_forward.8} parent=5 // pred_check
      _
    $region34: #{wide_resnet_forward.8} parent=5 // pred_check_branch
      %167 = sbr.rel (%p164) target = $region36
    $region35: #{wide_resnet_forward.8} parent=5 // pred_region
      %s168 = ssub.s32 %s10, 1
      %s169 = smul.u32 64, %s15
      %p170 = scmp.lt.s32.totalorder %s169, 255
      %s171 = scalar_select %p170, %s169, 255
      %s172 = smul.addr %s171, 4
      %s173 = scalar_lea.vmem %s0, %s172
      %p174 = pneg %p36
      %p175 = pneg %p33
      %p176 = pneg %p57
      %p177 = pneg %p54
      %p178 = pneg %p78
      %p179 = pneg %p75
      %p180 = pneg %p99
      %p181 = pneg %p96
      %p182 = pneg %p125
      %p183 = pneg %p122
      %s184 = smul.u32 64, %s15
      %p185 = scmp.lt.s32.totalorder %s184, 255
      %s186 = scalar_select %p185, %s184, 255
      %s187 = smul.addr %s186, 8
      %s188 = scalar_lea.vmem %s4, %s187
      %s189 = smul.u32 64, %s15
      %p190 = scmp.lt.s32.totalorder %s189, 255
      %s191 = scalar_select %p190, %s189, 255
      %s192 = smul.addr %s191, 4
      %s193 = scalar_lea.vmem %s0, %s192
      %s194 = smul.u32 64, %s15
      %s195 = smul.u32 64, %s15
      %p196 = scmp.lt.s32.totalorder %s195, 255
      %s197 = scalar_select %p196, %s195, 255
      %s198 = smul.addr %s197, 8
      %s199 = scalar_lea.vmem %s4, %s198
      %s200 = smul.u32 64, %s15
      %v202 = vld [vmem:[%s193] sm:$0xf]
      %v203 = vld [vmem:[%s193 + $0x4] sm:$0xf]
      %v204 = vld [vmem:[%s193 + $0x8] sm:$0xf]
      %v205 = vld [vmem:[%s193 + $0xc] sm:$0xf]
      %v206 = vld [vmem:[%s193 + $0x10] sm:$0xf]
      %v207 = vld [vmem:[%s193 + $0x14] sm:$0xf]
      %v208 = vld [vmem:[%s193 + $0x18] sm:$0xf]
      %v209 = vld [vmem:[%s193 + $0x1c] sm:$0xf]
      %v210 = vld [vmem:[%s193 + $0x20] sm:$0xf]
      %v211 = vld [vmem:[%s193 + $0x24] sm:$0xf]
      %v212 = vld [vmem:[%s193 + $0x28] sm:$0xf]
      %v213 = vld [vmem:[%s193 + $0x2c] sm:$0xf]
      %v214 = vld [vmem:[%s193 + $0x30] sm:$0xf]
      %v215 = vld [vmem:[%s193 + $0x34] sm:$0xf]
      %v216 = vld [vmem:[%s193 + $0x38] sm:$0xf]
      %v217 = vld [vmem:[%s193 + $0x3c] sm:$0xf]
      %v218 = vld [vmem:[%s193 + $0x40] sm:$0xf]
      %v219 = vld [vmem:[%s193 + $0x44] sm:$0xf]
      %v220 = vld [vmem:[%s193 + $0x48] sm:$0xf]
      %v221 = vld [vmem:[%s193 + $0x4c] sm:$0xf]
      %v222 = vld [vmem:[%s193 + $0x50] sm:$0xf]
      %v223 = vld [vmem:[%s193 + $0x54] sm:$0xf]
      %v224 = vld [vmem:[%s193 + $0x58] sm:$0xf]
      %v225 = vld [vmem:[%s193 + $0x5c] sm:$0xf]
      %v226 = vld [vmem:[%s193 + $0x60] sm:$0xf]
      %v227 = vld [vmem:[%s193 + $0x64] sm:$0xf]
      %v228 = vld [vmem:[%s193 + $0x68] sm:$0xf]
      %v229 = vld [vmem:[%s193 + $0x6c] sm:$0xf]
      %v230 = vld [vmem:[%s193 + $0x70] sm:$0xf]
      %v231 = vld [vmem:[%s193 + $0x74] sm:$0xf]
      %v232 = vld [vmem:[%s193 + $0x78] sm:$0xf]
      %v233 = vld [vmem:[%s193 + $0x7c] sm:$0xf]
      %v234 = vld [vmem:[%s193 + $0x80] sm:$0xf]
      %v235 = vld [vmem:[%s193 + $0x84] sm:$0xf]
      %v236 = vld [vmem:[%s193 + $0x88] sm:$0xf]
      %v237 = vld [vmem:[%s193 + $0x8c] sm:$0xf]
      %v238 = vld [vmem:[%s193 + $0x90] sm:$0xf]
      %v239 = vld [vmem:[%s193 + $0x94] sm:$0xf]
      %v240 = vld [vmem:[%s193 + $0x98] sm:$0xf]
      %v241 = vld [vmem:[%s193 + $0x9c] sm:$0xf]
      %v242 = vld [vmem:[%s193 + $0xa0] sm:$0xf]
      %v243 = vld [vmem:[%s193 + $0xa4] sm:$0xf]
      %v244 = vld [vmem:[%s193 + $0xa8] sm:$0xf]
      %v245 = vld [vmem:[%s193 + $0xac] sm:$0xf]
      %v246 = vld [vmem:[%s193 + $0xb0] sm:$0xf]
      %v247 = vld [vmem:[%s193 + $0xb4] sm:$0xf]
      %v248 = vld [vmem:[%s193 + $0xb8] sm:$0xf]
      %v249 = vld [vmem:[%s193 + $0xbc] sm:$0xf]
      %v250 = vld [vmem:[%s193 + $0xc0] sm:$0xf]
      %v251 = vld [vmem:[%s193 + $0xc4] sm:$0xf]
      %v252 = vld [vmem:[%s193 + $0xc8] sm:$0xf]
      %v253 = vld [vmem:[%s193 + $0xcc] sm:$0xf]
      %v254 = vld [vmem:[%s193 + $0xd0] sm:$0xf]
      %v255 = vld [vmem:[%s193 + $0xd4] sm:$0xf]
      %v256 = vld [vmem:[%s193 + $0xd8] sm:$0xf]
      %v257 = vld [vmem:[%s193 + $0xdc] sm:$0xf]
      %v258 = vld [vmem:[%s193 + $0xe0] sm:$0xf]
      %v259 = vld [vmem:[%s193 + $0xe4] sm:$0xf]
      %v260 = vld [vmem:[%s193 + $0xe8] sm:$0xf]
      %v261 = vld [vmem:[%s193 + $0xec] sm:$0xf]
      %v262 = vld [vmem:[%s193 + $0xf0] sm:$0xf]
      %v263 = vld [vmem:[%s193 + $0xf4] sm:$0xf]
      %v264 = vld [vmem:[%s193 + $0xf8] sm:$0xf]
      %v265 = vld [vmem:[%s193 + $0xfc] sm:$0xf]
      %v266 = vld [vmem:[%s1] sm:$0xf]
      %v267 = vld [vmem:[%s1 + $0x4] sm:$0xf]
      %v268 = vld [vmem:[%s1 + $0x8] sm:$0xf]
      %v269 = vld [vmem:[%s1 + $0xc] sm:$0x3]
      %v334 = vunpack.c.l.b16 %v202
      %v335 = vunpack.c.l.b16 %v203
      %v336 = vunpack.c.l.b16 %v204
      %v337 = vunpack.c.l.b16 %v205
      %v338 = vunpack.c.l.b16 %v206
      %v339 = vunpack.c.l.b16 %v207
      %v340 = vunpack.c.l.b16 %v208
      %v341 = vunpack.c.l.b16 %v209
      %v342 = vunpack.c.l.b16 %v210
      %v343 = vunpack.c.l.b16 %v211
      %v344 = vunpack.c.l.b16 %v212
      %v345 = vunpack.c.l.b16 %v213
      %v346 = vunpack.c.l.b16 %v214
      %v347 = vunpack.c.l.b16 %v215
      %v348 = vunpack.c.l.b16 %v216
      %v349 = vunpack.c.l.b16 %v217
      %v350 = vunpack.c.l.b16 %v218
      %v351 = vunpack.c.l.b16 %v219
      %v352 = vunpack.c.l.b16 %v220
      %v353 = vunpack.c.l.b16 %v221
      %v354 = vunpack.c.l.b16 %v222
      %v355 = vunpack.c.l.b16 %v223
      %v356 = vunpack.c.l.b16 %v224
      %v357 = vunpack.c.l.b16 %v225
      %v358 = vunpack.c.l.b16 %v226
      %v359 = vunpack.c.l.b16 %v227
      %v360 = vunpack.c.l.b16 %v228
      %v361 = vunpack.c.l.b16 %v229
      %v362 = vunpack.c.l.b16 %v230
      %v363 = vunpack.c.l.b16 %v231
      %v364 = vunpack.c.l.b16 %v232
      %v365 = vunpack.c.l.b16 %v233
      %v366 = vunpack.c.l.b16 %v234
      %v367 = vunpack.c.l.b16 %v235
      %v368 = vunpack.c.l.b16 %v236
      %v369 = vunpack.c.l.b16 %v237
      %v370 = vunpack.c.l.b16 %v238
      %v371 = vunpack.c.l.b16 %v239
      %v372 = vunpack.c.l.b16 %v240
      %v373 = vunpack.c.l.b16 %v241
      %v374 = vunpack.c.l.b16 %v242
      %v375 = vunpack.c.l.b16 %v243
      %v376 = vunpack.c.l.b16 %v244
      %v377 = vunpack.c.l.b16 %v245
      %v378 = vunpack.c.l.b16 %v246
      %v379 = vunpack.c.l.b16 %v247
      %v380 = vunpack.c.l.b16 %v248
      %v381 = vunpack.c.l.b16 %v249
      %v382 = vunpack.c.l.b16 %v250
      %v383 = vunpack.c.l.b16 %v251
      %v384 = vunpack.c.l.b16 %v252
      %v385 = vunpack.c.l.b16 %v253
      %v386 = vunpack.c.l.b16 %v254
      %v387 = vunpack.c.l.b16 %v255
      %v388 = vunpack.c.l.b16 %v256
      %v389 = vunpack.c.l.b16 %v257
      %v390 = vunpack.c.l.b16 %v258
      %v391 = vunpack.c.l.b16 %v259
      %v392 = vunpack.c.l.b16 %v260
      %v393 = vunpack.c.l.b16 %v261
      %v394 = vunpack.c.l.b16 %v262
      %v395 = vunpack.c.l.b16 %v263
      %v396 = vunpack.c.l.b16 %v264
      %v397 = vunpack.c.l.b16 %v265
      %v398 = vpack.c.b16 %v335, %v334
      %v399 = vpack.c.b16 %v337, %v336
      %v400 = vpack.c.b16 %v339, %v338
      %v401 = vpack.c.b16 %v341, %v340
      %v402 = vpack.c.b16 %v343, %v342
      %v403 = vpack.c.b16 %v345, %v344
      %v404 = vpack.c.b16 %v347, %v346
      %v405 = vpack.c.b16 %v349, %v348
      %v406 = vpack.c.b16 %v351, %v350
      %v407 = vpack.c.b16 %v353, %v352
      %v408 = vpack.c.b16 %v355, %v354
      %v409 = vpack.c.b16 %v357, %v356
      %v410 = vpack.c.b16 %v359, %v358
      %v411 = vpack.c.b16 %v361, %v360
      %v412 = vpack.c.b16 %v363, %v362
      %v413 = vpack.c.b16 %v365, %v364
      %v414 = vpack.c.b16 %v367, %v366
      %v415 = vpack.c.b16 %v369, %v368
      %v416 = vpack.c.b16 %v371, %v370
      %v417 = vpack.c.b16 %v373, %v372
      %v418 = vpack.c.b16 %v375, %v374
      %v419 = vpack.c.b16 %v377, %v376
      %v420 = vpack.c.b16 %v379, %v378
      %v421 = vpack.c.b16 %v381, %v380
      %v422 = vpack.c.b16 %v383, %v382
      %v423 = vpack.c.b16 %v385, %v384
      %v424 = vpack.c.b16 %v387, %v386
      %v425 = vpack.c.b16 %v389, %v388
      %v426 = vpack.c.b16 %v391, %v390
      %v427 = vpack.c.b16 %v393, %v392
      %v428 = vpack.c.b16 %v395, %v394
      %v429 = vpack.c.b16 %v397, %v396
      %v434 = vunpack.c.l.b16 %v266
      %v435 = vunpack.c.l.b16 %v267
      %v436 = vunpack.c.l.b16 %v268
      %v437 = vunpack.c.l.b16 %v269
      %v438 = vpack.c.b16 %v435, %v434
      %v439 = vpack.c.b16 %v437, %v436
      %vm441 = vcmask 220160
      %v443 = vsel %vm441, %v398, 0
      %v446 = vsel %vm441, %v399, 0
      %v449 = vsel %vm441, %v400, 0
      %v452 = vsel %vm441, %v401, 0
      %v455 = vsel %vm441, %v402, 0
      %v458 = vsel %vm441, %v403, 0
      %v461 = vsel %vm441, %v404, 0
      %v464 = vsel %vm441, %v405, 0
      %v467 = vsel %vm441, %v406, 0
      %v470 = vsel %vm441, %v407, 0
      %v473 = vsel %vm441, %v408, 0
      %v476 = vsel %vm441, %v409, 0
      %v479 = vsel %vm441, %v410, 0
      %v482 = vsel %vm441, %v411, 0
      %v485 = vsel %vm441, %v412, 0
      %v488 = vsel %vm441, %v413, 0
      %v491 = vsel %vm441, %v414, 0
      %v494 = vsel %vm441, %v415, 0
      %v497 = vsel %vm441, %v416, 0
      %v500 = vsel %vm441, %v417, 0
      %v503 = vsel %vm441, %v418, 0
      %v506 = vsel %vm441, %v419, 0
      %v509 = vsel %vm441, %v420, 0
      %v512 = vsel %vm441, %v421, 0
      %v515 = vsel %vm441, %v422, 0
      %v518 = vsel %vm441, %v423, 0
      %v521 = vsel %vm441, %v424, 0
      %v524 = vsel %vm441, %v425, 0
      %v527 = vsel %vm441, %v426, 0
      %v530 = vsel %vm441, %v427, 0
      %v533 = vsel %vm441, %v428, 0
      %v536 = vsel %vm441, %v429, 0
      %vm538 = vcmask 1044480
      %vm539 = vcmask 1045504
      %v540 = vsel %vm538, 4294967295, 65535
      %v541 = vsel %vm539, %v540, 0
      %v543 = vand.u32 %v439, %v541
      %545 = vmatpush.bf16.msra.mxu0 0
      %546 = vmatpush.bf16.msra.mxu0 0
      %547 = vmatpush.bf16.msra.mxu0 0
      %548 = vmatpush.bf16.msra.mxu0 0
      %549 = vmatpush.bf16.msra.mxu0 0
      %550 = vmatpush.bf16.msra.mxu0 0
      %551 = vmatpush.bf16.msra.mxu0 %v543
      %552 = vmatpush.bf16.msra.mxu0 %v438
      %553 = vmatmul.bf16.gmra.mxu0 %v443
      %v554 = vpop.f32.mrf.mxu0
      %v555 = vadd.f32 0.0, %v554
      %v556 = vpop.f32.mrf.mxu0
      %v557 = vadd.f32 0.0, %v556
      %558 = vmatmul.bf16.gmra.mxu0 %v446
      %v559 = vpop.f32.mrf.mxu0
      %v560 = vadd.f32 0.0, %v559
      %v561 = vpop.f32.mrf.mxu0
      %v562 = vadd.f32 0.0, %v561
      %563 = vmatmul.bf16.gmra.mxu0 %v449
      %v564 = vpop.f32.mrf.mxu0
      %v565 = vadd.f32 0.0, %v564
      %v566 = vpop.f32.mrf.mxu0
      %v567 = vadd.f32 0.0, %v566
      %568 = vmatmul.bf16.gmra.mxu0 %v452
      %v569 = vpop.f32.mrf.mxu0
      %v570 = vadd.f32 0.0, %v569
      %v571 = vpop.f32.mrf.mxu0
      %v572 = vadd.f32 0.0, %v571
      %573 = vmatmul.bf16.gmra.mxu0 %v455
      %v574 = vpop.f32.mrf.mxu0
      %v575 = vadd.f32 0.0, %v574
      %v576 = vpop.f32.mrf.mxu0
      %v577 = vadd.f32 0.0, %v576
      %578 = vmatmul.bf16.gmra.mxu0 %v458
      %v579 = vpop.f32.mrf.mxu0
      %v580 = vadd.f32 0.0, %v579
      %v581 = vpop.f32.mrf.mxu0
      %v582 = vadd.f32 0.0, %v581
      %583 = vmatmul.bf16.gmra.mxu0 %v461
      %v584 = vpop.f32.mrf.mxu0
      %v585 = vadd.f32 0.0, %v584
      %v586 = vpop.f32.mrf.mxu0
      %v587 = vadd.f32 0.0, %v586
      %588 = vmatmul.bf16.gmra.mxu0 %v464
      %v589 = vpop.f32.mrf.mxu0
      %v590 = vadd.f32 0.0, %v589
      %v591 = vpop.f32.mrf.mxu0
      %v592 = vadd.f32 0.0, %v591
      %593 = vmatmul.bf16.gmra.mxu0 %v467
      %v594 = vpop.f32.mrf.mxu0
      %v595 = vadd.f32 0.0, %v594
      %v596 = vpop.f32.mrf.mxu0
      %v597 = vadd.f32 0.0, %v596
      %598 = vmatmul.bf16.gmra.mxu0 %v470
      %v599 = vpop.f32.mrf.mxu0
      %v600 = vadd.f32 0.0, %v599
      %v601 = vpop.f32.mrf.mxu0
      %v602 = vadd.f32 0.0, %v601
      %603 = vmatmul.bf16.gmra.mxu0 %v473
      %v604 = vpop.f32.mrf.mxu0
      %v605 = vadd.f32 0.0, %v604
      %v606 = vpop.f32.mrf.mxu0
      %v607 = vadd.f32 0.0, %v606
      %608 = vmatmul.bf16.gmra.mxu0 %v476
      %v609 = vpop.f32.mrf.mxu0
      %v610 = vadd.f32 0.0, %v609
      %v611 = vpop.f32.mrf.mxu0
      %v612 = vadd.f32 0.0, %v611
      %613 = vmatmul.bf16.gmra.mxu0 %v479
      %v614 = vpop.f32.mrf.mxu0
      %v615 = vadd.f32 0.0, %v614
      %v616 = vpop.f32.mrf.mxu0
      %v617 = vadd.f32 0.0, %v616
      %618 = vmatmul.bf16.gmra.mxu0 %v482
      %v619 = vpop.f32.mrf.mxu0
      %v620 = vadd.f32 0.0, %v619
      %v621 = vpop.f32.mrf.mxu0
      %v622 = vadd.f32 0.0, %v621
      %623 = vmatmul.bf16.gmra.mxu0 %v485
      %v624 = vpop.f32.mrf.mxu0
      %v625 = vadd.f32 0.0, %v624
      %v626 = vpop.f32.mrf.mxu0
      %v627 = vadd.f32 0.0, %v626
      %628 = vmatmul.bf16.gmra.mxu0 %v488
      %v629 = vpop.f32.mrf.mxu0
      %v630 = vadd.f32 0.0, %v629
      %v631 = vpop.f32.mrf.mxu0
      %v632 = vadd.f32 0.0, %v631
      %633 = vmatmul.bf16.gmra.mxu0 %v491
      %v634 = vpop.f32.mrf.mxu0
      %v635 = vadd.f32 0.0, %v634
      %v636 = vpop.f32.mrf.mxu0
      %v637 = vadd.f32 0.0, %v636
      %638 = vmatmul.bf16.gmra.mxu0 %v494
      %v639 = vpop.f32.mrf.mxu0
      %v640 = vadd.f32 0.0, %v639
      %v641 = vpop.f32.mrf.mxu0
      %v642 = vadd.f32 0.0, %v641
      %643 = vmatmul.bf16.gmra.mxu0 %v497
      %v644 = vpop.f32.mrf.mxu0
      %v645 = vadd.f32 0.0, %v644
      %v646 = vpop.f32.mrf.mxu0
      %v647 = vadd.f32 0.0, %v646
      %648 = vmatmul.bf16.gmra.mxu0 %v500
      %v649 = vpop.f32.mrf.mxu0
      %v650 = vadd.f32 0.0, %v649
      %v651 = vpop.f32.mrf.mxu0
      %v652 = vadd.f32 0.0, %v651
      %653 = vmatmul.bf16.gmra.mxu0 %v503
      %v654 = vpop.f32.mrf.mxu0
      %v655 = vadd.f32 0.0, %v654
      %v656 = vpop.f32.mrf.mxu0
      %v657 = vadd.f32 0.0, %v656
      %658 = vmatmul.bf16.gmra.mxu0 %v506
      %v659 = vpop.f32.mrf.mxu0
      %v660 = vadd.f32 0.0, %v659
      %v661 = vpop.f32.mrf.mxu0
      %v662 = vadd.f32 0.0, %v661
      %663 = vmatmul.bf16.gmra.mxu0 %v509
      %v664 = vpop.f32.mrf.mxu0
      %v665 = vadd.f32 0.0, %v664
      %v666 = vpop.f32.mrf.mxu0
      %v667 = vadd.f32 0.0, %v666
      %668 = vmatmul.bf16.gmra.mxu0 %v512
      %v669 = vpop.f32.mrf.mxu0
      %v670 = vadd.f32 0.0, %v669
      %v671 = vpop.f32.mrf.mxu0
      %v672 = vadd.f32 0.0, %v671
      %673 = vmatmul.bf16.gmra.mxu0 %v515
      %v674 = vpop.f32.mrf.mxu0
      %v675 = vadd.f32 0.0, %v674
      %v676 = vpop.f32.mrf.mxu0
      %v677 = vadd.f32 0.0, %v676
      %678 = vmatmul.bf16.gmra.mxu0 %v518
      %v679 = vpop.f32.mrf.mxu0
      %v680 = vadd.f32 0.0, %v679
      %v681 = vpop.f32.mrf.mxu0
      %v682 = vadd.f32 0.0, %v681
      %683 = vmatmul.bf16.gmra.mxu0 %v521
      %v684 = vpop.f32.mrf.mxu0
      %v685 = vadd.f32 0.0, %v684
      %v686 = vpop.f32.mrf.mxu0
      %v687 = vadd.f32 0.0, %v686
      %688 = vmatmul.bf16.gmra.mxu0 %v524
      %v689 = vpop.f32.mrf.mxu0
      %v690 = vadd.f32 0.0, %v689
      %v691 = vpop.f32.mrf.mxu0
      %v692 = vadd.f32 0.0, %v691
      %693 = vmatmul.bf16.gmra.mxu0 %v527
      %v694 = vpop.f32.mrf.mxu0
      %v695 = vadd.f32 0.0, %v694
      %v696 = vpop.f32.mrf.mxu0
      %v697 = vadd.f32 0.0, %v696
      %698 = vmatmul.bf16.gmra.mxu0 %v530
      %v699 = vpop.f32.mrf.mxu0
      %v700 = vadd.f32 0.0, %v699
      %v701 = vpop.f32.mrf.mxu0
      %v702 = vadd.f32 0.0, %v701
      %703 = vmatmul.bf16.gmra.mxu0 %v533
      %v704 = vpop.f32.mrf.mxu0
      %v705 = vadd.f32 0.0, %v704
      %v706 = vpop.f32.mrf.mxu0
      %v707 = vadd.f32 0.0, %v706
      %708 = vmatmul.bf16.gmra.mxu0 %v536
      %v709 = vpop.f32.mrf.mxu0
      %v710 = vadd.f32 0.0, %v709
      %v711 = vpop.f32.mrf.mxu0
      %v712 = vadd.f32 0.0, %v711
      %713 = vdwg.mxu0
      %v714 = vld [vmem:[%s2] sm:$0x1]
      %v716 = vperm.slane %v714, 0
      %v718 = vmul.f32 %v555, %v716
      %v719 = vmul.f32 %v557, %v716
      %v720 = vmul.f32 %v560, %v716
      %v721 = vmul.f32 %v562, %v716
      %v722 = vmul.f32 %v565, %v716
      %v723 = vmul.f32 %v567, %v716
      %v724 = vmul.f32 %v570, %v716
      %v725 = vmul.f32 %v572, %v716
      %v726 = vmul.f32 %v575, %v716
      %v727 = vmul.f32 %v577, %v716
      %v728 = vmul.f32 %v580, %v716
      %v729 = vmul.f32 %v582, %v716
      %v730 = vmul.f32 %v585, %v716
      %v731 = vmul.f32 %v587, %v716
      %v732 = vmul.f32 %v590, %v716
      %v733 = vmul.f32 %v592, %v716
      %v734 = vmul.f32 %v595, %v716
      %v735 = vmul.f32 %v597, %v716
      %v736 = vmul.f32 %v600, %v716
      %v737 = vmul.f32 %v602, %v716
      %v738 = vmul.f32 %v605, %v716
      %v739 = vmul.f32 %v607, %v716
      %v740 = vmul.f32 %v610, %v716
      %v741 = vmul.f32 %v612, %v716
      %v742 = vmul.f32 %v615, %v716
      %v743 = vmul.f32 %v617, %v716
      %v744 = vmul.f32 %v620, %v716
      %v745 = vmul.f32 %v622, %v716
      %v746 = vmul.f32 %v625, %v716
      %v747 = vmul.f32 %v627, %v716
      %v748 = vmul.f32 %v630, %v716
      %v749 = vmul.f32 %v632, %v716
      %v750 = vmul.f32 %v635, %v716
      %v751 = vmul.f32 %v637, %v716
      %v752 = vmul.f32 %v640, %v716
      %v753 = vmul.f32 %v642, %v716
      %v754 = vmul.f32 %v645, %v716
      %v755 = vmul.f32 %v647, %v716
      %v756 = vmul.f32 %v650, %v716
      %v757 = vmul.f32 %v652, %v716
      %v758 = vmul.f32 %v655, %v716
      %v759 = vmul.f32 %v657, %v716
      %v760 = vmul.f32 %v660, %v716
      %v761 = vmul.f32 %v662, %v716
      %v762 = vmul.f32 %v665, %v716
      %v763 = vmul.f32 %v667, %v716
      %v764 = vmul.f32 %v670, %v716
      %v765 = vmul.f32 %v672, %v716
      %v766 = vmul.f32 %v675, %v716
      %v767 = vmul.f32 %v677, %v716
      %v768 = vmul.f32 %v680, %v716
      %v769 = vmul.f32 %v682, %v716
      %v770 = vmul.f32 %v685, %v716
      %v771 = vmul.f32 %v687, %v716
      %v772 = vmul.f32 %v690, %v716
      %v773 = vmul.f32 %v692, %v716
      %v774 = vmul.f32 %v695, %v716
      %v775 = vmul.f32 %v697, %v716
      %v776 = vmul.f32 %v700, %v716
      %v777 = vmul.f32 %v702, %v716
      %v778 = vmul.f32 %v705, %v716
      %v779 = vmul.f32 %v707, %v716
      %v780 = vmul.f32 %v710, %v716
      %v781 = vmul.f32 %v712, %v716
      %v782 = vld [vmem:[%s3] sm:$0x1]
      %v784 = vperm.slane %v782, 0
      %v786 = vadd.f32 %v718, %v784
      %v787 = vadd.f32 %v719, %v784
      %v788 = vadd.f32 %v720, %v784
      %v789 = vadd.f32 %v721, %v784
      %v790 = vadd.f32 %v722, %v784
      %v791 = vadd.f32 %v723, %v784
      %v792 = vadd.f32 %v724, %v784
      %v793 = vadd.f32 %v725, %v784
      %v794 = vadd.f32 %v726, %v784
      %v795 = vadd.f32 %v727, %v784
      %v796 = vadd.f32 %v728, %v784
      %v797 = vadd.f32 %v729, %v784
      %v798 = vadd.f32 %v730, %v784
      %v799 = vadd.f32 %v731, %v784
      %v800 = vadd.f32 %v732, %v784
      %v801 = vadd.f32 %v733, %v784
      %v802 = vadd.f32 %v734, %v784
      %v803 = vadd.f32 %v735, %v784
      %v804 = vadd.f32 %v736, %v784
      %v805 = vadd.f32 %v737, %v784
      %v806 = vadd.f32 %v738, %v784
      %v807 = vadd.f32 %v739, %v784
      %v808 = vadd.f32 %v740, %v784
      %v809 = vadd.f32 %v741, %v784
      %v810 = vadd.f32 %v742, %v784
      %v811 = vadd.f32 %v743, %v784
      %v812 = vadd.f32 %v744, %v784
      %v813 = vadd.f32 %v745, %v784
      %v814 = vadd.f32 %v746, %v784
      %v815 = vadd.f32 %v747, %v784
      %v816 = vadd.f32 %v748, %v784
      %v817 = vadd.f32 %v749, %v784
      %v818 = vadd.f32 %v750, %v784
      %v819 = vadd.f32 %v751, %v784
      %v820 = vadd.f32 %v752, %v784
      %v821 = vadd.f32 %v753, %v784
      %v822 = vadd.f32 %v754, %v784
      %v823 = vadd.f32 %v755, %v784
      %v824 = vadd.f32 %v756, %v784
      %v825 = vadd.f32 %v757, %v784
      %v826 = vadd.f32 %v758, %v784
      %v827 = vadd.f32 %v759, %v784
      %v828 = vadd.f32 %v760, %v784
      %v829 = vadd.f32 %v761, %v784
      %v830 = vadd.f32 %v762, %v784
      %v831 = vadd.f32 %v763, %v784
      %v832 = vadd.f32 %v764, %v784
      %v833 = vadd.f32 %v765, %v784
      %v834 = vadd.f32 %v766, %v784
      %v835 = vadd.f32 %v767, %v784
      %v836 = vadd.f32 %v768, %v784
      %v837 = vadd.f32 %v769, %v784
      %v838 = vadd.f32 %v770, %v784
      %v839 = vadd.f32 %v771, %v784
      %v840 = vadd.f32 %v772, %v784
      %v841 = vadd.f32 %v773, %v784
      %v842 = vadd.f32 %v774, %v784
      %v843 = vadd.f32 %v775, %v784
      %v844 = vadd.f32 %v776, %v784
      %v845 = vadd.f32 %v777, %v784
      %v846 = vadd.f32 %v778, %v784
      %v847 = vadd.f32 %v779, %v784
      %v848 = vadd.f32 %v780, %v784
      %v849 = vadd.f32 %v781, %v784
      %vm850 = vcmp.ge.f32.partialorder %v786, 0.0
      %vm851 = vcmp.ge.f32.partialorder %v787, 0.0
      %vm852 = vcmp.ge.f32.partialorder %v788, 0.0
      %vm853 = vcmp.ge.f32.partialorder %v789, 0.0
      %vm854 = vcmp.ge.f32.partialorder %v790, 0.0
      %vm855 = vcmp.ge.f32.partialorder %v791, 0.0
      %vm856 = vcmp.ge.f32.partialorder %v792, 0.0
      %vm857 = vcmp.ge.f32.partialorder %v793, 0.0
      %vm858 = vcmp.ge.f32.partialorder %v794, 0.0
      %vm859 = vcmp.ge.f32.partialorder %v795, 0.0
      %vm860 = vcmp.ge.f32.partialorder %v796, 0.0
      %vm861 = vcmp.ge.f32.partialorder %v797, 0.0
      %vm862 = vcmp.ge.f32.partialorder %v798, 0.0
      %vm863 = vcmp.ge.f32.partialorder %v799, 0.0
      %vm864 = vcmp.ge.f32.partialorder %v800, 0.0
      %vm865 = vcmp.ge.f32.partialorder %v801, 0.0
      %vm866 = vcmp.ge.f32.partialorder %v802, 0.0
      %vm867 = vcmp.ge.f32.partialorder %v803, 0.0
      %vm868 = vcmp.ge.f32.partialorder %v804, 0.0
      %vm869 = vcmp.ge.f32.partialorder %v805, 0.0
      %vm870 = vcmp.ge.f32.partialorder %v806, 0.0
      %vm871 = vcmp.ge.f32.partialorder %v807, 0.0
      %vm872 = vcmp.ge.f32.partialorder %v808, 0.0
      %vm873 = vcmp.ge.f32.partialorder %v809, 0.0
      %vm874 = vcmp.ge.f32.partialorder %v810, 0.0
      %vm875 = vcmp.ge.f32.partialorder %v811, 0.0
      %vm876 = vcmp.ge.f32.partialorder %v812, 0.0
      %vm877 = vcmp.ge.f32.partialorder %v813, 0.0
      %vm878 = vcmp.ge.f32.partialorder %v814, 0.0
      %vm879 = vcmp.ge.f32.partialorder %v815, 0.0
      %vm880 = vcmp.ge.f32.partialorder %v816, 0.0
      %vm881 = vcmp.ge.f32.partialorder %v817, 0.0
      %vm882 = vcmp.ge.f32.partialorder %v818, 0.0
      %vm883 = vcmp.ge.f32.partialorder %v819, 0.0
      %vm884 = vcmp.ge.f32.partialorder %v820, 0.0
      %vm885 = vcmp.ge.f32.partialorder %v821, 0.0
      %vm886 = vcmp.ge.f32.partialorder %v822, 0.0
      %vm887 = vcmp.ge.f32.partialorder %v823, 0.0
      %vm888 = vcmp.ge.f32.partialorder %v824, 0.0
      %vm889 = vcmp.ge.f32.partialorder %v825, 0.0
      %vm890 = vcmp.ge.f32.partialorder %v826, 0.0
      %vm891 = vcmp.ge.f32.partialorder %v827, 0.0
      %vm892 = vcmp.ge.f32.partialorder %v828, 0.0
      %vm893 = vcmp.ge.f32.partialorder %v829, 0.0
      %vm894 = vcmp.ge.f32.partialorder %v830, 0.0
      %vm895 = vcmp.ge.f32.partialorder %v831, 0.0
      %vm896 = vcmp.ge.f32.partialorder %v832, 0.0
      %vm897 = vcmp.ge.f32.partialorder %v833, 0.0
      %vm898 = vcmp.ge.f32.partialorder %v834, 0.0
      %vm899 = vcmp.ge.f32.partialorder %v835, 0.0
      %vm900 = vcmp.ge.f32.partialorder %v836, 0.0
      %vm901 = vcmp.ge.f32.partialorder %v837, 0.0
      %vm902 = vcmp.ge.f32.partialorder %v838, 0.0
      %vm903 = vcmp.ge.f32.partialorder %v839, 0.0
      %vm904 = vcmp.ge.f32.partialorder %v840, 0.0
      %vm905 = vcmp.ge.f32.partialorder %v841, 0.0
      %vm906 = vcmp.ge.f32.partialorder %v842, 0.0
      %vm907 = vcmp.ge.f32.partialorder %v843, 0.0
      %vm908 = vcmp.ge.f32.partialorder %v844, 0.0
      %vm909 = vcmp.ge.f32.partialorder %v845, 0.0
      %vm910 = vcmp.ge.f32.partialorder %v846, 0.0
      %vm911 = vcmp.ge.f32.partialorder %v847, 0.0
      %vm912 = vcmp.ge.f32.partialorder %v848, 0.0
      %vm913 = vcmp.ge.f32.partialorder %v849, 0.0
      %v914 = vmul.f32 %v786, 0.0
      %v915 = vmul.f32 %v787, 0.0
      %v916 = vmul.f32 %v788, 0.0
      %v917 = vmul.f32 %v789, 0.0
      %v918 = vmul.f32 %v790, 0.0
      %v919 = vmul.f32 %v791, 0.0
      %v920 = vmul.f32 %v792, 0.0
      %v921 = vmul.f32 %v793, 0.0
      %v922 = vmul.f32 %v794, 0.0
      %v923 = vmul.f32 %v795, 0.0
      %v924 = vmul.f32 %v796, 0.0
      %v925 = vmul.f32 %v797, 0.0
      %v926 = vmul.f32 %v798, 0.0
      %v927 = vmul.f32 %v799, 0.0
      %v928 = vmul.f32 %v800, 0.0
      %v929 = vmul.f32 %v801, 0.0
      %v930 = vmul.f32 %v802, 0.0
      %v931 = vmul.f32 %v803, 0.0
      %v932 = vmul.f32 %v804, 0.0
      %v933 = vmul.f32 %v805, 0.0
      %v934 = vmul.f32 %v806, 0.0
      %v935 = vmul.f32 %v807, 0.0
      %v936 = vmul.f32 %v808, 0.0
      %v937 = vmul.f32 %v809, 0.0
      %v938 = vmul.f32 %v810, 0.0
      %v939 = vmul.f32 %v811, 0.0
      %v940 = vmul.f32 %v812, 0.0
      %v941 = vmul.f32 %v813, 0.0
      %v942 = vmul.f32 %v814, 0.0
      %v943 = vmul.f32 %v815, 0.0
      %v944 = vmul.f32 %v816, 0.0
      %v945 = vmul.f32 %v817, 0.0
      %v946 = vmul.f32 %v818, 0.0
      %v947 = vmul.f32 %v819, 0.0
      %v948 = vmul.f32 %v820, 0.0
      %v949 = vmul.f32 %v821, 0.0
      %v950 = vmul.f32 %v822, 0.0
      %v951 = vmul.f32 %v823, 0.0
      %v952 = vmul.f32 %v824, 0.0
      %v953 = vmul.f32 %v825, 0.0
      %v954 = vmul.f32 %v826, 0.0
      %v955 = vmul.f32 %v827, 0.0
      %v956 = vmul.f32 %v828, 0.0
      %v957 = vmul.f32 %v829, 0.0
      %v958 = vmul.f32 %v830, 0.0
      %v959 = vmul.f32 %v831, 0.0
      %v960 = vmul.f32 %v832, 0.0
      %v961 = vmul.f32 %v833, 0.0
      %v962 = vmul.f32 %v834, 0.0
      %v963 = vmul.f32 %v835, 0.0
      %v964 = vmul.f32 %v836, 0.0
      %v965 = vmul.f32 %v837, 0.0
      %v966 = vmul.f32 %v838, 0.0
      %v967 = vmul.f32 %v839, 0.0
      %v968 = vmul.f32 %v840, 0.0
      %v969 = vmul.f32 %v841, 0.0
      %v970 = vmul.f32 %v842, 0.0
      %v971 = vmul.f32 %v843, 0.0
      %v972 = vmul.f32 %v844, 0.0
      %v973 = vmul.f32 %v845, 0.0
      %v974 = vmul.f32 %v846, 0.0
      %v975 = vmul.f32 %v847, 0.0
      %v976 = vmul.f32 %v848, 0.0
      %v977 = vmul.f32 %v849, 0.0
      %v978 = vsel %vm850, %v786, %v914
      %v979 = vsel %vm851, %v787, %v915
      %v980 = vsel %vm852, %v788, %v916
      %v981 = vsel %vm853, %v789, %v917
      %v982 = vsel %vm854, %v790, %v918
      %v983 = vsel %vm855, %v791, %v919
      %v984 = vsel %vm856, %v792, %v920
      %v985 = vsel %vm857, %v793, %v921
      %v986 = vsel %vm858, %v794, %v922
      %v987 = vsel %vm859, %v795, %v923
      %v988 = vsel %vm860, %v796, %v924
      %v989 = vsel %vm861, %v797, %v925
      %v990 = vsel %vm862, %v798, %v926
      %v991 = vsel %vm863, %v799, %v927
      %v992 = vsel %vm864, %v800, %v928
      %v993 = vsel %vm865, %v801, %v929
      %v994 = vsel %vm866, %v802, %v930
      %v995 = vsel %vm867, %v803, %v931
      %v996 = vsel %vm868, %v804, %v932
      %v997 = vsel %vm869, %v805, %v933
      %v998 = vsel %vm870, %v806, %v934
      %v999 = vsel %vm871, %v807, %v935
      %v1000 = vsel %vm872, %v808, %v936
      %v1001 = vsel %vm873, %v809, %v937
      %v1002 = vsel %vm874, %v810, %v938
      %v1003 = vsel %vm875, %v811, %v939
      %v1004 = vsel %vm876, %v812, %v940
      %v1005 = vsel %vm877, %v813, %v941
      %v1006 = vsel %vm878, %v814, %v942
      %v1007 = vsel %vm879, %v815, %v943
      %v1008 = vsel %vm880, %v816, %v944
      %v1009 = vsel %vm881, %v817, %v945
      %v1010 = vsel %vm882, %v818, %v946
      %v1011 = vsel %vm883, %v819, %v947
      %v1012 = vsel %vm884, %v820, %v948
      %v1013 = vsel %vm885, %v821, %v949
      %v1014 = vsel %vm886, %v822, %v950
      %v1015 = vsel %vm887, %v823, %v951
      %v1016 = vsel %vm888, %v824, %v952
      %v1017 = vsel %vm889, %v825, %v953
      %v1018 = vsel %vm890, %v826, %v954
      %v1019 = vsel %vm891, %v827, %v955
      %v1020 = vsel %vm892, %v828, %v956
      %v1021 = vsel %vm893, %v829, %v957
      %v1022 = vsel %vm894, %v830, %v958
      %v1023 = vsel %vm895, %v831, %v959
      %v1024 = vsel %vm896, %v832, %v960
      %v1025 = vsel %vm897, %v833, %v961
      %v1026 = vsel %vm898, %v834, %v962
      %v1027 = vsel %vm899, %v835, %v963
      %v1028 = vsel %vm900, %v836, %v964
      %v1029 = vsel %vm901, %v837, %v965
      %v1030 = vsel %vm902, %v838, %v966
      %v1031 = vsel %vm903, %v839, %v967
      %v1032 = vsel %vm904, %v840, %v968
      %v1033 = vsel %vm905, %v841, %v969
      %v1034 = vsel %vm906, %v842, %v970
      %v1035 = vsel %vm907, %v843, %v971
      %v1036 = vsel %vm908, %v844, %v972
      %v1037 = vsel %vm909, %v845, %v973
      %v1038 = vsel %vm910, %v846, %v974
      %v1039 = vsel %vm911, %v847, %v975
      %v1040 = vsel %vm912, %v848, %v976
      %v1041 = vsel %vm913, %v849, %v977
      %vm1042 = vcmask 130048
      %1043 = vst.msk [vmem:[%s199] sm:$0xff] %vm1042, %v978
      %1044 = vst.msk [vmem:[%s199 + $0x8] sm:$0xff] %vm1042, %v979
      %1045 = vst.msk [vmem:[%s199 + $0x10] sm:$0xff] %vm1042, %v980
      %1046 = vst.msk [vmem:[%s199 + $0x18] sm:$0xff] %vm1042, %v981
      %1047 = vst.msk [vmem:[%s199 + $0x20] sm:$0xff] %vm1042, %v982
      %1048 = vst.msk [vmem:[%s199 + $0x28] sm:$0xff] %vm1042, %v983
      %1049 = vst.msk [vmem:[%s199 + $0x30] sm:$0xff] %vm1042, %v984
      %1050 = vst.msk [vmem:[%s199 + $0x38] sm:$0xff] %vm1042, %v985
      %1051 = vst.msk [vmem:[%s199 + $0x40] sm:$0xff] %vm1042, %v986
      %1052 = vst.msk [vmem:[%s199 + $0x48] sm:$0xff] %vm1042, %v987
      %1053 = vst.msk [vmem:[%s199 + $0x50] sm:$0xff] %vm1042, %v988
      %1054 = vst.msk [vmem:[%s199 + $0x58] sm:$0xff] %vm1042, %v989
      %1055 = vst.msk [vmem:[%s199 + $0x60] sm:$0xff] %vm1042, %v990
      %1056 = vst.msk [vmem:[%s199 + $0x68] sm:$0xff] %vm1042, %v991
      %1057 = vst.msk [vmem:[%s199 + $0x70] sm:$0xff] %vm1042, %v992
      %1058 = vst.msk [vmem:[%s199 + $0x78] sm:$0xff] %vm1042, %v993
      %1059 = vst.msk [vmem:[%s199 + $0x80] sm:$0xff] %vm1042, %v994
      %1060 = vst.msk [vmem:[%s199 + $0x88] sm:$0xff] %vm1042, %v995
      %1061 = vst.msk [vmem:[%s199 + $0x90] sm:$0xff] %vm1042, %v996
      %1062 = vst.msk [vmem:[%s199 + $0x98] sm:$0xff] %vm1042, %v997
      %1063 = vst.msk [vmem:[%s199 + $0xa0] sm:$0xff] %vm1042, %v998
      %1064 = vst.msk [vmem:[%s199 + $0xa8] sm:$0xff] %vm1042, %v999
      %1065 = vst.msk [vmem:[%s199 + $0xb0] sm:$0xff] %vm1042, %v1000
      %1066 = vst.msk [vmem:[%s199 + $0xb8] sm:$0xff] %vm1042, %v1001
      %1067 = vst.msk [vmem:[%s199 + $0xc0] sm:$0xff] %vm1042, %v1002
      %1068 = vst.msk [vmem:[%s199 + $0xc8] sm:$0xff] %vm1042, %v1003
      %1069 = vst.msk [vmem:[%s199 + $0xd0] sm:$0xff] %vm1042, %v1004
      %1070 = vst.msk [vmem:[%s199 + $0xd8] sm:$0xff] %vm1042, %v1005
      %1071 = vst.msk [vmem:[%s199 + $0xe0] sm:$0xff] %vm1042, %v1006
      %1072 = vst.msk [vmem:[%s199 + $0xe8] sm:$0xff] %vm1042, %v1007
      %1073 = vst.msk [vmem:[%s199 + $0xf0] sm:$0xff] %vm1042, %v1008
      %1074 = vst.msk [vmem:[%s199 + $0xf8] sm:$0xff] %vm1042, %v1009
      %1075 = vst.msk [vmem:[%s199 + $0x100] sm:$0xff] %vm1042, %v1010
      %1076 = vst.msk [vmem:[%s199 + $0x108] sm:$0xff] %vm1042, %v1011
      %1077 = vst.msk [vmem:[%s199 + $0x110] sm:$0xff] %vm1042, %v1012
      %1078 = vst.msk [vmem:[%s199 + $0x118] sm:$0xff] %vm1042, %v1013
      %1079 = vst.msk [vmem:[%s199 + $0x120] sm:$0xff] %vm1042, %v1014
      %1080 = vst.msk [vmem:[%s199 + $0x128] sm:$0xff] %vm1042, %v1015
      %1081 = vst.msk [vmem:[%s199 + $0x130] sm:$0xff] %vm1042, %v1016
      %1082 = vst.msk [vmem:[%s199 + $0x138] sm:$0xff] %vm1042, %v1017
      %1083 = vst.msk [vmem:[%s199 + $0x140] sm:$0xff] %vm1042, %v1018
      %1084 = vst.msk [vmem:[%s199 + $0x148] sm:$0xff] %vm1042, %v1019
      %1085 = vst.msk [vmem:[%s199 + $0x150] sm:$0xff] %vm1042, %v1020
      %1086 = vst.msk [vmem:[%s199 + $0x158] sm:$0xff] %vm1042, %v1021
      %1087 = vst.msk [vmem:[%s199 + $0x160] sm:$0xff] %vm1042, %v1022
      %1088 = vst.msk [vmem:[%s199 + $0x168] sm:$0xff] %vm1042, %v1023
      %1089 = vst.msk [vmem:[%s199 + $0x170] sm:$0xff] %vm1042, %v1024
      %1090 = vst.msk [vmem:[%s199 + $0x178] sm:$0xff] %vm1042, %v1025
      %1091 = vst.msk [vmem:[%s199 + $0x180] sm:$0xff] %vm1042, %v1026
      %1092 = vst.msk [vmem:[%s199 + $0x188] sm:$0xff] %vm1042, %v1027
      %1093 = vst.msk [vmem:[%s199 + $0x190] sm:$0xff] %vm1042, %v1028
      %1094 = vst.msk [vmem:[%s199 + $0x198] sm:$0xff] %vm1042, %v1029
      %1095 = vst.msk [vmem:[%s199 + $0x1a0] sm:$0xff] %vm1042, %v1030
      %1096 = vst.msk [vmem:[%s199 + $0x1a8] sm:$0xff] %vm1042, %v1031
      %1097 = vst.msk [vmem:[%s199 + $0x1b0] sm:$0xff] %vm1042, %v1032
      %1098 = vst.msk [vmem:[%s199 + $0x1b8] sm:$0xff] %vm1042, %v1033
      %1099 = vst.msk [vmem:[%s199 + $0x1c0] sm:$0xff] %vm1042, %v1034
      %1100 = vst.msk [vmem:[%s199 + $0x1c8] sm:$0xff] %vm1042, %v1035
      %1101 = vst.msk [vmem:[%s199 + $0x1d0] sm:$0xff] %vm1042, %v1036
      %1102 = vst.msk [vmem:[%s199 + $0x1d8] sm:$0xff] %vm1042, %v1037
      %1103 = vst.msk [vmem:[%s199 + $0x1e0] sm:$0xff] %vm1042, %v1038
      %1104 = vst.msk [vmem:[%s199 + $0x1e8] sm:$0xff] %vm1042, %v1039
      %1105 = vst.msk [vmem:[%s199 + $0x1f0] sm:$0xff] %vm1042, %v1040
      %1106 = vst.msk [vmem:[%s199 + $0x1f8] sm:$0xff] %vm1042, %v1041
      %s1107 = smul.u32 64, %s15
      %p1108 = scmp.lt.s32.totalorder %s1107, 255
      %s1109 = scalar_select %p1108, %s1107, 255
      %s1110 = smul.addr %s1109, 8
      %s1111 = scalar_lea.vmem %s4, %s1110
      // Predicated region
      $region37: #{wide_resnet_forward.8} parent=35 // pred_check
        %p1112 = pneg %p122
      $region38: #{wide_resnet_forward.8} parent=35 // pred_check_branch
        %1114 = sbr.rel (%p1112) target = $region40
      $region39: #{wide_resnet_forward.8} parent=35 // pred_region
        %s1115 = smul.u32 64, %s15
      $region40: #{wide_resnet_forward.8} parent=35 // pred_fallthru
        _
    $region36: #{wide_resnet_forward.8} parent=5 // pred_fallthru
      _
    %p1116 = scmp.le.s32.totalorder 2, %s10
    // Predicated region
    $region41: #{wide_resnet_forward.8} parent=5 // pred_check
      %p1117 = pneg %p1116
    $region42: #{wide_resnet_forward.8} parent=5 // pred_check_branch
      %1119 = sbr.rel (%p1117) target = $region44
    $region43: #{wide_resnet_forward.8} parent=5 // pred_region
      %s1120 = ssub.s32 %s10, 2
      // Predicated region
      $region45: #{wide_resnet_forward.8} parent=43 // pred_check
        %p1121 = pneg %p128
      $region46: #{wide_resnet_forward.8} parent=43 // pred_check_branch
        %1123 = sbr.rel (%p1121) target = $region48
      $region47: #{wide_resnet_forward.8} parent=43 // pred_region
        %s1124 = smul.u32 64, %s16
        %p1125 = scmp.lt.s32.totalorder %s1124, 255
        %s1126 = scalar_select %p1125, %s1124, 255
        %s1127 = smul.addr %s1126, 8
        %s1128 = scalar_lea.vmem %s4, %s1127
      $region48: #{wide_resnet_forward.8} parent=43 // pred_fallthru
        _
    $region44: #{wide_resnet_forward.8} parent=5 // pred_fallthru
      _
  $region6: #{wide_resnet_forward.8} parent=0 // loop_footer
    %s14 = sadd.s32 1, %s10
  $region7: #{wide_resnet_forward.8} parent=0 // loop_footer_branch
    %9 = sbr.rel target = $region3
  $region8: #{wide_resnet_forward.8} parent=0 // loop_exit
    _

// kernel: wide_resnet_forward.9
$region0: #{wide_resnet_forward.9}
  #allocation0 [shape = 'u32[]', space=smem, size = 0x4, offset = 0x4, fixed_abs, tag = 'smem constant byte address 0x4 - core index']
  #allocation1 [shape = 'u32[72,128]{1,0:T(1,128)}', space=vmem, size = 0x9000, scoped, tag = 'internal scratch']
  %s0 = inlined_call_operand.vmem [shape: bf16[2048,144], index: 0, kind: input, shape index: {}]
  %s1 = inlined_call_operand.vmem [shape: bf16[144,16], index: 1, kind: input, shape index: {}]
  %s2 = inlined_call_operand.vmem [shape: f32[1,16], index: 2, kind: input, shape index: {}]
  %s3 = inlined_call_operand.vmem [shape: f32[1,16], index: 3, kind: input, shape index: {}]
  %s4 = inlined_call_operand.vmem [shape: f32[2048,16], index: 4, kind: output, shape index: {}]
  %s5 = sld [smem:[#allocation0]]
  $region49: #{wide_resnet_forward.9} parent=0
    _
  %s7 = ssub.s32 1, %s5
  %s8 = scalar_select 0, %s7, %s5
  loop: start=0, step=1, limit=6
  $region2: #{wide_resnet_forward.9} parent=0 // loop_pre_header
    _
  $region3: #{wide_resnet_forward.9} parent=0 // loop_header
    %s10 = sphi 0, %s14
    %p11 = scmp.ge.s32.totalorder %s10, 6
    %s20 = sphi 0, %s22
    %s23 = sphi 0, %s20
    %s24 = sphi 0, %s23
    %s40 = sphi 0, %s24
    %s44 = sphi 0, %s44
    %s46 = sphi 0, %s44
    %s47 = sphi 0, %s46
    %s61 = sphi 0, %s47
    %s65 = sphi 0, %s65
    %s67 = sphi 0, %s65
    %s68 = sphi 0, %s67
    %s82 = sphi 0, %s68
    %s86 = sphi 0, %s86
    %s88 = sphi 0, %s86
    %s89 = sphi 0, %s88
    %s103 = sphi 0, %s89
    %s109 = sphi 0, %s111
    %s112 = sphi 0, %s109
    %s113 = sphi 0, %s112
    %s129 = sphi 0, %s113
  $region4: #{wide_resnet_forward.9} parent=0 // loop_header_branch
    %13 = sbr.rel (%p11) target = $region8
  $region5: #{wide_resnet_forward.9} parent=0 // loop_body
    %s15 = ssub.s32 %s10, 1
    %s16 = ssub.s32 %s10, 2
    %s17 = sadd.s32 %s10, 1
    %s18 = ssub.s32 %s10, %s17
    %p19 = scmp.eq.s32.totalorder %s18, 0
    %s21 = sadd.s32 %s20, 1
    %s22 = scalar_select %p19, %s20, %s21
    %p25 = pneg %p19
    %p26 = scmp.eq.s32.totalorder %s10, 3
    %p27 = por %p25, %p26
    %p28 = scmp.ne.s32.totalorder %s20, %s23
    %p29 = scmp.eq.s32.totalorder %s10, 0
    %p30 = por %p28, %p29
    %p31 = scmp.ne.s32.totalorder %s20, %s23
    %p32 = scmp.eq.s32.totalorder %s15, 3
    %p33 = por %p31, %p32
    %p34 = scmp.ne.s32.totalorder %s23, %s24
    %p35 = scmp.eq.s32.totalorder %s15, 0
    %p36 = por %p34, %p35
    %p37 = scmp.ne.s32.totalorder %s23, %s24
    %p38 = scmp.eq.s32.totalorder %s16, 3
    %p39 = por %p37, %p38
    %p41 = scmp.ne.s32.totalorder %s24, %s40
    %p42 = scmp.eq.s32.totalorder %s16, 0
    %p43 = por %p41, %p42
    %s45 = sadd.s32 %s44, 1
    %p48 = scmp.eq.s32.totalorder %s10, 3
    %p49 = scmp.ne.s32.totalorder %s44, %s46
    %p50 = scmp.eq.s32.totalorder %s10, 0
    %p51 = por %p49, %p50
    %p52 = scmp.ne.s32.totalorder %s44, %s46
    %p53 = scmp.eq.s32.totalorder %s15, 3
    %p54 = por %p52, %p53
    %p55 = scmp.ne.s32.totalorder %s46, %s47
    %p56 = scmp.eq.s32.totalorder %s15, 0
    %p57 = por %p55, %p56
    %p58 = scmp.ne.s32.totalorder %s46, %s47
    %p59 = scmp.eq.s32.totalorder %s16, 3
    %p60 = por %p58, %p59
    %p62 = scmp.ne.s32.totalorder %s47, %s61
    %p63 = scmp.eq.s32.totalorder %s16, 0
    %p64 = por %p62, %p63
    %s66 = sadd.s32 %s65, 1
    %p69 = scmp.eq.s32.totalorder %s10, 3
    %p70 = scmp.ne.s32.totalorder %s65, %s67
    %p71 = scmp.eq.s32.totalorder %s10, 0
    %p72 = por %p70, %p71
    %p73 = scmp.ne.s32.totalorder %s65, %s67
    %p74 = scmp.eq.s32.totalorder %s15, 3
    %p75 = por %p73, %p74
    %p76 = scmp.ne.s32.totalorder %s67, %s68
    %p77 = scmp.eq.s32.totalorder %s15, 0
    %p78 = por %p76, %p77
    %p79 = scmp.ne.s32.totalorder %s67, %s68
    %p80 = scmp.eq.s32.totalorder %s16, 3
    %p81 = por %p79, %p80
    %p83 = scmp.ne.s32.totalorder %s68, %s82
    %p84 = scmp.eq.s32.totalorder %s16, 0
    %p85 = por %p83, %p84
    %s87 = sadd.s32 %s86, 1
    %p90 = scmp.eq.s32.totalorder %s10, 3
    %p91 = scmp.ne.s32.totalorder %s86, %s88
    %p92 = scmp.eq.s32.totalorder %s10, 0
    %p93 = por %p91, %p92
    %p94 = scmp.ne.s32.totalorder %s86, %s88
    %p95 = scmp.eq.s32.totalorder %s15, 3
    %p96 = por %p94, %p95
    %p97 = scmp.ne.s32.totalorder %s88, %s89
    %p98 = scmp.eq.s32.totalorder %s15, 0
    %p99 = por %p97, %p98
    %p100 = scmp.ne.s32.totalorder %s88, %s89
    %p101 = scmp.eq.s32.totalorder %s16, 3
    %p102 = por %p100, %p101
    %p104 = scmp.ne.s32.totalorder %s89, %s103
    %p105 = scmp.eq.s32.totalorder %s16, 0
    %p106 = por %p104, %p105
    %s107 = ssub.s32 %s10, %s17
    %p108 = scmp.eq.s32.totalorder %s107, 0
    %s110 = sadd.s32 %s109, 1
    %s111 = scalar_select %p108, %s109, %s110
    %p114 = pneg %p108
    %p115 = scmp.eq.s32.totalorder %s10, 3
    %p116 = por %p114, %p115
    %p117 = scmp.ne.s32.totalorder %s109, %s112
    %p118 = scmp.eq.s32.totalorder %s10, 0
    %p119 = por %p117, %p118
    %p120 = scmp.ne.s32.totalorder %s109, %s112
    %p121 = scmp.eq.s32.totalorder %s15, 3
    %p122 = por %p120, %p121
    %p123 = scmp.ne.s32.totalorder %s112, %s113
    %p124 = scmp.eq.s32.totalorder %s15, 0
    %p125 = por %p123, %p124
    %p126 = scmp.ne.s32.totalorder %s112, %s113
    %p127 = scmp.eq.s32.totalorder %s16, 3
    %p128 = por %p126, %p127
    %p130 = scmp.ne.s32.totalorder %s113, %s129
    %p131 = scmp.eq.s32.totalorder %s16, 0
    %p132 = por %p130, %p131
    %p133 = scmp.le.s32.totalorder 1, %s10
    %p134 = scmp.lt.s32.totalorder %s10, 5
    %p135 = pnand %p133, %p134
    %p136 = pneg %p135
    // Predicated region
    $region9: #{wide_resnet_forward.9} parent=5 // pred_check
      _
    $region10: #{wide_resnet_forward.9} parent=5 // pred_check_branch
      %138 = sbr.rel (%p135) target = $region12
    $region11: #{wide_resnet_forward.9} parent=5 // pred_region
      %s139 = ssub.s32 %s10, 1
      // Predicated region
      $region13: #{wide_resnet_forward.9} parent=11 // pred_check
        %p140 = pneg %p57
      $region14: #{wide_resnet_forward.9} parent=11 // pred_check_branch
        %142 = sbr.rel (%p140) target = $region16
      $region15: #{wide_resnet_forward.9} parent=11 // pred_region
        _
      $region16: #{wide_resnet_forward.9} parent=11 // pred_fallthru
        _
      // Predicated region
      $region17: #{wide_resnet_forward.9} parent=11 // pred_check
        %p143 = pneg %p78
      $region18: #{wide_resnet_forward.9} parent=11 // pred_check_branch
        %145 = sbr.rel (%p143) target = $region20
      $region19: #{wide_resnet_forward.9} parent=11 // pred_region
        _
      $region20: #{wide_resnet_forward.9} parent=11 // pred_fallthru
        _
      // Predicated region
      $region21: #{wide_resnet_forward.9} parent=11 // pred_check
        %p146 = pneg %p99
      $region22: #{wide_resnet_forward.9} parent=11 // pred_check_branch
        %148 = sbr.rel (%p146) target = $region24
      $region23: #{wide_resnet_forward.9} parent=11 // pred_region
        _
      $region24: #{wide_resnet_forward.9} parent=11 // pred_fallthru
        _
    $region12: #{wide_resnet_forward.9} parent=5 // pred_fallthru
      _
    %p149 = scmp.lt.s32.totalorder %s10, 4
    // Predicated region
    $region25: #{wide_resnet_forward.9} parent=5 // pred_check
      %p150 = pneg %p149
    $region26: #{wide_resnet_forward.9} parent=5 // pred_check_branch
      %152 = sbr.rel (%p150) target = $region28
    $region27: #{wide_resnet_forward.9} parent=5 // pred_region
      // Predicated region
      $region29: #{wide_resnet_forward.9} parent=27 // pred_check
        %p153 = pneg %p30
      $region30: #{wide_resnet_forward.9} parent=27 // pred_check_branch
        %155 = sbr.rel (%p153) target = $region32
      $region31: #{wide_resnet_forward.9} parent=27 // pred_region
        %s156 = smul.u32 64, %s10
        %p157 = scmp.lt.s32.totalorder %s156, 255
        %s158 = scalar_select %p157, %s156, 255
        %s159 = smul.addr %s158, 2
        %s160 = smul.addr %s159, 4
        %s161 = scalar_lea.vmem %s0, %s160
        %s162 = smul.u32 64, %s10
      $region32: #{wide_resnet_forward.9} parent=27 // pred_fallthru
        _
    $region28: #{wide_resnet_forward.9} parent=5 // pred_fallthru
      _
    %p163 = scmp.le.s32.totalorder 1, %s10
    %p164 = scmp.lt.s32.totalorder %s10, 5
    %p165 = pnand %p163, %p164
    %p166 = pneg %p165
    // Predicated region
    $region33: #{wide_resnet_forward.9} parent=5 // pred_check
      _
    $region34: #{wide_resnet_forward.9} parent=5 // pred_check_branch
      %168 = sbr.rel (%p165) target = $region36
    $region35: #{wide_resnet_forward.9} parent=5 // pred_region
      %s169 = ssub.s32 %s10, 1
      %s170 = smul.u32 64, %s15
      %p171 = scmp.lt.s32.totalorder %s170, 255
      %s172 = scalar_select %p171, %s170, 255
      %s173 = smul.addr %s172, 2
      %s174 = smul.addr %s173, 4
      %s175 = scalar_lea.vmem %s0, %s174
      %p176 = pneg %p36
      %p177 = pneg %p33
      %p178 = pneg %p57
      %p179 = pneg %p54
      %p180 = pneg %p78
      %p181 = pneg %p75
      %p182 = pneg %p99
      %p183 = pneg %p96
      %p184 = pneg %p125
      %p185 = pneg %p122
      %s186 = smul.u32 64, %s15
      %p187 = scmp.lt.s32.totalorder %s186, 255
      %s188 = scalar_select %p187, %s186, 255
      %s189 = smul.addr %s188, 8
      %s190 = scalar_lea.vmem %s4, %s189
      %s191 = smul.u32 64, %s15
      %p192 = scmp.lt.s32.totalorder %s191, 255
      %s193 = scalar_select %p192, %s191, 255
      %s194 = smul.addr %s193, 2
      %s195 = smul.addr %s194, 4
      %s196 = scalar_lea.vmem %s0, %s195
      %s197 = smul.u32 64, %s15
      %s198 = smul.u32 64, %s15
      %p199 = scmp.lt.s32.totalorder %s198, 255
      %s200 = scalar_select %p199, %s198, 255
      %s201 = smul.addr %s200, 8
      %s202 = scalar_lea.vmem %s4, %s201
      %s203 = smul.u32 64, %s15
      %v205 = vld [vmem:[%s196] sm:$0xff]
      %v206 = vld [vmem:[%s196 + $0x8] sm:$0xff]
      %v207 = vld [vmem:[%s196 + $0x10] sm:$0xff]
      %v208 = vld [vmem:[%s196 + $0x18] sm:$0xff]
      %v209 = vld [vmem:[%s196 + $0x20] sm:$0xff]
      %v210 = vld [vmem:[%s196 + $0x28] sm:$0xff]
      %v211 = vld [vmem:[%s196 + $0x30] sm:$0xff]
      %v212 = vld [vmem:[%s196 + $0x38] sm:$0xff]
      %v213 = vld [vmem:[%s196 + $0x40] sm:$0xff]
      %v214 = vld [vmem:[%s196 + $0x48] sm:$0xff]
      %v215 = vld [vmem:[%s196 + $0x50] sm:$0xff]
      %v216 = vld [vmem:[%s196 + $0x58] sm:$0xff]
      %v217 = vld [vmem:[%s196 + $0x60] sm:$0xff]
      %v218 = vld [vmem:[%s196 + $0x68] sm:$0xff]
      %v219 = vld [vmem:[%s196 + $0x70] sm:$0xff]
      %v220 = vld [vmem:[%s196 + $0x78] sm:$0xff]
      %v221 = vld [vmem:[%s196 + $0x80] sm:$0xff]
      %v222 = vld [vmem:[%s196 + $0x88] sm:$0xff]
      %v223 = vld [vmem:[%s196 + $0x90] sm:$0xff]
      %v224 = vld [vmem:[%s196 + $0x98] sm:$0xff]
      %v225 = vld [vmem:[%s196 + $0xa0] sm:$0xff]
      %v226 = vld [vmem:[%s196 + $0xa8] sm:$0xff]
      %v227 = vld [vmem:[%s196 + $0xb0] sm:$0xff]
      %v228 = vld [vmem:[%s196 + $0xb8] sm:$0xff]
      %v229 = vld [vmem:[%s196 + $0xc0] sm:$0xff]
      %v230 = vld [vmem:[%s196 + $0xc8] sm:$0xff]
      %v231 = vld [vmem:[%s196 + $0xd0] sm:$0xff]
      %v232 = vld [vmem:[%s196 + $0xd8] sm:$0xff]
      %v233 = vld [vmem:[%s196 + $0xe0] sm:$0xff]
      %v234 = vld [vmem:[%s196 + $0xe8] sm:$0xff]
      %v235 = vld [vmem:[%s196 + $0xf0] sm:$0xff]
      %v236 = vld [vmem:[%s196 + $0xf8] sm:$0xff]
      %v237 = vld [vmem:[%s196 + $0x100] sm:$0xff]
      %v238 = vld [vmem:[%s196 + $0x108] sm:$0xff]
      %v239 = vld [vmem:[%s196 + $0x110] sm:$0xff]
      %v240 = vld [vmem:[%s196 + $0x118] sm:$0xff]
      %v241 = vld [vmem:[%s196 + $0x120] sm:$0xff]
      %v242 = vld [vmem:[%s196 + $0x128] sm:$0xff]
      %v243 = vld [vmem:[%s196 + $0x130] sm:$0xff]
      %v244 = vld [vmem:[%s196 + $0x138] sm:$0xff]
      %v245 = vld [vmem:[%s196 + $0x140] sm:$0xff]
      %v246 = vld [vmem:[%s196 + $0x148] sm:$0xff]
      %v247 = vld [vmem:[%s196 + $0x150] sm:$0xff]
      %v248 = vld [vmem:[%s196 + $0x158] sm:$0xff]
      %v249 = vld [vmem:[%s196 + $0x160] sm:$0xff]
      %v250 = vld [vmem:[%s196 + $0x168] sm:$0xff]
      %v251 = vld [vmem:[%s196 + $0x170] sm:$0xff]
      %v252 = vld [vmem:[%s196 + $0x178] sm:$0xff]
      %v253 = vld [vmem:[%s196 + $0x180] sm:$0xff]
      %v254 = vld [vmem:[%s196 + $0x188] sm:$0xff]
      %v255 = vld [vmem:[%s196 + $0x190] sm:$0xff]
      %v256 = vld [vmem:[%s196 + $0x198] sm:$0xff]
      %v257 = vld [vmem:[%s196 + $0x1a0] sm:$0xff]
      %v258 = vld [vmem:[%s196 + $0x1a8] sm:$0xff]
      %v259 = vld [vmem:[%s196 + $0x1b0] sm:$0xff]
      %v260 = vld [vmem:[%s196 + $0x1b8] sm:$0xff]
      %v261 = vld [vmem:[%s196 + $0x1c0] sm:$0xff]
      %v262 = vld [vmem:[%s196 + $0x1c8] sm:$0xff]
      %v263 = vld [vmem:[%s196 + $0x1d0] sm:$0xff]
      %v264 = vld [vmem:[%s196 + $0x1d8] sm:$0xff]
      %v265 = vld [vmem:[%s196 + $0x1e0] sm:$0xff]
      %v266 = vld [vmem:[%s196 + $0x1e8] sm:$0xff]
      %v267 = vld [vmem:[%s196 + $0x1f0] sm:$0xff]
      %v268 = vld [vmem:[%s196 + $0x1f8] sm:$0xff]
      %v269 = vld [vmem:[%s1] sm:$0xf]
      %v270 = vld [vmem:[%s1 + $0x4] sm:$0xf]
      %v271 = vld [vmem:[%s1 + $0x8] sm:$0xf]
      %v272 = vld [vmem:[%s1 + $0xc] sm:$0xf]
      %v273 = vld [vmem:[%s1 + $0x10] sm:$0xf]
      %v274 = vld [vmem:[%s1 + $0x14] sm:$0xf]
      %v275 = vld [vmem:[%s1 + $0x18] sm:$0xf]
      %v276 = vld [vmem:[%s1 + $0x1c] sm:$0xf]
      %v277 = vld [vmem:[%s1 + $0x20] sm:$0xf]
      %v278 = vld [vmem:[%s1 + $0x24] sm:$0xf]
      %v279 = vld [vmem:[%s1 + $0x28] sm:$0xf]
      %v280 = vld [vmem:[%s1 + $0x2c] sm:$0xf]
      %v281 = vld [vmem:[%s1 + $0x30] sm:$0xf]
      %v282 = vld [vmem:[%s1 + $0x34] sm:$0xf]
      %v283 = vld [vmem:[%s1 + $0x38] sm:$0xf]
      %v284 = vld [vmem:[%s1 + $0x3c] sm:$0xf]
      %v285 = vld [vmem:[%s1 + $0x40] sm:$0xf]
      %v286 = vld [vmem:[%s1 + $0x44] sm:$0xf]
      %v351 = vunpack.c.l.b16 %v205
      %v352 = vunpack.c.h.b16 %v205
      %v353 = vunpack.c.l.b16 %v206
      %v354 = vunpack.c.h.b16 %v206
      %v355 = vunpack.c.l.b16 %v207
      %v356 = vunpack.c.h.b16 %v207
      %v357 = vunpack.c.l.b16 %v208
      %v358 = vunpack.c.h.b16 %v208
      %v359 = vunpack.c.l.b16 %v209
      %v360 = vunpack.c.h.b16 %v209
      %v361 = vunpack.c.l.b16 %v210
      %v362 = vunpack.c.h.b16 %v210
      %v363 = vunpack.c.l.b16 %v211
      %v364 = vunpack.c.h.b16 %v211
      %v365 = vunpack.c.l.b16 %v212
      %v366 = vunpack.c.h.b16 %v212
      %v367 = vunpack.c.l.b16 %v213
      %v368 = vunpack.c.h.b16 %v213
      %v369 = vunpack.c.l.b16 %v214
      %v370 = vunpack.c.h.b16 %v214
      %v371 = vunpack.c.l.b16 %v215
      %v372 = vunpack.c.h.b16 %v215
      %v373 = vunpack.c.l.b16 %v216
      %v374 = vunpack.c.h.b16 %v216
      %v375 = vunpack.c.l.b16 %v217
      %v376 = vunpack.c.h.b16 %v217
      %v377 = vunpack.c.l.b16 %v218
      %v378 = vunpack.c.h.b16 %v218
      %v379 = vunpack.c.l.b16 %v219
      %v380 = vunpack.c.h.b16 %v219
      %v381 = vunpack.c.l.b16 %v220
      %v382 = vunpack.c.h.b16 %v220
      %v383 = vunpack.c.l.b16 %v221
      %v384 = vunpack.c.h.b16 %v221
      %v385 = vunpack.c.l.b16 %v222
      %v386 = vunpack.c.h.b16 %v222
      %v387 = vunpack.c.l.b16 %v223
      %v388 = vunpack.c.h.b16 %v223
      %v389 = vunpack.c.l.b16 %v224
      %v390 = vunpack.c.h.b16 %v224
      %v391 = vunpack.c.l.b16 %v225
      %v392 = vunpack.c.h.b16 %v225
      %v393 = vunpack.c.l.b16 %v226
      %v394 = vunpack.c.h.b16 %v226
      %v395 = vunpack.c.l.b16 %v227
      %v396 = vunpack.c.h.b16 %v227
      %v397 = vunpack.c.l.b16 %v228
      %v398 = vunpack.c.h.b16 %v228
      %v399 = vunpack.c.l.b16 %v229
      %v400 = vunpack.c.h.b16 %v229
      %v401 = vunpack.c.l.b16 %v230
      %v402 = vunpack.c.h.b16 %v230
      %v403 = vunpack.c.l.b16 %v231
      %v404 = vunpack.c.h.b16 %v231
      %v405 = vunpack.c.l.b16 %v232
      %v406 = vunpack.c.h.b16 %v232
      %v407 = vunpack.c.l.b16 %v233
      %v408 = vunpack.c.h.b16 %v233
      %v409 = vunpack.c.l.b16 %v234
      %v410 = vunpack.c.h.b16 %v234
      %v411 = vunpack.c.l.b16 %v235
      %v412 = vunpack.c.h.b16 %v235
      %v413 = vunpack.c.l.b16 %v236
      %v414 = vunpack.c.h.b16 %v236
      %v415 = vunpack.c.l.b16 %v237
      %v416 = vunpack.c.h.b16 %v237
      %v417 = vunpack.c.l.b16 %v238
      %v418 = vunpack.c.h.b16 %v238
      %v419 = vunpack.c.l.b16 %v239
      %v420 = vunpack.c.h.b16 %v239
      %v421 = vunpack.c.l.b16 %v240
      %v422 = vunpack.c.h.b16 %v240
      %v423 = vunpack.c.l.b16 %v241
      %v424 = vunpack.c.h.b16 %v241
      %v425 = vunpack.c.l.b16 %v242
      %v426 = vunpack.c.h.b16 %v242
      %v427 = vunpack.c.l.b16 %v243
      %v428 = vunpack.c.h.b16 %v243
      %v429 = vunpack.c.l.b16 %v244
      %v430 = vunpack.c.h.b16 %v244
      %v431 = vunpack.c.l.b16 %v245
      %v432 = vunpack.c.h.b16 %v245
      %v433 = vunpack.c.l.b16 %v246
      %v434 = vunpack.c.h.b16 %v246
      %v435 = vunpack.c.l.b16 %v247
      %v436 = vunpack.c.h.b16 %v247
      %v437 = vunpack.c.l.b16 %v248
      %v438 = vunpack.c.h.b16 %v248
      %v439 = vunpack.c.l.b16 %v249
      %v440 = vunpack.c.h.b16 %v249
      %v441 = vunpack.c.l.b16 %v250
      %v442 = vunpack.c.h.b16 %v250
      %v443 = vunpack.c.l.b16 %v251
      %v444 = vunpack.c.h.b16 %v251
      %v445 = vunpack.c.l.b16 %v252
      %v446 = vunpack.c.h.b16 %v252
      %v447 = vunpack.c.l.b16 %v253
      %v448 = vunpack.c.h.b16 %v253
      %v449 = vunpack.c.l.b16 %v254
      %v450 = vunpack.c.h.b16 %v254
      %v451 = vunpack.c.l.b16 %v255
      %v452 = vunpack.c.h.b16 %v255
      %v453 = vunpack.c.l.b16 %v256
      %v454 = vunpack.c.h.b16 %v256
      %v455 = vunpack.c.l.b16 %v257
      %v456 = vunpack.c.h.b16 %v257
      %v457 = vunpack.c.l.b16 %v258
      %v458 = vunpack.c.h.b16 %v258
      %v459 = vunpack.c.l.b16 %v259
      %v460 = vunpack.c.h.b16 %v259
      %v461 = vunpack.c.l.b16 %v260
      %v462 = vunpack.c.h.b16 %v260
      %v463 = vunpack.c.l.b16 %v261
      %v464 = vunpack.c.h.b16 %v261
      %v465 = vunpack.c.l.b16 %v262
      %v466 = vunpack.c.h.b16 %v262
      %v467 = vunpack.c.l.b16 %v263
      %v468 = vunpack.c.h.b16 %v263
      %v469 = vunpack.c.l.b16 %v264
      %v470 = vunpack.c.h.b16 %v264
      %v471 = vunpack.c.l.b16 %v265
      %v472 = vunpack.c.h.b16 %v265
      %v473 = vunpack.c.l.b16 %v266
      %v474 = vunpack.c.h.b16 %v266
      %v475 = vunpack.c.l.b16 %v267
      %v476 = vunpack.c.h.b16 %v267
      %v477 = vunpack.c.l.b16 %v268
      %v478 = vunpack.c.h.b16 %v268
      %v479 = vpack.c.b16 %v353, %v351
      %v480 = vpack.c.b16 %v354, %v352
      %v481 = vpack.c.b16 %v357, %v355
      %v482 = vpack.c.b16 %v358, %v356
      %v483 = vpack.c.b16 %v361, %v359
      %v484 = vpack.c.b16 %v362, %v360
      %v485 = vpack.c.b16 %v365, %v363
      %v486 = vpack.c.b16 %v366, %v364
      %v487 = vpack.c.b16 %v369, %v367
      %v488 = vpack.c.b16 %v370, %v368
      %v489 = vpack.c.b16 %v373, %v371
      %v490 = vpack.c.b16 %v374, %v372
      %v491 = vpack.c.b16 %v377, %v375
      %v492 = vpack.c.b16 %v378, %v376
      %v493 = vpack.c.b16 %v381, %v379
      %v494 = vpack.c.b16 %v382, %v380
      %v495 = vpack.c.b16 %v385, %v383
      %v496 = vpack.c.b16 %v386, %v384
      %v497 = vpack.c.b16 %v389, %v387
      %v498 = vpack.c.b16 %v390, %v388
      %v499 = vpack.c.b16 %v393, %v391
      %v500 = vpack.c.b16 %v394, %v392
      %v501 = vpack.c.b16 %v397, %v395
      %v502 = vpack.c.b16 %v398, %v396
      %v503 = vpack.c.b16 %v401, %v399
      %v504 = vpack.c.b16 %v402, %v400
      %v505 = vpack.c.b16 %v405, %v403
      %v506 = vpack.c.b16 %v406, %v404
      %v507 = vpack.c.b16 %v409, %v407
      %v508 = vpack.c.b16 %v410, %v408
      %v509 = vpack.c.b16 %v413, %v411
      %v510 = vpack.c.b16 %v414, %v412
      %v511 = vpack.c.b16 %v417, %v415
      %v512 = vpack.c.b16 %v418, %v416
      %v513 = vpack.c.b16 %v421, %v419
      %v514 = vpack.c.b16 %v422, %v420
      %v515 = vpack.c.b16 %v425, %v423
      %v516 = vpack.c.b16 %v426, %v424
      %v517 = vpack.c.b16 %v429, %v427
      %v518 = vpack.c.b16 %v430, %v428
      %v519 = vpack.c.b16 %v433, %v431
      %v520 = vpack.c.b16 %v434, %v432
      %v521 = vpack.c.b16 %v437, %v435
      %v522 = vpack.c.b16 %v438, %v436
      %v523 = vpack.c.b16 %v441, %v439
      %v524 = vpack.c.b16 %v442, %v440
      %v525 = vpack.c.b16 %v445, %v443
      %v526 = vpack.c.b16 %v446, %v444
      %v527 = vpack.c.b16 %v449, %v447
      %v528 = vpack.c.b16 %v450, %v448
      %v529 = vpack.c.b16 %v453, %v451
      %v530 = vpack.c.b16 %v454, %v452
      %v531 = vpack.c.b16 %v457, %v455
      %v532 = vpack.c.b16 %v458, %v456
      %v533 = vpack.c.b16 %v461, %v459
      %v534 = vpack.c.b16 %v462, %v460
      %v535 = vpack.c.b16 %v465, %v463
      %v536 = vpack.c.b16 %v466, %v464
      %v537 = vpack.c.b16 %v469, %v467
      %v538 = vpack.c.b16 %v470, %v468
      %v539 = vpack.c.b16 %v473, %v471
      %v540 = vpack.c.b16 %v474, %v472
      %v541 = vpack.c.b16 %v477, %v475
      %v542 = vpack.c.b16 %v478, %v476
      %v593 = vunpack.c.l.b16 %v269
      %v594 = vunpack.c.l.b16 %v270
      %v595 = vunpack.c.l.b16 %v271
      %v596 = vunpack.c.l.b16 %v272
      %v597 = vunpack.c.l.b16 %v273
      %v598 = vunpack.c.l.b16 %v274
      %v599 = vunpack.c.l.b16 %v275
      %v600 = vunpack.c.l.b16 %v276
      %v601 = vunpack.c.l.b16 %v277
      %v602 = vunpack.c.l.b16 %v278
      %v603 = vunpack.c.l.b16 %v279
      %v604 = vunpack.c.l.b16 %v280
      %v605 = vunpack.c.l.b16 %v281
      %v606 = vunpack.c.l.b16 %v282
      %v607 = vunpack.c.l.b16 %v283
      %v608 = vunpack.c.l.b16 %v284
      %v609 = vunpack.c.l.b16 %v285
      %v610 = vunpack.c.l.b16 %v286
      %v611 = vpack.c.b16 %v594, %v593
      %v612 = vpack.c.b16 %v596, %v595
      %v613 = vpack.c.b16 %v598, %v597
      %v614 = vpack.c.b16 %v600, %v599
      %v615 = vpack.c.b16 %v602, %v601
      %v616 = vpack.c.b16 %v604, %v603
      %v617 = vpack.c.b16 %v606, %v605
      %v618 = vpack.c.b16 %v608, %v607
      %v619 = vpack.c.b16 %v610, %v609
      %vm629 = vcmask 130048
      %v631 = vsel %vm629, %v480, 0
      %v634 = vsel %vm629, %v482, 0
      %v637 = vsel %vm629, %v484, 0
      %v640 = vsel %vm629, %v486, 0
      %v643 = vsel %vm629, %v488, 0
      %v646 = vsel %vm629, %v490, 0
      %v649 = vsel %vm629, %v492, 0
      %v652 = vsel %vm629, %v494, 0
      %v655 = vsel %vm629, %v496, 0
      %v658 = vsel %vm629, %v498, 0
      %v661 = vsel %vm629, %v500, 0
      %v664 = vsel %vm629, %v502, 0
      %v667 = vsel %vm629, %v504, 0
      %v670 = vsel %vm629, %v506, 0
      %v673 = vsel %vm629, %v508, 0
      %v676 = vsel %vm629, %v510, 0
      %v679 = vsel %vm629, %v512, 0
      %v682 = vsel %vm629, %v514, 0
      %v685 = vsel %vm629, %v516, 0
      %v688 = vsel %vm629, %v518, 0
      %v691 = vsel %vm629, %v520, 0
      %v694 = vsel %vm629, %v522, 0
      %v697 = vsel %vm629, %v524, 0
      %v700 = vsel %vm629, %v526, 0
      %v703 = vsel %vm629, %v528, 0
      %v706 = vsel %vm629, %v530, 0
      %v709 = vsel %vm629, %v532, 0
      %v712 = vsel %vm629, %v534, 0
      %v715 = vsel %vm629, %v536, 0
      %v718 = vsel %vm629, %v538, 0
      %v721 = vsel %vm629, %v540, 0
      %v724 = vsel %vm629, %v542, 0
      %726 = vmatpush.bf16.msra.mxu0 %v618
      %727 = vmatpush.bf16.msra.mxu0 %v617
      %728 = vmatpush.bf16.msra.mxu0 %v616
      %729 = vmatpush.bf16.msra.mxu0 %v615
      %730 = vmatpush.bf16.msra.mxu0 %v614
      %731 = vmatpush.bf16.msra.mxu0 %v613
      %732 = vmatpush.bf16.msra.mxu0 %v612
      %733 = vmatpush.bf16.msra.mxu0 %v611
      %734 = vmatmul.bf16.gmra.mxu0 %v479
      %v735 = vpop.f32.mrf.mxu0
      %v736 = vadd.f32 0.0, %v735
      %v737 = vpop.f32.mrf.mxu0
      %v738 = vadd.f32 0.0, %v737
      %739 = vmatmul.bf16.gmra.mxu0 %v481
      %v740 = vpop.f32.mrf.mxu0
      %v741 = vadd.f32 0.0, %v740
      %v742 = vpop.f32.mrf.mxu0
      %v743 = vadd.f32 0.0, %v742
      %744 = vmatmul.bf16.gmra.mxu0 %v483
      %v745 = vpop.f32.mrf.mxu0
      %v746 = vadd.f32 0.0, %v745
      %v747 = vpop.f32.mrf.mxu0
      %v748 = vadd.f32 0.0, %v747
      %749 = vmatmul.bf16.gmra.mxu0 %v485
      %v750 = vpop.f32.mrf.mxu0
      %v751 = vadd.f32 0.0, %v750
      %v752 = vpop.f32.mrf.mxu0
      %v753 = vadd.f32 0.0, %v752
      %754 = vmatmul.bf16.gmra.mxu0 %v487
      %v755 = vpop.f32.mrf.mxu0
      %v756 = vadd.f32 0.0, %v755
      %v757 = vpop.f32.mrf.mxu0
      %v758 = vadd.f32 0.0, %v757
      %759 = vmatmul.bf16.gmra.mxu0 %v489
      %v760 = vpop.f32.mrf.mxu0
      %v761 = vadd.f32 0.0, %v760
      %v762 = vpop.f32.mrf.mxu0
      %v763 = vadd.f32 0.0, %v762
      %764 = vmatmul.bf16.gmra.mxu0 %v491
      %v765 = vpop.f32.mrf.mxu0
      %v766 = vadd.f32 0.0, %v765
      %v767 = vpop.f32.mrf.mxu0
      %v768 = vadd.f32 0.0, %v767
      %769 = vmatmul.bf16.gmra.mxu0 %v493
      %v770 = vpop.f32.mrf.mxu0
      %v771 = vadd.f32 0.0, %v770
      %v772 = vpop.f32.mrf.mxu0
      %v773 = vadd.f32 0.0, %v772
      %774 = vmatmul.bf16.gmra.mxu0 %v495
      %v775 = vpop.f32.mrf.mxu0
      %v776 = vadd.f32 0.0, %v775
      %v777 = vpop.f32.mrf.mxu0
      %v778 = vadd.f32 0.0, %v777
      %779 = vmatmul.bf16.gmra.mxu0 %v497
      %v780 = vpop.f32.mrf.mxu0
      %v781 = vadd.f32 0.0, %v780
      %v782 = vpop.f32.mrf.mxu0
      %v783 = vadd.f32 0.0, %v782
      %784 = vmatmul.bf16.gmra.mxu0 %v499
      %v785 = vpop.f32.mrf.mxu0
      %v786 = vadd.f32 0.0, %v785
      %v787 = vpop.f32.mrf.mxu0
      %v788 = vadd.f32 0.0, %v787
      %789 = vmatmul.bf16.gmra.mxu0 %v501
      %v790 = vpop.f32.mrf.mxu0
      %v791 = vadd.f32 0.0, %v790
      %v792 = vpop.f32.mrf.mxu0
      %v793 = vadd.f32 0.0, %v792
      %794 = vmatmul.bf16.gmra.mxu0 %v503
      %v795 = vpop.f32.mrf.mxu0
      %v796 = vadd.f32 0.0, %v795
      %v797 = vpop.f32.mrf.mxu0
      %v798 = vadd.f32 0.0, %v797
      %799 = vmatmul.bf16.gmra.mxu0 %v505
      %v800 = vpop.f32.mrf.mxu0
      %v801 = vadd.f32 0.0, %v800
      %v802 = vpop.f32.mrf.mxu0
      %v803 = vadd.f32 0.0, %v802
      %804 = vmatmul.bf16.gmra.mxu0 %v507
      %v805 = vpop.f32.mrf.mxu0
      %v806 = vadd.f32 0.0, %v805
      %v807 = vpop.f32.mrf.mxu0
      %v808 = vadd.f32 0.0, %v807
      %809 = vmatmul.bf16.gmra.mxu0 %v509
      %v810 = vpop.f32.mrf.mxu0
      %v811 = vadd.f32 0.0, %v810
      %v812 = vpop.f32.mrf.mxu0
      %v813 = vadd.f32 0.0, %v812
      %814 = vmatmul.bf16.gmra.mxu0 %v511
      %v815 = vpop.f32.mrf.mxu0
      %v816 = vadd.f32 0.0, %v815
      %v817 = vpop.f32.mrf.mxu0
      %v818 = vadd.f32 0.0, %v817
      %819 = vmatmul.bf16.gmra.mxu0 %v513
      %v820 = vpop.f32.mrf.mxu0
      %v821 = vadd.f32 0.0, %v820
      %v822 = vpop.f32.mrf.mxu0
      %v823 = vadd.f32 0.0, %v822
      %824 = vmatmul.bf16.gmra.mxu0 %v515
      %v825 = vpop.f32.mrf.mxu0
      %v826 = vadd.f32 0.0, %v825
      %v827 = vpop.f32.mrf.mxu0
      %v828 = vadd.f32 0.0, %v827
      %829 = vmatmul.bf16.gmra.mxu0 %v517
      %v830 = vpop.f32.mrf.mxu0
      %v831 = vadd.f32 0.0, %v830
      %v832 = vpop.f32.mrf.mxu0
      %v833 = vadd.f32 0.0, %v832
      %834 = vmatmul.bf16.gmra.mxu0 %v519
      %v835 = vpop.f32.mrf.mxu0
      %v836 = vadd.f32 0.0, %v835
      %v837 = vpop.f32.mrf.mxu0
      %v838 = vadd.f32 0.0, %v837
      %839 = vmatmul.bf16.gmra.mxu0 %v521
      %v840 = vpop.f32.mrf.mxu0
      %v841 = vadd.f32 0.0, %v840
      %v842 = vpop.f32.mrf.mxu0
      %v843 = vadd.f32 0.0, %v842
      %844 = vmatmul.bf16.gmra.mxu0 %v523
      %v845 = vpop.f32.mrf.mxu0
      %v846 = vadd.f32 0.0, %v845
      %v847 = vpop.f32.mrf.mxu0
      %v848 = vadd.f32 0.0, %v847
      %849 = vmatmul.bf16.gmra.mxu0 %v525
      %v850 = vpop.f32.mrf.mxu0
      %v851 = vadd.f32 0.0, %v850
      %v852 = vpop.f32.mrf.mxu0
      %v853 = vadd.f32 0.0, %v852
      %854 = vmatmul.bf16.gmra.mxu0 %v527
      %v855 = vpop.f32.mrf.mxu0
      %v856 = vadd.f32 0.0, %v855
      %v857 = vpop.f32.mrf.mxu0
      %v858 = vadd.f32 0.0, %v857
      %859 = vmatmul.bf16.gmra.mxu0 %v529
      %v860 = vpop.f32.mrf.mxu0
      %v861 = vadd.f32 0.0, %v860
      %v862 = vpop.f32.mrf.mxu0
      %v863 = vadd.f32 0.0, %v862
      %864 = vmatmul.bf16.gmra.mxu0 %v531
      %v865 = vpop.f32.mrf.mxu0
      %v866 = vadd.f32 0.0, %v865
      %v867 = vpop.f32.mrf.mxu0
      %v868 = vadd.f32 0.0, %v867
      %869 = vmatmul.bf16.gmra.mxu0 %v533
      %v870 = vpop.f32.mrf.mxu0
      %v871 = vadd.f32 0.0, %v870
      %v872 = vpop.f32.mrf.mxu0
      %v873 = vadd.f32 0.0, %v872
      %874 = vmatmul.bf16.gmra.mxu0 %v535
      %v875 = vpop.f32.mrf.mxu0
      %v876 = vadd.f32 0.0, %v875
      %v877 = vpop.f32.mrf.mxu0
      %v878 = vadd.f32 0.0, %v877
      %879 = vmatmul.bf16.gmra.mxu0 %v537
      %v880 = vpop.f32.mrf.mxu0
      %v881 = vadd.f32 0.0, %v880
      %v882 = vpop.f32.mrf.mxu0
      %v883 = vadd.f32 0.0, %v882
      %884 = vmatmul.bf16.gmra.mxu0 %v539
      %v885 = vpop.f32.mrf.mxu0
      %v886 = vadd.f32 0.0, %v885
      %v887 = vpop.f32.mrf.mxu0
      %v888 = vadd.f32 0.0, %v887
      %889 = vmatmul.bf16.gmra.mxu0 %v541
      %v890 = vpop.f32.mrf.mxu0
      %v891 = vadd.f32 0.0, %v890
      %v892 = vpop.f32.mrf.mxu0
      %v893 = vadd.f32 0.0, %v892
      %894 = vdwg.mxu0
      %895 = vmatpush.bf16.msra.mxu0 0
      %896 = vmatpush.bf16.msra.mxu0 0
      %897 = vmatpush.bf16.msra.mxu0 0
      %898 = vmatpush.bf16.msra.mxu0 0
      %899 = vmatpush.bf16.msra.mxu0 0
      %900 = vmatpush.bf16.msra.mxu0 0
      %901 = vmatpush.bf16.msra.mxu0 0
      %902 = vmatpush.bf16.msra.mxu0 %v619
      %903 = vmatmul.bf16.gmra.mxu0 %v631
      %v904 = vpop.f32.mrf.mxu0
      %v905 = vadd.f32 %v736, %v904
      %v906 = vpop.f32.mrf.mxu0
      %v907 = vadd.f32 %v738, %v906
      %908 = vmatmul.bf16.gmra.mxu0 %v634
      %v909 = vpop.f32.mrf.mxu0
      %v910 = vadd.f32 %v741, %v909
      %v911 = vpop.f32.mrf.mxu0
      %v912 = vadd.f32 %v743, %v911
      %913 = vmatmul.bf16.gmra.mxu0 %v637
      %v914 = vpop.f32.mrf.mxu0
      %v915 = vadd.f32 %v746, %v914
      %v916 = vpop.f32.mrf.mxu0
      %v917 = vadd.f32 %v748, %v916
      %918 = vmatmul.bf16.gmra.mxu0 %v640
      %v919 = vpop.f32.mrf.mxu0
      %v920 = vadd.f32 %v751, %v919
      %v921 = vpop.f32.mrf.mxu0
      %v922 = vadd.f32 %v753, %v921
      %923 = vmatmul.bf16.gmra.mxu0 %v643
      %v924 = vpop.f32.mrf.mxu0
      %v925 = vadd.f32 %v756, %v924
      %v926 = vpop.f32.mrf.mxu0
      %v927 = vadd.f32 %v758, %v926
      %928 = vmatmul.bf16.gmra.mxu0 %v646
      %v929 = vpop.f32.mrf.mxu0
      %v930 = vadd.f32 %v761, %v929
      %v931 = vpop.f32.mrf.mxu0
      %v932 = vadd.f32 %v763, %v931
      %933 = vmatmul.bf16.gmra.mxu0 %v649
      %v934 = vpop.f32.mrf.mxu0
      %v935 = vadd.f32 %v766, %v934
      %v936 = vpop.f32.mrf.mxu0
      %v937 = vadd.f32 %v768, %v936
      %938 = vmatmul.bf16.gmra.mxu0 %v652
      %v939 = vpop.f32.mrf.mxu0
      %v940 = vadd.f32 %v771, %v939
      %v941 = vpop.f32.mrf.mxu0
      %v942 = vadd.f32 %v773, %v941
      %943 = vmatmul.bf16.gmra.mxu0 %v655
      %v944 = vpop.f32.mrf.mxu0
      %v945 = vadd.f32 %v776, %v944
      %v946 = vpop.f32.mrf.mxu0
      %v947 = vadd.f32 %v778, %v946
      %948 = vmatmul.bf16.gmra.mxu0 %v658
      %v949 = vpop.f32.mrf.mxu0
      %v950 = vadd.f32 %v781, %v949
      %v951 = vpop.f32.mrf.mxu0
      %v952 = vadd.f32 %v783, %v951
      %953 = vmatmul.bf16.gmra.mxu0 %v661
      %v954 = vpop.f32.mrf.mxu0
      %v955 = vadd.f32 %v786, %v954
      %v956 = vpop.f32.mrf.mxu0
      %v957 = vadd.f32 %v788, %v956
      %958 = vmatmul.bf16.gmra.mxu0 %v664
      %v959 = vpop.f32.mrf.mxu0
      %v960 = vadd.f32 %v791, %v959
      %v961 = vpop.f32.mrf.mxu0
      %v962 = vadd.f32 %v793, %v961
      %963 = vmatmul.bf16.gmra.mxu0 %v667
      %v964 = vpop.f32.mrf.mxu0
      %v965 = vadd.f32 %v796, %v964
      %v966 = vpop.f32.mrf.mxu0
      %v967 = vadd.f32 %v798, %v966
      %968 = vmatmul.bf16.gmra.mxu0 %v670
      %v969 = vpop.f32.mrf.mxu0
      %v970 = vadd.f32 %v801, %v969
      %v971 = vpop.f32.mrf.mxu0
      %v972 = vadd.f32 %v803, %v971
      %973 = vmatmul.bf16.gmra.mxu0 %v673
      %v974 = vpop.f32.mrf.mxu0
      %v975 = vadd.f32 %v806, %v974
      %v976 = vpop.f32.mrf.mxu0
      %v977 = vadd.f32 %v808, %v976
      %978 = vmatmul.bf16.gmra.mxu0 %v676
      %v979 = vpop.f32.mrf.mxu0
      %v980 = vadd.f32 %v811, %v979
      %v981 = vpop.f32.mrf.mxu0
      %v982 = vadd.f32 %v813, %v981
      %983 = vmatmul.bf16.gmra.mxu0 %v679
      %v984 = vpop.f32.mrf.mxu0
      %v985 = vadd.f32 %v816, %v984
      %v986 = vpop.f32.mrf.mxu0
      %v987 = vadd.f32 %v818, %v986
      %988 = vmatmul.bf16.gmra.mxu0 %v682
      %v989 = vpop.f32.mrf.mxu0
      %v990 = vadd.f32 %v821, %v989
      %v991 = vpop.f32.mrf.mxu0
      %v992 = vadd.f32 %v823, %v991
      %993 = vmatmul.bf16.gmra.mxu0 %v685
      %v994 = vpop.f32.mrf.mxu0
      %v995 = vadd.f32 %v826, %v994
      %v996 = vpop.f32.mrf.mxu0
      %v997 = vadd.f32 %v828, %v996
      %998 = vmatmul.bf16.gmra.mxu0 %v688
      %v999 = vpop.f32.mrf.mxu0
      %v1000 = vadd.f32 %v831, %v999
      %v1001 = vpop.f32.mrf.mxu0
      %v1002 = vadd.f32 %v833, %v1001
      %1003 = vmatmul.bf16.gmra.mxu0 %v691
      %v1004 = vpop.f32.mrf.mxu0
      %v1005 = vadd.f32 %v836, %v1004
      %v1006 = vpop.f32.mrf.mxu0
      %v1007 = vadd.f32 %v838, %v1006
      %1008 = vmatmul.bf16.gmra.mxu0 %v694
      %v1009 = vpop.f32.mrf.mxu0
      %v1010 = vadd.f32 %v841, %v1009
      %v1011 = vpop.f32.mrf.mxu0
      %v1012 = vadd.f32 %v843, %v1011
      %1013 = vmatmul.bf16.gmra.mxu0 %v697
      %v1014 = vpop.f32.mrf.mxu0
      %v1015 = vadd.f32 %v846, %v1014
      %v1016 = vpop.f32.mrf.mxu0
      %v1017 = vadd.f32 %v848, %v1016
      %1018 = vmatmul.bf16.gmra.mxu0 %v700
      %v1019 = vpop.f32.mrf.mxu0
      %v1020 = vadd.f32 %v851, %v1019
      %v1021 = vpop.f32.mrf.mxu0
      %v1022 = vadd.f32 %v853, %v1021
      %1023 = vmatmul.bf16.gmra.mxu0 %v703
      %v1024 = vpop.f32.mrf.mxu0
      %v1025 = vadd.f32 %v856, %v1024
      %v1026 = vpop.f32.mrf.mxu0
      %v1027 = vadd.f32 %v858, %v1026
      %1028 = vmatmul.bf16.gmra.mxu0 %v706
      %v1029 = vpop.f32.mrf.mxu0
      %v1030 = vadd.f32 %v861, %v1029
      %v1031 = vpop.f32.mrf.mxu0
      %v1032 = vadd.f32 %v863, %v1031
      %1033 = vmatmul.bf16.gmra.mxu0 %v709
      %v1034 = vpop.f32.mrf.mxu0
      %v1035 = vadd.f32 %v866, %v1034
      %v1036 = vpop.f32.mrf.mxu0
      %v1037 = vadd.f32 %v868, %v1036
      %1038 = vmatmul.bf16.gmra.mxu0 %v712
      %v1039 = vpop.f32.mrf.mxu0
      %v1040 = vadd.f32 %v871, %v1039
      %v1041 = vpop.f32.mrf.mxu0
      %v1042 = vadd.f32 %v873, %v1041
      %1043 = vmatmul.bf16.gmra.mxu0 %v715
      %v1044 = vpop.f32.mrf.mxu0
      %v1045 = vadd.f32 %v876, %v1044
      %v1046 = vpop.f32.mrf.mxu0
      %v1047 = vadd.f32 %v878, %v1046
      %1048 = vmatmul.bf16.gmra.mxu0 %v718
      %v1049 = vpop.f32.mrf.mxu0
      %v1050 = vadd.f32 %v881, %v1049
      %v1051 = vpop.f32.mrf.mxu0
      %v1052 = vadd.f32 %v883, %v1051
      %1053 = vmatmul.bf16.gmra.mxu0 %v721
      %v1054 = vpop.f32.mrf.mxu0
      %v1055 = vadd.f32 %v886, %v1054
      %v1056 = vpop.f32.mrf.mxu0
      %v1057 = vadd.f32 %v888, %v1056
      %1058 = vmatmul.bf16.gmra.mxu0 %v724
      %v1059 = vpop.f32.mrf.mxu0
      %v1060 = vadd.f32 %v891, %v1059
      %v1061 = vpop.f32.mrf.mxu0
      %v1062 = vadd.f32 %v893, %v1061
      %1063 = vdwg.mxu0
      %v1064 = vld [vmem:[%s2] sm:$0x1]
      %v1066 = vperm.slane %v1064, 0
      %v1068 = vmul.f32 %v905, %v1066
      %v1069 = vmul.f32 %v907, %v1066
      %v1070 = vmul.f32 %v910, %v1066
      %v1071 = vmul.f32 %v912, %v1066
      %v1072 = vmul.f32 %v915, %v1066
      %v1073 = vmul.f32 %v917, %v1066
      %v1074 = vmul.f32 %v920, %v1066
      %v1075 = vmul.f32 %v922, %v1066
      %v1076 = vmul.f32 %v925, %v1066
      %v1077 = vmul.f32 %v927, %v1066
      %v1078 = vmul.f32 %v930, %v1066
      %v1079 = vmul.f32 %v932, %v1066
      %v1080 = vmul.f32 %v935, %v1066
      %v1081 = vmul.f32 %v937, %v1066
      %v1082 = vmul.f32 %v940, %v1066
      %v1083 = vmul.f32 %v942, %v1066
      %v1084 = vmul.f32 %v945, %v1066
      %v1085 = vmul.f32 %v947, %v1066
      %v1086 = vmul.f32 %v950, %v1066
      %v1087 = vmul.f32 %v952, %v1066
      %v1088 = vmul.f32 %v955, %v1066
      %v1089 = vmul.f32 %v957, %v1066
      %v1090 = vmul.f32 %v960, %v1066
      %v1091 = vmul.f32 %v962, %v1066
      %v1092 = vmul.f32 %v965, %v1066
      %v1093 = vmul.f32 %v967, %v1066
      %v1094 = vmul.f32 %v970, %v1066
      %v1095 = vmul.f32 %v972, %v1066
      %v1096 = vmul.f32 %v975, %v1066
      %v1097 = vmul.f32 %v977, %v1066
      %v1098 = vmul.f32 %v980, %v1066
      %v1099 = vmul.f32 %v982, %v1066
      %v1100 = vmul.f32 %v985, %v1066
      %v1101 = vmul.f32 %v987, %v1066
      %v1102 = vmul.f32 %v990, %v1066
      %v1103 = vmul.f32 %v992, %v1066
      %v1104 = vmul.f32 %v995, %v1066
      %v1105 = vmul.f32 %v997, %v1066
      %v1106 = vmul.f32 %v1000, %v1066
      %v1107 = vmul.f32 %v1002, %v1066
      %v1108 = vmul.f32 %v1005, %v1066
      %v1109 = vmul.f32 %v1007, %v1066
      %v1110 = vmul.f32 %v1010, %v1066
      %v1111 = vmul.f32 %v1012, %v1066
      %v1112 = vmul.f32 %v1015, %v1066
      %v1113 = vmul.f32 %v1017, %v1066
      %v1114 = vmul.f32 %v1020, %v1066
      %v1115 = vmul.f32 %v1022, %v1066
      %v1116 = vmul.f32 %v1025, %v1066
      %v1117 = vmul.f32 %v1027, %v1066
      %v1118 = vmul.f32 %v1030, %v1066
      %v1119 = vmul.f32 %v1032, %v1066
      %v1120 = vmul.f32 %v1035, %v1066
      %v1121 = vmul.f32 %v1037, %v1066
      %v1122 = vmul.f32 %v1040, %v1066
      %v1123 = vmul.f32 %v1042, %v1066
      %v1124 = vmul.f32 %v1045, %v1066
      %v1125 = vmul.f32 %v1047, %v1066
      %v1126 = vmul.f32 %v1050, %v1066
      %v1127 = vmul.f32 %v1052, %v1066
      %v1128 = vmul.f32 %v1055, %v1066
      %v1129 = vmul.f32 %v1057, %v1066
      %v1130 = vmul.f32 %v1060, %v1066
      %v1131 = vmul.f32 %v1062, %v1066
      %v1132 = vld [vmem:[%s3] sm:$0x1]
      %v1134 = vperm.slane %v1132, 0
      %v1136 = vadd.f32 %v1068, %v1134
      %v1137 = vadd.f32 %v1069, %v1134
      %v1138 = vadd.f32 %v1070, %v1134
      %v1139 = vadd.f32 %v1071, %v1134
      %v1140 = vadd.f32 %v1072, %v1134
      %v1141 = vadd.f32 %v1073, %v1134
      %v1142 = vadd.f32 %v1074, %v1134
      %v1143 = vadd.f32 %v1075, %v1134
      %v1144 = vadd.f32 %v1076, %v1134
      %v1145 = vadd.f32 %v1077, %v1134
      %v1146 = vadd.f32 %v1078, %v1134
      %v1147 = vadd.f32 %v1079, %v1134
      %v1148 = vadd.f32 %v1080, %v1134
      %v1149 = vadd.f32 %v1081, %v1134
      %v1150 = vadd.f32 %v1082, %v1134
      %v1151 = vadd.f32 %v1083, %v1134
      %v1152 = vadd.f32 %v1084, %v1134
      %v1153 = vadd.f32 %v1085, %v1134
      %v1154 = vadd.f32 %v1086, %v1134
      %v1155 = vadd.f32 %v1087, %v1134
      %v1156 = vadd.f32 %v1088, %v1134
      %v1157 = vadd.f32 %v1089, %v1134
      %v1158 = vadd.f32 %v1090, %v1134
      %v1159 = vadd.f32 %v1091, %v1134
      %v1160 = vadd.f32 %v1092, %v1134
      %v1161 = vadd.f32 %v1093, %v1134
      %v1162 = vadd.f32 %v1094, %v1134
      %v1163 = vadd.f32 %v1095, %v1134
      %v1164 = vadd.f32 %v1096, %v1134
      %v1165 = vadd.f32 %v1097, %v1134
      %v1166 = vadd.f32 %v1098, %v1134
      %v1167 = vadd.f32 %v1099, %v1134
      %v1168 = vadd.f32 %v1100, %v1134
      %v1169 = vadd.f32 %v1101, %v1134
      %v1170 = vadd.f32 %v1102, %v1134
      %v1171 = vadd.f32 %v1103, %v1134
      %v1172 = vadd.f32 %v1104, %v1134
      %v1173 = vadd.f32 %v1105, %v1134
      %v1174 = vadd.f32 %v1106, %v1134
      %v1175 = vadd.f32 %v1107, %v1134
      %v1176 = vadd.f32 %v1108, %v1134
      %v1177 = vadd.f32 %v1109, %v1134
      %v1178 = vadd.f32 %v1110, %v1134
      %v1179 = vadd.f32 %v1111, %v1134
      %v1180 = vadd.f32 %v1112, %v1134
      %v1181 = vadd.f32 %v1113, %v1134
      %v1182 = vadd.f32 %v1114, %v1134
      %v1183 = vadd.f32 %v1115, %v1134
      %v1184 = vadd.f32 %v1116, %v1134
      %v1185 = vadd.f32 %v1117, %v1134
      %v1186 = vadd.f32 %v1118, %v1134
      %v1187 = vadd.f32 %v1119, %v1134
      %v1188 = vadd.f32 %v1120, %v1134
      %v1189 = vadd.f32 %v1121, %v1134
      %v1190 = vadd.f32 %v1122, %v1134
      %v1191 = vadd.f32 %v1123, %v1134
      %v1192 = vadd.f32 %v1124, %v1134
      %v1193 = vadd.f32 %v1125, %v1134
      %v1194 = vadd.f32 %v1126, %v1134
      %v1195 = vadd.f32 %v1127, %v1134
      %v1196 = vadd.f32 %v1128, %v1134
      %v1197 = vadd.f32 %v1129, %v1134
      %v1198 = vadd.f32 %v1130, %v1134
      %v1199 = vadd.f32 %v1131, %v1134
      %vm1200 = vcmp.ge.f32.partialorder %v1136, 0.0
      %vm1201 = vcmp.ge.f32.partialorder %v1137, 0.0
      %vm1202 = vcmp.ge.f32.partialorder %v1138, 0.0
      %vm1203 = vcmp.ge.f32.partialorder %v1139, 0.0
      %vm1204 = vcmp.ge.f32.partialorder %v1140, 0.0
      %vm1205 = vcmp.ge.f32.partialorder %v1141, 0.0
      %vm1206 = vcmp.ge.f32.partialorder %v1142, 0.0
      %vm1207 = vcmp.ge.f32.partialorder %v1143, 0.0
      %vm1208 = vcmp.ge.f32.partialorder %v1144, 0.0
      %vm1209 = vcmp.ge.f32.partialorder %v1145, 0.0
      %vm1210 = vcmp.ge.f32.partialorder %v1146, 0.0
      %vm1211 = vcmp.ge.f32.partialorder %v1147, 0.0
      %vm1212 = vcmp.ge.f32.partialorder %v1148, 0.0
      %vm1213 = vcmp.ge.f32.partialorder %v1149, 0.0
      %vm1214 = vcmp.ge.f32.partialorder %v1150, 0.0
      %vm1215 = vcmp.ge.f32.partialorder %v1151, 0.0
      %vm1216 = vcmp.ge.f32.partialorder %v1152, 0.0
      %vm1217 = vcmp.ge.f32.partialorder %v1153, 0.0
      %vm1218 = vcmp.ge.f32.partialorder %v1154, 0.0
      %vm1219 = vcmp.ge.f32.partialorder %v1155, 0.0
      %vm1220 = vcmp.ge.f32.partialorder %v1156, 0.0
      %vm1221 = vcmp.ge.f32.partialorder %v1157, 0.0
      %vm1222 = vcmp.ge.f32.partialorder %v1158, 0.0
      %vm1223 = vcmp.ge.f32.partialorder %v1159, 0.0
      %vm1224 = vcmp.ge.f32.partialorder %v1160, 0.0
      %vm1225 = vcmp.ge.f32.partialorder %v1161, 0.0
      %vm1226 = vcmp.ge.f32.partialorder %v1162, 0.0
      %vm1227 = vcmp.ge.f32.partialorder %v1163, 0.0
      %vm1228 = vcmp.ge.f32.partialorder %v1164, 0.0
      %vm1229 = vcmp.ge.f32.partialorder %v1165, 0.0
      %vm1230 = vcmp.ge.f32.partialorder %v1166, 0.0
      %vm1231 = vcmp.ge.f32.partialorder %v1167, 0.0
      %vm1232 = vcmp.ge.f32.partialorder %v1168, 0.0
      %vm1233 = vcmp.ge.f32.partialorder %v1169, 0.0
      %vm1234 = vcmp.ge.f32.partialorder %v1170, 0.0
      %vm1235 = vcmp.ge.f32.partialorder %v1171, 0.0
      %vm1236 = vcmp.ge.f32.partialorder %v1172, 0.0
      %vm1237 = vcmp.ge.f32.partialorder %v1173, 0.0
      %vm1238 = vcmp.ge.f32.partialorder %v1174, 0.0
      %vm1239 = vcmp.ge.f32.partialorder %v1175, 0.0
      %vm1240 = vcmp.ge.f32.partialorder %v1176, 0.0
      %vm1241 = vcmp.ge.f32.partialorder %v1177, 0.0
      %vm1242 = vcmp.ge.f32.partialorder %v1178, 0.0
      %vm1243 = vcmp.ge.f32.partialorder %v1179, 0.0
      %vm1244 = vcmp.ge.f32.partialorder %v1180, 0.0
      %vm1245 = vcmp.ge.f32.partialorder %v1181, 0.0
      %vm1246 = vcmp.ge.f32.partialorder %v1182, 0.0
      %vm1247 = vcmp.ge.f32.partialorder %v1183, 0.0
      %vm1248 = vcmp.ge.f32.partialorder %v1184, 0.0
      %vm1249 = vcmp.ge.f32.partialorder %v1185, 0.0
      %vm1250 = vcmp.ge.f32.partialorder %v1186, 0.0
      %vm1251 = vcmp.ge.f32.partialorder %v1187, 0.0
      %vm1252 = vcmp.ge.f32.partialorder %v1188, 0.0
      %vm1253 = vcmp.ge.f32.partialorder %v1189, 0.0
      %vm1254 = vcmp.ge.f32.partialorder %v1190, 0.0
      %vm1255 = vcmp.ge.f32.partialorder %v1191, 0.0
      %vm1256 = vcmp.ge.f32.partialorder %v1192, 0.0
      %vm1257 = vcmp.ge.f32.partialorder %v1193, 0.0
      %vm1258 = vcmp.ge.f32.partialorder %v1194, 0.0
      %vm1259 = vcmp.ge.f32.partialorder %v1195, 0.0
      %vm1260 = vcmp.ge.f32.partialorder %v1196, 0.0
      %vm1261 = vcmp.ge.f32.partialorder %v1197, 0.0
      %vm1262 = vcmp.ge.f32.partialorder %v1198, 0.0
      %vm1263 = vcmp.ge.f32.partialorder %v1199, 0.0
      %v1264 = vmul.f32 %v1136, 0.0
      %v1265 = vmul.f32 %v1137, 0.0
      %v1266 = vmul.f32 %v1138, 0.0
      %v1267 = vmul.f32 %v1139, 0.0
      %v1268 = vmul.f32 %v1140, 0.0
      %v1269 = vmul.f32 %v1141, 0.0
      %v1270 = vmul.f32 %v1142, 0.0
      %v1271 = vmul.f32 %v1143, 0.0
      %v1272 = vmul.f32 %v1144, 0.0
      %v1273 = vmul.f32 %v1145, 0.0
      %v1274 = vmul.f32 %v1146, 0.0
      %v1275 = vmul.f32 %v1147, 0.0
      %v1276 = vmul.f32 %v1148, 0.0
      %v1277 = vmul.f32 %v1149, 0.0
      %v1278 = vmul.f32 %v1150, 0.0
      %v1279 = vmul.f32 %v1151, 0.0
      %v1280 = vmul.f32 %v1152, 0.0
      %v1281 = vmul.f32 %v1153, 0.0
      %v1282 = vmul.f32 %v1154, 0.0
      %v1283 = vmul.f32 %v1155, 0.0
      %v1284 = vmul.f32 %v1156, 0.0
      %v1285 = vmul.f32 %v1157, 0.0
      %v1286 = vmul.f32 %v1158, 0.0
      %v1287 = vmul.f32 %v1159, 0.0
      %v1288 = vmul.f32 %v1160, 0.0
      %v1289 = vmul.f32 %v1161, 0.0
      %v1290 = vmul.f32 %v1162, 0.0
      %v1291 = vmul.f32 %v1163, 0.0
      %v1292 = vmul.f32 %v1164, 0.0
      %v1293 = vmul.f32 %v1165, 0.0
      %v1294 = vmul.f32 %v1166, 0.0
      %v1295 = vmul.f32 %v1167, 0.0
      %v1296 = vmul.f32 %v1168, 0.0
      %v1297 = vmul.f32 %v1169, 0.0
      %v1298 = vmul.f32 %v1170, 0.0
      %v1299 = vmul.f32 %v1171, 0.0
      %v1300 = vmul.f32 %v1172, 0.0
      %v1301 = vmul.f32 %v1173, 0.0
      %v1302 = vmul.f32 %v1174, 0.0
      %v1303 = vmul.f32 %v1175, 0.0
      %v1304 = vmul.f32 %v1176, 0.0
      %v1305 = vmul.f32 %v1177, 0.0
      %v1306 = vmul.f32 %v1178, 0.0
      %v1307 = vmul.f32 %v1179, 0.0
      %v1308 = vmul.f32 %v1180, 0.0
      %v1309 = vmul.f32 %v1181, 0.0
      %v1310 = vmul.f32 %v1182, 0.0
      %v1311 = vmul.f32 %v1183, 0.0
      %v1312 = vmul.f32 %v1184, 0.0
      %v1313 = vmul.f32 %v1185, 0.0
      %v1314 = vmul.f32 %v1186, 0.0
      %v1315 = vmul.f32 %v1187, 0.0
      %v1316 = vmul.f32 %v1188, 0.0
      %v1317 = vmul.f32 %v1189, 0.0
      %v1318 = vmul.f32 %v1190, 0.0
      %v1319 = vmul.f32 %v1191, 0.0
      %v1320 = vmul.f32 %v1192, 0.0
      %v1321 = vmul.f32 %v1193, 0.0
      %v1322 = vmul.f32 %v1194, 0.0
      %v1323 = vmul.f32 %v1195, 0.0
      %v1324 = vmul.f32 %v1196, 0.0
      %v1325 = vmul.f32 %v1197, 0.0
      %v1326 = vmul.f32 %v1198, 0.0
      %v1327 = vmul.f32 %v1199, 0.0
      %v1328 = vsel %vm1200, %v1136, %v1264
      %v1329 = vsel %vm1201, %v1137, %v1265
      %v1330 = vsel %vm1202, %v1138, %v1266
      %v1331 = vsel %vm1203, %v1139, %v1267
      %v1332 = vsel %vm1204, %v1140, %v1268
      %v1333 = vsel %vm1205, %v1141, %v1269
      %v1334 = vsel %vm1206, %v1142, %v1270
      %v1335 = vsel %vm1207, %v1143, %v1271
      %v1336 = vsel %vm1208, %v1144, %v1272
      %v1337 = vsel %vm1209, %v1145, %v1273
      %v1338 = vsel %vm1210, %v1146, %v1274
      %v1339 = vsel %vm1211, %v1147, %v1275
      %v1340 = vsel %vm1212, %v1148, %v1276
      %v1341 = vsel %vm1213, %v1149, %v1277
      %v1342 = vsel %vm1214, %v1150, %v1278
      %v1343 = vsel %vm1215, %v1151, %v1279
      %v1344 = vsel %vm1216, %v1152, %v1280
      %v1345 = vsel %vm1217, %v1153, %v1281
      %v1346 = vsel %vm1218, %v1154, %v1282
      %v1347 = vsel %vm1219, %v1155, %v1283
      %v1348 = vsel %vm1220, %v1156, %v1284
      %v1349 = vsel %vm1221, %v1157, %v1285
      %v1350 = vsel %vm1222, %v1158, %v1286
      %v1351 = vsel %vm1223, %v1159, %v1287
      %v1352 = vsel %vm1224, %v1160, %v1288
      %v1353 = vsel %vm1225, %v1161, %v1289
      %v1354 = vsel %vm1226, %v1162, %v1290
      %v1355 = vsel %vm1227, %v1163, %v1291
      %v1356 = vsel %vm1228, %v1164, %v1292
      %v1357 = vsel %vm1229, %v1165, %v1293
      %v1358 = vsel %vm1230, %v1166, %v1294
      %v1359 = vsel %vm1231, %v1167, %v1295
      %v1360 = vsel %vm1232, %v1168, %v1296
      %v1361 = vsel %vm1233, %v1169, %v1297
      %v1362 = vsel %vm1234, %v1170, %v1298
      %v1363 = vsel %vm1235, %v1171, %v1299
      %v1364 = vsel %vm1236, %v1172, %v1300
      %v1365 = vsel %vm1237, %v1173, %v1301
      %v1366 = vsel %vm1238, %v1174, %v1302
      %v1367 = vsel %vm1239, %v1175, %v1303
      %v1368 = vsel %vm1240, %v1176, %v1304
      %v1369 = vsel %vm1241, %v1177, %v1305
      %v1370 = vsel %vm1242, %v1178, %v1306
      %v1371 = vsel %vm1243, %v1179, %v1307
      %v1372 = vsel %vm1244, %v1180, %v1308
      %v1373 = vsel %vm1245, %v1181, %v1309
      %v1374 = vsel %vm1246, %v1182, %v1310
      %v1375 = vsel %vm1247, %v1183, %v1311
      %v1376 = vsel %vm1248, %v1184, %v1312
      %v1377 = vsel %vm1249, %v1185, %v1313
      %v1378 = vsel %vm1250, %v1186, %v1314
      %v1379 = vsel %vm1251, %v1187, %v1315
      %v1380 = vsel %vm1252, %v1188, %v1316
      %v1381 = vsel %vm1253, %v1189, %v1317
      %v1382 = vsel %vm1254, %v1190, %v1318
      %v1383 = vsel %vm1255, %v1191, %v1319
      %v1384 = vsel %vm1256, %v1192, %v1320
      %v1385 = vsel %vm1257, %v1193, %v1321
      %v1386 = vsel %vm1258, %v1194, %v1322
      %v1387 = vsel %vm1259, %v1195, %v1323
      %v1388 = vsel %vm1260, %v1196, %v1324
      %v1389 = vsel %vm1261, %v1197, %v1325
      %v1390 = vsel %vm1262, %v1198, %v1326
      %v1391 = vsel %vm1263, %v1199, %v1327
      %1392 = vst.msk [vmem:[%s202] sm:$0xff] %vm629, %v1328
      %1393 = vst.msk [vmem:[%s202 + $0x8] sm:$0xff] %vm629, %v1329
      %1394 = vst.msk [vmem:[%s202 + $0x10] sm:$0xff] %vm629, %v1330
      %1395 = vst.msk [vmem:[%s202 + $0x18] sm:$0xff] %vm629, %v1331
      %1396 = vst.msk [vmem:[%s202 + $0x20] sm:$0xff] %vm629, %v1332
      %1397 = vst.msk [vmem:[%s202 + $0x28] sm:$0xff] %vm629, %v1333
      %1398 = vst.msk [vmem:[%s202 + $0x30] sm:$0xff] %vm629, %v1334
      %1399 = vst.msk [vmem:[%s202 + $0x38] sm:$0xff] %vm629, %v1335
      %1400 = vst.msk [vmem:[%s202 + $0x40] sm:$0xff] %vm629, %v1336
      %1401 = vst.msk [vmem:[%s202 + $0x48] sm:$0xff] %vm629, %v1337
      %1402 = vst.msk [vmem:[%s202 + $0x50] sm:$0xff] %vm629, %v1338
      %1403 = vst.msk [vmem:[%s202 + $0x58] sm:$0xff] %vm629, %v1339
      %1404 = vst.msk [vmem:[%s202 + $0x60] sm:$0xff] %vm629, %v1340
      %1405 = vst.msk [vmem:[%s202 + $0x68] sm:$0xff] %vm629, %v1341
      %1406 = vst.msk [vmem:[%s202 + $0x70] sm:$0xff] %vm629, %v1342
      %1407 = vst.msk [vmem:[%s202 + $0x78] sm:$0xff] %vm629, %v1343
      %1408 = vst.msk [vmem:[%s202 + $0x80] sm:$0xff] %vm629, %v1344
      %1409 = vst.msk [vmem:[%s202 + $0x88] sm:$0xff] %vm629, %v1345
      %1410 = vst.msk [vmem:[%s202 + $0x90] sm:$0xff] %vm629, %v1346
      %1411 = vst.msk [vmem:[%s202 + $0x98] sm:$0xff] %vm629, %v1347
      %1412 = vst.msk [vmem:[%s202 + $0xa0] sm:$0xff] %vm629, %v1348
      %1413 = vst.msk [vmem:[%s202 + $0xa8] sm:$0xff] %vm629, %v1349
      %1414 = vst.msk [vmem:[%s202 + $0xb0] sm:$0xff] %vm629, %v1350
      %1415 = vst.msk [vmem:[%s202 + $0xb8] sm:$0xff] %vm629, %v1351
      %1416 = vst.msk [vmem:[%s202 + $0xc0] sm:$0xff] %vm629, %v1352
      %1417 = vst.msk [vmem:[%s202 + $0xc8] sm:$0xff] %vm629, %v1353
      %1418 = vst.msk [vmem:[%s202 + $0xd0] sm:$0xff] %vm629, %v1354
      %1419 = vst.msk [vmem:[%s202 + $0xd8] sm:$0xff] %vm629, %v1355
      %1420 = vst.msk [vmem:[%s202 + $0xe0] sm:$0xff] %vm629, %v1356
      %1421 = vst.msk [vmem:[%s202 + $0xe8] sm:$0xff] %vm629, %v1357
      %1422 = vst.msk [vmem:[%s202 + $0xf0] sm:$0xff] %vm629, %v1358
      %1423 = vst.msk [vmem:[%s202 + $0xf8] sm:$0xff] %vm629, %v1359
      %1424 = vst.msk [vmem:[%s202 + $0x100] sm:$0xff] %vm629, %v1360
      %1425 = vst.msk [vmem:[%s202 + $0x108] sm:$0xff] %vm629, %v1361
      %1426 = vst.msk [vmem:[%s202 + $0x110] sm:$0xff] %vm629, %v1362
      %1427 = vst.msk [vmem:[%s202 + $0x118] sm:$0xff] %vm629, %v1363
      %1428 = vst.msk [vmem:[%s202 + $0x120] sm:$0xff] %vm629, %v1364
      %1429 = vst.msk [vmem:[%s202 + $0x128] sm:$0xff] %vm629, %v1365
      %1430 = vst.msk [vmem:[%s202 + $0x130] sm:$0xff] %vm629, %v1366
      %1431 = vst.msk [vmem:[%s202 + $0x138] sm:$0xff] %vm629, %v1367
      %1432 = vst.msk [vmem:[%s202 + $0x140] sm:$0xff] %vm629, %v1368
      %1433 = vst.msk [vmem:[%s202 + $0x148] sm:$0xff] %vm629, %v1369
      %1434 = vst.msk [vmem:[%s202 + $0x150] sm:$0xff] %vm629, %v1370
      %1435 = vst.msk [vmem:[%s202 + $0x158] sm:$0xff] %vm629, %v1371
      %1436 = vst.msk [vmem:[%s202 + $0x160] sm:$0xff] %vm629, %v1372
      %1437 = vst.msk [vmem:[%s202 + $0x168] sm:$0xff] %vm629, %v1373
      %1438 = vst.msk [vmem:[%s202 + $0x170] sm:$0xff] %vm629, %v1374
      %1439 = vst.msk [vmem:[%s202 + $0x178] sm:$0xff] %vm629, %v1375
      %1440 = vst.msk [vmem:[%s202 + $0x180] sm:$0xff] %vm629, %v1376
      %1441 = vst.msk [vmem:[%s202 + $0x188] sm:$0xff] %vm629, %v1377
      %1442 = vst.msk [vmem:[%s202 + $0x190] sm:$0xff] %vm629, %v1378
      %1443 = vst.msk [vmem:[%s202 + $0x198] sm:$0xff] %vm629, %v1379
      %1444 = vst.msk [vmem:[%s202 + $0x1a0] sm:$0xff] %vm629, %v1380
      %1445 = vst.msk [vmem:[%s202 + $0x1a8] sm:$0xff] %vm629, %v1381
      %1446 = vst.msk [vmem:[%s202 + $0x1b0] sm:$0xff] %vm629, %v1382
      %1447 = vst.msk [vmem:[%s202 + $0x1b8] sm:$0xff] %vm629, %v1383
      %1448 = vst.msk [vmem:[%s202 + $0x1c0] sm:$0xff] %vm629, %v1384
      %1449 = vst.msk [vmem:[%s202 + $0x1c8] sm:$0xff] %vm629, %v1385
      %1450 = vst.msk [vmem:[%s202 + $0x1d0] sm:$0xff] %vm629, %v1386
      %1451 = vst.msk [vmem:[%s202 + $0x1d8] sm:$0xff] %vm629, %v1387
      %1452 = vst.msk [vmem:[%s202 + $0x1e0] sm:$0xff] %vm629, %v1388
      %1453 = vst.msk [vmem:[%s202 + $0x1e8] sm:$0xff] %vm629, %v1389
      %1454 = vst.msk [vmem:[%s202 + $0x1f0] sm:$0xff] %vm629, %v1390
      %1455 = vst.msk [vmem:[%s202 + $0x1f8] sm:$0xff] %vm629, %v1391
      %s1456 = smul.u32 64, %s15
      %p1457 = scmp.lt.s32.totalorder %s1456, 255
      %s1458 = scalar_select %p1457, %s1456, 255
      %s1459 = smul.addr %s1458, 8
      %s1460 = scalar_lea.vmem %s4, %s1459
      // Predicated region
      $region37: #{wide_resnet_forward.9} parent=35 // pred_check
        %p1461 = pneg %p122
      $region38: #{wide_resnet_forward.9} parent=35 // pred_check_branch
        %1463 = sbr.rel (%p1461) target = $region40
      $region39: #{wide_resnet_forward.9} parent=35 // pred_region
        %s1464 = smul.u32 64, %s15
      $region40: #{wide_resnet_forward.9} parent=35 // pred_fallthru
        _
    $region36: #{wide_resnet_forward.9} parent=5 // pred_fallthru
      _
    %p1465 = scmp.le.s32.totalorder 2, %s10
    // Predicated region
    $region41: #{wide_resnet_forward.9} parent=5 // pred_check
      %p1466 = pneg %p1465
    $region42: #{wide_resnet_forward.9} parent=5 // pred_check_branch
      %1468 = sbr.rel (%p1466) target = $region44
    $region43: #{wide_resnet_forward.9} parent=5 // pred_region
      %s1469 = ssub.s32 %s10, 2
      // Predicated region
      $region45: #{wide_resnet_forward.9} parent=43 // pred_check
        %p1470 = pneg %p128
      $region46: #{wide_resnet_forward.9} parent=43 // pred_check_branch
        %1472 = sbr.rel (%p1470) target = $region48
      $region47: #{wide_resnet_forward.9} parent=43 // pred_region
        %s1473 = smul.u32 64, %s16
        %p1474 = scmp.lt.s32.totalorder %s1473, 255
        %s1475 = scalar_select %p1474, %s1473, 255
        %s1476 = smul.addr %s1475, 8
        %s1477 = scalar_lea.vmem %s4, %s1476
      $region48: #{wide_resnet_forward.9} parent=43 // pred_fallthru
        _
    $region44: #{wide_resnet_forward.9} parent=5 // pred_fallthru
      _
  $region6: #{wide_resnet_forward.9} parent=0 // loop_footer
    %s14 = sadd.s32 1, %s10
  $region7: #{wide_resnet_forward.9} parent=0 // loop_footer_branch
    %9 = sbr.rel target = $region3
  $region8: #{wide_resnet_forward.9} parent=0 // loop_exit
    _

// kernel: wide_resnet_forward.10
$region0: #{wide_resnet_forward.10}
  #allocation0 [shape = 'u32[]', space=smem, size = 0x4, offset = 0x4, fixed_abs, tag = 'smem constant byte address 0x4 - core index']
  #allocation1 [shape = 'u32[72,128]{1,0:T(1,128)}', space=vmem, size = 0x9000, scoped, tag = 'internal scratch']
  %s0 = inlined_call_operand.vmem [shape: bf16[2048,144], index: 0, kind: input, shape index: {}]
  %s1 = inlined_call_operand.vmem [shape: bf16[144,16], index: 1, kind: input, shape index: {}]
  %s2 = inlined_call_operand.vmem [shape: f32[2048,16], index: 2, kind: input, shape index: {}]
  %s3 = inlined_call_operand.vmem [shape: f32[1,16], index: 3, kind: input, shape index: {}]
  %s4 = inlined_call_operand.vmem [shape: f32[1,16], index: 4, kind: input, shape index: {}]
  %s5 = inlined_call_operand.vmem [shape: f32[2048,16], index: 5, kind: output, shape index: {}]
  %s6 = sld [smem:[#allocation0]]
  $region53: #{wide_resnet_forward.10} parent=0
    _
  %s8 = ssub.s32 1, %s6
  %s9 = scalar_select 0, %s8, %s6
  loop: start=0, step=1, limit=6
  $region2: #{wide_resnet_forward.10} parent=0 // loop_pre_header
    _
  $region3: #{wide_resnet_forward.10} parent=0 // loop_header
    %s11 = sphi 0, %s15
    %p12 = scmp.ge.s32.totalorder %s11, 6
    %s21 = sphi 0, %s23
    %s24 = sphi 0, %s21
    %s25 = sphi 0, %s24
    %s41 = sphi 0, %s25
    %s45 = sphi 0, %s45
    %s47 = sphi 0, %s45
    %s48 = sphi 0, %s47
    %s62 = sphi 0, %s48
    %s68 = sphi 0, %s70
    %s71 = sphi 0, %s68
    %s72 = sphi 0, %s71
    %s88 = sphi 0, %s72
    %s92 = sphi 0, %s92
    %s94 = sphi 0, %s92
    %s95 = sphi 0, %s94
    %s109 = sphi 0, %s95
    %s113 = sphi 0, %s113
    %s115 = sphi 0, %s113
    %s116 = sphi 0, %s115
    %s130 = sphi 0, %s116
    %s136 = sphi 0, %s138
    %s139 = sphi 0, %s136
    %s140 = sphi 0, %s139
    %s156 = sphi 0, %s140
  $region4: #{wide_resnet_forward.10} parent=0 // loop_header_branch
    %14 = sbr.rel (%p12) target = $region8
  $region5: #{wide_resnet_forward.10} parent=0 // loop_body
    %s16 = ssub.s32 %s11, 1
    %s17 = ssub.s32 %s11, 2
    %s18 = sadd.s32 %s11, 1
    %s19 = ssub.s32 %s11, %s18
    %p20 = scmp.eq.s32.totalorder %s19, 0
    %s22 = sadd.s32 %s21, 1
    %s23 = scalar_select %p20, %s21, %s22
    %p26 = pneg %p20
    %p27 = scmp.eq.s32.totalorder %s11, 3
    %p28 = por %p26, %p27
    %p29 = scmp.ne.s32.totalorder %s21, %s24
    %p30 = scmp.eq.s32.totalorder %s11, 0
    %p31 = por %p29, %p30
    %p32 = scmp.ne.s32.totalorder %s21, %s24
    %p33 = scmp.eq.s32.totalorder %s16, 3
    %p34 = por %p32, %p33
    %p35 = scmp.ne.s32.totalorder %s24, %s25
    %p36 = scmp.eq.s32.totalorder %s16, 0
    %p37 = por %p35, %p36
    %p38 = scmp.ne.s32.totalorder %s24, %s25
    %p39 = scmp.eq.s32.totalorder %s17, 3
    %p40 = por %p38, %p39
    %p42 = scmp.ne.s32.totalorder %s25, %s41
    %p43 = scmp.eq.s32.totalorder %s17, 0
    %p44 = por %p42, %p43
    %s46 = sadd.s32 %s45, 1
    %p49 = scmp.eq.s32.totalorder %s11, 3
    %p50 = scmp.ne.s32.totalorder %s45, %s47
    %p51 = scmp.eq.s32.totalorder %s11, 0
    %p52 = por %p50, %p51
    %p53 = scmp.ne.s32.totalorder %s45, %s47
    %p54 = scmp.eq.s32.totalorder %s16, 3
    %p55 = por %p53, %p54
    %p56 = scmp.ne.s32.totalorder %s47, %s48
    %p57 = scmp.eq.s32.totalorder %s16, 0
    %p58 = por %p56, %p57
    %p59 = scmp.ne.s32.totalorder %s47, %s48
    %p60 = scmp.eq.s32.totalorder %s17, 3
    %p61 = por %p59, %p60
    %p63 = scmp.ne.s32.totalorder %s48, %s62
    %p64 = scmp.eq.s32.totalorder %s17, 0
    %p65 = por %p63, %p64
    %s66 = ssub.s32 %s11, %s18
    %p67 = scmp.eq.s32.totalorder %s66, 0
    %s69 = sadd.s32 %s68, 1
    %s70 = scalar_select %p67, %s68, %s69
    %p73 = pneg %p67
    %p74 = scmp.eq.s32.totalorder %s11, 3
    %p75 = por %p73, %p74
    %p76 = scmp.ne.s32.totalorder %s68, %s71
    %p77 = scmp.eq.s32.totalorder %s11, 0
    %p78 = por %p76, %p77
    %p79 = scmp.ne.s32.totalorder %s68, %s71
    %p80 = scmp.eq.s32.totalorder %s16, 3
    %p81 = por %p79, %p80
    %p82 = scmp.ne.s32.totalorder %s71, %s72
    %p83 = scmp.eq.s32.totalorder %s16, 0
    %p84 = por %p82, %p83
    %p85 = scmp.ne.s32.totalorder %s71, %s72
    %p86 = scmp.eq.s32.totalorder %s17, 3
    %p87 = por %p85, %p86
    %p89 = scmp.ne.s32.totalorder %s72, %s88
    %p90 = scmp.eq.s32.totalorder %s17, 0
    %p91 = por %p89, %p90
    %s93 = sadd.s32 %s92, 1
    %p96 = scmp.eq.s32.totalorder %s11, 3
    %p97 = scmp.ne.s32.totalorder %s92, %s94
    %p98 = scmp.eq.s32.totalorder %s11, 0
    %p99 = por %p97, %p98
    %p100 = scmp.ne.s32.totalorder %s92, %s94
    %p101 = scmp.eq.s32.totalorder %s16, 3
    %p102 = por %p100, %p101
    %p103 = scmp.ne.s32.totalorder %s94, %s95
    %p104 = scmp.eq.s32.totalorder %s16, 0
    %p105 = por %p103, %p104
    %p106 = scmp.ne.s32.totalorder %s94, %s95
    %p107 = scmp.eq.s32.totalorder %s17, 3
    %p108 = por %p106, %p107
    %p110 = scmp.ne.s32.totalorder %s95, %s109
    %p111 = scmp.eq.s32.totalorder %s17, 0
    %p112 = por %p110, %p111
    %s114 = sadd.s32 %s113, 1
    %p117 = scmp.eq.s32.totalorder %s11, 3
    %p118 = scmp.ne.s32.totalorder %s113, %s115
    %p119 = scmp.eq.s32.totalorder %s11, 0
    %p120 = por %p118, %p119
    %p121 = scmp.ne.s32.totalorder %s113, %s115
    %p122 = scmp.eq.s32.totalorder %s16, 3
    %p123 = por %p121, %p122
    %p124 = scmp.ne.s32.totalorder %s115, %s116
    %p125 = scmp.eq.s32.totalorder %s16, 0
    %p126 = por %p124, %p125
    %p127 = scmp.ne.s32.totalorder %s115, %s116
    %p128 = scmp.eq.s32.totalorder %s17, 3
    %p129 = por %p127, %p128
    %p131 = scmp.ne.s32.totalorder %s116, %s130
    %p132 = scmp.eq.s32.totalorder %s17, 0
    %p133 = por %p131, %p132
    %s134 = ssub.s32 %s11, %s18
    %p135 = scmp.eq.s32.totalorder %s134, 0
    %s137 = sadd.s32 %s136, 1
    %s138 = scalar_select %p135, %s136, %s137
    %p141 = pneg %p135
    %p142 = scmp.eq.s32.totalorder %s11, 3
    %p143 = por %p141, %p142
    %p144 = scmp.ne.s32.totalorder %s136, %s139
    %p145 = scmp.eq.s32.totalorder %s11, 0
    %p146 = por %p144, %p145
    %p147 = scmp.ne.s32.totalorder %s136, %s139
    %p148 = scmp.eq.s32.totalorder %s16, 3
    %p149 = por %p147, %p148
    %p150 = scmp.ne.s32.totalorder %s139, %s140
    %p151 = scmp.eq.s32.totalorder %s16, 0
    %p152 = por %p150, %p151
    %p153 = scmp.ne.s32.totalorder %s139, %s140
    %p154 = scmp.eq.s32.totalorder %s17, 3
    %p155 = por %p153, %p154
    %p157 = scmp.ne.s32.totalorder %s140, %s156
    %p158 = scmp.eq.s32.totalorder %s17, 0
    %p159 = por %p157, %p158
    %p160 = scmp.le.s32.totalorder 1, %s11
    %p161 = scmp.lt.s32.totalorder %s11, 5
    %p162 = pnand %p160, %p161
    %p163 = pneg %p162
    // Predicated region
    $region9: #{wide_resnet_forward.10} parent=5 // pred_check
      _
    $region10: #{wide_resnet_forward.10} parent=5 // pred_check_branch
      %165 = sbr.rel (%p162) target = $region12
    $region11: #{wide_resnet_forward.10} parent=5 // pred_region
      %s166 = ssub.s32 %s11, 1
      // Predicated region
      $region13: #{wide_resnet_forward.10} parent=11 // pred_check
        %p167 = pneg %p58
      $region14: #{wide_resnet_forward.10} parent=11 // pred_check_branch
        %169 = sbr.rel (%p167) target = $region16
      $region15: #{wide_resnet_forward.10} parent=11 // pred_region
        _
      $region16: #{wide_resnet_forward.10} parent=11 // pred_fallthru
        _
      // Predicated region
      $region17: #{wide_resnet_forward.10} parent=11 // pred_check
        %p170 = pneg %p105
      $region18: #{wide_resnet_forward.10} parent=11 // pred_check_branch
        %172 = sbr.rel (%p170) target = $region20
      $region19: #{wide_resnet_forward.10} parent=11 // pred_region
        _
      $region20: #{wide_resnet_forward.10} parent=11 // pred_fallthru
        _
      // Predicated region
      $region21: #{wide_resnet_forward.10} parent=11 // pred_check
        %p173 = pneg %p126
      $region22: #{wide_resnet_forward.10} parent=11 // pred_check_branch
        %175 = sbr.rel (%p173) target = $region24
      $region23: #{wide_resnet_forward.10} parent=11 // pred_region
        _
      $region24: #{wide_resnet_forward.10} parent=11 // pred_fallthru
        _
    $region12: #{wide_resnet_forward.10} parent=5 // pred_fallthru
      _
    %p176 = scmp.lt.s32.totalorder %s11, 4
    // Predicated region
    $region25: #{wide_resnet_forward.10} parent=5 // pred_check
      %p177 = pneg %p176
    $region26: #{wide_resnet_forward.10} parent=5 // pred_check_branch
      %179 = sbr.rel (%p177) target = $region28
    $region27: #{wide_resnet_forward.10} parent=5 // pred_region
      // Predicated region
      $region29: #{wide_resnet_forward.10} parent=27 // pred_check
        %p180 = pneg %p31
      $region30: #{wide_resnet_forward.10} parent=27 // pred_check_branch
        %182 = sbr.rel (%p180) target = $region32
      $region31: #{wide_resnet_forward.10} parent=27 // pred_region
        %s183 = smul.u32 64, %s11
        %p184 = scmp.lt.s32.totalorder %s183, 255
        %s185 = scalar_select %p184, %s183, 255
        %s186 = smul.addr %s185, 2
        %s187 = smul.addr %s186, 4
        %s188 = scalar_lea.vmem %s0, %s187
        %s189 = smul.u32 64, %s11
      $region32: #{wide_resnet_forward.10} parent=27 // pred_fallthru
        _
      // Predicated region
      $region33: #{wide_resnet_forward.10} parent=27 // pred_check
        %p190 = pneg %p78
      $region34: #{wide_resnet_forward.10} parent=27 // pred_check_branch
        %192 = sbr.rel (%p190) target = $region36
      $region35: #{wide_resnet_forward.10} parent=27 // pred_region
        %s193 = smul.u32 64, %s11
        %p194 = scmp.lt.s32.totalorder %s193, 255
        %s195 = scalar_select %p194, %s193, 255
        %s196 = smul.addr %s195, 8
        %s197 = scalar_lea.vmem %s2, %s196
        %s198 = smul.u32 64, %s11
      $region36: #{wide_resnet_forward.10} parent=27 // pred_fallthru
        _
    $region28: #{wide_resnet_forward.10} parent=5 // pred_fallthru
      _
    %p199 = scmp.le.s32.totalorder 1, %s11
    %p200 = scmp.lt.s32.totalorder %s11, 5
    %p201 = pnand %p199, %p200
    %p202 = pneg %p201
    // Predicated region
    $region37: #{wide_resnet_forward.10} parent=5 // pred_check
      _
    $region38: #{wide_resnet_forward.10} parent=5 // pred_check_branch
      %204 = sbr.rel (%p201) target = $region40
    $region39: #{wide_resnet_forward.10} parent=5 // pred_region
      %s205 = ssub.s32 %s11, 1
      %s206 = smul.u32 64, %s16
      %p207 = scmp.lt.s32.totalorder %s206, 255
      %s208 = scalar_select %p207, %s206, 255
      %s209 = smul.addr %s208, 2
      %s210 = smul.addr %s209, 4
      %s211 = scalar_lea.vmem %s0, %s210
      %p212 = pneg %p37
      %p213 = pneg %p34
      %p214 = pneg %p58
      %p215 = pneg %p55
      %s216 = smul.u32 64, %s16
      %p217 = scmp.lt.s32.totalorder %s216, 255
      %s218 = scalar_select %p217, %s216, 255
      %s219 = smul.addr %s218, 8
      %s220 = scalar_lea.vmem %s2, %s219
      %p221 = pneg %p84
      %p222 = pneg %p81
      %p223 = pneg %p105
      %p224 = pneg %p102
      %p225 = pneg %p126
      %p226 = pneg %p123
      %p227 = pneg %p152
      %p228 = pneg %p149
      %s229 = smul.u32 64, %s16
      %p230 = scmp.lt.s32.totalorder %s229, 255
      %s231 = scalar_select %p230, %s229, 255
      %s232 = smul.addr %s231, 8
      %s233 = scalar_lea.vmem %s5, %s232
      %s234 = smul.u32 64, %s16
      %p235 = scmp.lt.s32.totalorder %s234, 255
      %s236 = scalar_select %p235, %s234, 255
      %s237 = smul.addr %s236, 2
      %s238 = smul.addr %s237, 4
      %s239 = scalar_lea.vmem %s0, %s238
      %s240 = smul.u32 64, %s16
      %s241 = smul.u32 64, %s16
      %p242 = scmp.lt.s32.totalorder %s241, 255
      %s243 = scalar_select %p242, %s241, 255
      %s244 = smul.addr %s243, 8
      %s245 = scalar_lea.vmem %s2, %s244
      %s246 = smul.u32 64, %s16
      %s247 = smul.u32 64, %s16
      %p248 = scmp.lt.s32.totalorder %s247, 255
      %s249 = scalar_select %p248, %s247, 255
      %s250 = smul.addr %s249, 8
      %s251 = scalar_lea.vmem %s5, %s250
      %s252 = smul.u32 64, %s16
      %v254 = vld [vmem:[%s239] sm:$0xff]
      %v255 = vld [vmem:[%s239 + $0x8] sm:$0xff]
      %v256 = vld [vmem:[%s239 + $0x10] sm:$0xff]
      %v257 = vld [vmem:[%s239 + $0x18] sm:$0xff]
      %v258 = vld [vmem:[%s239 + $0x20] sm:$0xff]
      %v259 = vld [vmem:[%s239 + $0x28] sm:$0xff]
      %v260 = vld [vmem:[%s239 + $0x30] sm:$0xff]
      %v261 = vld [vmem:[%s239 + $0x38] sm:$0xff]
      %v262 = vld [vmem:[%s239 + $0x40] sm:$0xff]
      %v263 = vld [vmem:[%s239 + $0x48] sm:$0xff]
      %v264 = vld [vmem:[%s239 + $0x50] sm:$0xff]
      %v265 = vld [vmem:[%s239 + $0x58] sm:$0xff]
      %v266 = vld [vmem:[%s239 + $0x60] sm:$0xff]
      %v267 = vld [vmem:[%s239 + $0x68] sm:$0xff]
      %v268 = vld [vmem:[%s239 + $0x70] sm:$0xff]
      %v269 = vld [vmem:[%s239 + $0x78] sm:$0xff]
      %v270 = vld [vmem:[%s239 + $0x80] sm:$0xff]
      %v271 = vld [vmem:[%s239 + $0x88] sm:$0xff]
      %v272 = vld [vmem:[%s239 + $0x90] sm:$0xff]
      %v273 = vld [vmem:[%s239 + $0x98] sm:$0xff]
      %v274 = vld [vmem:[%s239 + $0xa0] sm:$0xff]
      %v275 = vld [vmem:[%s239 + $0xa8] sm:$0xff]
      %v276 = vld [vmem:[%s239 + $0xb0] sm:$0xff]
      %v277 = vld [vmem:[%s239 + $0xb8] sm:$0xff]
      %v278 = vld [vmem:[%s239 + $0xc0] sm:$0xff]
      %v279 = vld [vmem:[%s239 + $0xc8] sm:$0xff]
      %v280 = vld [vmem:[%s239 + $0xd0] sm:$0xff]
      %v281 = vld [vmem:[%s239 + $0xd8] sm:$0xff]
      %v282 = vld [vmem:[%s239 + $0xe0] sm:$0xff]
      %v283 = vld [vmem:[%s239 + $0xe8] sm:$0xff]
      %v284 = vld [vmem:[%s239 + $0xf0] sm:$0xff]
      %v285 = vld [vmem:[%s239 + $0xf8] sm:$0xff]
      %v286 = vld [vmem:[%s239 + $0x100] sm:$0xff]
      %v287 = vld [vmem:[%s239 + $0x108] sm:$0xff]
      %v288 = vld [vmem:[%s239 + $0x110] sm:$0xff]
      %v289 = vld [vmem:[%s239 + $0x118] sm:$0xff]
      %v290 = vld [vmem:[%s239 + $0x120] sm:$0xff]
      %v291 = vld [vmem:[%s239 + $0x128] sm:$0xff]
      %v292 = vld [vmem:[%s239 + $0x130] sm:$0xff]
      %v293 = vld [vmem:[%s239 + $0x138] sm:$0xff]
      %v294 = vld [vmem:[%s239 + $0x140] sm:$0xff]
      %v295 = vld [vmem:[%s239 + $0x148] sm:$0xff]
      %v296 = vld [vmem:[%s239 + $0x150] sm:$0xff]
      %v297 = vld [vmem:[%s239 + $0x158] sm:$0xff]
      %v298 = vld [vmem:[%s239 + $0x160] sm:$0xff]
      %v299 = vld [vmem:[%s239 + $0x168] sm:$0xff]
      %v300 = vld [vmem:[%s239 + $0x170] sm:$0xff]
      %v301 = vld [vmem:[%s239 + $0x178] sm:$0xff]
      %v302 = vld [vmem:[%s239 + $0x180] sm:$0xff]
      %v303 = vld [vmem:[%s239 + $0x188] sm:$0xff]
      %v304 = vld [vmem:[%s239 + $0x190] sm:$0xff]
      %v305 = vld [vmem:[%s239 + $0x198] sm:$0xff]
      %v306 = vld [vmem:[%s239 + $0x1a0] sm:$0xff]
      %v307 = vld [vmem:[%s239 + $0x1a8] sm:$0xff]
      %v308 = vld [vmem:[%s239 + $0x1b0] sm:$0xff]
      %v309 = vld [vmem:[%s239 + $0x1b8] sm:$0xff]
      %v310 = vld [vmem:[%s239 + $0x1c0] sm:$0xff]
      %v311 = vld [vmem:[%s239 + $0x1c8] sm:$0xff]
      %v312 = vld [vmem:[%s239 + $0x1d0] sm:$0xff]
      %v313 = vld [vmem:[%s239 + $0x1d8] sm:$0xff]
      %v314 = vld [vmem:[%s239 + $0x1e0] sm:$0xff]
      %v315 = vld [vmem:[%s239 + $0x1e8] sm:$0xff]
      %v316 = vld [vmem:[%s239 + $0x1f0] sm:$0xff]
      %v317 = vld [vmem:[%s239 + $0x1f8] sm:$0xff]
      %v318 = vld [vmem:[%s1] sm:$0xf]
      %v319 = vld [vmem:[%s1 + $0x4] sm:$0xf]
      %v320 = vld [vmem:[%s1 + $0x8] sm:$0xf]
      %v321 = vld [vmem:[%s1 + $0xc] sm:$0xf]
      %v322 = vld [vmem:[%s1 + $0x10] sm:$0xf]
      %v323 = vld [vmem:[%s1 + $0x14] sm:$0xf]
      %v324 = vld [vmem:[%s1 + $0x18] sm:$0xf]
      %v325 = vld [vmem:[%s1 + $0x1c] sm:$0xf]
      %v326 = vld [vmem:[%s1 + $0x20] sm:$0xf]
      %v327 = vld [vmem:[%s1 + $0x24] sm:$0xf]
      %v328 = vld [vmem:[%s1 + $0x28] sm:$0xf]
      %v329 = vld [vmem:[%s1 + $0x2c] sm:$0xf]
      %v330 = vld [vmem:[%s1 + $0x30] sm:$0xf]
      %v331 = vld [vmem:[%s1 + $0x34] sm:$0xf]
      %v332 = vld [vmem:[%s1 + $0x38] sm:$0xf]
      %v333 = vld [vmem:[%s1 + $0x3c] sm:$0xf]
      %v334 = vld [vmem:[%s1 + $0x40] sm:$0xf]
      %v335 = vld [vmem:[%s1 + $0x44] sm:$0xf]
      %v336 = vld [vmem:[%s245] sm:$0xff]
      %v337 = vld [vmem:[%s245 + $0x8] sm:$0xff]
      %v338 = vld [vmem:[%s245 + $0x10] sm:$0xff]
      %v339 = vld [vmem:[%s245 + $0x18] sm:$0xff]
      %v340 = vld [vmem:[%s245 + $0x20] sm:$0xff]
      %v341 = vld [vmem:[%s245 + $0x28] sm:$0xff]
      %v342 = vld [vmem:[%s245 + $0x30] sm:$0xff]
      %v343 = vld [vmem:[%s245 + $0x38] sm:$0xff]
      %v344 = vld [vmem:[%s245 + $0x40] sm:$0xff]
      %v345 = vld [vmem:[%s245 + $0x48] sm:$0xff]
      %v346 = vld [vmem:[%s245 + $0x50] sm:$0xff]
      %v347 = vld [vmem:[%s245 + $0x58] sm:$0xff]
      %v348 = vld [vmem:[%s245 + $0x60] sm:$0xff]
      %v349 = vld [vmem:[%s245 + $0x68] sm:$0xff]
      %v350 = vld [vmem:[%s245 + $0x70] sm:$0xff]
      %v351 = vld [vmem:[%s245 + $0x78] sm:$0xff]
      %v352 = vld [vmem:[%s245 + $0x80] sm:$0xff]
      %v353 = vld [vmem:[%s245 + $0x88] sm:$0xff]
      %v354 = vld [vmem:[%s245 + $0x90] sm:$0xff]
      %v355 = vld [vmem:[%s245 + $0x98] sm:$0xff]
      %v356 = vld [vmem:[%s245 + $0xa0] sm:$0xff]
      %v357 = vld [vmem:[%s245 + $0xa8] sm:$0xff]
      %v358 = vld [vmem:[%s245 + $0xb0] sm:$0xff]
      %v359 = vld [vmem:[%s245 + $0xb8] sm:$0xff]
      %v360 = vld [vmem:[%s245 + $0xc0] sm:$0xff]
      %v361 = vld [vmem:[%s245 + $0xc8] sm:$0xff]
      %v362 = vld [vmem:[%s245 + $0xd0] sm:$0xff]
      %v363 = vld [vmem:[%s245 + $0xd8] sm:$0xff]
      %v364 = vld [vmem:[%s245 + $0xe0] sm:$0xff]
      %v365 = vld [vmem:[%s245 + $0xe8] sm:$0xff]
      %v366 = vld [vmem:[%s245 + $0xf0] sm:$0xff]
      %v367 = vld [vmem:[%s245 + $0xf8] sm:$0xff]
      %v368 = vld [vmem:[%s245 + $0x100] sm:$0xff]
      %v369 = vld [vmem:[%s245 + $0x108] sm:$0xff]
      %v370 = vld [vmem:[%s245 + $0x110] sm:$0xff]
      %v371 = vld [vmem:[%s245 + $0x118] sm:$0xff]
      %v372 = vld [vmem:[%s245 + $0x120] sm:$0xff]
      %v373 = vld [vmem:[%s245 + $0x128] sm:$0xff]
      %v374 = vld [vmem:[%s245 + $0x130] sm:$0xff]
      %v375 = vld [vmem:[%s245 + $0x138] sm:$0xff]
      %v376 = vld [vmem:[%s245 + $0x140] sm:$0xff]
      %v377 = vld [vmem:[%s245 + $0x148] sm:$0xff]
      %v378 = vld [vmem:[%s245 + $0x150] sm:$0xff]
      %v379 = vld [vmem:[%s245 + $0x158] sm:$0xff]
      %v380 = vld [vmem:[%s245 + $0x160] sm:$0xff]
      %v381 = vld [vmem:[%s245 + $0x168] sm:$0xff]
      %v382 = vld [vmem:[%s245 + $0x170] sm:$0xff]
      %v383 = vld [vmem:[%s245 + $0x178] sm:$0xff]
      %v384 = vld [vmem:[%s245 + $0x180] sm:$0xff]
      %v385 = vld [vmem:[%s245 + $0x188] sm:$0xff]
      %v386 = vld [vmem:[%s245 + $0x190] sm:$0xff]
      %v387 = vld [vmem:[%s245 + $0x198] sm:$0xff]
      %v388 = vld [vmem:[%s245 + $0x1a0] sm:$0xff]
      %v389 = vld [vmem:[%s245 + $0x1a8] sm:$0xff]
      %v390 = vld [vmem:[%s245 + $0x1b0] sm:$0xff]
      %v391 = vld [vmem:[%s245 + $0x1b8] sm:$0xff]
      %v392 = vld [vmem:[%s245 + $0x1c0] sm:$0xff]
      %v393 = vld [vmem:[%s245 + $0x1c8] sm:$0xff]
      %v394 = vld [vmem:[%s245 + $0x1d0] sm:$0xff]
      %v395 = vld [vmem:[%s245 + $0x1d8] sm:$0xff]
      %v396 = vld [vmem:[%s245 + $0x1e0] sm:$0xff]
      %v397 = vld [vmem:[%s245 + $0x1e8] sm:$0xff]
      %v398 = vld [vmem:[%s245 + $0x1f0] sm:$0xff]
      %v399 = vld [vmem:[%s245 + $0x1f8] sm:$0xff]
      %v464 = vunpack.c.l.b16 %v254
      %v465 = vunpack.c.h.b16 %v254
      %v466 = vunpack.c.l.b16 %v255
      %v467 = vunpack.c.h.b16 %v255
      %v468 = vunpack.c.l.b16 %v256
      %v469 = vunpack.c.h.b16 %v256
      %v470 = vunpack.c.l.b16 %v257
      %v471 = vunpack.c.h.b16 %v257
      %v472 = vunpack.c.l.b16 %v258
      %v473 = vunpack.c.h.b16 %v258
      %v474 = vunpack.c.l.b16 %v259
      %v475 = vunpack.c.h.b16 %v259
      %v476 = vunpack.c.l.b16 %v260
      %v477 = vunpack.c.h.b16 %v260
      %v478 = vunpack.c.l.b16 %v261
      %v479 = vunpack.c.h.b16 %v261
      %v480 = vunpack.c.l.b16 %v262
      %v481 = vunpack.c.h.b16 %v262
      %v482 = vunpack.c.l.b16 %v263
      %v483 = vunpack.c.h.b16 %v263
      %v484 = vunpack.c.l.b16 %v264
      %v485 = vunpack.c.h.b16 %v264
      %v486 = vunpack.c.l.b16 %v265
      %v487 = vunpack.c.h.b16 %v265
      %v488 = vunpack.c.l.b16 %v266
      %v489 = vunpack.c.h.b16 %v266
      %v490 = vunpack.c.l.b16 %v267
      %v491 = vunpack.c.h.b16 %v267
      %v492 = vunpack.c.l.b16 %v268
      %v493 = vunpack.c.h.b16 %v268
      %v494 = vunpack.c.l.b16 %v269
      %v495 = vunpack.c.h.b16 %v269
      %v496 = vunpack.c.l.b16 %v270
      %v497 = vunpack.c.h.b16 %v270
      %v498 = vunpack.c.l.b16 %v271
      %v499 = vunpack.c.h.b16 %v271
      %v500 = vunpack.c.l.b16 %v272
      %v501 = vunpack.c.h.b16 %v272
      %v502 = vunpack.c.l.b16 %v273
      %v503 = vunpack.c.h.b16 %v273
      %v504 = vunpack.c.l.b16 %v274
      %v505 = vunpack.c.h.b16 %v274
      %v506 = vunpack.c.l.b16 %v275
      %v507 = vunpack.c.h.b16 %v275
      %v508 = vunpack.c.l.b16 %v276
      %v509 = vunpack.c.h.b16 %v276
      %v510 = vunpack.c.l.b16 %v277
      %v511 = vunpack.c.h.b16 %v277
      %v512 = vunpack.c.l.b16 %v278
      %v513 = vunpack.c.h.b16 %v278
      %v514 = vunpack.c.l.b16 %v279
      %v515 = vunpack.c.h.b16 %v279
      %v516 = vunpack.c.l.b16 %v280
      %v517 = vunpack.c.h.b16 %v280
      %v518 = vunpack.c.l.b16 %v281
      %v519 = vunpack.c.h.b16 %v281
      %v520 = vunpack.c.l.b16 %v282
      %v521 = vunpack.c.h.b16 %v282
      %v522 = vunpack.c.l.b16 %v283
      %v523 = vunpack.c.h.b16 %v283
      %v524 = vunpack.c.l.b16 %v284
      %v525 = vunpack.c.h.b16 %v284
      %v526 = vunpack.c.l.b16 %v285
      %v527 = vunpack.c.h.b16 %v285
      %v528 = vunpack.c.l.b16 %v286
      %v529 = vunpack.c.h.b16 %v286
      %v530 = vunpack.c.l.b16 %v287
      %v531 = vunpack.c.h.b16 %v287
      %v532 = vunpack.c.l.b16 %v288
      %v533 = vunpack.c.h.b16 %v288
      %v534 = vunpack.c.l.b16 %v289
      %v535 = vunpack.c.h.b16 %v289
      %v536 = vunpack.c.l.b16 %v290
      %v537 = vunpack.c.h.b16 %v290
      %v538 = vunpack.c.l.b16 %v291
      %v539 = vunpack.c.h.b16 %v291
      %v540 = vunpack.c.l.b16 %v292
      %v541 = vunpack.c.h.b16 %v292
      %v542 = vunpack.c.l.b16 %v293
      %v543 = vunpack.c.h.b16 %v293
      %v544 = vunpack.c.l.b16 %v294
      %v545 = vunpack.c.h.b16 %v294
      %v546 = vunpack.c.l.b16 %v295
      %v547 = vunpack.c.h.b16 %v295
      %v548 = vunpack.c.l.b16 %v296
      %v549 = vunpack.c.h.b16 %v296
      %v550 = vunpack.c.l.b16 %v297
      %v551 = vunpack.c.h.b16 %v297
      %v552 = vunpack.c.l.b16 %v298
      %v553 = vunpack.c.h.b16 %v298
      %v554 = vunpack.c.l.b16 %v299
      %v555 = vunpack.c.h.b16 %v299
      %v556 = vunpack.c.l.b16 %v300
      %v557 = vunpack.c.h.b16 %v300
      %v558 = vunpack.c.l.b16 %v301
      %v559 = vunpack.c.h.b16 %v301
      %v560 = vunpack.c.l.b16 %v302
      %v561 = vunpack.c.h.b16 %v302
      %v562 = vunpack.c.l.b16 %v303
      %v563 = vunpack.c.h.b16 %v303
      %v564 = vunpack.c.l.b16 %v304
      %v565 = vunpack.c.h.b16 %v304
      %v566 = vunpack.c.l.b16 %v305
      %v567 = vunpack.c.h.b16 %v305
      %v568 = vunpack.c.l.b16 %v306
      %v569 = vunpack.c.h.b16 %v306
      %v570 = vunpack.c.l.b16 %v307
      %v571 = vunpack.c.h.b16 %v307
      %v572 = vunpack.c.l.b16 %v308
      %v573 = vunpack.c.h.b16 %v308
      %v574 = vunpack.c.l.b16 %v309
      %v575 = vunpack.c.h.b16 %v309
      %v576 = vunpack.c.l.b16 %v310
      %v577 = vunpack.c.h.b16 %v310
      %v578 = vunpack.c.l.b16 %v311
      %v579 = vunpack.c.h.b16 %v311
      %v580 = vunpack.c.l.b16 %v312
      %v581 = vunpack.c.h.b16 %v312
      %v582 = vunpack.c.l.b16 %v313
      %v583 = vunpack.c.h.b16 %v313
      %v584 = vunpack.c.l.b16 %v314
      %v585 = vunpack.c.h.b16 %v314
      %v586 = vunpack.c.l.b16 %v315
      %v587 = vunpack.c.h.b16 %v315
      %v588 = vunpack.c.l.b16 %v316
      %v589 = vunpack.c.h.b16 %v316
      %v590 = vunpack.c.l.b16 %v317
      %v591 = vunpack.c.h.b16 %v317
      %v592 = vpack.c.b16 %v466, %v464
      %v593 = vpack.c.b16 %v467, %v465
      %v594 = vpack.c.b16 %v470, %v468
      %v595 = vpack.c.b16 %v471, %v469
      %v596 = vpack.c.b16 %v474, %v472
      %v597 = vpack.c.b16 %v475, %v473
      %v598 = vpack.c.b16 %v478, %v476
      %v599 = vpack.c.b16 %v479, %v477
      %v600 = vpack.c.b16 %v482, %v480
      %v601 = vpack.c.b16 %v483, %v481
      %v602 = vpack.c.b16 %v486, %v484
      %v603 = vpack.c.b16 %v487, %v485
      %v604 = vpack.c.b16 %v490, %v488
      %v605 = vpack.c.b16 %v491, %v489
      %v606 = vpack.c.b16 %v494, %v492
      %v607 = vpack.c.b16 %v495, %v493
      %v608 = vpack.c.b16 %v498, %v496
      %v609 = vpack.c.b16 %v499, %v497
      %v610 = vpack.c.b16 %v502, %v500
      %v611 = vpack.c.b16 %v503, %v501
      %v612 = vpack.c.b16 %v506, %v504
      %v613 = vpack.c.b16 %v507, %v505
      %v614 = vpack.c.b16 %v510, %v508
      %v615 = vpack.c.b16 %v511, %v509
      %v616 = vpack.c.b16 %v514, %v512
      %v617 = vpack.c.b16 %v515, %v513
      %v618 = vpack.c.b16 %v518, %v516
      %v619 = vpack.c.b16 %v519, %v517
      %v620 = vpack.c.b16 %v522, %v520
      %v621 = vpack.c.b16 %v523, %v521
      %v622 = vpack.c.b16 %v526, %v524
      %v623 = vpack.c.b16 %v527, %v525
      %v624 = vpack.c.b16 %v530, %v528
      %v625 = vpack.c.b16 %v531, %v529
      %v626 = vpack.c.b16 %v534, %v532
      %v627 = vpack.c.b16 %v535, %v533
      %v628 = vpack.c.b16 %v538, %v536
      %v629 = vpack.c.b16 %v539, %v537
      %v630 = vpack.c.b16 %v542, %v540
      %v631 = vpack.c.b16 %v543, %v541
      %v632 = vpack.c.b16 %v546, %v544
      %v633 = vpack.c.b16 %v547, %v545
      %v634 = vpack.c.b16 %v550, %v548
      %v635 = vpack.c.b16 %v551, %v549
      %v636 = vpack.c.b16 %v554, %v552
      %v637 = vpack.c.b16 %v555, %v553
      %v638 = vpack.c.b16 %v558, %v556
      %v639 = vpack.c.b16 %v559, %v557
      %v640 = vpack.c.b16 %v562, %v560
      %v641 = vpack.c.b16 %v563, %v561
      %v642 = vpack.c.b16 %v566, %v564
      %v643 = vpack.c.b16 %v567, %v565
      %v644 = vpack.c.b16 %v570, %v568
      %v645 = vpack.c.b16 %v571, %v569
      %v646 = vpack.c.b16 %v574, %v572
      %v647 = vpack.c.b16 %v575, %v573
      %v648 = vpack.c.b16 %v578, %v576
      %v649 = vpack.c.b16 %v579, %v577
      %v650 = vpack.c.b16 %v582, %v580
      %v651 = vpack.c.b16 %v583, %v581
      %v652 = vpack.c.b16 %v586, %v584
      %v653 = vpack.c.b16 %v587, %v585
      %v654 = vpack.c.b16 %v590, %v588
      %v655 = vpack.c.b16 %v591, %v589
      %v706 = vunpack.c.l.b16 %v318
      %v707 = vunpack.c.l.b16 %v319
      %v708 = vunpack.c.l.b16 %v320
      %v709 = vunpack.c.l.b16 %v321
      %v710 = vunpack.c.l.b16 %v322
      %v711 = vunpack.c.l.b16 %v323
      %v712 = vunpack.c.l.b16 %v324
      %v713 = vunpack.c.l.b16 %v325
      %v714 = vunpack.c.l.b16 %v326
      %v715 = vunpack.c.l.b16 %v327
      %v716 = vunpack.c.l.b16 %v328
      %v717 = vunpack.c.l.b16 %v329
      %v718 = vunpack.c.l.b16 %v330
      %v719 = vunpack.c.l.b16 %v331
      %v720 = vunpack.c.l.b16 %v332
      %v721 = vunpack.c.l.b16 %v333
      %v722 = vunpack.c.l.b16 %v334
      %v723 = vunpack.c.l.b16 %v335
      %v724 = vpack.c.b16 %v707, %v706
      %v725 = vpack.c.b16 %v709, %v708
      %v726 = vpack.c.b16 %v711, %v710
      %v727 = vpack.c.b16 %v713, %v712
      %v728 = vpack.c.b16 %v715, %v714
      %v729 = vpack.c.b16 %v717, %v716
      %v730 = vpack.c.b16 %v719, %v718
      %v731 = vpack.c.b16 %v721, %v720
      %v732 = vpack.c.b16 %v723, %v722
      %vm742 = vcmask 130048
      %v744 = vsel %vm742, %v593, 0
      %v747 = vsel %vm742, %v595, 0
      %v750 = vsel %vm742, %v597, 0
      %v753 = vsel %vm742, %v599, 0
      %v756 = vsel %vm742, %v601, 0
      %v759 = vsel %vm742, %v603, 0
      %v762 = vsel %vm742, %v605, 0
      %v765 = vsel %vm742, %v607, 0
      %v768 = vsel %vm742, %v609, 0
      %v771 = vsel %vm742, %v611, 0
      %v774 = vsel %vm742, %v613, 0
      %v777 = vsel %vm742, %v615, 0
      %v780 = vsel %vm742, %v617, 0
      %v783 = vsel %vm742, %v619, 0
      %v786 = vsel %vm742, %v621, 0
      %v789 = vsel %vm742, %v623, 0
      %v792 = vsel %vm742, %v625, 0
      %v795 = vsel %vm742, %v627, 0
      %v798 = vsel %vm742, %v629, 0
      %v801 = vsel %vm742, %v631, 0
      %v804 = vsel %vm742, %v633, 0
      %v807 = vsel %vm742, %v635, 0
      %v810 = vsel %vm742, %v637, 0
      %v813 = vsel %vm742, %v639, 0
      %v816 = vsel %vm742, %v641, 0
      %v819 = vsel %vm742, %v643, 0
      %v822 = vsel %vm742, %v645, 0
      %v825 = vsel %vm742, %v647, 0
      %v828 = vsel %vm742, %v649, 0
      %v831 = vsel %vm742, %v651, 0
      %v834 = vsel %vm742, %v653, 0
      %v837 = vsel %vm742, %v655, 0
      %839 = vmatpush.bf16.msra.mxu0 %v731
      %840 = vmatpush.bf16.msra.mxu0 %v730
      %841 = vmatpush.bf16.msra.mxu0 %v729
      %842 = vmatpush.bf16.msra.mxu0 %v728
      %843 = vmatpush.bf16.msra.mxu0 %v727
      %844 = vmatpush.bf16.msra.mxu0 %v726
      %845 = vmatpush.bf16.msra.mxu0 %v725
      %846 = vmatpush.bf16.msra.mxu0 %v724
      %847 = vmatmul.bf16.gmra.mxu0 %v592
      %v848 = vpop.f32.mrf.mxu0
      %v849 = vadd.f32 %v336, %v848
      %v850 = vpop.f32.mrf.mxu0
      %v851 = vadd.f32 %v337, %v850
      %852 = vmatmul.bf16.gmra.mxu0 %v594
      %v853 = vpop.f32.mrf.mxu0
      %v854 = vadd.f32 %v338, %v853
      %v855 = vpop.f32.mrf.mxu0
      %v856 = vadd.f32 %v339, %v855
      %857 = vmatmul.bf16.gmra.mxu0 %v596
      %v858 = vpop.f32.mrf.mxu0
      %v859 = vadd.f32 %v340, %v858
      %v860 = vpop.f32.mrf.mxu0
      %v861 = vadd.f32 %v341, %v860
      %862 = vmatmul.bf16.gmra.mxu0 %v598
      %v863 = vpop.f32.mrf.mxu0
      %v864 = vadd.f32 %v342, %v863
      %v865 = vpop.f32.mrf.mxu0
      %v866 = vadd.f32 %v343, %v865
      %867 = vmatmul.bf16.gmra.mxu0 %v600
      %v868 = vpop.f32.mrf.mxu0
      %v869 = vadd.f32 %v344, %v868
      %v870 = vpop.f32.mrf.mxu0
      %v871 = vadd.f32 %v345, %v870
      %872 = vmatmul.bf16.gmra.mxu0 %v602
      %v873 = vpop.f32.mrf.mxu0
      %v874 = vadd.f32 %v346, %v873
      %v875 = vpop.f32.mrf.mxu0
      %v876 = vadd.f32 %v347, %v875
      %877 = vmatmul.bf16.gmra.mxu0 %v604
      %v878 = vpop.f32.mrf.mxu0
      %v879 = vadd.f32 %v348, %v878
      %v880 = vpop.f32.mrf.mxu0
      %v881 = vadd.f32 %v349, %v880
      %882 = vmatmul.bf16.gmra.mxu0 %v606
      %v883 = vpop.f32.mrf.mxu0
      %v884 = vadd.f32 %v350, %v883
      %v885 = vpop.f32.mrf.mxu0
      %v886 = vadd.f32 %v351, %v885
      %887 = vmatmul.bf16.gmra.mxu0 %v608
      %v888 = vpop.f32.mrf.mxu0
      %v889 = vadd.f32 %v352, %v888
      %v890 = vpop.f32.mrf.mxu0
      %v891 = vadd.f32 %v353, %v890
      %892 = vmatmul.bf16.gmra.mxu0 %v610
      %v893 = vpop.f32.mrf.mxu0
      %v894 = vadd.f32 %v354, %v893
      %v895 = vpop.f32.mrf.mxu0
      %v896 = vadd.f32 %v355, %v895
      %897 = vmatmul.bf16.gmra.mxu0 %v612
      %v898 = vpop.f32.mrf.mxu0
      %v899 = vadd.f32 %v356, %v898
      %v900 = vpop.f32.mrf.mxu0
      %v901 = vadd.f32 %v357, %v900
      %902 = vmatmul.bf16.gmra.mxu0 %v614
      %v903 = vpop.f32.mrf.mxu0
      %v904 = vadd.f32 %v358, %v903
      %v905 = vpop.f32.mrf.mxu0
      %v906 = vadd.f32 %v359, %v905
      %907 = vmatmul.bf16.gmra.mxu0 %v616
      %v908 = vpop.f32.mrf.mxu0
      %v909 = vadd.f32 %v360, %v908
      %v910 = vpop.f32.mrf.mxu0
      %v911 = vadd.f32 %v361, %v910
      %912 = vmatmul.bf16.gmra.mxu0 %v618
      %v913 = vpop.f32.mrf.mxu0
      %v914 = vadd.f32 %v362, %v913
      %v915 = vpop.f32.mrf.mxu0
      %v916 = vadd.f32 %v363, %v915
      %917 = vmatmul.bf16.gmra.mxu0 %v620
      %v918 = vpop.f32.mrf.mxu0
      %v919 = vadd.f32 %v364, %v918
      %v920 = vpop.f32.mrf.mxu0
      %v921 = vadd.f32 %v365, %v920
      %922 = vmatmul.bf16.gmra.mxu0 %v622
      %v923 = vpop.f32.mrf.mxu0
      %v924 = vadd.f32 %v366, %v923
      %v925 = vpop.f32.mrf.mxu0
      %v926 = vadd.f32 %v367, %v925
      %927 = vmatmul.bf16.gmra.mxu0 %v624
      %v928 = vpop.f32.mrf.mxu0
      %v929 = vadd.f32 %v368, %v928
      %v930 = vpop.f32.mrf.mxu0
      %v931 = vadd.f32 %v369, %v930
      %932 = vmatmul.bf16.gmra.mxu0 %v626
      %v933 = vpop.f32.mrf.mxu0
      %v934 = vadd.f32 %v370, %v933
      %v935 = vpop.f32.mrf.mxu0
      %v936 = vadd.f32 %v371, %v935
      %937 = vmatmul.bf16.gmra.mxu0 %v628
      %v938 = vpop.f32.mrf.mxu0
      %v939 = vadd.f32 %v372, %v938
      %v940 = vpop.f32.mrf.mxu0
      %v941 = vadd.f32 %v373, %v940
      %942 = vmatmul.bf16.gmra.mxu0 %v630
      %v943 = vpop.f32.mrf.mxu0
      %v944 = vadd.f32 %v374, %v943
      %v945 = vpop.f32.mrf.mxu0
      %v946 = vadd.f32 %v375, %v945
      %947 = vmatmul.bf16.gmra.mxu0 %v632
      %v948 = vpop.f32.mrf.mxu0
      %v949 = vadd.f32 %v376, %v948
      %v950 = vpop.f32.mrf.mxu0
      %v951 = vadd.f32 %v377, %v950
      %952 = vmatmul.bf16.gmra.mxu0 %v634
      %v953 = vpop.f32.mrf.mxu0
      %v954 = vadd.f32 %v378, %v953
      %v955 = vpop.f32.mrf.mxu0
      %v956 = vadd.f32 %v379, %v955
      %957 = vmatmul.bf16.gmra.mxu0 %v636
      %v958 = vpop.f32.mrf.mxu0
      %v959 = vadd.f32 %v380, %v958
      %v960 = vpop.f32.mrf.mxu0
      %v961 = vadd.f32 %v381, %v960
      %962 = vmatmul.bf16.gmra.mxu0 %v638
      %v963 = vpop.f32.mrf.mxu0
      %v964 = vadd.f32 %v382, %v963
      %v965 = vpop.f32.mrf.mxu0
      %v966 = vadd.f32 %v383, %v965
      %967 = vmatmul.bf16.gmra.mxu0 %v640
      %v968 = vpop.f32.mrf.mxu0
      %v969 = vadd.f32 %v384, %v968
      %v970 = vpop.f32.mrf.mxu0
      %v971 = vadd.f32 %v385, %v970
      %972 = vmatmul.bf16.gmra.mxu0 %v642
      %v973 = vpop.f32.mrf.mxu0
      %v974 = vadd.f32 %v386, %v973
      %v975 = vpop.f32.mrf.mxu0
      %v976 = vadd.f32 %v387, %v975
      %977 = vmatmul.bf16.gmra.mxu0 %v644
      %v978 = vpop.f32.mrf.mxu0
      %v979 = vadd.f32 %v388, %v978
      %v980 = vpop.f32.mrf.mxu0
      %v981 = vadd.f32 %v389, %v980
      %982 = vmatmul.bf16.gmra.mxu0 %v646
      %v983 = vpop.f32.mrf.mxu0
      %v984 = vadd.f32 %v390, %v983
      %v985 = vpop.f32.mrf.mxu0
      %v986 = vadd.f32 %v391, %v985
      %987 = vmatmul.bf16.gmra.mxu0 %v648
      %v988 = vpop.f32.mrf.mxu0
      %v989 = vadd.f32 %v392, %v988
      %v990 = vpop.f32.mrf.mxu0
      %v991 = vadd.f32 %v393, %v990
      %992 = vmatmul.bf16.gmra.mxu0 %v650
      %v993 = vpop.f32.mrf.mxu0
      %v994 = vadd.f32 %v394, %v993
      %v995 = vpop.f32.mrf.mxu0
      %v996 = vadd.f32 %v395, %v995
      %997 = vmatmul.bf16.gmra.mxu0 %v652
      %v998 = vpop.f32.mrf.mxu0
      %v999 = vadd.f32 %v396, %v998
      %v1000 = vpop.f32.mrf.mxu0
      %v1001 = vadd.f32 %v397, %v1000
      %1002 = vmatmul.bf16.gmra.mxu0 %v654
      %v1003 = vpop.f32.mrf.mxu0
      %v1004 = vadd.f32 %v398, %v1003
      %v1005 = vpop.f32.mrf.mxu0
      %v1006 = vadd.f32 %v399, %v1005
      %1007 = vdwg.mxu0
      %1008 = vmatpush.bf16.msra.mxu0 0
      %1009 = vmatpush.bf16.msra.mxu0 0
      %1010 = vmatpush.bf16.msra.mxu0 0
      %1011 = vmatpush.bf16.msra.mxu0 0
      %1012 = vmatpush.bf16.msra.mxu0 0
      %1013 = vmatpush.bf16.msra.mxu0 0
      %1014 = vmatpush.bf16.msra.mxu0 0
      %1015 = vmatpush.bf16.msra.mxu0 %v732
      %1016 = vmatmul.bf16.gmra.mxu0 %v744
      %v1017 = vpop.f32.mrf.mxu0
      %v1018 = vadd.f32 %v849, %v1017
      %v1019 = vpop.f32.mrf.mxu0
      %v1020 = vadd.f32 %v851, %v1019
      %1021 = vmatmul.bf16.gmra.mxu0 %v747
      %v1022 = vpop.f32.mrf.mxu0
      %v1023 = vadd.f32 %v854, %v1022
      %v1024 = vpop.f32.mrf.mxu0
      %v1025 = vadd.f32 %v856, %v1024
      %1026 = vmatmul.bf16.gmra.mxu0 %v750
      %v1027 = vpop.f32.mrf.mxu0
      %v1028 = vadd.f32 %v859, %v1027
      %v1029 = vpop.f32.mrf.mxu0
      %v1030 = vadd.f32 %v861, %v1029
      %1031 = vmatmul.bf16.gmra.mxu0 %v753
      %v1032 = vpop.f32.mrf.mxu0
      %v1033 = vadd.f32 %v864, %v1032
      %v1034 = vpop.f32.mrf.mxu0
      %v1035 = vadd.f32 %v866, %v1034
      %1036 = vmatmul.bf16.gmra.mxu0 %v756
      %v1037 = vpop.f32.mrf.mxu0
      %v1038 = vadd.f32 %v869, %v1037
      %v1039 = vpop.f32.mrf.mxu0
      %v1040 = vadd.f32 %v871, %v1039
      %1041 = vmatmul.bf16.gmra.mxu0 %v759
      %v1042 = vpop.f32.mrf.mxu0
      %v1043 = vadd.f32 %v874, %v1042
      %v1044 = vpop.f32.mrf.mxu0
      %v1045 = vadd.f32 %v876, %v1044
      %1046 = vmatmul.bf16.gmra.mxu0 %v762
      %v1047 = vpop.f32.mrf.mxu0
      %v1048 = vadd.f32 %v879, %v1047
      %v1049 = vpop.f32.mrf.mxu0
      %v1050 = vadd.f32 %v881, %v1049
      %1051 = vmatmul.bf16.gmra.mxu0 %v765
      %v1052 = vpop.f32.mrf.mxu0
      %v1053 = vadd.f32 %v884, %v1052
      %v1054 = vpop.f32.mrf.mxu0
      %v1055 = vadd.f32 %v886, %v1054
      %1056 = vmatmul.bf16.gmra.mxu0 %v768
      %v1057 = vpop.f32.mrf.mxu0
      %v1058 = vadd.f32 %v889, %v1057
      %v1059 = vpop.f32.mrf.mxu0
      %v1060 = vadd.f32 %v891, %v1059
      %1061 = vmatmul.bf16.gmra.mxu0 %v771
      %v1062 = vpop.f32.mrf.mxu0
      %v1063 = vadd.f32 %v894, %v1062
      %v1064 = vpop.f32.mrf.mxu0
      %v1065 = vadd.f32 %v896, %v1064
      %1066 = vmatmul.bf16.gmra.mxu0 %v774
      %v1067 = vpop.f32.mrf.mxu0
      %v1068 = vadd.f32 %v899, %v1067
      %v1069 = vpop.f32.mrf.mxu0
      %v1070 = vadd.f32 %v901, %v1069
      %1071 = vmatmul.bf16.gmra.mxu0 %v777
      %v1072 = vpop.f32.mrf.mxu0
      %v1073 = vadd.f32 %v904, %v1072
      %v1074 = vpop.f32.mrf.mxu0
      %v1075 = vadd.f32 %v906, %v1074
      %1076 = vmatmul.bf16.gmra.mxu0 %v780
      %v1077 = vpop.f32.mrf.mxu0
      %v1078 = vadd.f32 %v909, %v1077
      %v1079 = vpop.f32.mrf.mxu0
      %v1080 = vadd.f32 %v911, %v1079
      %1081 = vmatmul.bf16.gmra.mxu0 %v783
      %v1082 = vpop.f32.mrf.mxu0
      %v1083 = vadd.f32 %v914, %v1082
      %v1084 = vpop.f32.mrf.mxu0
      %v1085 = vadd.f32 %v916, %v1084
      %1086 = vmatmul.bf16.gmra.mxu0 %v786
      %v1087 = vpop.f32.mrf.mxu0
      %v1088 = vadd.f32 %v919, %v1087
      %v1089 = vpop.f32.mrf.mxu0
      %v1090 = vadd.f32 %v921, %v1089
      %1091 = vmatmul.bf16.gmra.mxu0 %v789
      %v1092 = vpop.f32.mrf.mxu0
      %v1093 = vadd.f32 %v924, %v1092
      %v1094 = vpop.f32.mrf.mxu0
      %v1095 = vadd.f32 %v926, %v1094
      %1096 = vmatmul.bf16.gmra.mxu0 %v792
      %v1097 = vpop.f32.mrf.mxu0
      %v1098 = vadd.f32 %v929, %v1097
      %v1099 = vpop.f32.mrf.mxu0
      %v1100 = vadd.f32 %v931, %v1099
      %1101 = vmatmul.bf16.gmra.mxu0 %v795
      %v1102 = vpop.f32.mrf.mxu0
      %v1103 = vadd.f32 %v934, %v1102
      %v1104 = vpop.f32.mrf.mxu0
      %v1105 = vadd.f32 %v936, %v1104
      %1106 = vmatmul.bf16.gmra.mxu0 %v798
      %v1107 = vpop.f32.mrf.mxu0
      %v1108 = vadd.f32 %v939, %v1107
      %v1109 = vpop.f32.mrf.mxu0
      %v1110 = vadd.f32 %v941, %v1109
      %1111 = vmatmul.bf16.gmra.mxu0 %v801
      %v1112 = vpop.f32.mrf.mxu0
      %v1113 = vadd.f32 %v944, %v1112
      %v1114 = vpop.f32.mrf.mxu0
      %v1115 = vadd.f32 %v946, %v1114
      %1116 = vmatmul.bf16.gmra.mxu0 %v804
      %v1117 = vpop.f32.mrf.mxu0
      %v1118 = vadd.f32 %v949, %v1117
      %v1119 = vpop.f32.mrf.mxu0
      %v1120 = vadd.f32 %v951, %v1119
      %1121 = vmatmul.bf16.gmra.mxu0 %v807
      %v1122 = vpop.f32.mrf.mxu0
      %v1123 = vadd.f32 %v954, %v1122
      %v1124 = vpop.f32.mrf.mxu0
      %v1125 = vadd.f32 %v956, %v1124
      %1126 = vmatmul.bf16.gmra.mxu0 %v810
      %v1127 = vpop.f32.mrf.mxu0
      %v1128 = vadd.f32 %v959, %v1127
      %v1129 = vpop.f32.mrf.mxu0
      %v1130 = vadd.f32 %v961, %v1129
      %1131 = vmatmul.bf16.gmra.mxu0 %v813
      %v1132 = vpop.f32.mrf.mxu0
      %v1133 = vadd.f32 %v964, %v1132
      %v1134 = vpop.f32.mrf.mxu0
      %v1135 = vadd.f32 %v966, %v1134
      %1136 = vmatmul.bf16.gmra.mxu0 %v816
      %v1137 = vpop.f32.mrf.mxu0
      %v1138 = vadd.f32 %v969, %v1137
      %v1139 = vpop.f32.mrf.mxu0
      %v1140 = vadd.f32 %v971, %v1139
      %1141 = vmatmul.bf16.gmra.mxu0 %v819
      %v1142 = vpop.f32.mrf.mxu0
      %v1143 = vadd.f32 %v974, %v1142
      %v1144 = vpop.f32.mrf.mxu0
      %v1145 = vadd.f32 %v976, %v1144
      %1146 = vmatmul.bf16.gmra.mxu0 %v822
      %v1147 = vpop.f32.mrf.mxu0
      %v1148 = vadd.f32 %v979, %v1147
      %v1149 = vpop.f32.mrf.mxu0
      %v1150 = vadd.f32 %v981, %v1149
      %1151 = vmatmul.bf16.gmra.mxu0 %v825
      %v1152 = vpop.f32.mrf.mxu0
      %v1153 = vadd.f32 %v984, %v1152
      %v1154 = vpop.f32.mrf.mxu0
      %v1155 = vadd.f32 %v986, %v1154
      %1156 = vmatmul.bf16.gmra.mxu0 %v828
      %v1157 = vpop.f32.mrf.mxu0
      %v1158 = vadd.f32 %v989, %v1157
      %v1159 = vpop.f32.mrf.mxu0
      %v1160 = vadd.f32 %v991, %v1159
      %1161 = vmatmul.bf16.gmra.mxu0 %v831
      %v1162 = vpop.f32.mrf.mxu0
      %v1163 = vadd.f32 %v994, %v1162
      %v1164 = vpop.f32.mrf.mxu0
      %v1165 = vadd.f32 %v996, %v1164
      %1166 = vmatmul.bf16.gmra.mxu0 %v834
      %v1167 = vpop.f32.mrf.mxu0
      %v1168 = vadd.f32 %v999, %v1167
      %v1169 = vpop.f32.mrf.mxu0
      %v1170 = vadd.f32 %v1001, %v1169
      %1171 = vmatmul.bf16.gmra.mxu0 %v837
      %v1172 = vpop.f32.mrf.mxu0
      %v1173 = vadd.f32 %v1004, %v1172
      %v1174 = vpop.f32.mrf.mxu0
      %v1175 = vadd.f32 %v1006, %v1174
      %1176 = vdwg.mxu0
      %v1177 = vld [vmem:[%s3] sm:$0x1]
      %v1179 = vperm.slane %v1177, 0
      %v1181 = vmul.f32 %v1018, %v1179
      %v1182 = vmul.f32 %v1020, %v1179
      %v1183 = vmul.f32 %v1023, %v1179
      %v1184 = vmul.f32 %v1025, %v1179
      %v1185 = vmul.f32 %v1028, %v1179
      %v1186 = vmul.f32 %v1030, %v1179
      %v1187 = vmul.f32 %v1033, %v1179
      %v1188 = vmul.f32 %v1035, %v1179
      %v1189 = vmul.f32 %v1038, %v1179
      %v1190 = vmul.f32 %v1040, %v1179
      %v1191 = vmul.f32 %v1043, %v1179
      %v1192 = vmul.f32 %v1045, %v1179
      %v1193 = vmul.f32 %v1048, %v1179
      %v1194 = vmul.f32 %v1050, %v1179
      %v1195 = vmul.f32 %v1053, %v1179
      %v1196 = vmul.f32 %v1055, %v1179
      %v1197 = vmul.f32 %v1058, %v1179
      %v1198 = vmul.f32 %v1060, %v1179
      %v1199 = vmul.f32 %v1063, %v1179
      %v1200 = vmul.f32 %v1065, %v1179
      %v1201 = vmul.f32 %v1068, %v1179
      %v1202 = vmul.f32 %v1070, %v1179
      %v1203 = vmul.f32 %v1073, %v1179
      %v1204 = vmul.f32 %v1075, %v1179
      %v1205 = vmul.f32 %v1078, %v1179
      %v1206 = vmul.f32 %v1080, %v1179
      %v1207 = vmul.f32 %v1083, %v1179
      %v1208 = vmul.f32 %v1085, %v1179
      %v1209 = vmul.f32 %v1088, %v1179
      %v1210 = vmul.f32 %v1090, %v1179
      %v1211 = vmul.f32 %v1093, %v1179
      %v1212 = vmul.f32 %v1095, %v1179
      %v1213 = vmul.f32 %v1098, %v1179
      %v1214 = vmul.f32 %v1100, %v1179
      %v1215 = vmul.f32 %v1103, %v1179
      %v1216 = vmul.f32 %v1105, %v1179
      %v1217 = vmul.f32 %v1108, %v1179
      %v1218 = vmul.f32 %v1110, %v1179
      %v1219 = vmul.f32 %v1113, %v1179
      %v1220 = vmul.f32 %v1115, %v1179
      %v1221 = vmul.f32 %v1118, %v1179
      %v1222 = vmul.f32 %v1120, %v1179
      %v1223 = vmul.f32 %v1123, %v1179
      %v1224 = vmul.f32 %v1125, %v1179
      %v1225 = vmul.f32 %v1128, %v1179
      %v1226 = vmul.f32 %v1130, %v1179
      %v1227 = vmul.f32 %v1133, %v1179
      %v1228 = vmul.f32 %v1135, %v1179
      %v1229 = vmul.f32 %v1138, %v1179
      %v1230 = vmul.f32 %v1140, %v1179
      %v1231 = vmul.f32 %v1143, %v1179
      %v1232 = vmul.f32 %v1145, %v1179
      %v1233 = vmul.f32 %v1148, %v1179
      %v1234 = vmul.f32 %v1150, %v1179
      %v1235 = vmul.f32 %v1153, %v1179
      %v1236 = vmul.f32 %v1155, %v1179
      %v1237 = vmul.f32 %v1158, %v1179
      %v1238 = vmul.f32 %v1160, %v1179
      %v1239 = vmul.f32 %v1163, %v1179
      %v1240 = vmul.f32 %v1165, %v1179
      %v1241 = vmul.f32 %v1168, %v1179
      %v1242 = vmul.f32 %v1170, %v1179
      %v1243 = vmul.f32 %v1173, %v1179
      %v1244 = vmul.f32 %v1175, %v1179
      %v1245 = vld [vmem:[%s4] sm:$0x1]
      %v1247 = vperm.slane %v1245, 0
      %v1249 = vadd.f32 %v1181, %v1247
      %v1250 = vadd.f32 %v1182, %v1247
      %v1251 = vadd.f32 %v1183, %v1247
      %v1252 = vadd.f32 %v1184, %v1247
      %v1253 = vadd.f32 %v1185, %v1247
      %v1254 = vadd.f32 %v1186, %v1247
      %v1255 = vadd.f32 %v1187, %v1247
      %v1256 = vadd.f32 %v1188, %v1247
      %v1257 = vadd.f32 %v1189, %v1247
      %v1258 = vadd.f32 %v1190, %v1247
      %v1259 = vadd.f32 %v1191, %v1247
      %v1260 = vadd.f32 %v1192, %v1247
      %v1261 = vadd.f32 %v1193, %v1247
      %v1262 = vadd.f32 %v1194, %v1247
      %v1263 = vadd.f32 %v1195, %v1247
      %v1264 = vadd.f32 %v1196, %v1247
      %v1265 = vadd.f32 %v1197, %v1247
      %v1266 = vadd.f32 %v1198, %v1247
      %v1267 = vadd.f32 %v1199, %v1247
      %v1268 = vadd.f32 %v1200, %v1247
      %v1269 = vadd.f32 %v1201, %v1247
      %v1270 = vadd.f32 %v1202, %v1247
      %v1271 = vadd.f32 %v1203, %v1247
      %v1272 = vadd.f32 %v1204, %v1247
      %v1273 = vadd.f32 %v1205, %v1247
      %v1274 = vadd.f32 %v1206, %v1247
      %v1275 = vadd.f32 %v1207, %v1247
      %v1276 = vadd.f32 %v1208, %v1247
      %v1277 = vadd.f32 %v1209, %v1247
      %v1278 = vadd.f32 %v1210, %v1247
      %v1279 = vadd.f32 %v1211, %v1247
      %v1280 = vadd.f32 %v1212, %v1247
      %v1281 = vadd.f32 %v1213, %v1247
      %v1282 = vadd.f32 %v1214, %v1247
      %v1283 = vadd.f32 %v1215, %v1247
      %v1284 = vadd.f32 %v1216, %v1247
      %v1285 = vadd.f32 %v1217, %v1247
      %v1286 = vadd.f32 %v1218, %v1247
      %v1287 = vadd.f32 %v1219, %v1247
      %v1288 = vadd.f32 %v1220, %v1247
      %v1289 = vadd.f32 %v1221, %v1247
      %v1290 = vadd.f32 %v1222, %v1247
      %v1291 = vadd.f32 %v1223, %v1247
      %v1292 = vadd.f32 %v1224, %v1247
      %v1293 = vadd.f32 %v1225, %v1247
      %v1294 = vadd.f32 %v1226, %v1247
      %v1295 = vadd.f32 %v1227, %v1247
      %v1296 = vadd.f32 %v1228, %v1247
      %v1297 = vadd.f32 %v1229, %v1247
      %v1298 = vadd.f32 %v1230, %v1247
      %v1299 = vadd.f32 %v1231, %v1247
      %v1300 = vadd.f32 %v1232, %v1247
      %v1301 = vadd.f32 %v1233, %v1247
      %v1302 = vadd.f32 %v1234, %v1247
      %v1303 = vadd.f32 %v1235, %v1247
      %v1304 = vadd.f32 %v1236, %v1247
      %v1305 = vadd.f32 %v1237, %v1247
      %v1306 = vadd.f32 %v1238, %v1247
      %v1307 = vadd.f32 %v1239, %v1247
      %v1308 = vadd.f32 %v1240, %v1247
      %v1309 = vadd.f32 %v1241, %v1247
      %v1310 = vadd.f32 %v1242, %v1247
      %v1311 = vadd.f32 %v1243, %v1247
      %v1312 = vadd.f32 %v1244, %v1247
      %vm1313 = vcmp.ge.f32.partialorder %v1249, 0.0
      %vm1314 = vcmp.ge.f32.partialorder %v1250, 0.0
      %vm1315 = vcmp.ge.f32.partialorder %v1251, 0.0
      %vm1316 = vcmp.ge.f32.partialorder %v1252, 0.0
      %vm1317 = vcmp.ge.f32.partialorder %v1253, 0.0
      %vm1318 = vcmp.ge.f32.partialorder %v1254, 0.0
      %vm1319 = vcmp.ge.f32.partialorder %v1255, 0.0
      %vm1320 = vcmp.ge.f32.partialorder %v1256, 0.0
      %vm1321 = vcmp.ge.f32.partialorder %v1257, 0.0
      %vm1322 = vcmp.ge.f32.partialorder %v1258, 0.0
      %vm1323 = vcmp.ge.f32.partialorder %v1259, 0.0
      %vm1324 = vcmp.ge.f32.partialorder %v1260, 0.0
      %vm1325 = vcmp.ge.f32.partialorder %v1261, 0.0
      %vm1326 = vcmp.ge.f32.partialorder %v1262, 0.0
      %vm1327 = vcmp.ge.f32.partialorder %v1263, 0.0
      %vm1328 = vcmp.ge.f32.partialorder %v1264, 0.0
      %vm1329 = vcmp.ge.f32.partialorder %v1265, 0.0
      %vm1330 = vcmp.ge.f32.partialorder %v1266, 0.0
      %vm1331 = vcmp.ge.f32.partialorder %v1267, 0.0
      %vm1332 = vcmp.ge.f32.partialorder %v1268, 0.0
      %vm1333 = vcmp.ge.f32.partialorder %v1269, 0.0
      %vm1334 = vcmp.ge.f32.partialorder %v1270, 0.0
      %vm1335 = vcmp.ge.f32.partialorder %v1271, 0.0
      %vm1336 = vcmp.ge.f32.partialorder %v1272, 0.0
      %vm1337 = vcmp.ge.f32.partialorder %v1273, 0.0
      %vm1338 = vcmp.ge.f32.partialorder %v1274, 0.0
      %vm1339 = vcmp.ge.f32.partialorder %v1275, 0.0
      %vm1340 = vcmp.ge.f32.partialorder %v1276, 0.0
      %vm1341 = vcmp.ge.f32.partialorder %v1277, 0.0
      %vm1342 = vcmp.ge.f32.partialorder %v1278, 0.0
      %vm1343 = vcmp.ge.f32.partialorder %v1279, 0.0
      %vm1344 = vcmp.ge.f32.partialorder %v1280, 0.0
      %vm1345 = vcmp.ge.f32.partialorder %v1281, 0.0
      %vm1346 = vcmp.ge.f32.partialorder %v1282, 0.0
      %vm1347 = vcmp.ge.f32.partialorder %v1283, 0.0
      %vm1348 = vcmp.ge.f32.partialorder %v1284, 0.0
      %vm1349 = vcmp.ge.f32.partialorder %v1285, 0.0
      %vm1350 = vcmp.ge.f32.partialorder %v1286, 0.0
      %vm1351 = vcmp.ge.f32.partialorder %v1287, 0.0
      %vm1352 = vcmp.ge.f32.partialorder %v1288, 0.0
      %vm1353 = vcmp.ge.f32.partialorder %v1289, 0.0
      %vm1354 = vcmp.ge.f32.partialorder %v1290, 0.0
      %vm1355 = vcmp.ge.f32.partialorder %v1291, 0.0
      %vm1356 = vcmp.ge.f32.partialorder %v1292, 0.0
      %vm1357 = vcmp.ge.f32.partialorder %v1293, 0.0
      %vm1358 = vcmp.ge.f32.partialorder %v1294, 0.0
      %vm1359 = vcmp.ge.f32.partialorder %v1295, 0.0
      %vm1360 = vcmp.ge.f32.partialorder %v1296, 0.0
      %vm1361 = vcmp.ge.f32.partialorder %v1297, 0.0
      %vm1362 = vcmp.ge.f32.partialorder %v1298, 0.0
      %vm1363 = vcmp.ge.f32.partialorder %v1299, 0.0
      %vm1364 = vcmp.ge.f32.partialorder %v1300, 0.0
      %vm1365 = vcmp.ge.f32.partialorder %v1301, 0.0
      %vm1366 = vcmp.ge.f32.partialorder %v1302, 0.0
      %vm1367 = vcmp.ge.f32.partialorder %v1303, 0.0
      %vm1368 = vcmp.ge.f32.partialorder %v1304, 0.0
      %vm1369 = vcmp.ge.f32.partialorder %v1305, 0.0
      %vm1370 = vcmp.ge.f32.partialorder %v1306, 0.0
      %vm1371 = vcmp.ge.f32.partialorder %v1307, 0.0
      %vm1372 = vcmp.ge.f32.partialorder %v1308, 0.0
      %vm1373 = vcmp.ge.f32.partialorder %v1309, 0.0
      %vm1374 = vcmp.ge.f32.partialorder %v1310, 0.0
      %vm1375 = vcmp.ge.f32.partialorder %v1311, 0.0
      %vm1376 = vcmp.ge.f32.partialorder %v1312, 0.0
      %v1377 = vmul.f32 %v1249, 0.0
      %v1378 = vmul.f32 %v1250, 0.0
      %v1379 = vmul.f32 %v1251, 0.0
      %v1380 = vmul.f32 %v1252, 0.0
      %v1381 = vmul.f32 %v1253, 0.0
      %v1382 = vmul.f32 %v1254, 0.0
      %v1383 = vmul.f32 %v1255, 0.0
      %v1384 = vmul.f32 %v1256, 0.0
      %v1385 = vmul.f32 %v1257, 0.0
      %v1386 = vmul.f32 %v1258, 0.0
      %v1387 = vmul.f32 %v1259, 0.0
      %v1388 = vmul.f32 %v1260, 0.0
      %v1389 = vmul.f32 %v1261, 0.0
      %v1390 = vmul.f32 %v1262, 0.0
      %v1391 = vmul.f32 %v1263, 0.0
      %v1392 = vmul.f32 %v1264, 0.0
      %v1393 = vmul.f32 %v1265, 0.0
      %v1394 = vmul.f32 %v1266, 0.0
      %v1395 = vmul.f32 %v1267, 0.0
      %v1396 = vmul.f32 %v1268, 0.0
      %v1397 = vmul.f32 %v1269, 0.0
      %v1398 = vmul.f32 %v1270, 0.0
      %v1399 = vmul.f32 %v1271, 0.0
      %v1400 = vmul.f32 %v1272, 0.0
      %v1401 = vmul.f32 %v1273, 0.0
      %v1402 = vmul.f32 %v1274, 0.0
      %v1403 = vmul.f32 %v1275, 0.0
      %v1404 = vmul.f32 %v1276, 0.0
      %v1405 = vmul.f32 %v1277, 0.0
      %v1406 = vmul.f32 %v1278, 0.0
      %v1407 = vmul.f32 %v1279, 0.0
      %v1408 = vmul.f32 %v1280, 0.0
      %v1409 = vmul.f32 %v1281, 0.0
      %v1410 = vmul.f32 %v1282, 0.0
      %v1411 = vmul.f32 %v1283, 0.0
      %v1412 = vmul.f32 %v1284, 0.0
      %v1413 = vmul.f32 %v1285, 0.0
      %v1414 = vmul.f32 %v1286, 0.0
      %v1415 = vmul.f32 %v1287, 0.0
      %v1416 = vmul.f32 %v1288, 0.0
      %v1417 = vmul.f32 %v1289, 0.0
      %v1418 = vmul.f32 %v1290, 0.0
      %v1419 = vmul.f32 %v1291, 0.0
      %v1420 = vmul.f32 %v1292, 0.0
      %v1421 = vmul.f32 %v1293, 0.0
      %v1422 = vmul.f32 %v1294, 0.0
      %v1423 = vmul.f32 %v1295, 0.0
      %v1424 = vmul.f32 %v1296, 0.0
      %v1425 = vmul.f32 %v1297, 0.0
      %v1426 = vmul.f32 %v1298, 0.0
      %v1427 = vmul.f32 %v1299, 0.0
      %v1428 = vmul.f32 %v1300, 0.0
      %v1429 = vmul.f32 %v1301, 0.0
      %v1430 = vmul.f32 %v1302, 0.0
      %v1431 = vmul.f32 %v1303, 0.0
      %v1432 = vmul.f32 %v1304, 0.0
      %v1433 = vmul.f32 %v1305, 0.0
      %v1434 = vmul.f32 %v1306, 0.0
      %v1435 = vmul.f32 %v1307, 0.0
      %v1436 = vmul.f32 %v1308, 0.0
      %v1437 = vmul.f32 %v1309, 0.0
      %v1438 = vmul.f32 %v1310, 0.0
      %v1439 = vmul.f32 %v1311, 0.0
      %v1440 = vmul.f32 %v1312, 0.0
      %v1441 = vsel %vm1313, %v1249, %v1377
      %v1442 = vsel %vm1314, %v1250, %v1378
      %v1443 = vsel %vm1315, %v1251, %v1379
      %v1444 = vsel %vm1316, %v1252, %v1380
      %v1445 = vsel %vm1317, %v1253, %v1381
      %v1446 = vsel %vm1318, %v1254, %v1382
      %v1447 = vsel %vm1319, %v1255, %v1383
      %v1448 = vsel %vm1320, %v1256, %v1384
      %v1449 = vsel %vm1321, %v1257, %v1385
      %v1450 = vsel %vm1322, %v1258, %v1386
      %v1451 = vsel %vm1323, %v1259, %v1387
      %v1452 = vsel %vm1324, %v1260, %v1388
      %v1453 = vsel %vm1325, %v1261, %v1389
      %v1454 = vsel %vm1326, %v1262, %v1390
      %v1455 = vsel %vm1327, %v1263, %v1391
      %v1456 = vsel %vm1328, %v1264, %v1392
      %v1457 = vsel %vm1329, %v1265, %v1393
      %v1458 = vsel %vm1330, %v1266, %v1394
      %v1459 = vsel %vm1331, %v1267, %v1395
      %v1460 = vsel %vm1332, %v1268, %v1396
      %v1461 = vsel %vm1333, %v1269, %v1397
      %v1462 = vsel %vm1334, %v1270, %v1398
      %v1463 = vsel %vm1335, %v1271, %v1399
      %v1464 = vsel %vm1336, %v1272, %v1400
      %v1465 = vsel %vm1337, %v1273, %v1401
      %v1466 = vsel %vm1338, %v1274, %v1402
      %v1467 = vsel %vm1339, %v1275, %v1403
      %v1468 = vsel %vm1340, %v1276, %v1404
      %v1469 = vsel %vm1341, %v1277, %v1405
      %v1470 = vsel %vm1342, %v1278, %v1406
      %v1471 = vsel %vm1343, %v1279, %v1407
      %v1472 = vsel %vm1344, %v1280, %v1408
      %v1473 = vsel %vm1345, %v1281, %v1409
      %v1474 = vsel %vm1346, %v1282, %v1410
      %v1475 = vsel %vm1347, %v1283, %v1411
      %v1476 = vsel %vm1348, %v1284, %v1412
      %v1477 = vsel %vm1349, %v1285, %v1413
      %v1478 = vsel %vm1350, %v1286, %v1414
      %v1479 = vsel %vm1351, %v1287, %v1415
      %v1480 = vsel %vm1352, %v1288, %v1416
      %v1481 = vsel %vm1353, %v1289, %v1417
      %v1482 = vsel %vm1354, %v1290, %v1418
      %v1483 = vsel %vm1355, %v1291, %v1419
      %v1484 = vsel %vm1356, %v1292, %v1420
      %v1485 = vsel %vm1357, %v1293, %v1421
      %v1486 = vsel %vm1358, %v1294, %v1422
      %v1487 = vsel %vm1359, %v1295, %v1423
      %v1488 = vsel %vm1360, %v1296, %v1424
      %v1489 = vsel %vm1361, %v1297, %v1425
      %v1490 = vsel %vm1362, %v1298, %v1426
      %v1491 = vsel %vm1363, %v1299, %v1427
      %v1492 = vsel %vm1364, %v1300, %v1428
      %v1493 = vsel %vm1365, %v1301, %v1429
      %v1494 = vsel %vm1366, %v1302, %v1430
      %v1495 = vsel %vm1367, %v1303, %v1431
      %v1496 = vsel %vm1368, %v1304, %v1432
      %v1497 = vsel %vm1369, %v1305, %v1433
      %v1498 = vsel %vm1370, %v1306, %v1434
      %v1499 = vsel %vm1371, %v1307, %v1435
      %v1500 = vsel %vm1372, %v1308, %v1436
      %v1501 = vsel %vm1373, %v1309, %v1437
      %v1502 = vsel %vm1374, %v1310, %v1438
      %v1503 = vsel %vm1375, %v1311, %v1439
      %v1504 = vsel %vm1376, %v1312, %v1440
      %1505 = vst.msk [vmem:[%s251] sm:$0xff] %vm742, %v1441
      %1506 = vst.msk [vmem:[%s251 + $0x8] sm:$0xff] %vm742, %v1442
      %1507 = vst.msk [vmem:[%s251 + $0x10] sm:$0xff] %vm742, %v1443
      %1508 = vst.msk [vmem:[%s251 + $0x18] sm:$0xff] %vm742, %v1444
      %1509 = vst.msk [vmem:[%s251 + $0x20] sm:$0xff] %vm742, %v1445
      %1510 = vst.msk [vmem:[%s251 + $0x28] sm:$0xff] %vm742, %v1446
      %1511 = vst.msk [vmem:[%s251 + $0x30] sm:$0xff] %vm742, %v1447
      %1512 = vst.msk [vmem:[%s251 + $0x38] sm:$0xff] %vm742, %v1448
      %1513 = vst.msk [vmem:[%s251 + $0x40] sm:$0xff] %vm742, %v1449
      %1514 = vst.msk [vmem:[%s251 + $0x48] sm:$0xff] %vm742, %v1450
      %1515 = vst.msk [vmem:[%s251 + $0x50] sm:$0xff] %vm742, %v1451
      %1516 = vst.msk [vmem:[%s251 + $0x58] sm:$0xff] %vm742, %v1452
      %1517 = vst.msk [vmem:[%s251 + $0x60] sm:$0xff] %vm742, %v1453
      %1518 = vst.msk [vmem:[%s251 + $0x68] sm:$0xff] %vm742, %v1454
      %1519 = vst.msk [vmem:[%s251 + $0x70] sm:$0xff] %vm742, %v1455
      %1520 = vst.msk [vmem:[%s251 + $0x78] sm:$0xff] %vm742, %v1456
      %1521 = vst.msk [vmem:[%s251 + $0x80] sm:$0xff] %vm742, %v1457
      %1522 = vst.msk [vmem:[%s251 + $0x88] sm:$0xff] %vm742, %v1458
      %1523 = vst.msk [vmem:[%s251 + $0x90] sm:$0xff] %vm742, %v1459
      %1524 = vst.msk [vmem:[%s251 + $0x98] sm:$0xff] %vm742, %v1460
      %1525 = vst.msk [vmem:[%s251 + $0xa0] sm:$0xff] %vm742, %v1461
      %1526 = vst.msk [vmem:[%s251 + $0xa8] sm:$0xff] %vm742, %v1462
      %1527 = vst.msk [vmem:[%s251 + $0xb0] sm:$0xff] %vm742, %v1463
      %1528 = vst.msk [vmem:[%s251 + $0xb8] sm:$0xff] %vm742, %v1464
      %1529 = vst.msk [vmem:[%s251 + $0xc0] sm:$0xff] %vm742, %v1465
      %1530 = vst.msk [vmem:[%s251 + $0xc8] sm:$0xff] %vm742, %v1466
      %1531 = vst.msk [vmem:[%s251 + $0xd0] sm:$0xff] %vm742, %v1467
      %1532 = vst.msk [vmem:[%s251 + $0xd8] sm:$0xff] %vm742, %v1468
      %1533 = vst.msk [vmem:[%s251 + $0xe0] sm:$0xff] %vm742, %v1469
      %1534 = vst.msk [vmem:[%s251 + $0xe8] sm:$0xff] %vm742, %v1470
      %1535 = vst.msk [vmem:[%s251 + $0xf0] sm:$0xff] %vm742, %v1471
      %1536 = vst.msk [vmem:[%s251 + $0xf8] sm:$0xff] %vm742, %v1472
      %1537 = vst.msk [vmem:[%s251 + $0x100] sm:$0xff] %vm742, %v1473
      %1538 = vst.msk [vmem:[%s251 + $0x108] sm:$0xff] %vm742, %v1474
      %1539 = vst.msk [vmem:[%s251 + $0x110] sm:$0xff] %vm742, %v1475
      %1540 = vst.msk [vmem:[%s251 + $0x118] sm:$0xff] %vm742, %v1476
      %1541 = vst.msk [vmem:[%s251 + $0x120] sm:$0xff] %vm742, %v1477
      %1542 = vst.msk [vmem:[%s251 + $0x128] sm:$0xff] %vm742, %v1478
      %1543 = vst.msk [vmem:[%s251 + $0x130] sm:$0xff] %vm742, %v1479
      %1544 = vst.msk [vmem:[%s251 + $0x138] sm:$0xff] %vm742, %v1480
      %1545 = vst.msk [vmem:[%s251 + $0x140] sm:$0xff] %vm742, %v1481
      %1546 = vst.msk [vmem:[%s251 + $0x148] sm:$0xff] %vm742, %v1482
      %1547 = vst.msk [vmem:[%s251 + $0x150] sm:$0xff] %vm742, %v1483
      %1548 = vst.msk [vmem:[%s251 + $0x158] sm:$0xff] %vm742, %v1484
      %1549 = vst.msk [vmem:[%s251 + $0x160] sm:$0xff] %vm742, %v1485
      %1550 = vst.msk [vmem:[%s251 + $0x168] sm:$0xff] %vm742, %v1486
      %1551 = vst.msk [vmem:[%s251 + $0x170] sm:$0xff] %vm742, %v1487
      %1552 = vst.msk [vmem:[%s251 + $0x178] sm:$0xff] %vm742, %v1488
      %1553 = vst.msk [vmem:[%s251 + $0x180] sm:$0xff] %vm742, %v1489
      %1554 = vst.msk [vmem:[%s251 + $0x188] sm:$0xff] %vm742, %v1490
      %1555 = vst.msk [vmem:[%s251 + $0x190] sm:$0xff] %vm742, %v1491
      %1556 = vst.msk [vmem:[%s251 + $0x198] sm:$0xff] %vm742, %v1492
      %1557 = vst.msk [vmem:[%s251 + $0x1a0] sm:$0xff] %vm742, %v1493
      %1558 = vst.msk [vmem:[%s251 + $0x1a8] sm:$0xff] %vm742, %v1494
      %1559 = vst.msk [vmem:[%s251 + $0x1b0] sm:$0xff] %vm742, %v1495
      %1560 = vst.msk [vmem:[%s251 + $0x1b8] sm:$0xff] %vm742, %v1496
      %1561 = vst.msk [vmem:[%s251 + $0x1c0] sm:$0xff] %vm742, %v1497
      %1562 = vst.msk [vmem:[%s251 + $0x1c8] sm:$0xff] %vm742, %v1498
      %1563 = vst.msk [vmem:[%s251 + $0x1d0] sm:$0xff] %vm742, %v1499
      %1564 = vst.msk [vmem:[%s251 + $0x1d8] sm:$0xff] %vm742, %v1500
      %1565 = vst.msk [vmem:[%s251 + $0x1e0] sm:$0xff] %vm742, %v1501
      %1566 = vst.msk [vmem:[%s251 + $0x1e8] sm:$0xff] %vm742, %v1502
      %1567 = vst.msk [vmem:[%s251 + $0x1f0] sm:$0xff] %vm742, %v1503
      %1568 = vst.msk [vmem:[%s251 + $0x1f8] sm:$0xff] %vm742, %v1504
      %s1569 = smul.u32 64, %s16
      %p1570 = scmp.lt.s32.totalorder %s1569, 255
      %s1571 = scalar_select %p1570, %s1569, 255
      %s1572 = smul.addr %s1571, 8
      %s1573 = scalar_lea.vmem %s5, %s1572
      // Predicated region
      $region41: #{wide_resnet_forward.10} parent=39 // pred_check
        %p1574 = pneg %p149
      $region42: #{wide_resnet_forward.10} parent=39 // pred_check_branch
        %1576 = sbr.rel (%p1574) target = $region44
      $region43: #{wide_resnet_forward.10} parent=39 // pred_region
        %s1577 = smul.u32 64, %s16
      $region44: #{wide_resnet_forward.10} parent=39 // pred_fallthru
        _
    $region40: #{wide_resnet_forward.10} parent=5 // pred_fallthru
      _
    %p1578 = scmp.le.s32.totalorder 2, %s11
    // Predicated region
    $region45: #{wide_resnet_forward.10} parent=5 // pred_check
      %p1579 = pneg %p1578
    $region46: #{wide_resnet_forward.10} parent=5 // pred_check_branch
      %1581 = sbr.rel (%p1579) target = $region48
    $region47: #{wide_resnet_forward.10} parent=5 // pred_region
      %s1582 = ssub.s32 %s11, 2
      // Predicated region
      $region49: #{wide_resnet_forward.10} parent=47 // pred_check
        %p1583 = pneg %p155
      $region50: #{wide_resnet_forward.10} parent=47 // pred_check_branch
        %1585 = sbr.rel (%p1583) target = $region52
      $region51: #{wide_resnet_forward.10} parent=47 // pred_region
        %s1586 = smul.u32 64, %s17
        %p1587 = scmp.lt.s32.totalorder %s1586, 255
        %s1588 = scalar_select %p1587, %s1586, 255
        %s1589 = smul.addr %s1588, 8
        %s1590 = scalar_lea.vmem %s5, %s1589
      $region52: #{wide_resnet_forward.10} parent=47 // pred_fallthru
        _
    $region48: #{wide_resnet_forward.10} parent=5 // pred_fallthru
      _
  $region6: #{wide_resnet_forward.10} parent=0 // loop_footer
    %s15 = sadd.s32 1, %s11
  $region7: #{wide_resnet_forward.10} parent=0 // loop_footer_branch
    %10 = sbr.rel target = $region3
  $region8: #{wide_resnet_forward.10} parent=0 // loop_exit
    _

// kernel: wide_resnet_forward.11
$region0: #{wide_resnet_forward.11}
  #allocation0 [shape = 'u32[]', space=smem, size = 0x4, offset = 0x4, fixed_abs, tag = 'smem constant byte address 0x4 - core index']
  #allocation1 [shape = 'u32[72,128]{1,0:T(1,128)}', space=vmem, size = 0x9000, scoped, tag = 'internal scratch']
  %s0 = inlined_call_operand.vmem [shape: bf16[512,144], index: 0, kind: input, shape index: {}]
  %s1 = inlined_call_operand.vmem [shape: bf16[144,32], index: 1, kind: input, shape index: {}]
  %s2 = inlined_call_operand.vmem [shape: f32[1,32], index: 2, kind: input, shape index: {}]
  %s3 = inlined_call_operand.vmem [shape: f32[1,32], index: 3, kind: input, shape index: {}]
  %s4 = inlined_call_operand.vmem [shape: f32[512,32], index: 4, kind: output, shape index: {}]
  %s5 = sld [smem:[#allocation0]]
  $region26: #{wide_resnet_forward.11} parent=0
    _
  %s7 = ssub.s32 1, %s5
  %s8 = scalar_select 0, %s7, %s5
  // Predicated region
  $region2: #{wide_resnet_forward.11} parent=0 // pred_check
    _
  $region3: #{wide_resnet_forward.11} parent=0 // pred_check_branch
    %10 = sbr.rel (0) target = $region5
  $region4: #{wide_resnet_forward.11} parent=0 // pred_region
    _
  $region5: #{wide_resnet_forward.11} parent=0 // pred_fallthru
    _
  // Predicated region
  $region6: #{wide_resnet_forward.11} parent=0 // pred_check
    _
  $region7: #{wide_resnet_forward.11} parent=0 // pred_check_branch
    %12 = sbr.rel (0) target = $region9
  $region8: #{wide_resnet_forward.11} parent=0 // pred_region
    _
  $region9: #{wide_resnet_forward.11} parent=0 // pred_fallthru
    _
  // Predicated region
  $region10: #{wide_resnet_forward.11} parent=0 // pred_check
    _
  $region11: #{wide_resnet_forward.11} parent=0 // pred_check_branch
    %14 = sbr.rel (0) target = $region13
  $region12: #{wide_resnet_forward.11} parent=0 // pred_region
    _
  $region13: #{wide_resnet_forward.11} parent=0 // pred_fallthru
    _
  // Predicated region
  $region14: #{wide_resnet_forward.11} parent=0 // pred_check
    _
  $region15: #{wide_resnet_forward.11} parent=0 // pred_check_branch
    %16 = sbr.rel (0) target = $region17
  $region16: #{wide_resnet_forward.11} parent=0 // pred_region
    _
  $region17: #{wide_resnet_forward.11} parent=0 // pred_fallthru
    _
  %v18 = vld [vmem:[%s0] sm:$0xff]
  %v19 = vld [vmem:[%s0 + $0x8] sm:$0xff]
  %v20 = vld [vmem:[%s0 + $0x10] sm:$0xff]
  %v21 = vld [vmem:[%s0 + $0x18] sm:$0xff]
  %v22 = vld [vmem:[%s0 + $0x20] sm:$0xff]
  %v23 = vld [vmem:[%s0 + $0x28] sm:$0xff]
  %v24 = vld [vmem:[%s0 + $0x30] sm:$0xff]
  %v25 = vld [vmem:[%s0 + $0x38] sm:$0xff]
  %v26 = vld [vmem:[%s0 + $0x40] sm:$0xff]
  %v27 = vld [vmem:[%s0 + $0x48] sm:$0xff]
  %v28 = vld [vmem:[%s0 + $0x50] sm:$0xff]
  %v29 = vld [vmem:[%s0 + $0x58] sm:$0xff]
  %v30 = vld [vmem:[%s0 + $0x60] sm:$0xff]
  %v31 = vld [vmem:[%s0 + $0x68] sm:$0xff]
  %v32 = vld [vmem:[%s0 + $0x70] sm:$0xff]
  %v33 = vld [vmem:[%s0 + $0x78] sm:$0xff]
  %v34 = vld [vmem:[%s0 + $0x80] sm:$0xff]
  %v35 = vld [vmem:[%s0 + $0x88] sm:$0xff]
  %v36 = vld [vmem:[%s0 + $0x90] sm:$0xff]
  %v37 = vld [vmem:[%s0 + $0x98] sm:$0xff]
  %v38 = vld [vmem:[%s0 + $0xa0] sm:$0xff]
  %v39 = vld [vmem:[%s0 + $0xa8] sm:$0xff]
  %v40 = vld [vmem:[%s0 + $0xb0] sm:$0xff]
  %v41 = vld [vmem:[%s0 + $0xb8] sm:$0xff]
  %v42 = vld [vmem:[%s0 + $0xc0] sm:$0xff]
  %v43 = vld [vmem:[%s0 + $0xc8] sm:$0xff]
  %v44 = vld [vmem:[%s0 + $0xd0] sm:$0xff]
  %v45 = vld [vmem:[%s0 + $0xd8] sm:$0xff]
  %v46 = vld [vmem:[%s0 + $0xe0] sm:$0xff]
  %v47 = vld [vmem:[%s0 + $0xe8] sm:$0xff]
  %v48 = vld [vmem:[%s0 + $0xf0] sm:$0xff]
  %v49 = vld [vmem:[%s0 + $0xf8] sm:$0xff]
  %v50 = vld [vmem:[%s0 + $0x100] sm:$0xff]
  %v51 = vld [vmem:[%s0 + $0x108] sm:$0xff]
  %v52 = vld [vmem:[%s0 + $0x110] sm:$0xff]
  %v53 = vld [vmem:[%s0 + $0x118] sm:$0xff]
  %v54 = vld [vmem:[%s0 + $0x120] sm:$0xff]
  %v55 = vld [vmem:[%s0 + $0x128] sm:$0xff]
  %v56 = vld [vmem:[%s0 + $0x130] sm:$0xff]
  %v57 = vld [vmem:[%s0 + $0x138] sm:$0xff]
  %v58 = vld [vmem:[%s0 + $0x140] sm:$0xff]
  %v59 = vld [vmem:[%s0 + $0x148] sm:$0xff]
  %v60 = vld [vmem:[%s0 + $0x150] sm:$0xff]
  %v61 = vld [vmem:[%s0 + $0x158] sm:$0xff]
  %v62 = vld [vmem:[%s0 + $0x160] sm:$0xff]
  %v63 = vld [vmem:[%s0 + $0x168] sm:$0xff]
  %v64 = vld [vmem:[%s0 + $0x170] sm:$0xff]
  %v65 = vld [vmem:[%s0 + $0x178] sm:$0xff]
  %v66 = vld [vmem:[%s0 + $0x180] sm:$0xff]
  %v67 = vld [vmem:[%s0 + $0x188] sm:$0xff]
  %v68 = vld [vmem:[%s0 + $0x190] sm:$0xff]
  %v69 = vld [vmem:[%s0 + $0x198] sm:$0xff]
  %v70 = vld [vmem:[%s0 + $0x1a0] sm:$0xff]
  %v71 = vld [vmem:[%s0 + $0x1a8] sm:$0xff]
  %v72 = vld [vmem:[%s0 + $0x1b0] sm:$0xff]
  %v73 = vld [vmem:[%s0 + $0x1b8] sm:$0xff]
  %v74 = vld [vmem:[%s0 + $0x1c0] sm:$0xff]
  %v75 = vld [vmem:[%s0 + $0x1c8] sm:$0xff]
  %v76 = vld [vmem:[%s0 + $0x1d0] sm:$0xff]
  %v77 = vld [vmem:[%s0 + $0x1d8] sm:$0xff]
  %v78 = vld [vmem:[%s0 + $0x1e0] sm:$0xff]
  %v79 = vld [vmem:[%s0 + $0x1e8] sm:$0xff]
  %v80 = vld [vmem:[%s0 + $0x1f0] sm:$0xff]
  %v81 = vld [vmem:[%s0 + $0x1f8] sm:$0xff]
  %v82 = vld [vmem:[%s1] sm:$0xf]
  %v83 = vld [vmem:[%s1 + $0x4] sm:$0xf]
  %v84 = vld [vmem:[%s1 + $0x8] sm:$0xf]
  %v85 = vld [vmem:[%s1 + $0xc] sm:$0xf]
  %v86 = vld [vmem:[%s1 + $0x10] sm:$0xf]
  %v87 = vld [vmem:[%s1 + $0x14] sm:$0xf]
  %v88 = vld [vmem:[%s1 + $0x18] sm:$0xf]
  %v89 = vld [vmem:[%s1 + $0x1c] sm:$0xf]
  %v90 = vld [vmem:[%s1 + $0x20] sm:$0xf]
  %v91 = vld [vmem:[%s1 + $0x24] sm:$0xf]
  %v92 = vld [vmem:[%s1 + $0x28] sm:$0xf]
  %v93 = vld [vmem:[%s1 + $0x2c] sm:$0xf]
  %v94 = vld [vmem:[%s1 + $0x30] sm:$0xf]
  %v95 = vld [vmem:[%s1 + $0x34] sm:$0xf]
  %v96 = vld [vmem:[%s1 + $0x38] sm:$0xf]
  %v97 = vld [vmem:[%s1 + $0x3c] sm:$0xf]
  %v98 = vld [vmem:[%s1 + $0x40] sm:$0xf]
  %v99 = vld [vmem:[%s1 + $0x44] sm:$0xf]
  %v164 = vunpack.c.l.b16 %v18
  %v165 = vunpack.c.h.b16 %v18
  %v166 = vunpack.c.l.b16 %v19
  %v167 = vunpack.c.h.b16 %v19
  %v168 = vunpack.c.l.b16 %v20
  %v169 = vunpack.c.h.b16 %v20
  %v170 = vunpack.c.l.b16 %v21
  %v171 = vunpack.c.h.b16 %v21
  %v172 = vunpack.c.l.b16 %v22
  %v173 = vunpack.c.h.b16 %v22
  %v174 = vunpack.c.l.b16 %v23
  %v175 = vunpack.c.h.b16 %v23
  %v176 = vunpack.c.l.b16 %v24
  %v177 = vunpack.c.h.b16 %v24
  %v178 = vunpack.c.l.b16 %v25
  %v179 = vunpack.c.h.b16 %v25
  %v180 = vunpack.c.l.b16 %v26
  %v181 = vunpack.c.h.b16 %v26
  %v182 = vunpack.c.l.b16 %v27
  %v183 = vunpack.c.h.b16 %v27
  %v184 = vunpack.c.l.b16 %v28
  %v185 = vunpack.c.h.b16 %v28
  %v186 = vunpack.c.l.b16 %v29
  %v187 = vunpack.c.h.b16 %v29
  %v188 = vunpack.c.l.b16 %v30
  %v189 = vunpack.c.h.b16 %v30
  %v190 = vunpack.c.l.b16 %v31
  %v191 = vunpack.c.h.b16 %v31
  %v192 = vunpack.c.l.b16 %v32
  %v193 = vunpack.c.h.b16 %v32
  %v194 = vunpack.c.l.b16 %v33
  %v195 = vunpack.c.h.b16 %v33
  %v196 = vunpack.c.l.b16 %v34
  %v197 = vunpack.c.h.b16 %v34
  %v198 = vunpack.c.l.b16 %v35
  %v199 = vunpack.c.h.b16 %v35
  %v200 = vunpack.c.l.b16 %v36
  %v201 = vunpack.c.h.b16 %v36
  %v202 = vunpack.c.l.b16 %v37
  %v203 = vunpack.c.h.b16 %v37
  %v204 = vunpack.c.l.b16 %v38
  %v205 = vunpack.c.h.b16 %v38
  %v206 = vunpack.c.l.b16 %v39
  %v207 = vunpack.c.h.b16 %v39
  %v208 = vunpack.c.l.b16 %v40
  %v209 = vunpack.c.h.b16 %v40
  %v210 = vunpack.c.l.b16 %v41
  %v211 = vunpack.c.h.b16 %v41
  %v212 = vunpack.c.l.b16 %v42
  %v213 = vunpack.c.h.b16 %v42
  %v214 = vunpack.c.l.b16 %v43
  %v215 = vunpack.c.h.b16 %v43
  %v216 = vunpack.c.l.b16 %v44
  %v217 = vunpack.c.h.b16 %v44
  %v218 = vunpack.c.l.b16 %v45
  %v219 = vunpack.c.h.b16 %v45
  %v220 = vunpack.c.l.b16 %v46
  %v221 = vunpack.c.h.b16 %v46
  %v222 = vunpack.c.l.b16 %v47
  %v223 = vunpack.c.h.b16 %v47
  %v224 = vunpack.c.l.b16 %v48
  %v225 = vunpack.c.h.b16 %v48
  %v226 = vunpack.c.l.b16 %v49
  %v227 = vunpack.c.h.b16 %v49
  %v228 = vunpack.c.l.b16 %v50
  %v229 = vunpack.c.h.b16 %v50
  %v230 = vunpack.c.l.b16 %v51
  %v231 = vunpack.c.h.b16 %v51
  %v232 = vunpack.c.l.b16 %v52
  %v233 = vunpack.c.h.b16 %v52
  %v234 = vunpack.c.l.b16 %v53
  %v235 = vunpack.c.h.b16 %v53
  %v236 = vunpack.c.l.b16 %v54
  %v237 = vunpack.c.h.b16 %v54
  %v238 = vunpack.c.l.b16 %v55
  %v239 = vunpack.c.h.b16 %v55
  %v240 = vunpack.c.l.b16 %v56
  %v241 = vunpack.c.h.b16 %v56
  %v242 = vunpack.c.l.b16 %v57
  %v243 = vunpack.c.h.b16 %v57
  %v244 = vunpack.c.l.b16 %v58
  %v245 = vunpack.c.h.b16 %v58
  %v246 = vunpack.c.l.b16 %v59
  %v247 = vunpack.c.h.b16 %v59
  %v248 = vunpack.c.l.b16 %v60
  %v249 = vunpack.c.h.b16 %v60
  %v250 = vunpack.c.l.b16 %v61
  %v251 = vunpack.c.h.b16 %v61
  %v252 = vunpack.c.l.b16 %v62
  %v253 = vunpack.c.h.b16 %v62
  %v254 = vunpack.c.l.b16 %v63
  %v255 = vunpack.c.h.b16 %v63
  %v256 = vunpack.c.l.b16 %v64
  %v257 = vunpack.c.h.b16 %v64
  %v258 = vunpack.c.l.b16 %v65
  %v259 = vunpack.c.h.b16 %v65
  %v260 = vunpack.c.l.b16 %v66
  %v261 = vunpack.c.h.b16 %v66
  %v262 = vunpack.c.l.b16 %v67
  %v263 = vunpack.c.h.b16 %v67
  %v264 = vunpack.c.l.b16 %v68
  %v265 = vunpack.c.h.b16 %v68
  %v266 = vunpack.c.l.b16 %v69
  %v267 = vunpack.c.h.b16 %v69
  %v268 = vunpack.c.l.b16 %v70
  %v269 = vunpack.c.h.b16 %v70
  %v270 = vunpack.c.l.b16 %v71
  %v271 = vunpack.c.h.b16 %v71
  %v272 = vunpack.c.l.b16 %v72
  %v273 = vunpack.c.h.b16 %v72
  %v274 = vunpack.c.l.b16 %v73
  %v275 = vunpack.c.h.b16 %v73
  %v276 = vunpack.c.l.b16 %v74
  %v277 = vunpack.c.h.b16 %v74
  %v278 = vunpack.c.l.b16 %v75
  %v279 = vunpack.c.h.b16 %v75
  %v280 = vunpack.c.l.b16 %v76
  %v281 = vunpack.c.h.b16 %v76
  %v282 = vunpack.c.l.b16 %v77
  %v283 = vunpack.c.h.b16 %v77
  %v284 = vunpack.c.l.b16 %v78
  %v285 = vunpack.c.h.b16 %v78
  %v286 = vunpack.c.l.b16 %v79
  %v287 = vunpack.c.h.b16 %v79
  %v288 = vunpack.c.l.b16 %v80
  %v289 = vunpack.c.h.b16 %v80
  %v290 = vunpack.c.l.b16 %v81
  %v291 = vunpack.c.h.b16 %v81
  %v292 = vpack.c.b16 %v166, %v164
  %v293 = vpack.c.b16 %v167, %v165
  %v294 = vpack.c.b16 %v170, %v168
  %v295 = vpack.c.b16 %v171, %v169
  %v296 = vpack.c.b16 %v174, %v172
  %v297 = vpack.c.b16 %v175, %v173
  %v298 = vpack.c.b16 %v178, %v176
  %v299 = vpack.c.b16 %v179, %v177
  %v300 = vpack.c.b16 %v182, %v180
  %v301 = vpack.c.b16 %v183, %v181
  %v302 = vpack.c.b16 %v186, %v184
  %v303 = vpack.c.b16 %v187, %v185
  %v304 = vpack.c.b16 %v190, %v188
  %v305 = vpack.c.b16 %v191, %v189
  %v306 = vpack.c.b16 %v194, %v192
  %v307 = vpack.c.b16 %v195, %v193
  %v308 = vpack.c.b16 %v198, %v196
  %v309 = vpack.c.b16 %v199, %v197
  %v310 = vpack.c.b16 %v202, %v200
  %v311 = vpack.c.b16 %v203, %v201
  %v312 = vpack.c.b16 %v206, %v204
  %v313 = vpack.c.b16 %v207, %v205
  %v314 = vpack.c.b16 %v210, %v208
  %v315 = vpack.c.b16 %v211, %v209
  %v316 = vpack.c.b16 %v214, %v212
  %v317 = vpack.c.b16 %v215, %v213
  %v318 = vpack.c.b16 %v218, %v216
  %v319 = vpack.c.b16 %v219, %v217
  %v320 = vpack.c.b16 %v222, %v220
  %v321 = vpack.c.b16 %v223, %v221
  %v322 = vpack.c.b16 %v226, %v224
  %v323 = vpack.c.b16 %v227, %v225
  %v324 = vpack.c.b16 %v230, %v228
  %v325 = vpack.c.b16 %v231, %v229
  %v326 = vpack.c.b16 %v234, %v232
  %v327 = vpack.c.b16 %v235, %v233
  %v328 = vpack.c.b16 %v238, %v236
  %v329 = vpack.c.b16 %v239, %v237
  %v330 = vpack.c.b16 %v242, %v240
  %v331 = vpack.c.b16 %v243, %v241
  %v332 = vpack.c.b16 %v246, %v244
  %v333 = vpack.c.b16 %v247, %v245
  %v334 = vpack.c.b16 %v250, %v248
  %v335 = vpack.c.b16 %v251, %v249
  %v336 = vpack.c.b16 %v254, %v252
  %v337 = vpack.c.b16 %v255, %v253
  %v338 = vpack.c.b16 %v258, %v256
  %v339 = vpack.c.b16 %v259, %v257
  %v340 = vpack.c.b16 %v262, %v260
  %v341 = vpack.c.b16 %v263, %v261
  %v342 = vpack.c.b16 %v266, %v264
  %v343 = vpack.c.b16 %v267, %v265
  %v344 = vpack.c.b16 %v270, %v268
  %v345 = vpack.c.b16 %v271, %v269
  %v346 = vpack.c.b16 %v274, %v272
  %v347 = vpack.c.b16 %v275, %v273
  %v348 = vpack.c.b16 %v278, %v276
  %v349 = vpack.c.b16 %v279, %v277
  %v350 = vpack.c.b16 %v282, %v280
  %v351 = vpack.c.b16 %v283, %v281
  %v352 = vpack.c.b16 %v286, %v284
  %v353 = vpack.c.b16 %v287, %v285
  %v354 = vpack.c.b16 %v290, %v288
  %v355 = vpack.c.b16 %v291, %v289
  %v406 = vunpack.c.l.b16 %v82
  %v407 = vunpack.c.l.b16 %v83
  %v408 = vunpack.c.l.b16 %v84
  %v409 = vunpack.c.l.b16 %v85
  %v410 = vunpack.c.l.b16 %v86
  %v411 = vunpack.c.l.b16 %v87
  %v412 = vunpack.c.l.b16 %v88
  %v413 = vunpack.c.l.b16 %v89
  %v414 = vunpack.c.l.b16 %v90
  %v415 = vunpack.c.l.b16 %v91
  %v416 = vunpack.c.l.b16 %v92
  %v417 = vunpack.c.l.b16 %v93
  %v418 = vunpack.c.l.b16 %v94
  %v419 = vunpack.c.l.b16 %v95
  %v420 = vunpack.c.l.b16 %v96
  %v421 = vunpack.c.l.b16 %v97
  %v422 = vunpack.c.l.b16 %v98
  %v423 = vunpack.c.l.b16 %v99
  %v424 = vpack.c.b16 %v407, %v406
  %v425 = vpack.c.b16 %v409, %v408
  %v426 = vpack.c.b16 %v411, %v410
  %v427 = vpack.c.b16 %v413, %v412
  %v428 = vpack.c.b16 %v415, %v414
  %v429 = vpack.c.b16 %v417, %v416
  %v430 = vpack.c.b16 %v419, %v418
  %v431 = vpack.c.b16 %v421, %v420
  %v432 = vpack.c.b16 %v423, %v422
  %vm442 = vcmask 130048
  %v444 = vsel %vm442, %v293, 0
  %v447 = vsel %vm442, %v295, 0
  %v450 = vsel %vm442, %v297, 0
  %v453 = vsel %vm442, %v299, 0
  %v456 = vsel %vm442, %v301, 0
  %v459 = vsel %vm442, %v303, 0
  %v462 = vsel %vm442, %v305, 0
  %v465 = vsel %vm442, %v307, 0
  %v468 = vsel %vm442, %v309, 0
  %v471 = vsel %vm442, %v311, 0
  %v474 = vsel %vm442, %v313, 0
  %v477 = vsel %vm442, %v315, 0
  %v480 = vsel %vm442, %v317, 0
  %v483 = vsel %vm442, %v319, 0
  %v486 = vsel %vm442, %v321, 0
  %v489 = vsel %vm442, %v323, 0
  %v492 = vsel %vm442, %v325, 0
  %v495 = vsel %vm442, %v327, 0
  %v498 = vsel %vm442, %v329, 0
  %v501 = vsel %vm442, %v331, 0
  %v504 = vsel %vm442, %v333, 0
  %v507 = vsel %vm442, %v335, 0
  %v510 = vsel %vm442, %v337, 0
  %v513 = vsel %vm442, %v339, 0
  %v516 = vsel %vm442, %v341, 0
  %v519 = vsel %vm442, %v343, 0
  %v522 = vsel %vm442, %v345, 0
  %v525 = vsel %vm442, %v347, 0
  %v528 = vsel %vm442, %v349, 0
  %v531 = vsel %vm442, %v351, 0
  %v534 = vsel %vm442, %v353, 0
  %v537 = vsel %vm442, %v355, 0
  %539 = vmatpush.bf16.msra.mxu0 %v431
  %540 = vmatpush.bf16.msra.mxu0 %v430
  %541 = vmatpush.bf16.msra.mxu0 %v429
  %542 = vmatpush.bf16.msra.mxu0 %v428
  %543 = vmatpush.bf16.msra.mxu0 %v427
  %544 = vmatpush.bf16.msra.mxu0 %v426
  %545 = vmatpush.bf16.msra.mxu0 %v425
  %546 = vmatpush.bf16.msra.mxu0 %v424
  %547 = vmatmul.bf16.gmra.mxu0 %v292
  %v548 = vpop.f32.mrf.mxu0
  %v549 = vadd.f32 0.0, %v548
  %v550 = vpop.f32.mrf.mxu0
  %v551 = vadd.f32 0.0, %v550
  %552 = vmatmul.bf16.gmra.mxu0 %v294
  %v553 = vpop.f32.mrf.mxu0
  %v554 = vadd.f32 0.0, %v553
  %v555 = vpop.f32.mrf.mxu0
  %v556 = vadd.f32 0.0, %v555
  %557 = vmatmul.bf16.gmra.mxu0 %v296
  %v558 = vpop.f32.mrf.mxu0
  %v559 = vadd.f32 0.0, %v558
  %v560 = vpop.f32.mrf.mxu0
  %v561 = vadd.f32 0.0, %v560
  %562 = vmatmul.bf16.gmra.mxu0 %v298
  %v563 = vpop.f32.mrf.mxu0
  %v564 = vadd.f32 0.0, %v563
  %v565 = vpop.f32.mrf.mxu0
  %v566 = vadd.f32 0.0, %v565
  %567 = vmatmul.bf16.gmra.mxu0 %v300
  %v568 = vpop.f32.mrf.mxu0
  %v569 = vadd.f32 0.0, %v568
  %v570 = vpop.f32.mrf.mxu0
  %v571 = vadd.f32 0.0, %v570
  %572 = vmatmul.bf16.gmra.mxu0 %v302
  %v573 = vpop.f32.mrf.mxu0
  %v574 = vadd.f32 0.0, %v573
  %v575 = vpop.f32.mrf.mxu0
  %v576 = vadd.f32 0.0, %v575
  %577 = vmatmul.bf16.gmra.mxu0 %v304
  %v578 = vpop.f32.mrf.mxu0
  %v579 = vadd.f32 0.0, %v578
  %v580 = vpop.f32.mrf.mxu0
  %v581 = vadd.f32 0.0, %v580
  %582 = vmatmul.bf16.gmra.mxu0 %v306
  %v583 = vpop.f32.mrf.mxu0
  %v584 = vadd.f32 0.0, %v583
  %v585 = vpop.f32.mrf.mxu0
  %v586 = vadd.f32 0.0, %v585
  %587 = vmatmul.bf16.gmra.mxu0 %v308
  %v588 = vpop.f32.mrf.mxu0
  %v589 = vadd.f32 0.0, %v588
  %v590 = vpop.f32.mrf.mxu0
  %v591 = vadd.f32 0.0, %v590
  %592 = vmatmul.bf16.gmra.mxu0 %v310
  %v593 = vpop.f32.mrf.mxu0
  %v594 = vadd.f32 0.0, %v593
  %v595 = vpop.f32.mrf.mxu0
  %v596 = vadd.f32 0.0, %v595
  %597 = vmatmul.bf16.gmra.mxu0 %v312
  %v598 = vpop.f32.mrf.mxu0
  %v599 = vadd.f32 0.0, %v598
  %v600 = vpop.f32.mrf.mxu0
  %v601 = vadd.f32 0.0, %v600
  %602 = vmatmul.bf16.gmra.mxu0 %v314
  %v603 = vpop.f32.mrf.mxu0
  %v604 = vadd.f32 0.0, %v603
  %v605 = vpop.f32.mrf.mxu0
  %v606 = vadd.f32 0.0, %v605
  %607 = vmatmul.bf16.gmra.mxu0 %v316
  %v608 = vpop.f32.mrf.mxu0
  %v609 = vadd.f32 0.0, %v608
  %v610 = vpop.f32.mrf.mxu0
  %v611 = vadd.f32 0.0, %v610
  %612 = vmatmul.bf16.gmra.mxu0 %v318
  %v613 = vpop.f32.mrf.mxu0
  %v614 = vadd.f32 0.0, %v613
  %v615 = vpop.f32.mrf.mxu0
  %v616 = vadd.f32 0.0, %v615
  %617 = vmatmul.bf16.gmra.mxu0 %v320
  %v618 = vpop.f32.mrf.mxu0
  %v619 = vadd.f32 0.0, %v618
  %v620 = vpop.f32.mrf.mxu0
  %v621 = vadd.f32 0.0, %v620
  %622 = vmatmul.bf16.gmra.mxu0 %v322
  %v623 = vpop.f32.mrf.mxu0
  %v624 = vadd.f32 0.0, %v623
  %v625 = vpop.f32.mrf.mxu0
  %v626 = vadd.f32 0.0, %v625
  %627 = vmatmul.bf16.gmra.mxu0 %v324
  %v628 = vpop.f32.mrf.mxu0
  %v629 = vadd.f32 0.0, %v628
  %v630 = vpop.f32.mrf.mxu0
  %v631 = vadd.f32 0.0, %v630
  %632 = vmatmul.bf16.gmra.mxu0 %v326
  %v633 = vpop.f32.mrf.mxu0
  %v634 = vadd.f32 0.0, %v633
  %v635 = vpop.f32.mrf.mxu0
  %v636 = vadd.f32 0.0, %v635
  %637 = vmatmul.bf16.gmra.mxu0 %v328
  %v638 = vpop.f32.mrf.mxu0
  %v639 = vadd.f32 0.0, %v638
  %v640 = vpop.f32.mrf.mxu0
  %v641 = vadd.f32 0.0, %v640
  %642 = vmatmul.bf16.gmra.mxu0 %v330
  %v643 = vpop.f32.mrf.mxu0
  %v644 = vadd.f32 0.0, %v643
  %v645 = vpop.f32.mrf.mxu0
  %v646 = vadd.f32 0.0, %v645
  %647 = vmatmul.bf16.gmra.mxu0 %v332
  %v648 = vpop.f32.mrf.mxu0
  %v649 = vadd.f32 0.0, %v648
  %v650 = vpop.f32.mrf.mxu0
  %v651 = vadd.f32 0.0, %v650
  %652 = vmatmul.bf16.gmra.mxu0 %v334
  %v653 = vpop.f32.mrf.mxu0
  %v654 = vadd.f32 0.0, %v653
  %v655 = vpop.f32.mrf.mxu0
  %v656 = vadd.f32 0.0, %v655
  %657 = vmatmul.bf16.gmra.mxu0 %v336
  %v658 = vpop.f32.mrf.mxu0
  %v659 = vadd.f32 0.0, %v658
  %v660 = vpop.f32.mrf.mxu0
  %v661 = vadd.f32 0.0, %v660
  %662 = vmatmul.bf16.gmra.mxu0 %v338
  %v663 = vpop.f32.mrf.mxu0
  %v664 = vadd.f32 0.0, %v663
  %v665 = vpop.f32.mrf.mxu0
  %v666 = vadd.f32 0.0, %v665
  %667 = vmatmul.bf16.gmra.mxu0 %v340
  %v668 = vpop.f32.mrf.mxu0
  %v669 = vadd.f32 0.0, %v668
  %v670 = vpop.f32.mrf.mxu0
  %v671 = vadd.f32 0.0, %v670
  %672 = vmatmul.bf16.gmra.mxu0 %v342
  %v673 = vpop.f32.mrf.mxu0
  %v674 = vadd.f32 0.0, %v673
  %v675 = vpop.f32.mrf.mxu0
  %v676 = vadd.f32 0.0, %v675
  %677 = vmatmul.bf16.gmra.mxu0 %v344
  %v678 = vpop.f32.mrf.mxu0
  %v679 = vadd.f32 0.0, %v678
  %v680 = vpop.f32.mrf.mxu0
  %v681 = vadd.f32 0.0, %v680
  %682 = vmatmul.bf16.gmra.mxu0 %v346
  %v683 = vpop.f32.mrf.mxu0
  %v684 = vadd.f32 0.0, %v683
  %v685 = vpop.f32.mrf.mxu0
  %v686 = vadd.f32 0.0, %v685
  %687 = vmatmul.bf16.gmra.mxu0 %v348
  %v688 = vpop.f32.mrf.mxu0
  %v689 = vadd.f32 0.0, %v688
  %v690 = vpop.f32.mrf.mxu0
  %v691 = vadd.f32 0.0, %v690
  %692 = vmatmul.bf16.gmra.mxu0 %v350
  %v693 = vpop.f32.mrf.mxu0
  %v694 = vadd.f32 0.0, %v693
  %v695 = vpop.f32.mrf.mxu0
  %v696 = vadd.f32 0.0, %v695
  %697 = vmatmul.bf16.gmra.mxu0 %v352
  %v698 = vpop.f32.mrf.mxu0
  %v699 = vadd.f32 0.0, %v698
  %v700 = vpop.f32.mrf.mxu0
  %v701 = vadd.f32 0.0, %v700
  %702 = vmatmul.bf16.gmra.mxu0 %v354
  %v703 = vpop.f32.mrf.mxu0
  %v704 = vadd.f32 0.0, %v703
  %v705 = vpop.f32.mrf.mxu0
  %v706 = vadd.f32 0.0, %v705
  %707 = vdwg.mxu0
  %708 = vmatpush.bf16.msra.mxu0 0
  %709 = vmatpush.bf16.msra.mxu0 0
  %710 = vmatpush.bf16.msra.mxu0 0
  %711 = vmatpush.bf16.msra.mxu0 0
  %712 = vmatpush.bf16.msra.mxu0 0
  %713 = vmatpush.bf16.msra.mxu0 0
  %714 = vmatpush.bf16.msra.mxu0 0
  %715 = vmatpush.bf16.msra.mxu0 %v432
  %716 = vmatmul.bf16.gmra.mxu0 %v444
  %v717 = vpop.f32.mrf.mxu0
  %v718 = vadd.f32 %v549, %v717
  %v719 = vpop.f32.mrf.mxu0
  %v720 = vadd.f32 %v551, %v719
  %721 = vmatmul.bf16.gmra.mxu0 %v447
  %v722 = vpop.f32.mrf.mxu0
  %v723 = vadd.f32 %v554, %v722
  %v724 = vpop.f32.mrf.mxu0
  %v725 = vadd.f32 %v556, %v724
  %726 = vmatmul.bf16.gmra.mxu0 %v450
  %v727 = vpop.f32.mrf.mxu0
  %v728 = vadd.f32 %v559, %v727
  %v729 = vpop.f32.mrf.mxu0
  %v730 = vadd.f32 %v561, %v729
  %731 = vmatmul.bf16.gmra.mxu0 %v453
  %v732 = vpop.f32.mrf.mxu0
  %v733 = vadd.f32 %v564, %v732
  %v734 = vpop.f32.mrf.mxu0
  %v735 = vadd.f32 %v566, %v734
  %736 = vmatmul.bf16.gmra.mxu0 %v456
  %v737 = vpop.f32.mrf.mxu0
  %v738 = vadd.f32 %v569, %v737
  %v739 = vpop.f32.mrf.mxu0
  %v740 = vadd.f32 %v571, %v739
  %741 = vmatmul.bf16.gmra.mxu0 %v459
  %v742 = vpop.f32.mrf.mxu0
  %v743 = vadd.f32 %v574, %v742
  %v744 = vpop.f32.mrf.mxu0
  %v745 = vadd.f32 %v576, %v744
  %746 = vmatmul.bf16.gmra.mxu0 %v462
  %v747 = vpop.f32.mrf.mxu0
  %v748 = vadd.f32 %v579, %v747
  %v749 = vpop.f32.mrf.mxu0
  %v750 = vadd.f32 %v581, %v749
  %751 = vmatmul.bf16.gmra.mxu0 %v465
  %v752 = vpop.f32.mrf.mxu0
  %v753 = vadd.f32 %v584, %v752
  %v754 = vpop.f32.mrf.mxu0
  %v755 = vadd.f32 %v586, %v754
  %756 = vmatmul.bf16.gmra.mxu0 %v468
  %v757 = vpop.f32.mrf.mxu0
  %v758 = vadd.f32 %v589, %v757
  %v759 = vpop.f32.mrf.mxu0
  %v760 = vadd.f32 %v591, %v759
  %761 = vmatmul.bf16.gmra.mxu0 %v471
  %v762 = vpop.f32.mrf.mxu0
  %v763 = vadd.f32 %v594, %v762
  %v764 = vpop.f32.mrf.mxu0
  %v765 = vadd.f32 %v596, %v764
  %766 = vmatmul.bf16.gmra.mxu0 %v474
  %v767 = vpop.f32.mrf.mxu0
  %v768 = vadd.f32 %v599, %v767
  %v769 = vpop.f32.mrf.mxu0
  %v770 = vadd.f32 %v601, %v769
  %771 = vmatmul.bf16.gmra.mxu0 %v477
  %v772 = vpop.f32.mrf.mxu0
  %v773 = vadd.f32 %v604, %v772
  %v774 = vpop.f32.mrf.mxu0
  %v775 = vadd.f32 %v606, %v774
  %776 = vmatmul.bf16.gmra.mxu0 %v480
  %v777 = vpop.f32.mrf.mxu0
  %v778 = vadd.f32 %v609, %v777
  %v779 = vpop.f32.mrf.mxu0
  %v780 = vadd.f32 %v611, %v779
  %781 = vmatmul.bf16.gmra.mxu0 %v483
  %v782 = vpop.f32.mrf.mxu0
  %v783 = vadd.f32 %v614, %v782
  %v784 = vpop.f32.mrf.mxu0
  %v785 = vadd.f32 %v616, %v784
  %786 = vmatmul.bf16.gmra.mxu0 %v486
  %v787 = vpop.f32.mrf.mxu0
  %v788 = vadd.f32 %v619, %v787
  %v789 = vpop.f32.mrf.mxu0
  %v790 = vadd.f32 %v621, %v789
  %791 = vmatmul.bf16.gmra.mxu0 %v489
  %v792 = vpop.f32.mrf.mxu0
  %v793 = vadd.f32 %v624, %v792
  %v794 = vpop.f32.mrf.mxu0
  %v795 = vadd.f32 %v626, %v794
  %796 = vmatmul.bf16.gmra.mxu0 %v492
  %v797 = vpop.f32.mrf.mxu0
  %v798 = vadd.f32 %v629, %v797
  %v799 = vpop.f32.mrf.mxu0
  %v800 = vadd.f32 %v631, %v799
  %801 = vmatmul.bf16.gmra.mxu0 %v495
  %v802 = vpop.f32.mrf.mxu0
  %v803 = vadd.f32 %v634, %v802
  %v804 = vpop.f32.mrf.mxu0
  %v805 = vadd.f32 %v636, %v804
  %806 = vmatmul.bf16.gmra.mxu0 %v498
  %v807 = vpop.f32.mrf.mxu0
  %v808 = vadd.f32 %v639, %v807
  %v809 = vpop.f32.mrf.mxu0
  %v810 = vadd.f32 %v641, %v809
  %811 = vmatmul.bf16.gmra.mxu0 %v501
  %v812 = vpop.f32.mrf.mxu0
  %v813 = vadd.f32 %v644, %v812
  %v814 = vpop.f32.mrf.mxu0
  %v815 = vadd.f32 %v646, %v814
  %816 = vmatmul.bf16.gmra.mxu0 %v504
  %v817 = vpop.f32.mrf.mxu0
  %v818 = vadd.f32 %v649, %v817
  %v819 = vpop.f32.mrf.mxu0
  %v820 = vadd.f32 %v651, %v819
  %821 = vmatmul.bf16.gmra.mxu0 %v507
  %v822 = vpop.f32.mrf.mxu0
  %v823 = vadd.f32 %v654, %v822
  %v824 = vpop.f32.mrf.mxu0
  %v825 = vadd.f32 %v656, %v824
  %826 = vmatmul.bf16.gmra.mxu0 %v510
  %v827 = vpop.f32.mrf.mxu0
  %v828 = vadd.f32 %v659, %v827
  %v829 = vpop.f32.mrf.mxu0
  %v830 = vadd.f32 %v661, %v829
  %831 = vmatmul.bf16.gmra.mxu0 %v513
  %v832 = vpop.f32.mrf.mxu0
  %v833 = vadd.f32 %v664, %v832
  %v834 = vpop.f32.mrf.mxu0
  %v835 = vadd.f32 %v666, %v834
  %836 = vmatmul.bf16.gmra.mxu0 %v516
  %v837 = vpop.f32.mrf.mxu0
  %v838 = vadd.f32 %v669, %v837
  %v839 = vpop.f32.mrf.mxu0
  %v840 = vadd.f32 %v671, %v839
  %841 = vmatmul.bf16.gmra.mxu0 %v519
  %v842 = vpop.f32.mrf.mxu0
  %v843 = vadd.f32 %v674, %v842
  %v844 = vpop.f32.mrf.mxu0
  %v845 = vadd.f32 %v676, %v844
  %846 = vmatmul.bf16.gmra.mxu0 %v522
  %v847 = vpop.f32.mrf.mxu0
  %v848 = vadd.f32 %v679, %v847
  %v849 = vpop.f32.mrf.mxu0
  %v850 = vadd.f32 %v681, %v849
  %851 = vmatmul.bf16.gmra.mxu0 %v525
  %v852 = vpop.f32.mrf.mxu0
  %v853 = vadd.f32 %v684, %v852
  %v854 = vpop.f32.mrf.mxu0
  %v855 = vadd.f32 %v686, %v854
  %856 = vmatmul.bf16.gmra.mxu0 %v528
  %v857 = vpop.f32.mrf.mxu0
  %v858 = vadd.f32 %v689, %v857
  %v859 = vpop.f32.mrf.mxu0
  %v860 = vadd.f32 %v691, %v859
  %861 = vmatmul.bf16.gmra.mxu0 %v531
  %v862 = vpop.f32.mrf.mxu0
  %v863 = vadd.f32 %v694, %v862
  %v864 = vpop.f32.mrf.mxu0
  %v865 = vadd.f32 %v696, %v864
  %866 = vmatmul.bf16.gmra.mxu0 %v534
  %v867 = vpop.f32.mrf.mxu0
  %v868 = vadd.f32 %v699, %v867
  %v869 = vpop.f32.mrf.mxu0
  %v870 = vadd.f32 %v701, %v869
  %871 = vmatmul.bf16.gmra.mxu0 %v537
  %v872 = vpop.f32.mrf.mxu0
  %v873 = vadd.f32 %v704, %v872
  %v874 = vpop.f32.mrf.mxu0
  %v875 = vadd.f32 %v706, %v874
  %876 = vdwg.mxu0
  %v877 = vld [vmem:[%s2] sm:$0x1]
  %v879 = vperm.slane %v877, 0
  %v881 = vmul.f32 %v718, %v879
  %v882 = vmul.f32 %v720, %v879
  %v883 = vmul.f32 %v723, %v879
  %v884 = vmul.f32 %v725, %v879
  %v885 = vmul.f32 %v728, %v879
  %v886 = vmul.f32 %v730, %v879
  %v887 = vmul.f32 %v733, %v879
  %v888 = vmul.f32 %v735, %v879
  %v889 = vmul.f32 %v738, %v879
  %v890 = vmul.f32 %v740, %v879
  %v891 = vmul.f32 %v743, %v879
  %v892 = vmul.f32 %v745, %v879
  %v893 = vmul.f32 %v748, %v879
  %v894 = vmul.f32 %v750, %v879
  %v895 = vmul.f32 %v753, %v879
  %v896 = vmul.f32 %v755, %v879
  %v897 = vmul.f32 %v758, %v879
  %v898 = vmul.f32 %v760, %v879
  %v899 = vmul.f32 %v763, %v879
  %v900 = vmul.f32 %v765, %v879
  %v901 = vmul.f32 %v768, %v879
  %v902 = vmul.f32 %v770, %v879
  %v903 = vmul.f32 %v773, %v879
  %v904 = vmul.f32 %v775, %v879
  %v905 = vmul.f32 %v778, %v879
  %v906 = vmul.f32 %v780, %v879
  %v907 = vmul.f32 %v783, %v879
  %v908 = vmul.f32 %v785, %v879
  %v909 = vmul.f32 %v788, %v879
  %v910 = vmul.f32 %v790, %v879
  %v911 = vmul.f32 %v793, %v879
  %v912 = vmul.f32 %v795, %v879
  %v913 = vmul.f32 %v798, %v879
  %v914 = vmul.f32 %v800, %v879
  %v915 = vmul.f32 %v803, %v879
  %v916 = vmul.f32 %v805, %v879
  %v917 = vmul.f32 %v808, %v879
  %v918 = vmul.f32 %v810, %v879
  %v919 = vmul.f32 %v813, %v879
  %v920 = vmul.f32 %v815, %v879
  %v921 = vmul.f32 %v818, %v879
  %v922 = vmul.f32 %v820, %v879
  %v923 = vmul.f32 %v823, %v879
  %v924 = vmul.f32 %v825, %v879
  %v925 = vmul.f32 %v828, %v879
  %v926 = vmul.f32 %v830, %v879
  %v927 = vmul.f32 %v833, %v879
  %v928 = vmul.f32 %v835, %v879
  %v929 = vmul.f32 %v838, %v879
  %v930 = vmul.f32 %v840, %v879
  %v931 = vmul.f32 %v843, %v879
  %v932 = vmul.f32 %v845, %v879
  %v933 = vmul.f32 %v848, %v879
  %v934 = vmul.f32 %v850, %v879
  %v935 = vmul.f32 %v853, %v879
  %v936 = vmul.f32 %v855, %v879
  %v937 = vmul.f32 %v858, %v879
  %v938 = vmul.f32 %v860, %v879
  %v939 = vmul.f32 %v863, %v879
  %v940 = vmul.f32 %v865, %v879
  %v941 = vmul.f32 %v868, %v879
  %v942 = vmul.f32 %v870, %v879
  %v943 = vmul.f32 %v873, %v879
  %v944 = vmul.f32 %v875, %v879
  %v945 = vld [vmem:[%s3] sm:$0x1]
  %v947 = vperm.slane %v945, 0
  %v949 = vadd.f32 %v881, %v947
  %v950 = vadd.f32 %v882, %v947
  %v951 = vadd.f32 %v883, %v947
  %v952 = vadd.f32 %v884, %v947
  %v953 = vadd.f32 %v885, %v947
  %v954 = vadd.f32 %v886, %v947
  %v955 = vadd.f32 %v887, %v947
  %v956 = vadd.f32 %v888, %v947
  %v957 = vadd.f32 %v889, %v947
  %v958 = vadd.f32 %v890, %v947
  %v959 = vadd.f32 %v891, %v947
  %v960 = vadd.f32 %v892, %v947
  %v961 = vadd.f32 %v893, %v947
  %v962 = vadd.f32 %v894, %v947
  %v963 = vadd.f32 %v895, %v947
  %v964 = vadd.f32 %v896, %v947
  %v965 = vadd.f32 %v897, %v947
  %v966 = vadd.f32 %v898, %v947
  %v967 = vadd.f32 %v899, %v947
  %v968 = vadd.f32 %v900, %v947
  %v969 = vadd.f32 %v901, %v947
  %v970 = vadd.f32 %v902, %v947
  %v971 = vadd.f32 %v903, %v947
  %v972 = vadd.f32 %v904, %v947
  %v973 = vadd.f32 %v905, %v947
  %v974 = vadd.f32 %v906, %v947
  %v975 = vadd.f32 %v907, %v947
  %v976 = vadd.f32 %v908, %v947
  %v977 = vadd.f32 %v909, %v947
  %v978 = vadd.f32 %v910, %v947
  %v979 = vadd.f32 %v911, %v947
  %v980 = vadd.f32 %v912, %v947
  %v981 = vadd.f32 %v913, %v947
  %v982 = vadd.f32 %v914, %v947
  %v983 = vadd.f32 %v915, %v947
  %v984 = vadd.f32 %v916, %v947
  %v985 = vadd.f32 %v917, %v947
  %v986 = vadd.f32 %v918, %v947
  %v987 = vadd.f32 %v919, %v947
  %v988 = vadd.f32 %v920, %v947
  %v989 = vadd.f32 %v921, %v947
  %v990 = vadd.f32 %v922, %v947
  %v991 = vadd.f32 %v923, %v947
  %v992 = vadd.f32 %v924, %v947
  %v993 = vadd.f32 %v925, %v947
  %v994 = vadd.f32 %v926, %v947
  %v995 = vadd.f32 %v927, %v947
  %v996 = vadd.f32 %v928, %v947
  %v997 = vadd.f32 %v929, %v947
  %v998 = vadd.f32 %v930, %v947
  %v999 = vadd.f32 %v931, %v947
  %v1000 = vadd.f32 %v932, %v947
  %v1001 = vadd.f32 %v933, %v947
  %v1002 = vadd.f32 %v934, %v947
  %v1003 = vadd.f32 %v935, %v947
  %v1004 = vadd.f32 %v936, %v947
  %v1005 = vadd.f32 %v937, %v947
  %v1006 = vadd.f32 %v938, %v947
  %v1007 = vadd.f32 %v939, %v947
  %v1008 = vadd.f32 %v940, %v947
  %v1009 = vadd.f32 %v941, %v947
  %v1010 = vadd.f32 %v942, %v947
  %v1011 = vadd.f32 %v943, %v947
  %v1012 = vadd.f32 %v944, %v947
  %vm1013 = vcmp.ge.f32.partialorder %v949, 0.0
  %vm1014 = vcmp.ge.f32.partialorder %v950, 0.0
  %vm1015 = vcmp.ge.f32.partialorder %v951, 0.0
  %vm1016 = vcmp.ge.f32.partialorder %v952, 0.0
  %vm1017 = vcmp.ge.f32.partialorder %v953, 0.0
  %vm1018 = vcmp.ge.f32.partialorder %v954, 0.0
  %vm1019 = vcmp.ge.f32.partialorder %v955, 0.0
  %vm1020 = vcmp.ge.f32.partialorder %v956, 0.0
  %vm1021 = vcmp.ge.f32.partialorder %v957, 0.0
  %vm1022 = vcmp.ge.f32.partialorder %v958, 0.0
  %vm1023 = vcmp.ge.f32.partialorder %v959, 0.0
  %vm1024 = vcmp.ge.f32.partialorder %v960, 0.0
  %vm1025 = vcmp.ge.f32.partialorder %v961, 0.0
  %vm1026 = vcmp.ge.f32.partialorder %v962, 0.0
  %vm1027 = vcmp.ge.f32.partialorder %v963, 0.0
  %vm1028 = vcmp.ge.f32.partialorder %v964, 0.0
  %vm1029 = vcmp.ge.f32.partialorder %v965, 0.0
  %vm1030 = vcmp.ge.f32.partialorder %v966, 0.0
  %vm1031 = vcmp.ge.f32.partialorder %v967, 0.0
  %vm1032 = vcmp.ge.f32.partialorder %v968, 0.0
  %vm1033 = vcmp.ge.f32.partialorder %v969, 0.0
  %vm1034 = vcmp.ge.f32.partialorder %v970, 0.0
  %vm1035 = vcmp.ge.f32.partialorder %v971, 0.0
  %vm1036 = vcmp.ge.f32.partialorder %v972, 0.0
  %vm1037 = vcmp.ge.f32.partialorder %v973, 0.0
  %vm1038 = vcmp.ge.f32.partialorder %v974, 0.0
  %vm1039 = vcmp.ge.f32.partialorder %v975, 0.0
  %vm1040 = vcmp.ge.f32.partialorder %v976, 0.0
  %vm1041 = vcmp.ge.f32.partialorder %v977, 0.0
  %vm1042 = vcmp.ge.f32.partialorder %v978, 0.0
  %vm1043 = vcmp.ge.f32.partialorder %v979, 0.0
  %vm1044 = vcmp.ge.f32.partialorder %v980, 0.0
  %vm1045 = vcmp.ge.f32.partialorder %v981, 0.0
  %vm1046 = vcmp.ge.f32.partialorder %v982, 0.0
  %vm1047 = vcmp.ge.f32.partialorder %v983, 0.0
  %vm1048 = vcmp.ge.f32.partialorder %v984, 0.0
  %vm1049 = vcmp.ge.f32.partialorder %v985, 0.0
  %vm1050 = vcmp.ge.f32.partialorder %v986, 0.0
  %vm1051 = vcmp.ge.f32.partialorder %v987, 0.0
  %vm1052 = vcmp.ge.f32.partialorder %v988, 0.0
  %vm1053 = vcmp.ge.f32.partialorder %v989, 0.0
  %vm1054 = vcmp.ge.f32.partialorder %v990, 0.0
  %vm1055 = vcmp.ge.f32.partialorder %v991, 0.0
  %vm1056 = vcmp.ge.f32.partialorder %v992, 0.0
  %vm1057 = vcmp.ge.f32.partialorder %v993, 0.0
  %vm1058 = vcmp.ge.f32.partialorder %v994, 0.0
  %vm1059 = vcmp.ge.f32.partialorder %v995, 0.0
  %vm1060 = vcmp.ge.f32.partialorder %v996, 0.0
  %vm1061 = vcmp.ge.f32.partialorder %v997, 0.0
  %vm1062 = vcmp.ge.f32.partialorder %v998, 0.0
  %vm1063 = vcmp.ge.f32.partialorder %v999, 0.0
  %vm1064 = vcmp.ge.f32.partialorder %v1000, 0.0
  %vm1065 = vcmp.ge.f32.partialorder %v1001, 0.0
  %vm1066 = vcmp.ge.f32.partialorder %v1002, 0.0
  %vm1067 = vcmp.ge.f32.partialorder %v1003, 0.0
  %vm1068 = vcmp.ge.f32.partialorder %v1004, 0.0
  %vm1069 = vcmp.ge.f32.partialorder %v1005, 0.0
  %vm1070 = vcmp.ge.f32.partialorder %v1006, 0.0
  %vm1071 = vcmp.ge.f32.partialorder %v1007, 0.0
  %vm1072 = vcmp.ge.f32.partialorder %v1008, 0.0
  %vm1073 = vcmp.ge.f32.partialorder %v1009, 0.0
  %vm1074 = vcmp.ge.f32.partialorder %v1010, 0.0
  %vm1075 = vcmp.ge.f32.partialorder %v1011, 0.0
  %vm1076 = vcmp.ge.f32.partialorder %v1012, 0.0
  %v1077 = vmul.f32 %v949, 0.0
  %v1078 = vmul.f32 %v950, 0.0
  %v1079 = vmul.f32 %v951, 0.0
  %v1080 = vmul.f32 %v952, 0.0
  %v1081 = vmul.f32 %v953, 0.0
  %v1082 = vmul.f32 %v954, 0.0
  %v1083 = vmul.f32 %v955, 0.0
  %v1084 = vmul.f32 %v956, 0.0
  %v1085 = vmul.f32 %v957, 0.0
  %v1086 = vmul.f32 %v958, 0.0
  %v1087 = vmul.f32 %v959, 0.0
  %v1088 = vmul.f32 %v960, 0.0
  %v1089 = vmul.f32 %v961, 0.0
  %v1090 = vmul.f32 %v962, 0.0
  %v1091 = vmul.f32 %v963, 0.0
  %v1092 = vmul.f32 %v964, 0.0
  %v1093 = vmul.f32 %v965, 0.0
  %v1094 = vmul.f32 %v966, 0.0
  %v1095 = vmul.f32 %v967, 0.0
  %v1096 = vmul.f32 %v968, 0.0
  %v1097 = vmul.f32 %v969, 0.0
  %v1098 = vmul.f32 %v970, 0.0
  %v1099 = vmul.f32 %v971, 0.0
  %v1100 = vmul.f32 %v972, 0.0
  %v1101 = vmul.f32 %v973, 0.0
  %v1102 = vmul.f32 %v974, 0.0
  %v1103 = vmul.f32 %v975, 0.0
  %v1104 = vmul.f32 %v976, 0.0
  %v1105 = vmul.f32 %v977, 0.0
  %v1106 = vmul.f32 %v978, 0.0
  %v1107 = vmul.f32 %v979, 0.0
  %v1108 = vmul.f32 %v980, 0.0
  %v1109 = vmul.f32 %v981, 0.0
  %v1110 = vmul.f32 %v982, 0.0
  %v1111 = vmul.f32 %v983, 0.0
  %v1112 = vmul.f32 %v984, 0.0
  %v1113 = vmul.f32 %v985, 0.0
  %v1114 = vmul.f32 %v986, 0.0
  %v1115 = vmul.f32 %v987, 0.0
  %v1116 = vmul.f32 %v988, 0.0
  %v1117 = vmul.f32 %v989, 0.0
  %v1118 = vmul.f32 %v990, 0.0
  %v1119 = vmul.f32 %v991, 0.0
  %v1120 = vmul.f32 %v992, 0.0
  %v1121 = vmul.f32 %v993, 0.0
  %v1122 = vmul.f32 %v994, 0.0
  %v1123 = vmul.f32 %v995, 0.0
  %v1124 = vmul.f32 %v996, 0.0
  %v1125 = vmul.f32 %v997, 0.0
  %v1126 = vmul.f32 %v998, 0.0
  %v1127 = vmul.f32 %v999, 0.0
  %v1128 = vmul.f32 %v1000, 0.0
  %v1129 = vmul.f32 %v1001, 0.0
  %v1130 = vmul.f32 %v1002, 0.0
  %v1131 = vmul.f32 %v1003, 0.0
  %v1132 = vmul.f32 %v1004, 0.0
  %v1133 = vmul.f32 %v1005, 0.0
  %v1134 = vmul.f32 %v1006, 0.0
  %v1135 = vmul.f32 %v1007, 0.0
  %v1136 = vmul.f32 %v1008, 0.0
  %v1137 = vmul.f32 %v1009, 0.0
  %v1138 = vmul.f32 %v1010, 0.0
  %v1139 = vmul.f32 %v1011, 0.0
  %v1140 = vmul.f32 %v1012, 0.0
  %v1141 = vsel %vm1013, %v949, %v1077
  %v1142 = vsel %vm1014, %v950, %v1078
  %v1143 = vsel %vm1015, %v951, %v1079
  %v1144 = vsel %vm1016, %v952, %v1080
  %v1145 = vsel %vm1017, %v953, %v1081
  %v1146 = vsel %vm1018, %v954, %v1082
  %v1147 = vsel %vm1019, %v955, %v1083
  %v1148 = vsel %vm1020, %v956, %v1084
  %v1149 = vsel %vm1021, %v957, %v1085
  %v1150 = vsel %vm1022, %v958, %v1086
  %v1151 = vsel %vm1023, %v959, %v1087
  %v1152 = vsel %vm1024, %v960, %v1088
  %v1153 = vsel %vm1025, %v961, %v1089
  %v1154 = vsel %vm1026, %v962, %v1090
  %v1155 = vsel %vm1027, %v963, %v1091
  %v1156 = vsel %vm1028, %v964, %v1092
  %v1157 = vsel %vm1029, %v965, %v1093
  %v1158 = vsel %vm1030, %v966, %v1094
  %v1159 = vsel %vm1031, %v967, %v1095
  %v1160 = vsel %vm1032, %v968, %v1096
  %v1161 = vsel %vm1033, %v969, %v1097
  %v1162 = vsel %vm1034, %v970, %v1098
  %v1163 = vsel %vm1035, %v971, %v1099
  %v1164 = vsel %vm1036, %v972, %v1100
  %v1165 = vsel %vm1037, %v973, %v1101
  %v1166 = vsel %vm1038, %v974, %v1102
  %v1167 = vsel %vm1039, %v975, %v1103
  %v1168 = vsel %vm1040, %v976, %v1104
  %v1169 = vsel %vm1041, %v977, %v1105
  %v1170 = vsel %vm1042, %v978, %v1106
  %v1171 = vsel %vm1043, %v979, %v1107
  %v1172 = vsel %vm1044, %v980, %v1108
  %v1173 = vsel %vm1045, %v981, %v1109
  %v1174 = vsel %vm1046, %v982, %v1110
  %v1175 = vsel %vm1047, %v983, %v1111
  %v1176 = vsel %vm1048, %v984, %v1112
  %v1177 = vsel %vm1049, %v985, %v1113
  %v1178 = vsel %vm1050, %v986, %v1114
  %v1179 = vsel %vm1051, %v987, %v1115
  %v1180 = vsel %vm1052, %v988, %v1116
  %v1181 = vsel %vm1053, %v989, %v1117
  %v1182 = vsel %vm1054, %v990, %v1118
  %v1183 = vsel %vm1055, %v991, %v1119
  %v1184 = vsel %vm1056, %v992, %v1120
  %v1185 = vsel %vm1057, %v993, %v1121
  %v1186 = vsel %vm1058, %v994, %v1122
  %v1187 = vsel %vm1059, %v995, %v1123
  %v1188 = vsel %vm1060, %v996, %v1124
  %v1189 = vsel %vm1061, %v997, %v1125
  %v1190 = vsel %vm1062, %v998, %v1126
  %v1191 = vsel %vm1063, %v999, %v1127
  %v1192 = vsel %vm1064, %v1000, %v1128
  %v1193 = vsel %vm1065, %v1001, %v1129
  %v1194 = vsel %vm1066, %v1002, %v1130
  %v1195 = vsel %vm1067, %v1003, %v1131
  %v1196 = vsel %vm1068, %v1004, %v1132
  %v1197 = vsel %vm1069, %v1005, %v1133
  %v1198 = vsel %vm1070, %v1006, %v1134
  %v1199 = vsel %vm1071, %v1007, %v1135
  %v1200 = vsel %vm1072, %v1008, %v1136
  %v1201 = vsel %vm1073, %v1009, %v1137
  %v1202 = vsel %vm1074, %v1010, %v1138
  %v1203 = vsel %vm1075, %v1011, %v1139
  %v1204 = vsel %vm1076, %v1012, %v1140
  %vm1205 = vcmask 261120
  %1206 = vst.msk [vmem:[%s4] sm:$0xff] %vm1205, %v1141
  %1207 = vst.msk [vmem:[%s4 + $0x8] sm:$0xff] %vm1205, %v1142
  %1208 = vst.msk [vmem:[%s4 + $0x10] sm:$0xff] %vm1205, %v1143
  %1209 = vst.msk [vmem:[%s4 + $0x18] sm:$0xff] %vm1205, %v1144
  %1210 = vst.msk [vmem:[%s4 + $0x20] sm:$0xff] %vm1205, %v1145
  %1211 = vst.msk [vmem:[%s4 + $0x28] sm:$0xff] %vm1205, %v1146
  %1212 = vst.msk [vmem:[%s4 + $0x30] sm:$0xff] %vm1205, %v1147
  %1213 = vst.msk [vmem:[%s4 + $0x38] sm:$0xff] %vm1205, %v1148
  %1214 = vst.msk [vmem:[%s4 + $0x40] sm:$0xff] %vm1205, %v1149
  %1215 = vst.msk [vmem:[%s4 + $0x48] sm:$0xff] %vm1205, %v1150
  %1216 = vst.msk [vmem:[%s4 + $0x50] sm:$0xff] %vm1205, %v1151
  %1217 = vst.msk [vmem:[%s4 + $0x58] sm:$0xff] %vm1205, %v1152
  %1218 = vst.msk [vmem:[%s4 + $0x60] sm:$0xff] %vm1205, %v1153
  %1219 = vst.msk [vmem:[%s4 + $0x68] sm:$0xff] %vm1205, %v1154
  %1220 = vst.msk [vmem:[%s4 + $0x70] sm:$0xff] %vm1205, %v1155
  %1221 = vst.msk [vmem:[%s4 + $0x78] sm:$0xff] %vm1205, %v1156
  %1222 = vst.msk [vmem:[%s4 + $0x80] sm:$0xff] %vm1205, %v1157
  %1223 = vst.msk [vmem:[%s4 + $0x88] sm:$0xff] %vm1205, %v1158
  %1224 = vst.msk [vmem:[%s4 + $0x90] sm:$0xff] %vm1205, %v1159
  %1225 = vst.msk [vmem:[%s4 + $0x98] sm:$0xff] %vm1205, %v1160
  %1226 = vst.msk [vmem:[%s4 + $0xa0] sm:$0xff] %vm1205, %v1161
  %1227 = vst.msk [vmem:[%s4 + $0xa8] sm:$0xff] %vm1205, %v1162
  %1228 = vst.msk [vmem:[%s4 + $0xb0] sm:$0xff] %vm1205, %v1163
  %1229 = vst.msk [vmem:[%s4 + $0xb8] sm:$0xff] %vm1205, %v1164
  %1230 = vst.msk [vmem:[%s4 + $0xc0] sm:$0xff] %vm1205, %v1165
  %1231 = vst.msk [vmem:[%s4 + $0xc8] sm:$0xff] %vm1205, %v1166
  %1232 = vst.msk [vmem:[%s4 + $0xd0] sm:$0xff] %vm1205, %v1167
  %1233 = vst.msk [vmem:[%s4 + $0xd8] sm:$0xff] %vm1205, %v1168
  %1234 = vst.msk [vmem:[%s4 + $0xe0] sm:$0xff] %vm1205, %v1169
  %1235 = vst.msk [vmem:[%s4 + $0xe8] sm:$0xff] %vm1205, %v1170
  %1236 = vst.msk [vmem:[%s4 + $0xf0] sm:$0xff] %vm1205, %v1171
  %1237 = vst.msk [vmem:[%s4 + $0xf8] sm:$0xff] %vm1205, %v1172
  %1238 = vst.msk [vmem:[%s4 + $0x100] sm:$0xff] %vm1205, %v1173
  %1239 = vst.msk [vmem:[%s4 + $0x108] sm:$0xff] %vm1205, %v1174
  %1240 = vst.msk [vmem:[%s4 + $0x110] sm:$0xff] %vm1205, %v1175
  %1241 = vst.msk [vmem:[%s4 + $0x118] sm:$0xff] %vm1205, %v1176
  %1242 = vst.msk [vmem:[%s4 + $0x120] sm:$0xff] %vm1205, %v1177
  %1243 = vst.msk [vmem:[%s4 + $0x128] sm:$0xff] %vm1205, %v1178
  %1244 = vst.msk [vmem:[%s4 + $0x130] sm:$0xff] %vm1205, %v1179
  %1245 = vst.msk [vmem:[%s4 + $0x138] sm:$0xff] %vm1205, %v1180
  %1246 = vst.msk [vmem:[%s4 + $0x140] sm:$0xff] %vm1205, %v1181
  %1247 = vst.msk [vmem:[%s4 + $0x148] sm:$0xff] %vm1205, %v1182
  %1248 = vst.msk [vmem:[%s4 + $0x150] sm:$0xff] %vm1205, %v1183
  %1249 = vst.msk [vmem:[%s4 + $0x158] sm:$0xff] %vm1205, %v1184
  %1250 = vst.msk [vmem:[%s4 + $0x160] sm:$0xff] %vm1205, %v1185
  %1251 = vst.msk [vmem:[%s4 + $0x168] sm:$0xff] %vm1205, %v1186
  %1252 = vst.msk [vmem:[%s4 + $0x170] sm:$0xff] %vm1205, %v1187
  %1253 = vst.msk [vmem:[%s4 + $0x178] sm:$0xff] %vm1205, %v1188
  %1254 = vst.msk [vmem:[%s4 + $0x180] sm:$0xff] %vm1205, %v1189
  %1255 = vst.msk [vmem:[%s4 + $0x188] sm:$0xff] %vm1205, %v1190
  %1256 = vst.msk [vmem:[%s4 + $0x190] sm:$0xff] %vm1205, %v1191
  %1257 = vst.msk [vmem:[%s4 + $0x198] sm:$0xff] %vm1205, %v1192
  %1258 = vst.msk [vmem:[%s4 + $0x1a0] sm:$0xff] %vm1205, %v1193
  %1259 = vst.msk [vmem:[%s4 + $0x1a8] sm:$0xff] %vm1205, %v1194
  %1260 = vst.msk [vmem:[%s4 + $0x1b0] sm:$0xff] %vm1205, %v1195
  %1261 = vst.msk [vmem:[%s4 + $0x1b8] sm:$0xff] %vm1205, %v1196
  %1262 = vst.msk [vmem:[%s4 + $0x1c0] sm:$0xff] %vm1205, %v1197
  %1263 = vst.msk [vmem:[%s4 + $0x1c8] sm:$0xff] %vm1205, %v1198
  %1264 = vst.msk [vmem:[%s4 + $0x1d0] sm:$0xff] %vm1205, %v1199
  %1265 = vst.msk [vmem:[%s4 + $0x1d8] sm:$0xff] %vm1205, %v1200
  %1266 = vst.msk [vmem:[%s4 + $0x1e0] sm:$0xff] %vm1205, %v1201
  %1267 = vst.msk [vmem:[%s4 + $0x1e8] sm:$0xff] %vm1205, %v1202
  %1268 = vst.msk [vmem:[%s4 + $0x1f0] sm:$0xff] %vm1205, %v1203
  %1269 = vst.msk [vmem:[%s4 + $0x1f8] sm:$0xff] %vm1205, %v1204
  // Predicated region
  $region18: #{wide_resnet_forward.11} parent=0 // pred_check
    _
  $region19: #{wide_resnet_forward.11} parent=0 // pred_check_branch
    %1271 = sbr.rel (0) target = $region21
  $region20: #{wide_resnet_forward.11} parent=0 // pred_region
    _
  $region21: #{wide_resnet_forward.11} parent=0 // pred_fallthru
    _
  // Predicated region
  $region22: #{wide_resnet_forward.11} parent=0 // pred_check
    _
  $region23: #{wide_resnet_forward.11} parent=0 // pred_check_branch
    %1273 = sbr.rel (0) target = $region25
  $region24: #{wide_resnet_forward.11} parent=0 // pred_region
    _
  $region25: #{wide_resnet_forward.11} parent=0 // pred_fallthru
    _

// kernel: wide_resnet_forward.13
$region0: #{wide_resnet_forward.13}
  #allocation0 [shape = 'u32[]', space=smem, size = 0x4, offset = 0x4, fixed_abs, tag = 'smem constant byte address 0x4 - core index']
  #allocation1 [shape = 'u32[72,128]{1,0:T(1,128)}', space=vmem, size = 0x9000, scoped, tag = 'internal scratch']
  %s0 = inlined_call_operand.vmem [shape: bf16[128,288], index: 0, kind: input, shape index: {}]
  %s1 = inlined_call_operand.vmem [shape: bf16[288,64], index: 1, kind: input, shape index: {}]
  %s2 = inlined_call_operand.vmem [shape: f32[1,64], index: 2, kind: input, shape index: {}]
  %s3 = inlined_call_operand.vmem [shape: f32[1,64], index: 3, kind: input, shape index: {}]
  %s4 = inlined_call_operand.vmem [shape: f32[128,64], index: 4, kind: output, shape index: {}]
  %s5 = sld [smem:[#allocation0]]
  $region26: #{wide_resnet_forward.13} parent=0
    _
  %s7 = ssub.s32 1, %s5
  %s8 = scalar_select 0, %s7, %s5
  // Predicated region
  $region2: #{wide_resnet_forward.13} parent=0 // pred_check
    _
  $region3: #{wide_resnet_forward.13} parent=0 // pred_check_branch
    %10 = sbr.rel (0) target = $region5
  $region4: #{wide_resnet_forward.13} parent=0 // pred_region
    _
  $region5: #{wide_resnet_forward.13} parent=0 // pred_fallthru
    _
  // Predicated region
  $region6: #{wide_resnet_forward.13} parent=0 // pred_check
    _
  $region7: #{wide_resnet_forward.13} parent=0 // pred_check_branch
    %12 = sbr.rel (0) target = $region9
  $region8: #{wide_resnet_forward.13} parent=0 // pred_region
    _
  $region9: #{wide_resnet_forward.13} parent=0 // pred_fallthru
    _
  // Predicated region
  $region10: #{wide_resnet_forward.13} parent=0 // pred_check
    _
  $region11: #{wide_resnet_forward.13} parent=0 // pred_check_branch
    %14 = sbr.rel (0) target = $region13
  $region12: #{wide_resnet_forward.13} parent=0 // pred_region
    _
  $region13: #{wide_resnet_forward.13} parent=0 // pred_fallthru
    _
  // Predicated region
  $region14: #{wide_resnet_forward.13} parent=0 // pred_check
    _
  $region15: #{wide_resnet_forward.13} parent=0 // pred_check_branch
    %16 = sbr.rel (0) target = $region17
  $region16: #{wide_resnet_forward.13} parent=0 // pred_region
    _
  $region17: #{wide_resnet_forward.13} parent=0 // pred_fallthru
    _
  %v18 = vld [vmem:[%s0] sm:$0xff]
  %v19 = vld [vmem:[%s0 + $0x8] sm:$0xf]
  %v20 = vld [vmem:[%s0 + $0xc] sm:$0xff]
  %v21 = vld [vmem:[%s0 + $0x14] sm:$0xf]
  %v22 = vld [vmem:[%s0 + $0x18] sm:$0xff]
  %v23 = vld [vmem:[%s0 + $0x20] sm:$0xf]
  %v24 = vld [vmem:[%s0 + $0x24] sm:$0xff]
  %v25 = vld [vmem:[%s0 + $0x2c] sm:$0xf]
  %v26 = vld [vmem:[%s0 + $0x30] sm:$0xff]
  %v27 = vld [vmem:[%s0 + $0x38] sm:$0xf]
  %v28 = vld [vmem:[%s0 + $0x3c] sm:$0xff]
  %v29 = vld [vmem:[%s0 + $0x44] sm:$0xf]
  %v30 = vld [vmem:[%s0 + $0x48] sm:$0xff]
  %v31 = vld [vmem:[%s0 + $0x50] sm:$0xf]
  %v32 = vld [vmem:[%s0 + $0x54] sm:$0xff]
  %v33 = vld [vmem:[%s0 + $0x5c] sm:$0xf]
  %v34 = vld [vmem:[%s0 + $0x60] sm:$0xff]
  %v35 = vld [vmem:[%s0 + $0x68] sm:$0xf]
  %v36 = vld [vmem:[%s0 + $0x6c] sm:$0xff]
  %v37 = vld [vmem:[%s0 + $0x74] sm:$0xf]
  %v38 = vld [vmem:[%s0 + $0x78] sm:$0xff]
  %v39 = vld [vmem:[%s0 + $0x80] sm:$0xf]
  %v40 = vld [vmem:[%s0 + $0x84] sm:$0xff]
  %v41 = vld [vmem:[%s0 + $0x8c] sm:$0xf]
  %v42 = vld [vmem:[%s0 + $0x90] sm:$0xff]
  %v43 = vld [vmem:[%s0 + $0x98] sm:$0xf]
  %v44 = vld [vmem:[%s0 + $0x9c] sm:$0xff]
  %v45 = vld [vmem:[%s0 + $0xa4] sm:$0xf]
  %v46 = vld [vmem:[%s0 + $0xa8] sm:$0xff]
  %v47 = vld [vmem:[%s0 + $0xb0] sm:$0xf]
  %v48 = vld [vmem:[%s0 + $0xb4] sm:$0xff]
  %v49 = vld [vmem:[%s0 + $0xbc] sm:$0xf]
  %v50 = vld [vmem:[%s1] sm:$0xf]
  %v51 = vld [vmem:[%s1 + $0x4] sm:$0xf]
  %v52 = vld [vmem:[%s1 + $0x8] sm:$0xf]
  %v53 = vld [vmem:[%s1 + $0xc] sm:$0xf]
  %v54 = vld [vmem:[%s1 + $0x10] sm:$0xf]
  %v55 = vld [vmem:[%s1 + $0x14] sm:$0xf]
  %v56 = vld [vmem:[%s1 + $0x18] sm:$0xf]
  %v57 = vld [vmem:[%s1 + $0x1c] sm:$0xf]
  %v58 = vld [vmem:[%s1 + $0x20] sm:$0xf]
  %v59 = vld [vmem:[%s1 + $0x24] sm:$0xf]
  %v60 = vld [vmem:[%s1 + $0x28] sm:$0xf]
  %v61 = vld [vmem:[%s1 + $0x2c] sm:$0xf]
  %v62 = vld [vmem:[%s1 + $0x30] sm:$0xf]
  %v63 = vld [vmem:[%s1 + $0x34] sm:$0xf]
  %v64 = vld [vmem:[%s1 + $0x38] sm:$0xf]
  %v65 = vld [vmem:[%s1 + $0x3c] sm:$0xf]
  %v66 = vld [vmem:[%s1 + $0x40] sm:$0xf]
  %v67 = vld [vmem:[%s1 + $0x44] sm:$0xf]
  %v68 = vld [vmem:[%s1 + $0x48] sm:$0xf]
  %v69 = vld [vmem:[%s1 + $0x4c] sm:$0xf]
  %v70 = vld [vmem:[%s1 + $0x50] sm:$0xf]
  %v71 = vld [vmem:[%s1 + $0x54] sm:$0xf]
  %v72 = vld [vmem:[%s1 + $0x58] sm:$0xf]
  %v73 = vld [vmem:[%s1 + $0x5c] sm:$0xf]
  %v74 = vld [vmem:[%s1 + $0x60] sm:$0xf]
  %v75 = vld [vmem:[%s1 + $0x64] sm:$0xf]
  %v76 = vld [vmem:[%s1 + $0x68] sm:$0xf]
  %v77 = vld [vmem:[%s1 + $0x6c] sm:$0xf]
  %v78 = vld [vmem:[%s1 + $0x70] sm:$0xf]
  %v79 = vld [vmem:[%s1 + $0x74] sm:$0xf]
  %v80 = vld [vmem:[%s1 + $0x78] sm:$0xf]
  %v81 = vld [vmem:[%s1 + $0x7c] sm:$0xf]
  %v82 = vld [vmem:[%s1 + $0x80] sm:$0xf]
  %v83 = vld [vmem:[%s1 + $0x84] sm:$0xf]
  %v84 = vld [vmem:[%s1 + $0x88] sm:$0xf]
  %v85 = vld [vmem:[%s1 + $0x8c] sm:$0xf]
  %v118 = vunpack.c.l.b16 %v18
  %v119 = vunpack.c.h.b16 %v18
  %v120 = vunpack.c.l.b16 %v19
  %v121 = vunpack.c.l.b16 %v20
  %v122 = vunpack.c.h.b16 %v20
  %v123 = vunpack.c.l.b16 %v21
  %v124 = vunpack.c.l.b16 %v22
  %v125 = vunpack.c.h.b16 %v22
  %v126 = vunpack.c.l.b16 %v23
  %v127 = vunpack.c.l.b16 %v24
  %v128 = vunpack.c.h.b16 %v24
  %v129 = vunpack.c.l.b16 %v25
  %v130 = vunpack.c.l.b16 %v26
  %v131 = vunpack.c.h.b16 %v26
  %v132 = vunpack.c.l.b16 %v27
  %v133 = vunpack.c.l.b16 %v28
  %v134 = vunpack.c.h.b16 %v28
  %v135 = vunpack.c.l.b16 %v29
  %v136 = vunpack.c.l.b16 %v30
  %v137 = vunpack.c.h.b16 %v30
  %v138 = vunpack.c.l.b16 %v31
  %v139 = vunpack.c.l.b16 %v32
  %v140 = vunpack.c.h.b16 %v32
  %v141 = vunpack.c.l.b16 %v33
  %v142 = vunpack.c.l.b16 %v34
  %v143 = vunpack.c.h.b16 %v34
  %v144 = vunpack.c.l.b16 %v35
  %v145 = vunpack.c.l.b16 %v36
  %v146 = vunpack.c.h.b16 %v36
  %v147 = vunpack.c.l.b16 %v37
  %v148 = vunpack.c.l.b16 %v38
  %v149 = vunpack.c.h.b16 %v38
  %v150 = vunpack.c.l.b16 %v39
  %v151 = vunpack.c.l.b16 %v40
  %v152 = vunpack.c.h.b16 %v40
  %v153 = vunpack.c.l.b16 %v41
  %v154 = vunpack.c.l.b16 %v42
  %v155 = vunpack.c.h.b16 %v42
  %v156 = vunpack.c.l.b16 %v43
  %v157 = vunpack.c.l.b16 %v44
  %v158 = vunpack.c.h.b16 %v44
  %v159 = vunpack.c.l.b16 %v45
  %v160 = vunpack.c.l.b16 %v46
  %v161 = vunpack.c.h.b16 %v46
  %v162 = vunpack.c.l.b16 %v47
  %v163 = vunpack.c.l.b16 %v48
  %v164 = vunpack.c.h.b16 %v48
  %v165 = vunpack.c.l.b16 %v49
  %v166 = vpack.c.b16 %v121, %v118
  %v167 = vpack.c.b16 %v122, %v119
  %v168 = vpack.c.b16 %v123, %v120
  %v169 = vpack.c.b16 %v127, %v124
  %v170 = vpack.c.b16 %v128, %v125
  %v171 = vpack.c.b16 %v129, %v126
  %v172 = vpack.c.b16 %v133, %v130
  %v173 = vpack.c.b16 %v134, %v131
  %v174 = vpack.c.b16 %v135, %v132
  %v175 = vpack.c.b16 %v139, %v136
  %v176 = vpack.c.b16 %v140, %v137
  %v177 = vpack.c.b16 %v141, %v138
  %v178 = vpack.c.b16 %v145, %v142
  %v179 = vpack.c.b16 %v146, %v143
  %v180 = vpack.c.b16 %v147, %v144
  %v181 = vpack.c.b16 %v151, %v148
  %v182 = vpack.c.b16 %v152, %v149
  %v183 = vpack.c.b16 %v153, %v150
  %v184 = vpack.c.b16 %v157, %v154
  %v185 = vpack.c.b16 %v158, %v155
  %v186 = vpack.c.b16 %v159, %v156
  %v187 = vpack.c.b16 %v163, %v160
  %v188 = vpack.c.b16 %v164, %v161
  %v189 = vpack.c.b16 %v165, %v162
  %v242 = vunpack.c.l.b16 %v50
  %v243 = vunpack.c.l.b16 %v51
  %v244 = vunpack.c.l.b16 %v52
  %v245 = vunpack.c.l.b16 %v53
  %v246 = vunpack.c.l.b16 %v54
  %v247 = vunpack.c.l.b16 %v55
  %v248 = vunpack.c.l.b16 %v56
  %v249 = vunpack.c.l.b16 %v57
  %v250 = vunpack.c.l.b16 %v58
  %v251 = vunpack.c.l.b16 %v59
  %v252 = vunpack.c.l.b16 %v60
  %v253 = vunpack.c.l.b16 %v61
  %v254 = vunpack.c.l.b16 %v62
  %v255 = vunpack.c.l.b16 %v63
  %v256 = vunpack.c.l.b16 %v64
  %v257 = vunpack.c.l.b16 %v65
  %v258 = vunpack.c.l.b16 %v66
  %v259 = vunpack.c.l.b16 %v67
  %v260 = vunpack.c.l.b16 %v68
  %v261 = vunpack.c.l.b16 %v69
  %v262 = vunpack.c.l.b16 %v70
  %v263 = vunpack.c.l.b16 %v71
  %v264 = vunpack.c.l.b16 %v72
  %v265 = vunpack.c.l.b16 %v73
  %v266 = vunpack.c.l.b16 %v74
  %v267 = vunpack.c.l.b16 %v75
  %v268 = vunpack.c.l.b16 %v76
  %v269 = vunpack.c.l.b16 %v77
  %v270 = vunpack.c.l.b16 %v78
  %v271 = vunpack.c.l.b16 %v79
  %v272 = vunpack.c.l.b16 %v80
  %v273 = vunpack.c.l.b16 %v81
  %v274 = vunpack.c.l.b16 %v82
  %v275 = vunpack.c.l.b16 %v83
  %v276 = vunpack.c.l.b16 %v84
  %v277 = vunpack.c.l.b16 %v85
  %v278 = vpack.c.b16 %v243, %v242
  %v279 = vpack.c.b16 %v245, %v244
  %v280 = vpack.c.b16 %v247, %v246
  %v281 = vpack.c.b16 %v249, %v248
  %v282 = vpack.c.b16 %v251, %v250
  %v283 = vpack.c.b16 %v253, %v252
  %v284 = vpack.c.b16 %v255, %v254
  %v285 = vpack.c.b16 %v257, %v256
  %v286 = vpack.c.b16 %v259, %v258
  %v287 = vpack.c.b16 %v261, %v260
  %v288 = vpack.c.b16 %v263, %v262
  %v289 = vpack.c.b16 %v265, %v264
  %v290 = vpack.c.b16 %v267, %v266
  %v291 = vpack.c.b16 %v269, %v268
  %v292 = vpack.c.b16 %v271, %v270
  %v293 = vpack.c.b16 %v273, %v272
  %v294 = vpack.c.b16 %v275, %v274
  %v295 = vpack.c.b16 %v277, %v276
  %vm314 = vcmask 261120
  %v316 = vsel %vm314, %v168, 0
  %v319 = vsel %vm314, %v171, 0
  %v322 = vsel %vm314, %v174, 0
  %v325 = vsel %vm314, %v177, 0
  %v328 = vsel %vm314, %v180, 0
  %v331 = vsel %vm314, %v183, 0
  %v334 = vsel %vm314, %v186, 0
  %v337 = vsel %vm314, %v189, 0
  %339 = vmatpush.bf16.msra.mxu0 %v285
  %340 = vmatpush.bf16.msra.mxu0 %v284
  %341 = vmatpush.bf16.msra.mxu0 %v283
  %342 = vmatpush.bf16.msra.mxu0 %v282
  %343 = vmatpush.bf16.msra.mxu0 %v281
  %344 = vmatpush.bf16.msra.mxu0 %v280
  %345 = vmatpush.bf16.msra.mxu0 %v279
  %346 = vmatpush.bf16.msra.mxu0 %v278
  %347 = vmatmul.bf16.gmra.mxu0 %v166
  %v348 = vpop.f32.mrf.mxu0
  %v349 = vadd.f32 0.0, %v348
  %v350 = vpop.f32.mrf.mxu0
  %v351 = vadd.f32 0.0, %v350
  %352 = vmatmul.bf16.gmra.mxu0 %v169
  %v353 = vpop.f32.mrf.mxu0
  %v354 = vadd.f32 0.0, %v353
  %v355 = vpop.f32.mrf.mxu0
  %v356 = vadd.f32 0.0, %v355
  %357 = vmatmul.bf16.gmra.mxu0 %v172
  %v358 = vpop.f32.mrf.mxu0
  %v359 = vadd.f32 0.0, %v358
  %v360 = vpop.f32.mrf.mxu0
  %v361 = vadd.f32 0.0, %v360
  %362 = vmatmul.bf16.gmra.mxu0 %v175
  %v363 = vpop.f32.mrf.mxu0
  %v364 = vadd.f32 0.0, %v363
  %v365 = vpop.f32.mrf.mxu0
  %v366 = vadd.f32 0.0, %v365
  %367 = vmatmul.bf16.gmra.mxu0 %v178
  %v368 = vpop.f32.mrf.mxu0
  %v369 = vadd.f32 0.0, %v368
  %v370 = vpop.f32.mrf.mxu0
  %v371 = vadd.f32 0.0, %v370
  %372 = vmatmul.bf16.gmra.mxu0 %v181
  %v373 = vpop.f32.mrf.mxu0
  %v374 = vadd.f32 0.0, %v373
  %v375 = vpop.f32.mrf.mxu0
  %v376 = vadd.f32 0.0, %v375
  %377 = vmatmul.bf16.gmra.mxu0 %v184
  %v378 = vpop.f32.mrf.mxu0
  %v379 = vadd.f32 0.0, %v378
  %v380 = vpop.f32.mrf.mxu0
  %v381 = vadd.f32 0.0, %v380
  %382 = vmatmul.bf16.gmra.mxu0 %v187
  %v383 = vpop.f32.mrf.mxu0
  %v384 = vadd.f32 0.0, %v383
  %v385 = vpop.f32.mrf.mxu0
  %v386 = vadd.f32 0.0, %v385
  %387 = vdwg.mxu0
  %388 = vmatpush.bf16.msra.mxu0 %v293
  %389 = vmatpush.bf16.msra.mxu0 %v292
  %390 = vmatpush.bf16.msra.mxu0 %v291
  %391 = vmatpush.bf16.msra.mxu0 %v290
  %392 = vmatpush.bf16.msra.mxu0 %v289
  %393 = vmatpush.bf16.msra.mxu0 %v288
  %394 = vmatpush.bf16.msra.mxu0 %v287
  %395 = vmatpush.bf16.msra.mxu0 %v286
  %396 = vmatmul.bf16.gmra.mxu0 %v167
  %v397 = vpop.f32.mrf.mxu0
  %v398 = vadd.f32 %v349, %v397
  %v399 = vpop.f32.mrf.mxu0
  %v400 = vadd.f32 %v351, %v399
  %401 = vmatmul.bf16.gmra.mxu0 %v170
  %v402 = vpop.f32.mrf.mxu0
  %v403 = vadd.f32 %v354, %v402
  %v404 = vpop.f32.mrf.mxu0
  %v405 = vadd.f32 %v356, %v404
  %406 = vmatmul.bf16.gmra.mxu0 %v173
  %v407 = vpop.f32.mrf.mxu0
  %v408 = vadd.f32 %v359, %v407
  %v409 = vpop.f32.mrf.mxu0
  %v410 = vadd.f32 %v361, %v409
  %411 = vmatmul.bf16.gmra.mxu0 %v176
  %v412 = vpop.f32.mrf.mxu0
  %v413 = vadd.f32 %v364, %v412
  %v414 = vpop.f32.mrf.mxu0
  %v415 = vadd.f32 %v366, %v414
  %416 = vmatmul.bf16.gmra.mxu0 %v179
  %v417 = vpop.f32.mrf.mxu0
  %v418 = vadd.f32 %v369, %v417
  %v419 = vpop.f32.mrf.mxu0
  %v420 = vadd.f32 %v371, %v419
  %421 = vmatmul.bf16.gmra.mxu0 %v182
  %v422 = vpop.f32.mrf.mxu0
  %v423 = vadd.f32 %v374, %v422
  %v424 = vpop.f32.mrf.mxu0
  %v425 = vadd.f32 %v376, %v424
  %426 = vmatmul.bf16.gmra.mxu0 %v185
  %v427 = vpop.f32.mrf.mxu0
  %v428 = vadd.f32 %v379, %v427
  %v429 = vpop.f32.mrf.mxu0
  %v430 = vadd.f32 %v381, %v429
  %431 = vmatmul.bf16.gmra.mxu0 %v188
  %v432 = vpop.f32.mrf.mxu0
  %v433 = vadd.f32 %v384, %v432
  %v434 = vpop.f32.mrf.mxu0
  %v435 = vadd.f32 %v386, %v434
  %436 = vdwg.mxu0
  %437 = vmatpush.bf16.msra.mxu0 0
  %438 = vmatpush.bf16.msra.mxu0 0
  %439 = vmatpush.bf16.msra.mxu0 0
  %440 = vmatpush.bf16.msra.mxu0 0
  %441 = vmatpush.bf16.msra.mxu0 0
  %442 = vmatpush.bf16.msra.mxu0 0
  %443 = vmatpush.bf16.msra.mxu0 %v295
  %444 = vmatpush.bf16.msra.mxu0 %v294
  %445 = vmatmul.bf16.gmra.mxu0 %v316
  %v446 = vpop.f32.mrf.mxu0
  %v447 = vadd.f32 %v398, %v446
  %v448 = vpop.f32.mrf.mxu0
  %v449 = vadd.f32 %v400, %v448
  %450 = vmatmul.bf16.gmra.mxu0 %v319
  %v451 = vpop.f32.mrf.mxu0
  %v452 = vadd.f32 %v403, %v451
  %v453 = vpop.f32.mrf.mxu0
  %v454 = vadd.f32 %v405, %v453
  %455 = vmatmul.bf16.gmra.mxu0 %v322
  %v456 = vpop.f32.mrf.mxu0
  %v457 = vadd.f32 %v408, %v456
  %v458 = vpop.f32.mrf.mxu0
  %v459 = vadd.f32 %v410, %v458
  %460 = vmatmul.bf16.gmra.mxu0 %v325
  %v461 = vpop.f32.mrf.mxu0
  %v462 = vadd.f32 %v413, %v461
  %v463 = vpop.f32.mrf.mxu0
  %v464 = vadd.f32 %v415, %v463
  %465 = vmatmul.bf16.gmra.mxu0 %v328
  %v466 = vpop.f32.mrf.mxu0
  %v467 = vadd.f32 %v418, %v466
  %v468 = vpop.f32.mrf.mxu0
  %v469 = vadd.f32 %v420, %v468
  %470 = vmatmul.bf16.gmra.mxu0 %v331
  %v471 = vpop.f32.mrf.mxu0
  %v472 = vadd.f32 %v423, %v471
  %v473 = vpop.f32.mrf.mxu0
  %v474 = vadd.f32 %v425, %v473
  %475 = vmatmul.bf16.gmra.mxu0 %v334
  %v476 = vpop.f32.mrf.mxu0
  %v477 = vadd.f32 %v428, %v476
  %v478 = vpop.f32.mrf.mxu0
  %v479 = vadd.f32 %v430, %v478
  %480 = vmatmul.bf16.gmra.mxu0 %v337
  %v481 = vpop.f32.mrf.mxu0
  %v482 = vadd.f32 %v433, %v481
  %v483 = vpop.f32.mrf.mxu0
  %v484 = vadd.f32 %v435, %v483
  %485 = vdwg.mxu0
  %v486 = vld [vmem:[%s2] sm:$0x1]
  %v488 = vperm.slane %v486, 0
  %v490 = vmul.f32 %v447, %v488
  %v491 = vmul.f32 %v449, %v488
  %v492 = vmul.f32 %v452, %v488
  %v493 = vmul.f32 %v454, %v488
  %v494 = vmul.f32 %v457, %v488
  %v495 = vmul.f32 %v459, %v488
  %v496 = vmul.f32 %v462, %v488
  %v497 = vmul.f32 %v464, %v488
  %v498 = vmul.f32 %v467, %v488
  %v499 = vmul.f32 %v469, %v488
  %v500 = vmul.f32 %v472, %v488
  %v501 = vmul.f32 %v474, %v488
  %v502 = vmul.f32 %v477, %v488
  %v503 = vmul.f32 %v479, %v488
  %v504 = vmul.f32 %v482, %v488
  %v505 = vmul.f32 %v484, %v488
  %v506 = vld [vmem:[%s3] sm:$0x1]
  %v508 = vperm.slane %v506, 0
  %v510 = vadd.f32 %v490, %v508
  %v511 = vadd.f32 %v491, %v508
  %v512 = vadd.f32 %v492, %v508
  %v513 = vadd.f32 %v493, %v508
  %v514 = vadd.f32 %v494, %v508
  %v515 = vadd.f32 %v495, %v508
  %v516 = vadd.f32 %v496, %v508
  %v517 = vadd.f32 %v497, %v508
  %v518 = vadd.f32 %v498, %v508
  %v519 = vadd.f32 %v499, %v508
  %v520 = vadd.f32 %v500, %v508
  %v521 = vadd.f32 %v501, %v508
  %v522 = vadd.f32 %v502, %v508
  %v523 = vadd.f32 %v503, %v508
  %v524 = vadd.f32 %v504, %v508
  %v525 = vadd.f32 %v505, %v508
  %vm526 = vcmp.ge.f32.partialorder %v510, 0.0
  %vm527 = vcmp.ge.f32.partialorder %v511, 0.0
  %vm528 = vcmp.ge.f32.partialorder %v512, 0.0
  %vm529 = vcmp.ge.f32.partialorder %v513, 0.0
  %vm530 = vcmp.ge.f32.partialorder %v514, 0.0
  %vm531 = vcmp.ge.f32.partialorder %v515, 0.0
  %vm532 = vcmp.ge.f32.partialorder %v516, 0.0
  %vm533 = vcmp.ge.f32.partialorder %v517, 0.0
  %vm534 = vcmp.ge.f32.partialorder %v518, 0.0
  %vm535 = vcmp.ge.f32.partialorder %v519, 0.0
  %vm536 = vcmp.ge.f32.partialorder %v520, 0.0
  %vm537 = vcmp.ge.f32.partialorder %v521, 0.0
  %vm538 = vcmp.ge.f32.partialorder %v522, 0.0
  %vm539 = vcmp.ge.f32.partialorder %v523, 0.0
  %vm540 = vcmp.ge.f32.partialorder %v524, 0.0
  %vm541 = vcmp.ge.f32.partialorder %v525, 0.0
  %v542 = vmul.f32 %v510, 0.0
  %v543 = vmul.f32 %v511, 0.0
  %v544 = vmul.f32 %v512, 0.0
  %v545 = vmul.f32 %v513, 0.0
  %v546 = vmul.f32 %v514, 0.0
  %v547 = vmul.f32 %v515, 0.0
  %v548 = vmul.f32 %v516, 0.0
  %v549 = vmul.f32 %v517, 0.0
  %v550 = vmul.f32 %v518, 0.0
  %v551 = vmul.f32 %v519, 0.0
  %v552 = vmul.f32 %v520, 0.0
  %v553 = vmul.f32 %v521, 0.0
  %v554 = vmul.f32 %v522, 0.0
  %v555 = vmul.f32 %v523, 0.0
  %v556 = vmul.f32 %v524, 0.0
  %v557 = vmul.f32 %v525, 0.0
  %v558 = vsel %vm526, %v510, %v542
  %v559 = vsel %vm527, %v511, %v543
  %v560 = vsel %vm528, %v512, %v544
  %v561 = vsel %vm529, %v513, %v545
  %v562 = vsel %vm530, %v514, %v546
  %v563 = vsel %vm531, %v515, %v547
  %v564 = vsel %vm532, %v516, %v548
  %v565 = vsel %vm533, %v517, %v549
  %v566 = vsel %vm534, %v518, %v550
  %v567 = vsel %vm535, %v519, %v551
  %v568 = vsel %vm536, %v520, %v552
  %v569 = vsel %vm537, %v521, %v553
  %v570 = vsel %vm538, %v522, %v554
  %v571 = vsel %vm539, %v523, %v555
  %v572 = vsel %vm540, %v524, %v556
  %v573 = vsel %vm541, %v525, %v557
  %vm574 = vcmask 523264
  %575 = vst.msk [vmem:[%s4] sm:$0xff] %vm574, %v558
  %576 = vst.msk [vmem:[%s4 + $0x8] sm:$0xff] %vm574, %v559
  %577 = vst.msk [vmem:[%s4 + $0x10] sm:$0xff] %vm574, %v560
  %578 = vst.msk [vmem:[%s4 + $0x18] sm:$0xff] %vm574, %v561
  %579 = vst.msk [vmem:[%s4 + $0x20] sm:$0xff] %vm574, %v562
  %580 = vst.msk [vmem:[%s4 + $0x28] sm:$0xff] %vm574, %v563
  %581 = vst.msk [vmem:[%s4 + $0x30] sm:$0xff] %vm574, %v564
  %582 = vst.msk [vmem:[%s4 + $0x38] sm:$0xff] %vm574, %v565
  %583 = vst.msk [vmem:[%s4 + $0x40] sm:$0xff] %vm574, %v566
  %584 = vst.msk [vmem:[%s4 + $0x48] sm:$0xff] %vm574, %v567
  %585 = vst.msk [vmem:[%s4 + $0x50] sm:$0xff] %vm574, %v568
  %586 = vst.msk [vmem:[%s4 + $0x58] sm:$0xff] %vm574, %v569
  %587 = vst.msk [vmem:[%s4 + $0x60] sm:$0xff] %vm574, %v570
  %588 = vst.msk [vmem:[%s4 + $0x68] sm:$0xff] %vm574, %v571
  %589 = vst.msk [vmem:[%s4 + $0x70] sm:$0xff] %vm574, %v572
  %590 = vst.msk [vmem:[%s4 + $0x78] sm:$0xff] %vm574, %v573
  // Predicated region
  $region18: #{wide_resnet_forward.13} parent=0 // pred_check
    _
  $region19: #{wide_resnet_forward.13} parent=0 // pred_check_branch
    %592 = sbr.rel (0) target = $region21
  $region20: #{wide_resnet_forward.13} parent=0 // pred_region
    _
  $region21: #{wide_resnet_forward.13} parent=0 // pred_fallthru
    _
  // Predicated region
  $region22: #{wide_resnet_forward.13} parent=0 // pred_check
    _
  $region23: #{wide_resnet_forward.13} parent=0 // pred_check_branch
    %594 = sbr.rel (0) target = $region25
  $region24: #{wide_resnet_forward.13} parent=0 // pred_region
    _
  $region25: #{wide_resnet_forward.13} parent=0 // pred_fallthru
    _

// kernel: wide_resnet_forward.12
$region0: #{wide_resnet_forward.12}
  #allocation0 [shape = 'u32[]', space=smem, size = 0x4, offset = 0x4, fixed_abs, tag = 'smem constant byte address 0x4 - core index']
  #allocation1 [shape = 'u32[72,128]{1,0:T(1,128)}', space=vmem, size = 0x9000, scoped, tag = 'internal scratch']
  %s0 = inlined_call_operand.vmem [shape: bf16[512,288], index: 0, kind: input, shape index: {}]
  %s1 = inlined_call_operand.vmem [shape: bf16[288,32], index: 1, kind: input, shape index: {}]
  %s2 = inlined_call_operand.vmem [shape: bf16[512,16], index: 2, kind: input, shape index: {}]
  %s3 = inlined_call_operand.vmem [shape: bf16[16,32], index: 3, kind: input, shape index: {}]
  %s4 = inlined_call_operand.vmem [shape: f32[1,32], index: 4, kind: input, shape index: {}]
  %s5 = inlined_call_operand.vmem [shape: f32[1,32], index: 5, kind: input, shape index: {}]
  %s6 = inlined_call_operand.vmem [shape: f32[512,32], index: 6, kind: output, shape index: {}]
  %s7 = sld [smem:[#allocation0]]
  $region34: #{wide_resnet_forward.12} parent=0
    _
  %s9 = ssub.s32 1, %s7
  %s10 = scalar_select 0, %s9, %s7
  // Predicated region
  $region2: #{wide_resnet_forward.12} parent=0 // pred_check
    _
  $region3: #{wide_resnet_forward.12} parent=0 // pred_check_branch
    %12 = sbr.rel (0) target = $region5
  $region4: #{wide_resnet_forward.12} parent=0 // pred_region
    _
  $region5: #{wide_resnet_forward.12} parent=0 // pred_fallthru
    _
  // Predicated region
  $region6: #{wide_resnet_forward.12} parent=0 // pred_check
    _
  $region7: #{wide_resnet_forward.12} parent=0 // pred_check_branch
    %14 = sbr.rel (0) target = $region9
  $region8: #{wide_resnet_forward.12} parent=0 // pred_region
    _
  $region9: #{wide_resnet_forward.12} parent=0 // pred_fallthru
    _
  // Predicated region
  $region10: #{wide_resnet_forward.12} parent=0 // pred_check
    _
  $region11: #{wide_resnet_forward.12} parent=0 // pred_check_branch
    %16 = sbr.rel (0) target = $region13
  $region12: #{wide_resnet_forward.12} parent=0 // pred_region
    _
  $region13: #{wide_resnet_forward.12} parent=0 // pred_fallthru
    _
  // Predicated region
  $region14: #{wide_resnet_forward.12} parent=0 // pred_check
    _
  $region15: #{wide_resnet_forward.12} parent=0 // pred_check_branch
    %18 = sbr.rel (0) target = $region17
  $region16: #{wide_resnet_forward.12} parent=0 // pred_region
    _
  $region17: #{wide_resnet_forward.12} parent=0 // pred_fallthru
    _
  // Predicated region
  $region18: #{wide_resnet_forward.12} parent=0 // pred_check
    _
  $region19: #{wide_resnet_forward.12} parent=0 // pred_check_branch
    %20 = sbr.rel (0) target = $region21
  $region20: #{wide_resnet_forward.12} parent=0 // pred_region
    _
  $region21: #{wide_resnet_forward.12} parent=0 // pred_fallthru
    _
  // Predicated region
  $region22: #{wide_resnet_forward.12} parent=0 // pred_check
    _
  $region23: #{wide_resnet_forward.12} parent=0 // pred_check_branch
    %22 = sbr.rel (0) target = $region25
  $region24: #{wide_resnet_forward.12} parent=0 // pred_region
    _
  $region25: #{wide_resnet_forward.12} parent=0 // pred_fallthru
    _
  %v24 = vld [vmem:[%s0] sm:$0xff]
  %v25 = vld [vmem:[%s0 + $0x8] sm:$0xf]
  %v26 = vld [vmem:[%s0 + $0xc] sm:$0xff]
  %v27 = vld [vmem:[%s0 + $0x14] sm:$0xf]
  %v28 = vld [vmem:[%s0 + $0x18] sm:$0xff]
  %v29 = vld [vmem:[%s0 + $0x20] sm:$0xf]
  %v30 = vld [vmem:[%s0 + $0x24] sm:$0xff]
  %v31 = vld [vmem:[%s0 + $0x2c] sm:$0xf]
  %v32 = vld [vmem:[%s0 + $0x30] sm:$0xff]
  %v33 = vld [vmem:[%s0 + $0x38] sm:$0xf]
  %v34 = vld [vmem:[%s0 + $0x3c] sm:$0xff]
  %v35 = vld [vmem:[%s0 + $0x44] sm:$0xf]
  %v36 = vld [vmem:[%s0 + $0x48] sm:$0xff]
  %v37 = vld [vmem:[%s0 + $0x50] sm:$0xf]
  %v38 = vld [vmem:[%s0 + $0x54] sm:$0xff]
  %v39 = vld [vmem:[%s0 + $0x5c] sm:$0xf]
  %v40 = vld [vmem:[%s0 + $0x60] sm:$0xff]
  %v41 = vld [vmem:[%s0 + $0x68] sm:$0xf]
  %v42 = vld [vmem:[%s0 + $0x6c] sm:$0xff]
  %v43 = vld [vmem:[%s0 + $0x74] sm:$0xf]
  %v44 = vld [vmem:[%s0 + $0x78] sm:$0xff]
  %v45 = vld [vmem:[%s0 + $0x80] sm:$0xf]
  %v46 = vld [vmem:[%s0 + $0x84] sm:$0xff]
  %v47 = vld [vmem:[%s0 + $0x8c] sm:$0xf]
  %v48 = vld [vmem:[%s0 + $0x90] sm:$0xff]
  %v49 = vld [vmem:[%s0 + $0x98] sm:$0xf]
  %v50 = vld [vmem:[%s0 + $0x9c] sm:$0xff]
  %v51 = vld [vmem:[%s0 + $0xa4] sm:$0xf]
  %v52 = vld [vmem:[%s0 + $0xa8] sm:$0xff]
  %v53 = vld [vmem:[%s0 + $0xb0] sm:$0xf]
  %v54 = vld [vmem:[%s0 + $0xb4] sm:$0xff]
  %v55 = vld [vmem:[%s0 + $0xbc] sm:$0xf]
  %v56 = vld [vmem:[%s0 + $0xc0] sm:$0xff]
  %v57 = vld [vmem:[%s0 + $0xc8] sm:$0xf]
  %v58 = vld [vmem:[%s0 + $0xcc] sm:$0xff]
  %v59 = vld [vmem:[%s0 + $0xd4] sm:$0xf]
  %v60 = vld [vmem:[%s0 + $0xd8] sm:$0xff]
  %v61 = vld [vmem:[%s0 + $0xe0] sm:$0xf]
  %v62 = vld [vmem:[%s0 + $0xe4] sm:$0xff]
  %v63 = vld [vmem:[%s0 + $0xec] sm:$0xf]
  %v64 = vld [vmem:[%s0 + $0xf0] sm:$0xff]
  %v65 = vld [vmem:[%s0 + $0xf8] sm:$0xf]
  %v66 = vld [vmem:[%s0 + $0xfc] sm:$0xff]
  %v67 = vld [vmem:[%s0 + $0x104] sm:$0xf]
  %v68 = vld [vmem:[%s0 + $0x108] sm:$0xff]
  %v69 = vld [vmem:[%s0 + $0x110] sm:$0xf]
  %v70 = vld [vmem:[%s0 + $0x114] sm:$0xff]
  %v71 = vld [vmem:[%s0 + $0x11c] sm:$0xf]
  %v72 = vld [vmem:[%s0 + $0x120] sm:$0xff]
  %v73 = vld [vmem:[%s0 + $0x128] sm:$0xf]
  %v74 = vld [vmem:[%s0 + $0x12c] sm:$0xff]
  %v75 = vld [vmem:[%s0 + $0x134] sm:$0xf]
  %v76 = vld [vmem:[%s0 + $0x138] sm:$0xff]
  %v77 = vld [vmem:[%s0 + $0x140] sm:$0xf]
  %v78 = vld [vmem:[%s0 + $0x144] sm:$0xff]
  %v79 = vld [vmem:[%s0 + $0x14c] sm:$0xf]
  %v80 = vld [vmem:[%s0 + $0x150] sm:$0xff]
  %v81 = vld [vmem:[%s0 + $0x158] sm:$0xf]
  %v82 = vld [vmem:[%s0 + $0x15c] sm:$0xff]
  %v83 = vld [vmem:[%s0 + $0x164] sm:$0xf]
  %v84 = vld [vmem:[%s0 + $0x168] sm:$0xff]
  %v85 = vld [vmem:[%s0 + $0x170] sm:$0xf]
  %v86 = vld [vmem:[%s0 + $0x174] sm:$0xff]
  %v87 = vld [vmem:[%s0 + $0x17c] sm:$0xf]
  %v88 = vld [vmem:[%s0 + $0x180] sm:$0xff]
  %v89 = vld [vmem:[%s0 + $0x188] sm:$0xf]
  %v90 = vld [vmem:[%s0 + $0x18c] sm:$0xff]
  %v91 = vld [vmem:[%s0 + $0x194] sm:$0xf]
  %v92 = vld [vmem:[%s0 + $0x198] sm:$0xff]
  %v93 = vld [vmem:[%s0 + $0x1a0] sm:$0xf]
  %v94 = vld [vmem:[%s0 + $0x1a4] sm:$0xff]
  %v95 = vld [vmem:[%s0 + $0x1ac] sm:$0xf]
  %v96 = vld [vmem:[%s0 + $0x1b0] sm:$0xff]
  %v97 = vld [vmem:[%s0 + $0x1b8] sm:$0xf]
  %v98 = vld [vmem:[%s0 + $0x1bc] sm:$0xff]
  %v99 = vld [vmem:[%s0 + $0x1c4] sm:$0xf]
  %v100 = vld [vmem:[%s0 + $0x1c8] sm:$0xff]
  %v101 = vld [vmem:[%s0 + $0x1d0] sm:$0xf]
  %v102 = vld [vmem:[%s0 + $0x1d4] sm:$0xff]
  %v103 = vld [vmem:[%s0 + $0x1dc] sm:$0xf]
  %v104 = vld [vmem:[%s0 + $0x1e0] sm:$0xff]
  %v105 = vld [vmem:[%s0 + $0x1e8] sm:$0xf]
  %v106 = vld [vmem:[%s0 + $0x1ec] sm:$0xff]
  %v107 = vld [vmem:[%s0 + $0x1f4] sm:$0xf]
  %v108 = vld [vmem:[%s0 + $0x1f8] sm:$0xff]
  %v109 = vld [vmem:[%s0 + $0x200] sm:$0xf]
  %v110 = vld [vmem:[%s0 + $0x204] sm:$0xff]
  %v111 = vld [vmem:[%s0 + $0x20c] sm:$0xf]
  %v112 = vld [vmem:[%s0 + $0x210] sm:$0xff]
  %v113 = vld [vmem:[%s0 + $0x218] sm:$0xf]
  %v114 = vld [vmem:[%s0 + $0x21c] sm:$0xff]
  %v115 = vld [vmem:[%s0 + $0x224] sm:$0xf]
  %v116 = vld [vmem:[%s0 + $0x228] sm:$0xff]
  %v117 = vld [vmem:[%s0 + $0x230] sm:$0xf]
  %v118 = vld [vmem:[%s0 + $0x234] sm:$0xff]
  %v119 = vld [vmem:[%s0 + $0x23c] sm:$0xf]
  %v120 = vld [vmem:[%s0 + $0x240] sm:$0xff]
  %v121 = vld [vmem:[%s0 + $0x248] sm:$0xf]
  %v122 = vld [vmem:[%s0 + $0x24c] sm:$0xff]
  %v123 = vld [vmem:[%s0 + $0x254] sm:$0xf]
  %v124 = vld [vmem:[%s0 + $0x258] sm:$0xff]
  %v125 = vld [vmem:[%s0 + $0x260] sm:$0xf]
  %v126 = vld [vmem:[%s0 + $0x264] sm:$0xff]
  %v127 = vld [vmem:[%s0 + $0x26c] sm:$0xf]
  %v128 = vld [vmem:[%s0 + $0x270] sm:$0xff]
  %v129 = vld [vmem:[%s0 + $0x278] sm:$0xf]
  %v130 = vld [vmem:[%s0 + $0x27c] sm:$0xff]
  %v131 = vld [vmem:[%s0 + $0x284] sm:$0xf]
  %v132 = vld [vmem:[%s0 + $0x288] sm:$0xff]
  %v133 = vld [vmem:[%s0 + $0x290] sm:$0xf]
  %v134 = vld [vmem:[%s0 + $0x294] sm:$0xff]
  %v135 = vld [vmem:[%s0 + $0x29c] sm:$0xf]
  %v136 = vld [vmem:[%s0 + $0x2a0] sm:$0xff]
  %v137 = vld [vmem:[%s0 + $0x2a8] sm:$0xf]
  %v138 = vld [vmem:[%s0 + $0x2ac] sm:$0xff]
  %v139 = vld [vmem:[%s0 + $0x2b4] sm:$0xf]
  %v140 = vld [vmem:[%s0 + $0x2b8] sm:$0xff]
  %v141 = vld [vmem:[%s0 + $0x2c0] sm:$0xf]
  %v142 = vld [vmem:[%s0 + $0x2c4] sm:$0xff]
  %v143 = vld [vmem:[%s0 + $0x2cc] sm:$0xf]
  %v144 = vld [vmem:[%s0 + $0x2d0] sm:$0xff]
  %v145 = vld [vmem:[%s0 + $0x2d8] sm:$0xf]
  %v146 = vld [vmem:[%s0 + $0x2dc] sm:$0xff]
  %v147 = vld [vmem:[%s0 + $0x2e4] sm:$0xf]
  %v148 = vld [vmem:[%s0 + $0x2e8] sm:$0xff]
  %v149 = vld [vmem:[%s0 + $0x2f0] sm:$0xf]
  %v150 = vld [vmem:[%s0 + $0x2f4] sm:$0xff]
  %v151 = vld [vmem:[%s0 + $0x2fc] sm:$0xf]
  %v152 = vld [vmem:[%s1] sm:$0xf]
  %v153 = vld [vmem:[%s1 + $0x4] sm:$0xf]
  %v154 = vld [vmem:[%s1 + $0x8] sm:$0xf]
  %v155 = vld [vmem:[%s1 + $0xc] sm:$0xf]
  %v156 = vld [vmem:[%s1 + $0x10] sm:$0xf]
  %v157 = vld [vmem:[%s1 + $0x14] sm:$0xf]
  %v158 = vld [vmem:[%s1 + $0x18] sm:$0xf]
  %v159 = vld [vmem:[%s1 + $0x1c] sm:$0xf]
  %v160 = vld [vmem:[%s1 + $0x20] sm:$0xf]
  %v161 = vld [vmem:[%s1 + $0x24] sm:$0xf]
  %v162 = vld [vmem:[%s1 + $0x28] sm:$0xf]
  %v163 = vld [vmem:[%s1 + $0x2c] sm:$0xf]
  %v164 = vld [vmem:[%s1 + $0x30] sm:$0xf]
  %v165 = vld [vmem:[%s1 + $0x34] sm:$0xf]
  %v166 = vld [vmem:[%s1 + $0x38] sm:$0xf]
  %v167 = vld [vmem:[%s1 + $0x3c] sm:$0xf]
  %v168 = vld [vmem:[%s1 + $0x40] sm:$0xf]
  %v169 = vld [vmem:[%s1 + $0x44] sm:$0xf]
  %v170 = vld [vmem:[%s1 + $0x48] sm:$0xf]
  %v171 = vld [vmem:[%s1 + $0x4c] sm:$0xf]
  %v172 = vld [vmem:[%s1 + $0x50] sm:$0xf]
  %v173 = vld [vmem:[%s1 + $0x54] sm:$0xf]
  %v174 = vld [vmem:[%s1 + $0x58] sm:$0xf]
  %v175 = vld [vmem:[%s1 + $0x5c] sm:$0xf]
  %v176 = vld [vmem:[%s1 + $0x60] sm:$0xf]
  %v177 = vld [vmem:[%s1 + $0x64] sm:$0xf]
  %v178 = vld [vmem:[%s1 + $0x68] sm:$0xf]
  %v179 = vld [vmem:[%s1 + $0x6c] sm:$0xf]
  %v180 = vld [vmem:[%s1 + $0x70] sm:$0xf]
  %v181 = vld [vmem:[%s1 + $0x74] sm:$0xf]
  %v182 = vld [vmem:[%s1 + $0x78] sm:$0xf]
  %v183 = vld [vmem:[%s1 + $0x7c] sm:$0xf]
  %v184 = vld [vmem:[%s1 + $0x80] sm:$0xf]
  %v185 = vld [vmem:[%s1 + $0x84] sm:$0xf]
  %v186 = vld [vmem:[%s1 + $0x88] sm:$0xf]
  %v187 = vld [vmem:[%s1 + $0x8c] sm:$0xf]
  %v188 = vld [vmem:[%s2] sm:$0xf]
  %v189 = vld [vmem:[%s2 + $0x4] sm:$0xf]
  %v190 = vld [vmem:[%s2 + $0x8] sm:$0xf]
  %v191 = vld [vmem:[%s2 + $0xc] sm:$0xf]
  %v192 = vld [vmem:[%s2 + $0x10] sm:$0xf]
  %v193 = vld [vmem:[%s2 + $0x14] sm:$0xf]
  %v194 = vld [vmem:[%s2 + $0x18] sm:$0xf]
  %v195 = vld [vmem:[%s2 + $0x1c] sm:$0xf]
  %v196 = vld [vmem:[%s2 + $0x20] sm:$0xf]
  %v197 = vld [vmem:[%s2 + $0x24] sm:$0xf]
  %v198 = vld [vmem:[%s2 + $0x28] sm:$0xf]
  %v199 = vld [vmem:[%s2 + $0x2c] sm:$0xf]
  %v200 = vld [vmem:[%s2 + $0x30] sm:$0xf]
  %v201 = vld [vmem:[%s2 + $0x34] sm:$0xf]
  %v202 = vld [vmem:[%s2 + $0x38] sm:$0xf]
  %v203 = vld [vmem:[%s2 + $0x3c] sm:$0xf]
  %v204 = vld [vmem:[%s2 + $0x40] sm:$0xf]
  %v205 = vld [vmem:[%s2 + $0x44] sm:$0xf]
  %v206 = vld [vmem:[%s2 + $0x48] sm:$0xf]
  %v207 = vld [vmem:[%s2 + $0x4c] sm:$0xf]
  %v208 = vld [vmem:[%s2 + $0x50] sm:$0xf]
  %v209 = vld [vmem:[%s2 + $0x54] sm:$0xf]
  %v210 = vld [vmem:[%s2 + $0x58] sm:$0xf]
  %v211 = vld [vmem:[%s2 + $0x5c] sm:$0xf]
  %v212 = vld [vmem:[%s2 + $0x60] sm:$0xf]
  %v213 = vld [vmem:[%s2 + $0x64] sm:$0xf]
  %v214 = vld [vmem:[%s2 + $0x68] sm:$0xf]
  %v215 = vld [vmem:[%s2 + $0x6c] sm:$0xf]
  %v216 = vld [vmem:[%s2 + $0x70] sm:$0xf]
  %v217 = vld [vmem:[%s2 + $0x74] sm:$0xf]
  %v218 = vld [vmem:[%s2 + $0x78] sm:$0xf]
  %v219 = vld [vmem:[%s2 + $0x7c] sm:$0xf]
  %v220 = vld [vmem:[%s2 + $0x80] sm:$0xf]
  %v221 = vld [vmem:[%s2 + $0x84] sm:$0xf]
  %v222 = vld [vmem:[%s2 + $0x88] sm:$0xf]
  %v223 = vld [vmem:[%s2 + $0x8c] sm:$0xf]
  %v224 = vld [vmem:[%s2 + $0x90] sm:$0xf]
  %v225 = vld [vmem:[%s2 + $0x94] sm:$0xf]
  %v226 = vld [vmem:[%s2 + $0x98] sm:$0xf]
  %v227 = vld [vmem:[%s2 + $0x9c] sm:$0xf]
  %v228 = vld [vmem:[%s2 + $0xa0] sm:$0xf]
  %v229 = vld [vmem:[%s2 + $0xa4] sm:$0xf]
  %v230 = vld [vmem:[%s2 + $0xa8] sm:$0xf]
  %v231 = vld [vmem:[%s2 + $0xac] sm:$0xf]
  %v232 = vld [vmem:[%s2 + $0xb0] sm:$0xf]
  %v233 = vld [vmem:[%s2 + $0xb4] sm:$0xf]
  %v234 = vld [vmem:[%s2 + $0xb8] sm:$0xf]
  %v235 = vld [vmem:[%s2 + $0xbc] sm:$0xf]
  %v236 = vld [vmem:[%s2 + $0xc0] sm:$0xf]
  %v237 = vld [vmem:[%s2 + $0xc4] sm:$0xf]
  %v238 = vld [vmem:[%s2 + $0xc8] sm:$0xf]
  %v239 = vld [vmem:[%s2 + $0xcc] sm:$0xf]
  %v240 = vld [vmem:[%s2 + $0xd0] sm:$0xf]
  %v241 = vld [vmem:[%s2 + $0xd4] sm:$0xf]
  %v242 = vld [vmem:[%s2 + $0xd8] sm:$0xf]
  %v243 = vld [vmem:[%s2 + $0xdc] sm:$0xf]
  %v244 = vld [vmem:[%s2 + $0xe0] sm:$0xf]
  %v245 = vld [vmem:[%s2 + $0xe4] sm:$0xf]
  %v246 = vld [vmem:[%s2 + $0xe8] sm:$0xf]
  %v247 = vld [vmem:[%s2 + $0xec] sm:$0xf]
  %v248 = vld [vmem:[%s2 + $0xf0] sm:$0xf]
  %v249 = vld [vmem:[%s2 + $0xf4] sm:$0xf]
  %v250 = vld [vmem:[%s2 + $0xf8] sm:$0xf]
  %v251 = vld [vmem:[%s2 + $0xfc] sm:$0xf]
  %v252 = vld [vmem:[%s3] sm:$0xf]
  %v253 = vld [vmem:[%s3 + $0x4] sm:$0xf]
  %v318 = vunpack.c.l.b16 %v188
  %v319 = vunpack.c.l.b16 %v189
  %v320 = vunpack.c.l.b16 %v190
  %v321 = vunpack.c.l.b16 %v191
  %v322 = vunpack.c.l.b16 %v192
  %v323 = vunpack.c.l.b16 %v193
  %v324 = vunpack.c.l.b16 %v194
  %v325 = vunpack.c.l.b16 %v195
  %v326 = vunpack.c.l.b16 %v196
  %v327 = vunpack.c.l.b16 %v197
  %v328 = vunpack.c.l.b16 %v198
  %v329 = vunpack.c.l.b16 %v199
  %v330 = vunpack.c.l.b16 %v200
  %v331 = vunpack.c.l.b16 %v201
  %v332 = vunpack.c.l.b16 %v202
  %v333 = vunpack.c.l.b16 %v203
  %v334 = vunpack.c.l.b16 %v204
  %v335 = vunpack.c.l.b16 %v205
  %v336 = vunpack.c.l.b16 %v206
  %v337 = vunpack.c.l.b16 %v207
  %v338 = vunpack.c.l.b16 %v208
  %v339 = vunpack.c.l.b16 %v209
  %v340 = vunpack.c.l.b16 %v210
  %v341 = vunpack.c.l.b16 %v211
  %v342 = vunpack.c.l.b16 %v212
  %v343 = vunpack.c.l.b16 %v213
  %v344 = vunpack.c.l.b16 %v214
  %v345 = vunpack.c.l.b16 %v215
  %v346 = vunpack.c.l.b16 %v216
  %v347 = vunpack.c.l.b16 %v217
  %v348 = vunpack.c.l.b16 %v218
  %v349 = vunpack.c.l.b16 %v219
  %v350 = vunpack.c.l.b16 %v220
  %v351 = vunpack.c.l.b16 %v221
  %v352 = vunpack.c.l.b16 %v222
  %v353 = vunpack.c.l.b16 %v223
  %v354 = vunpack.c.l.b16 %v224
  %v355 = vunpack.c.l.b16 %v225
  %v356 = vunpack.c.l.b16 %v226
  %v357 = vunpack.c.l.b16 %v227
  %v358 = vunpack.c.l.b16 %v228
  %v359 = vunpack.c.l.b16 %v229
  %v360 = vunpack.c.l.b16 %v230
  %v361 = vunpack.c.l.b16 %v231
  %v362 = vunpack.c.l.b16 %v232
  %v363 = vunpack.c.l.b16 %v233
  %v364 = vunpack.c.l.b16 %v234
  %v365 = vunpack.c.l.b16 %v235
  %v366 = vunpack.c.l.b16 %v236
  %v367 = vunpack.c.l.b16 %v237
  %v368 = vunpack.c.l.b16 %v238
  %v369 = vunpack.c.l.b16 %v239
  %v370 = vunpack.c.l.b16 %v240
  %v371 = vunpack.c.l.b16 %v241
  %v372 = vunpack.c.l.b16 %v242
  %v373 = vunpack.c.l.b16 %v243
  %v374 = vunpack.c.l.b16 %v244
  %v375 = vunpack.c.l.b16 %v245
  %v376 = vunpack.c.l.b16 %v246
  %v377 = vunpack.c.l.b16 %v247
  %v378 = vunpack.c.l.b16 %v248
  %v379 = vunpack.c.l.b16 %v249
  %v380 = vunpack.c.l.b16 %v250
  %v381 = vunpack.c.l.b16 %v251
  %v382 = vpack.c.b16 %v319, %v318
  %v383 = vpack.c.b16 %v321, %v320
  %v384 = vpack.c.b16 %v323, %v322
  %v385 = vpack.c.b16 %v325, %v324
  %v386 = vpack.c.b16 %v327, %v326
  %v387 = vpack.c.b16 %v329, %v328
  %v388 = vpack.c.b16 %v331, %v330
  %v389 = vpack.c.b16 %v333, %v332
  %v390 = vpack.c.b16 %v335, %v334
  %v391 = vpack.c.b16 %v337, %v336
  %v392 = vpack.c.b16 %v339, %v338
  %v393 = vpack.c.b16 %v341, %v340
  %v394 = vpack.c.b16 %v343, %v342
  %v395 = vpack.c.b16 %v345, %v344
  %v396 = vpack.c.b16 %v347, %v346
  %v397 = vpack.c.b16 %v349, %v348
  %v398 = vpack.c.b16 %v351, %v350
  %v399 = vpack.c.b16 %v353, %v352
  %v400 = vpack.c.b16 %v355, %v354
  %v401 = vpack.c.b16 %v357, %v356
  %v402 = vpack.c.b16 %v359, %v358
  %v403 = vpack.c.b16 %v361, %v360
  %v404 = vpack.c.b16 %v363, %v362
  %v405 = vpack.c.b16 %v365, %v364
  %v406 = vpack.c.b16 %v367, %v366
  %v407 = vpack.c.b16 %v369, %v368
  %v408 = vpack.c.b16 %v371, %v370
  %v409 = vpack.c.b16 %v373, %v372
  %v410 = vpack.c.b16 %v375, %v374
  %v411 = vpack.c.b16 %v377, %v376
  %v412 = vpack.c.b16 %v379, %v378
  %v413 = vpack.c.b16 %v381, %v380
  %v416 = vunpack.c.l.b16 %v252
  %v417 = vunpack.c.l.b16 %v253
  %v418 = vpack.c.b16 %v417, %v416
  %vm420 = vcmask 130048
  %v422 = vsel %vm420, %v382, 0
  %v425 = vsel %vm420, %v383, 0
  %v428 = vsel %vm420, %v384, 0
  %v431 = vsel %vm420, %v385, 0
  %v434 = vsel %vm420, %v386, 0
  %v437 = vsel %vm420, %v387, 0
  %v440 = vsel %vm420, %v388, 0
  %v443 = vsel %vm420, %v389, 0
  %v446 = vsel %vm420, %v390, 0
  %v449 = vsel %vm420, %v391, 0
  %v452 = vsel %vm420, %v392, 0
  %v455 = vsel %vm420, %v393, 0
  %v458 = vsel %vm420, %v394, 0
  %v461 = vsel %vm420, %v395, 0
  %v464 = vsel %vm420, %v396, 0
  %v467 = vsel %vm420, %v397, 0
  %v470 = vsel %vm420, %v398, 0
  %v473 = vsel %vm420, %v399, 0
  %v476 = vsel %vm420, %v400, 0
  %v479 = vsel %vm420, %v401, 0
  %v482 = vsel %vm420, %v402, 0
  %v485 = vsel %vm420, %v403, 0
  %v488 = vsel %vm420, %v404, 0
  %v491 = vsel %vm420, %v405, 0
  %v494 = vsel %vm420, %v406, 0
  %v497 = vsel %vm420, %v407, 0
  %v500 = vsel %vm420, %v408, 0
  %v503 = vsel %vm420, %v409, 0
  %v506 = vsel %vm420, %v410, 0
  %v509 = vsel %vm420, %v411, 0
  %v512 = vsel %vm420, %v412, 0
  %v515 = vsel %vm420, %v413, 0
  %517 = vmatpush.bf16.msra.mxu0 0
  %518 = vmatpush.bf16.msra.mxu0 0
  %519 = vmatpush.bf16.msra.mxu0 0
  %520 = vmatpush.bf16.msra.mxu0 0
  %521 = vmatpush.bf16.msra.mxu0 0
  %522 = vmatpush.bf16.msra.mxu0 0
  %523 = vmatpush.bf16.msra.mxu0 0
  %524 = vmatpush.bf16.msra.mxu0 %v418
  %525 = vmatmul.bf16.gmra.mxu0 %v422
  %v526 = vpop.f32.mrf.mxu0
  %v527 = vadd.f32 0.0, %v526
  %v528 = vpop.f32.mrf.mxu0
  %v529 = vadd.f32 0.0, %v528
  %530 = vmatmul.bf16.gmra.mxu0 %v425
  %v531 = vpop.f32.mrf.mxu0
  %v532 = vadd.f32 0.0, %v531
  %v533 = vpop.f32.mrf.mxu0
  %v534 = vadd.f32 0.0, %v533
  %535 = vmatmul.bf16.gmra.mxu0 %v428
  %v536 = vpop.f32.mrf.mxu0
  %v537 = vadd.f32 0.0, %v536
  %v538 = vpop.f32.mrf.mxu0
  %v539 = vadd.f32 0.0, %v538
  %540 = vmatmul.bf16.gmra.mxu0 %v431
  %v541 = vpop.f32.mrf.mxu0
  %v542 = vadd.f32 0.0, %v541
  %v543 = vpop.f32.mrf.mxu0
  %v544 = vadd.f32 0.0, %v543
  %545 = vmatmul.bf16.gmra.mxu0 %v434
  %v546 = vpop.f32.mrf.mxu0
  %v547 = vadd.f32 0.0, %v546
  %v548 = vpop.f32.mrf.mxu0
  %v549 = vadd.f32 0.0, %v548
  %550 = vmatmul.bf16.gmra.mxu0 %v437
  %v551 = vpop.f32.mrf.mxu0
  %v552 = vadd.f32 0.0, %v551
  %v553 = vpop.f32.mrf.mxu0
  %v554 = vadd.f32 0.0, %v553
  %555 = vmatmul.bf16.gmra.mxu0 %v440
  %v556 = vpop.f32.mrf.mxu0
  %v557 = vadd.f32 0.0, %v556
  %v558 = vpop.f32.mrf.mxu0
  %v559 = vadd.f32 0.0, %v558
  %560 = vmatmul.bf16.gmra.mxu0 %v443
  %v561 = vpop.f32.mrf.mxu0
  %v562 = vadd.f32 0.0, %v561
  %v563 = vpop.f32.mrf.mxu0
  %v564 = vadd.f32 0.0, %v563
  %565 = vmatmul.bf16.gmra.mxu0 %v446
  %v566 = vpop.f32.mrf.mxu0
  %v567 = vadd.f32 0.0, %v566
  %v568 = vpop.f32.mrf.mxu0
  %v569 = vadd.f32 0.0, %v568
  %570 = vmatmul.bf16.gmra.mxu0 %v449
  %v571 = vpop.f32.mrf.mxu0
  %v572 = vadd.f32 0.0, %v571
  %v573 = vpop.f32.mrf.mxu0
  %v574 = vadd.f32 0.0, %v573
  %575 = vmatmul.bf16.gmra.mxu0 %v452
  %v576 = vpop.f32.mrf.mxu0
  %v577 = vadd.f32 0.0, %v576
  %v578 = vpop.f32.mrf.mxu0
  %v579 = vadd.f32 0.0, %v578
  %580 = vmatmul.bf16.gmra.mxu0 %v455
  %v581 = vpop.f32.mrf.mxu0
  %v582 = vadd.f32 0.0, %v581
  %v583 = vpop.f32.mrf.mxu0
  %v584 = vadd.f32 0.0, %v583
  %585 = vmatmul.bf16.gmra.mxu0 %v458
  %v586 = vpop.f32.mrf.mxu0
  %v587 = vadd.f32 0.0, %v586
  %v588 = vpop.f32.mrf.mxu0
  %v589 = vadd.f32 0.0, %v588
  %590 = vmatmul.bf16.gmra.mxu0 %v461
  %v591 = vpop.f32.mrf.mxu0
  %v592 = vadd.f32 0.0, %v591
  %v593 = vpop.f32.mrf.mxu0
  %v594 = vadd.f32 0.0, %v593
  %595 = vmatmul.bf16.gmra.mxu0 %v464
  %v596 = vpop.f32.mrf.mxu0
  %v597 = vadd.f32 0.0, %v596
  %v598 = vpop.f32.mrf.mxu0
  %v599 = vadd.f32 0.0, %v598
  %600 = vmatmul.bf16.gmra.mxu0 %v467
  %v601 = vpop.f32.mrf.mxu0
  %v602 = vadd.f32 0.0, %v601
  %v603 = vpop.f32.mrf.mxu0
  %v604 = vadd.f32 0.0, %v603
  %605 = vmatmul.bf16.gmra.mxu0 %v470
  %v606 = vpop.f32.mrf.mxu0
  %v607 = vadd.f32 0.0, %v606
  %v608 = vpop.f32.mrf.mxu0
  %v609 = vadd.f32 0.0, %v608
  %610 = vmatmul.bf16.gmra.mxu0 %v473
  %v611 = vpop.f32.mrf.mxu0
  %v612 = vadd.f32 0.0, %v611
  %v613 = vpop.f32.mrf.mxu0
  %v614 = vadd.f32 0.0, %v613
  %615 = vmatmul.bf16.gmra.mxu0 %v476
  %v616 = vpop.f32.mrf.mxu0
  %v617 = vadd.f32 0.0, %v616
  %v618 = vpop.f32.mrf.mxu0
  %v619 = vadd.f32 0.0, %v618
  %620 = vmatmul.bf16.gmra.mxu0 %v479
  %v621 = vpop.f32.mrf.mxu0
  %v622 = vadd.f32 0.0, %v621
  %v623 = vpop.f32.mrf.mxu0
  %v624 = vadd.f32 0.0, %v623
  %625 = vmatmul.bf16.gmra.mxu0 %v482
  %v626 = vpop.f32.mrf.mxu0
  %v627 = vadd.f32 0.0, %v626
  %v628 = vpop.f32.mrf.mxu0
  %v629 = vadd.f32 0.0, %v628
  %630 = vmatmul.bf16.gmra.mxu0 %v485
  %v631 = vpop.f32.mrf.mxu0
  %v632 = vadd.f32 0.0, %v631
  %v633 = vpop.f32.mrf.mxu0
  %v634 = vadd.f32 0.0, %v633
  %635 = vmatmul.bf16.gmra.mxu0 %v488
  %v636 = vpop.f32.mrf.mxu0
  %v637 = vadd.f32 0.0, %v636
  %v638 = vpop.f32.mrf.mxu0
  %v639 = vadd.f32 0.0, %v638
  %640 = vmatmul.bf16.gmra.mxu0 %v491
  %v641 = vpop.f32.mrf.mxu0
  %v642 = vadd.f32 0.0, %v641
  %v643 = vpop.f32.mrf.mxu0
  %v644 = vadd.f32 0.0, %v643
  %645 = vmatmul.bf16.gmra.mxu0 %v494
  %v646 = vpop.f32.mrf.mxu0
  %v647 = vadd.f32 0.0, %v646
  %v648 = vpop.f32.mrf.mxu0
  %v649 = vadd.f32 0.0, %v648
  %650 = vmatmul.bf16.gmra.mxu0 %v497
  %v651 = vpop.f32.mrf.mxu0
  %v652 = vadd.f32 0.0, %v651
  %v653 = vpop.f32.mrf.mxu0
  %v654 = vadd.f32 0.0, %v653
  %655 = vmatmul.bf16.gmra.mxu0 %v500
  %v656 = vpop.f32.mrf.mxu0
  %v657 = vadd.f32 0.0, %v656
  %v658 = vpop.f32.mrf.mxu0
  %v659 = vadd.f32 0.0, %v658
  %660 = vmatmul.bf16.gmra.mxu0 %v503
  %v661 = vpop.f32.mrf.mxu0
  %v662 = vadd.f32 0.0, %v661
  %v663 = vpop.f32.mrf.mxu0
  %v664 = vadd.f32 0.0, %v663
  %665 = vmatmul.bf16.gmra.mxu0 %v506
  %v666 = vpop.f32.mrf.mxu0
  %v667 = vadd.f32 0.0, %v666
  %v668 = vpop.f32.mrf.mxu0
  %v669 = vadd.f32 0.0, %v668
  %670 = vmatmul.bf16.gmra.mxu0 %v509
  %v671 = vpop.f32.mrf.mxu0
  %v672 = vadd.f32 0.0, %v671
  %v673 = vpop.f32.mrf.mxu0
  %v674 = vadd.f32 0.0, %v673
  %675 = vmatmul.bf16.gmra.mxu0 %v512
  %v676 = vpop.f32.mrf.mxu0
  %v677 = vadd.f32 0.0, %v676
  %v678 = vpop.f32.mrf.mxu0
  %v679 = vadd.f32 0.0, %v678
  %680 = vmatmul.bf16.gmra.mxu0 %v515
  %v681 = vpop.f32.mrf.mxu0
  %v682 = vadd.f32 0.0, %v681
  %v683 = vpop.f32.mrf.mxu0
  %v684 = vadd.f32 0.0, %v683
  %685 = vdwg.mxu0
  %v814 = vunpack.c.l.b16 %v24
  %v815 = vunpack.c.h.b16 %v24
  %v816 = vunpack.c.l.b16 %v25
  %v817 = vunpack.c.l.b16 %v26
  %v818 = vunpack.c.h.b16 %v26
  %v819 = vunpack.c.l.b16 %v27
  %v820 = vunpack.c.l.b16 %v28
  %v821 = vunpack.c.h.b16 %v28
  %v822 = vunpack.c.l.b16 %v29
  %v823 = vunpack.c.l.b16 %v30
  %v824 = vunpack.c.h.b16 %v30
  %v825 = vunpack.c.l.b16 %v31
  %v826 = vunpack.c.l.b16 %v32
  %v827 = vunpack.c.h.b16 %v32
  %v828 = vunpack.c.l.b16 %v33
  %v829 = vunpack.c.l.b16 %v34
  %v830 = vunpack.c.h.b16 %v34
  %v831 = vunpack.c.l.b16 %v35
  %v832 = vunpack.c.l.b16 %v36
  %v833 = vunpack.c.h.b16 %v36
  %v834 = vunpack.c.l.b16 %v37
  %v835 = vunpack.c.l.b16 %v38
  %v836 = vunpack.c.h.b16 %v38
  %v837 = vunpack.c.l.b16 %v39
  %v838 = vunpack.c.l.b16 %v40
  %v839 = vunpack.c.h.b16 %v40
  %v840 = vunpack.c.l.b16 %v41
  %v841 = vunpack.c.l.b16 %v42
  %v842 = vunpack.c.h.b16 %v42
  %v843 = vunpack.c.l.b16 %v43
  %v844 = vunpack.c.l.b16 %v44
  %v845 = vunpack.c.h.b16 %v44
  %v846 = vunpack.c.l.b16 %v45
  %v847 = vunpack.c.l.b16 %v46
  %v848 = vunpack.c.h.b16 %v46
  %v849 = vunpack.c.l.b16 %v47
  %v850 = vunpack.c.l.b16 %v48
  %v851 = vunpack.c.h.b16 %v48
  %v852 = vunpack.c.l.b16 %v49
  %v853 = vunpack.c.l.b16 %v50
  %v854 = vunpack.c.h.b16 %v50
  %v855 = vunpack.c.l.b16 %v51
  %v856 = vunpack.c.l.b16 %v52
  %v857 = vunpack.c.h.b16 %v52
  %v858 = vunpack.c.l.b16 %v53
  %v859 = vunpack.c.l.b16 %v54
  %v860 = vunpack.c.h.b16 %v54
  %v861 = vunpack.c.l.b16 %v55
  %v862 = vunpack.c.l.b16 %v56
  %v863 = vunpack.c.h.b16 %v56
  %v864 = vunpack.c.l.b16 %v57
  %v865 = vunpack.c.l.b16 %v58
  %v866 = vunpack.c.h.b16 %v58
  %v867 = vunpack.c.l.b16 %v59
  %v868 = vunpack.c.l.b16 %v60
  %v869 = vunpack.c.h.b16 %v60
  %v870 = vunpack.c.l.b16 %v61
  %v871 = vunpack.c.l.b16 %v62
  %v872 = vunpack.c.h.b16 %v62
  %v873 = vunpack.c.l.b16 %v63
  %v874 = vunpack.c.l.b16 %v64
  %v875 = vunpack.c.h.b16 %v64
  %v876 = vunpack.c.l.b16 %v65
  %v877 = vunpack.c.l.b16 %v66
  %v878 = vunpack.c.h.b16 %v66
  %v879 = vunpack.c.l.b16 %v67
  %v880 = vunpack.c.l.b16 %v68
  %v881 = vunpack.c.h.b16 %v68
  %v882 = vunpack.c.l.b16 %v69
  %v883 = vunpack.c.l.b16 %v70
  %v884 = vunpack.c.h.b16 %v70
  %v885 = vunpack.c.l.b16 %v71
  %v886 = vunpack.c.l.b16 %v72
  %v887 = vunpack.c.h.b16 %v72
  %v888 = vunpack.c.l.b16 %v73
  %v889 = vunpack.c.l.b16 %v74
  %v890 = vunpack.c.h.b16 %v74
  %v891 = vunpack.c.l.b16 %v75
  %v892 = vunpack.c.l.b16 %v76
  %v893 = vunpack.c.h.b16 %v76
  %v894 = vunpack.c.l.b16 %v77
  %v895 = vunpack.c.l.b16 %v78
  %v896 = vunpack.c.h.b16 %v78
  %v897 = vunpack.c.l.b16 %v79
  %v898 = vunpack.c.l.b16 %v80
  %v899 = vunpack.c.h.b16 %v80
  %v900 = vunpack.c.l.b16 %v81
  %v901 = vunpack.c.l.b16 %v82
  %v902 = vunpack.c.h.b16 %v82
  %v903 = vunpack.c.l.b16 %v83
  %v904 = vunpack.c.l.b16 %v84
  %v905 = vunpack.c.h.b16 %v84
  %v906 = vunpack.c.l.b16 %v85
  %v907 = vunpack.c.l.b16 %v86
  %v908 = vunpack.c.h.b16 %v86
  %v909 = vunpack.c.l.b16 %v87
  %v910 = vunpack.c.l.b16 %v88
  %v911 = vunpack.c.h.b16 %v88
  %v912 = vunpack.c.l.b16 %v89
  %v913 = vunpack.c.l.b16 %v90
  %v914 = vunpack.c.h.b16 %v90
  %v915 = vunpack.c.l.b16 %v91
  %v916 = vunpack.c.l.b16 %v92
  %v917 = vunpack.c.h.b16 %v92
  %v918 = vunpack.c.l.b16 %v93
  %v919 = vunpack.c.l.b16 %v94
  %v920 = vunpack.c.h.b16 %v94
  %v921 = vunpack.c.l.b16 %v95
  %v922 = vunpack.c.l.b16 %v96
  %v923 = vunpack.c.h.b16 %v96
  %v924 = vunpack.c.l.b16 %v97
  %v925 = vunpack.c.l.b16 %v98
  %v926 = vunpack.c.h.b16 %v98
  %v927 = vunpack.c.l.b16 %v99
  %v928 = vunpack.c.l.b16 %v100
  %v929 = vunpack.c.h.b16 %v100
  %v930 = vunpack.c.l.b16 %v101
  %v931 = vunpack.c.l.b16 %v102
  %v932 = vunpack.c.h.b16 %v102
  %v933 = vunpack.c.l.b16 %v103
  %v934 = vunpack.c.l.b16 %v104
  %v935 = vunpack.c.h.b16 %v104
  %v936 = vunpack.c.l.b16 %v105
  %v937 = vunpack.c.l.b16 %v106
  %v938 = vunpack.c.h.b16 %v106
  %v939 = vunpack.c.l.b16 %v107
  %v940 = vunpack.c.l.b16 %v108
  %v941 = vunpack.c.h.b16 %v108
  %v942 = vunpack.c.l.b16 %v109
  %v943 = vunpack.c.l.b16 %v110
  %v944 = vunpack.c.h.b16 %v110
  %v945 = vunpack.c.l.b16 %v111
  %v946 = vunpack.c.l.b16 %v112
  %v947 = vunpack.c.h.b16 %v112
  %v948 = vunpack.c.l.b16 %v113
  %v949 = vunpack.c.l.b16 %v114
  %v950 = vunpack.c.h.b16 %v114
  %v951 = vunpack.c.l.b16 %v115
  %v952 = vunpack.c.l.b16 %v116
  %v953 = vunpack.c.h.b16 %v116
  %v954 = vunpack.c.l.b16 %v117
  %v955 = vunpack.c.l.b16 %v118
  %v956 = vunpack.c.h.b16 %v118
  %v957 = vunpack.c.l.b16 %v119
  %v958 = vunpack.c.l.b16 %v120
  %v959 = vunpack.c.h.b16 %v120
  %v960 = vunpack.c.l.b16 %v121
  %v961 = vunpack.c.l.b16 %v122
  %v962 = vunpack.c.h.b16 %v122
  %v963 = vunpack.c.l.b16 %v123
  %v964 = vunpack.c.l.b16 %v124
  %v965 = vunpack.c.h.b16 %v124
  %v966 = vunpack.c.l.b16 %v125
  %v967 = vunpack.c.l.b16 %v126
  %v968 = vunpack.c.h.b16 %v126
  %v969 = vunpack.c.l.b16 %v127
  %v970 = vunpack.c.l.b16 %v128
  %v971 = vunpack.c.h.b16 %v128
  %v972 = vunpack.c.l.b16 %v129
  %v973 = vunpack.c.l.b16 %v130
  %v974 = vunpack.c.h.b16 %v130
  %v975 = vunpack.c.l.b16 %v131
  %v976 = vunpack.c.l.b16 %v132
  %v977 = vunpack.c.h.b16 %v132
  %v978 = vunpack.c.l.b16 %v133
  %v979 = vunpack.c.l.b16 %v134
  %v980 = vunpack.c.h.b16 %v134
  %v981 = vunpack.c.l.b16 %v135
  %v982 = vunpack.c.l.b16 %v136
  %v983 = vunpack.c.h.b16 %v136
  %v984 = vunpack.c.l.b16 %v137
  %v985 = vunpack.c.l.b16 %v138
  %v986 = vunpack.c.h.b16 %v138
  %v987 = vunpack.c.l.b16 %v139
  %v988 = vunpack.c.l.b16 %v140
  %v989 = vunpack.c.h.b16 %v140
  %v990 = vunpack.c.l.b16 %v141
  %v991 = vunpack.c.l.b16 %v142
  %v992 = vunpack.c.h.b16 %v142
  %v993 = vunpack.c.l.b16 %v143
  %v994 = vunpack.c.l.b16 %v144
  %v995 = vunpack.c.h.b16 %v144
  %v996 = vunpack.c.l.b16 %v145
  %v997 = vunpack.c.l.b16 %v146
  %v998 = vunpack.c.h.b16 %v146
  %v999 = vunpack.c.l.b16 %v147
  %v1000 = vunpack.c.l.b16 %v148
  %v1001 = vunpack.c.h.b16 %v148
  %v1002 = vunpack.c.l.b16 %v149
  %v1003 = vunpack.c.l.b16 %v150
  %v1004 = vunpack.c.h.b16 %v150
  %v1005 = vunpack.c.l.b16 %v151
  %v1006 = vpack.c.b16 %v817, %v814
  %v1007 = vpack.c.b16 %v818, %v815
  %v1008 = vpack.c.b16 %v819, %v816
  %v1009 = vpack.c.b16 %v823, %v820
  %v1010 = vpack.c.b16 %v824, %v821
  %v1011 = vpack.c.b16 %v825, %v822
  %v1012 = vpack.c.b16 %v829, %v826
  %v1013 = vpack.c.b16 %v830, %v827
  %v1014 = vpack.c.b16 %v831, %v828
  %v1015 = vpack.c.b16 %v835, %v832
  %v1016 = vpack.c.b16 %v836, %v833
  %v1017 = vpack.c.b16 %v837, %v834
  %v1018 = vpack.c.b16 %v841, %v838
  %v1019 = vpack.c.b16 %v842, %v839
  %v1020 = vpack.c.b16 %v843, %v840
  %v1021 = vpack.c.b16 %v847, %v844
  %v1022 = vpack.c.b16 %v848, %v845
  %v1023 = vpack.c.b16 %v849, %v846
  %v1024 = vpack.c.b16 %v853, %v850
  %v1025 = vpack.c.b16 %v854, %v851
  %v1026 = vpack.c.b16 %v855, %v852
  %v1027 = vpack.c.b16 %v859, %v856
  %v1028 = vpack.c.b16 %v860, %v857
  %v1029 = vpack.c.b16 %v861, %v858
  %v1030 = vpack.c.b16 %v865, %v862
  %v1031 = vpack.c.b16 %v866, %v863
  %v1032 = vpack.c.b16 %v867, %v864
  %v1033 = vpack.c.b16 %v871, %v868
  %v1034 = vpack.c.b16 %v872, %v869
  %v1035 = vpack.c.b16 %v873, %v870
  %v1036 = vpack.c.b16 %v877, %v874
  %v1037 = vpack.c.b16 %v878, %v875
  %v1038 = vpack.c.b16 %v879, %v876
  %v1039 = vpack.c.b16 %v883, %v880
  %v1040 = vpack.c.b16 %v884, %v881
  %v1041 = vpack.c.b16 %v885, %v882
  %v1042 = vpack.c.b16 %v889, %v886
  %v1043 = vpack.c.b16 %v890, %v887
  %v1044 = vpack.c.b16 %v891, %v888
  %v1045 = vpack.c.b16 %v895, %v892
  %v1046 = vpack.c.b16 %v896, %v893
  %v1047 = vpack.c.b16 %v897, %v894
  %v1048 = vpack.c.b16 %v901, %v898
  %v1049 = vpack.c.b16 %v902, %v899
  %v1050 = vpack.c.b16 %v903, %v900
  %v1051 = vpack.c.b16 %v907, %v904
  %v1052 = vpack.c.b16 %v908, %v905
  %v1053 = vpack.c.b16 %v909, %v906
  %v1054 = vpack.c.b16 %v913, %v910
  %v1055 = vpack.c.b16 %v914, %v911
  %v1056 = vpack.c.b16 %v915, %v912
  %v1057 = vpack.c.b16 %v919, %v916
  %v1058 = vpack.c.b16 %v920, %v917
  %v1059 = vpack.c.b16 %v921, %v918
  %v1060 = vpack.c.b16 %v925, %v922
  %v1061 = vpack.c.b16 %v926, %v923
  %v1062 = vpack.c.b16 %v927, %v924
  %v1063 = vpack.c.b16 %v931, %v928
  %v1064 = vpack.c.b16 %v932, %v929
  %v1065 = vpack.c.b16 %v933, %v930
  %v1066 = vpack.c.b16 %v937, %v934
  %v1067 = vpack.c.b16 %v938, %v935
  %v1068 = vpack.c.b16 %v939, %v936
  %v1069 = vpack.c.b16 %v943, %v940
  %v1070 = vpack.c.b16 %v944, %v941
  %v1071 = vpack.c.b16 %v945, %v942
  %v1072 = vpack.c.b16 %v949, %v946
  %v1073 = vpack.c.b16 %v950, %v947
  %v1074 = vpack.c.b16 %v951, %v948
  %v1075 = vpack.c.b16 %v955, %v952
  %v1076 = vpack.c.b16 %v956, %v953
  %v1077 = vpack.c.b16 %v957, %v954
  %v1078 = vpack.c.b16 %v961, %v958
  %v1079 = vpack.c.b16 %v962, %v959
  %v1080 = vpack.c.b16 %v963, %v960
  %v1081 = vpack.c.b16 %v967, %v964
  %v1082 = vpack.c.b16 %v968, %v965
  %v1083 = vpack.c.b16 %v969, %v966
  %v1084 = vpack.c.b16 %v973, %v970
  %v1085 = vpack.c.b16 %v974, %v971
  %v1086 = vpack.c.b16 %v975, %v972
  %v1087 = vpack.c.b16 %v979, %v976
  %v1088 = vpack.c.b16 %v980, %v977
  %v1089 = vpack.c.b16 %v981, %v978
  %v1090 = vpack.c.b16 %v985, %v982
  %v1091 = vpack.c.b16 %v986, %v983
  %v1092 = vpack.c.b16 %v987, %v984
  %v1093 = vpack.c.b16 %v991, %v988
  %v1094 = vpack.c.b16 %v992, %v989
  %v1095 = vpack.c.b16 %v993, %v990
  %v1096 = vpack.c.b16 %v997, %v994
  %v1097 = vpack.c.b16 %v998, %v995
  %v1098 = vpack.c.b16 %v999, %v996
  %v1099 = vpack.c.b16 %v1003, %v1000
  %v1100 = vpack.c.b16 %v1004, %v1001
  %v1101 = vpack.c.b16 %v1005, %v1002
  %v1202 = vunpack.c.l.b16 %v152
  %v1203 = vunpack.c.l.b16 %v153
  %v1204 = vunpack.c.l.b16 %v154
  %v1205 = vunpack.c.l.b16 %v155
  %v1206 = vunpack.c.l.b16 %v156
  %v1207 = vunpack.c.l.b16 %v157
  %v1208 = vunpack.c.l.b16 %v158
  %v1209 = vunpack.c.l.b16 %v159
  %v1210 = vunpack.c.l.b16 %v160
  %v1211 = vunpack.c.l.b16 %v161
  %v1212 = vunpack.c.l.b16 %v162
  %v1213 = vunpack.c.l.b16 %v163
  %v1214 = vunpack.c.l.b16 %v164
  %v1215 = vunpack.c.l.b16 %v165
  %v1216 = vunpack.c.l.b16 %v166
  %v1217 = vunpack.c.l.b16 %v167
  %v1218 = vunpack.c.l.b16 %v168
  %v1219 = vunpack.c.l.b16 %v169
  %v1220 = vunpack.c.l.b16 %v170
  %v1221 = vunpack.c.l.b16 %v171
  %v1222 = vunpack.c.l.b16 %v172
  %v1223 = vunpack.c.l.b16 %v173
  %v1224 = vunpack.c.l.b16 %v174
  %v1225 = vunpack.c.l.b16 %v175
  %v1226 = vunpack.c.l.b16 %v176
  %v1227 = vunpack.c.l.b16 %v177
  %v1228 = vunpack.c.l.b16 %v178
  %v1229 = vunpack.c.l.b16 %v179
  %v1230 = vunpack.c.l.b16 %v180
  %v1231 = vunpack.c.l.b16 %v181
  %v1232 = vunpack.c.l.b16 %v182
  %v1233 = vunpack.c.l.b16 %v183
  %v1234 = vunpack.c.l.b16 %v184
  %v1235 = vunpack.c.l.b16 %v185
  %v1236 = vunpack.c.l.b16 %v186
  %v1237 = vunpack.c.l.b16 %v187
  %v1238 = vpack.c.b16 %v1203, %v1202
  %v1239 = vpack.c.b16 %v1205, %v1204
  %v1240 = vpack.c.b16 %v1207, %v1206
  %v1241 = vpack.c.b16 %v1209, %v1208
  %v1242 = vpack.c.b16 %v1211, %v1210
  %v1243 = vpack.c.b16 %v1213, %v1212
  %v1244 = vpack.c.b16 %v1215, %v1214
  %v1245 = vpack.c.b16 %v1217, %v1216
  %v1246 = vpack.c.b16 %v1219, %v1218
  %v1247 = vpack.c.b16 %v1221, %v1220
  %v1248 = vpack.c.b16 %v1223, %v1222
  %v1249 = vpack.c.b16 %v1225, %v1224
  %v1250 = vpack.c.b16 %v1227, %v1226
  %v1251 = vpack.c.b16 %v1229, %v1228
  %v1252 = vpack.c.b16 %v1231, %v1230
  %v1253 = vpack.c.b16 %v1233, %v1232
  %v1254 = vpack.c.b16 %v1235, %v1234
  %v1255 = vpack.c.b16 %v1237, %v1236
  %vm1274 = vcmask 261120
  %v1276 = vsel %vm1274, %v1008, 0
  %v1279 = vsel %vm1274, %v1011, 0
  %v1282 = vsel %vm1274, %v1014, 0
  %v1285 = vsel %vm1274, %v1017, 0
  %v1288 = vsel %vm1274, %v1020, 0
  %v1291 = vsel %vm1274, %v1023, 0
  %v1294 = vsel %vm1274, %v1026, 0
  %v1297 = vsel %vm1274, %v1029, 0
  %v1300 = vsel %vm1274, %v1032, 0
  %v1303 = vsel %vm1274, %v1035, 0
  %v1306 = vsel %vm1274, %v1038, 0
  %v1309 = vsel %vm1274, %v1041, 0
  %v1312 = vsel %vm1274, %v1044, 0
  %v1315 = vsel %vm1274, %v1047, 0
  %v1318 = vsel %vm1274, %v1050, 0
  %v1321 = vsel %vm1274, %v1053, 0
  %v1324 = vsel %vm1274, %v1056, 0
  %v1327 = vsel %vm1274, %v1059, 0
  %v1330 = vsel %vm1274, %v1062, 0
  %v1333 = vsel %vm1274, %v1065, 0
  %v1336 = vsel %vm1274, %v1068, 0
  %v1339 = vsel %vm1274, %v1071, 0
  %v1342 = vsel %vm1274, %v1074, 0
  %v1345 = vsel %vm1274, %v1077, 0
  %v1348 = vsel %vm1274, %v1080, 0
  %v1351 = vsel %vm1274, %v1083, 0
  %v1354 = vsel %vm1274, %v1086, 0
  %v1357 = vsel %vm1274, %v1089, 0
  %v1360 = vsel %vm1274, %v1092, 0
  %v1363 = vsel %vm1274, %v1095, 0
  %v1366 = vsel %vm1274, %v1098, 0
  %v1369 = vsel %vm1274, %v1101, 0
  %1371 = vmatpush.bf16.msra.mxu0 %v1245
  %1372 = vmatpush.bf16.msra.mxu0 %v1244
  %1373 = vmatpush.bf16.msra.mxu0 %v1243
  %1374 = vmatpush.bf16.msra.mxu0 %v1242
  %1375 = vmatpush.bf16.msra.mxu0 %v1241
  %1376 = vmatpush.bf16.msra.mxu0 %v1240
  %1377 = vmatpush.bf16.msra.mxu0 %v1239
  %1378 = vmatpush.bf16.msra.mxu0 %v1238
  %1379 = vmatmul.bf16.gmra.mxu0 %v1006
  %v1380 = vpop.f32.mrf.mxu0
  %v1381 = vadd.f32 %v527, %v1380
  %v1382 = vpop.f32.mrf.mxu0
  %v1383 = vadd.f32 %v529, %v1382
  %1384 = vmatmul.bf16.gmra.mxu0 %v1009
  %v1385 = vpop.f32.mrf.mxu0
  %v1386 = vadd.f32 %v532, %v1385
  %v1387 = vpop.f32.mrf.mxu0
  %v1388 = vadd.f32 %v534, %v1387
  %1389 = vmatmul.bf16.gmra.mxu0 %v1012
  %v1390 = vpop.f32.mrf.mxu0
  %v1391 = vadd.f32 %v537, %v1390
  %v1392 = vpop.f32.mrf.mxu0
  %v1393 = vadd.f32 %v539, %v1392
  %1394 = vmatmul.bf16.gmra.mxu0 %v1015
  %v1395 = vpop.f32.mrf.mxu0
  %v1396 = vadd.f32 %v542, %v1395
  %v1397 = vpop.f32.mrf.mxu0
  %v1398 = vadd.f32 %v544, %v1397
  %1399 = vmatmul.bf16.gmra.mxu0 %v1018
  %v1400 = vpop.f32.mrf.mxu0
  %v1401 = vadd.f32 %v547, %v1400
  %v1402 = vpop.f32.mrf.mxu0
  %v1403 = vadd.f32 %v549, %v1402
  %1404 = vmatmul.bf16.gmra.mxu0 %v1021
  %v1405 = vpop.f32.mrf.mxu0
  %v1406 = vadd.f32 %v552, %v1405
  %v1407 = vpop.f32.mrf.mxu0
  %v1408 = vadd.f32 %v554, %v1407
  %1409 = vmatmul.bf16.gmra.mxu0 %v1024
  %v1410 = vpop.f32.mrf.mxu0
  %v1411 = vadd.f32 %v557, %v1410
  %v1412 = vpop.f32.mrf.mxu0
  %v1413 = vadd.f32 %v559, %v1412
  %1414 = vmatmul.bf16.gmra.mxu0 %v1027
  %v1415 = vpop.f32.mrf.mxu0
  %v1416 = vadd.f32 %v562, %v1415
  %v1417 = vpop.f32.mrf.mxu0
  %v1418 = vadd.f32 %v564, %v1417
  %1419 = vmatmul.bf16.gmra.mxu0 %v1030
  %v1420 = vpop.f32.mrf.mxu0
  %v1421 = vadd.f32 %v567, %v1420
  %v1422 = vpop.f32.mrf.mxu0
  %v1423 = vadd.f32 %v569, %v1422
  %1424 = vmatmul.bf16.gmra.mxu0 %v1033
  %v1425 = vpop.f32.mrf.mxu0
  %v1426 = vadd.f32 %v572, %v1425
  %v1427 = vpop.f32.mrf.mxu0
  %v1428 = vadd.f32 %v574, %v1427
  %1429 = vmatmul.bf16.gmra.mxu0 %v1036
  %v1430 = vpop.f32.mrf.mxu0
  %v1431 = vadd.f32 %v577, %v1430
  %v1432 = vpop.f32.mrf.mxu0
  %v1433 = vadd.f32 %v579, %v1432
  %1434 = vmatmul.bf16.gmra.mxu0 %v1039
  %v1435 = vpop.f32.mrf.mxu0
  %v1436 = vadd.f32 %v582, %v1435
  %v1437 = vpop.f32.mrf.mxu0
  %v1438 = vadd.f32 %v584, %v1437
  %1439 = vmatmul.bf16.gmra.mxu0 %v1042
  %v1440 = vpop.f32.mrf.mxu0
  %v1441 = vadd.f32 %v587, %v1440
  %v1442 = vpop.f32.mrf.mxu0
  %v1443 = vadd.f32 %v589, %v1442
  %1444 = vmatmul.bf16.gmra.mxu0 %v1045
  %v1445 = vpop.f32.mrf.mxu0
  %v1446 = vadd.f32 %v592, %v1445
  %v1447 = vpop.f32.mrf.mxu0
  %v1448 = vadd.f32 %v594, %v1447
  %1449 = vmatmul.bf16.gmra.mxu0 %v1048
  %v1450 = vpop.f32.mrf.mxu0
  %v1451 = vadd.f32 %v597, %v1450
  %v1452 = vpop.f32.mrf.mxu0
  %v1453 = vadd.f32 %v599, %v1452
  %1454 = vmatmul.bf16.gmra.mxu0 %v1051
  %v1455 = vpop.f32.mrf.mxu0
  %v1456 = vadd.f32 %v602, %v1455
  %v1457 = vpop.f32.mrf.mxu0
  %v1458 = vadd.f32 %v604, %v1457
  %1459 = vmatmul.bf16.gmra.mxu0 %v1054
  %v1460 = vpop.f32.mrf.mxu0
  %v1461 = vadd.f32 %v607, %v1460
  %v1462 = vpop.f32.mrf.mxu0
  %v1463 = vadd.f32 %v609, %v1462
  %1464 = vmatmul.bf16.gmra.mxu0 %v1057
  %v1465 = vpop.f32.mrf.mxu0
  %v1466 = vadd.f32 %v612, %v1465
  %v1467 = vpop.f32.mrf.mxu0
  %v1468 = vadd.f32 %v614, %v1467
  %1469 = vmatmul.bf16.gmra.mxu0 %v1060
  %v1470 = vpop.f32.mrf.mxu0
  %v1471 = vadd.f32 %v617, %v1470
  %v1472 = vpop.f32.mrf.mxu0
  %v1473 = vadd.f32 %v619, %v1472
  %1474 = vmatmul.bf16.gmra.mxu0 %v1063
  %v1475 = vpop.f32.mrf.mxu0
  %v1476 = vadd.f32 %v622, %v1475
  %v1477 = vpop.f32.mrf.mxu0
  %v1478 = vadd.f32 %v624, %v1477
  %1479 = vmatmul.bf16.gmra.mxu0 %v1066
  %v1480 = vpop.f32.mrf.mxu0
  %v1481 = vadd.f32 %v627, %v1480
  %v1482 = vpop.f32.mrf.mxu0
  %v1483 = vadd.f32 %v629, %v1482
  %1484 = vmatmul.bf16.gmra.mxu0 %v1069
  %v1485 = vpop.f32.mrf.mxu0
  %v1486 = vadd.f32 %v632, %v1485
  %v1487 = vpop.f32.mrf.mxu0
  %v1488 = vadd.f32 %v634, %v1487
  %1489 = vmatmul.bf16.gmra.mxu0 %v1072
  %v1490 = vpop.f32.mrf.mxu0
  %v1491 = vadd.f32 %v637, %v1490
  %v1492 = vpop.f32.mrf.mxu0
  %v1493 = vadd.f32 %v639, %v1492
  %1494 = vmatmul.bf16.gmra.mxu0 %v1075
  %v1495 = vpop.f32.mrf.mxu0
  %v1496 = vadd.f32 %v642, %v1495
  %v1497 = vpop.f32.mrf.mxu0
  %v1498 = vadd.f32 %v644, %v1497
  %1499 = vmatmul.bf16.gmra.mxu0 %v1078
  %v1500 = vpop.f32.mrf.mxu0
  %v1501 = vadd.f32 %v647, %v1500
  %v1502 = vpop.f32.mrf.mxu0
  %v1503 = vadd.f32 %v649, %v1502
  %1504 = vmatmul.bf16.gmra.mxu0 %v1081
  %v1505 = vpop.f32.mrf.mxu0
  %v1506 = vadd.f32 %v652, %v1505
  %v1507 = vpop.f32.mrf.mxu0
  %v1508 = vadd.f32 %v654, %v1507
  %1509 = vmatmul.bf16.gmra.mxu0 %v1084
  %v1510 = vpop.f32.mrf.mxu0
  %v1511 = vadd.f32 %v657, %v1510
  %v1512 = vpop.f32.mrf.mxu0
  %v1513 = vadd.f32 %v659, %v1512
  %1514 = vmatmul.bf16.gmra.mxu0 %v1087
  %v1515 = vpop.f32.mrf.mxu0
  %v1516 = vadd.f32 %v662, %v1515
  %v1517 = vpop.f32.mrf.mxu0
  %v1518 = vadd.f32 %v664, %v1517
  %1519 = vmatmul.bf16.gmra.mxu0 %v1090
  %v1520 = vpop.f32.mrf.mxu0
  %v1521 = vadd.f32 %v667, %v1520
  %v1522 = vpop.f32.mrf.mxu0
  %v1523 = vadd.f32 %v669, %v1522
  %1524 = vmatmul.bf16.gmra.mxu0 %v1093
  %v1525 = vpop.f32.mrf.mxu0
  %v1526 = vadd.f32 %v672, %v1525
  %v1527 = vpop.f32.mrf.mxu0
  %v1528 = vadd.f32 %v674, %v1527
  %1529 = vmatmul.bf16.gmra.mxu0 %v1096
  %v1530 = vpop.f32.mrf.mxu0
  %v1531 = vadd.f32 %v677, %v1530
  %v1532 = vpop.f32.mrf.mxu0
  %v1533 = vadd.f32 %v679, %v1532
  %1534 = vmatmul.bf16.gmra.mxu0 %v1099
  %v1535 = vpop.f32.mrf.mxu0
  %v1536 = vadd.f32 %v682, %v1535
  %v1537 = vpop.f32.mrf.mxu0
  %v1538 = vadd.f32 %v684, %v1537
  %1539 = vdwg.mxu0
  %1540 = vmatpush.bf16.msra.mxu0 %v1253
  %1541 = vmatpush.bf16.msra.mxu0 %v1252
  %1542 = vmatpush.bf16.msra.mxu0 %v1251
  %1543 = vmatpush.bf16.msra.mxu0 %v1250
  %1544 = vmatpush.bf16.msra.mxu0 %v1249
  %1545 = vmatpush.bf16.msra.mxu0 %v1248
  %1546 = vmatpush.bf16.msra.mxu0 %v1247
  %1547 = vmatpush.bf16.msra.mxu0 %v1246
  %1548 = vmatmul.bf16.gmra.mxu0 %v1007
  %v1549 = vpop.f32.mrf.mxu0
  %v1550 = vadd.f32 %v1381, %v1549
  %v1551 = vpop.f32.mrf.mxu0
  %v1552 = vadd.f32 %v1383, %v1551
  %1553 = vmatmul.bf16.gmra.mxu0 %v1010
  %v1554 = vpop.f32.mrf.mxu0
  %v1555 = vadd.f32 %v1386, %v1554
  %v1556 = vpop.f32.mrf.mxu0
  %v1557 = vadd.f32 %v1388, %v1556
  %1558 = vmatmul.bf16.gmra.mxu0 %v1013
  %v1559 = vpop.f32.mrf.mxu0
  %v1560 = vadd.f32 %v1391, %v1559
  %v1561 = vpop.f32.mrf.mxu0
  %v1562 = vadd.f32 %v1393, %v1561
  %1563 = vmatmul.bf16.gmra.mxu0 %v1016
  %v1564 = vpop.f32.mrf.mxu0
  %v1565 = vadd.f32 %v1396, %v1564
  %v1566 = vpop.f32.mrf.mxu0
  %v1567 = vadd.f32 %v1398, %v1566
  %1568 = vmatmul.bf16.gmra.mxu0 %v1019
  %v1569 = vpop.f32.mrf.mxu0
  %v1570 = vadd.f32 %v1401, %v1569
  %v1571 = vpop.f32.mrf.mxu0
  %v1572 = vadd.f32 %v1403, %v1571
  %1573 = vmatmul.bf16.gmra.mxu0 %v1022
  %v1574 = vpop.f32.mrf.mxu0
  %v1575 = vadd.f32 %v1406, %v1574
  %v1576 = vpop.f32.mrf.mxu0
  %v1577 = vadd.f32 %v1408, %v1576
  %1578 = vmatmul.bf16.gmra.mxu0 %v1025
  %v1579 = vpop.f32.mrf.mxu0
  %v1580 = vadd.f32 %v1411, %v1579
  %v1581 = vpop.f32.mrf.mxu0
  %v1582 = vadd.f32 %v1413, %v1581
  %1583 = vmatmul.bf16.gmra.mxu0 %v1028
  %v1584 = vpop.f32.mrf.mxu0
  %v1585 = vadd.f32 %v1416, %v1584
  %v1586 = vpop.f32.mrf.mxu0
  %v1587 = vadd.f32 %v1418, %v1586
  %1588 = vmatmul.bf16.gmra.mxu0 %v1031
  %v1589 = vpop.f32.mrf.mxu0
  %v1590 = vadd.f32 %v1421, %v1589
  %v1591 = vpop.f32.mrf.mxu0
  %v1592 = vadd.f32 %v1423, %v1591
  %1593 = vmatmul.bf16.gmra.mxu0 %v1034
  %v1594 = vpop.f32.mrf.mxu0
  %v1595 = vadd.f32 %v1426, %v1594
  %v1596 = vpop.f32.mrf.mxu0
  %v1597 = vadd.f32 %v1428, %v1596
  %1598 = vmatmul.bf16.gmra.mxu0 %v1037
  %v1599 = vpop.f32.mrf.mxu0
  %v1600 = vadd.f32 %v1431, %v1599
  %v1601 = vpop.f32.mrf.mxu0
  %v1602 = vadd.f32 %v1433, %v1601
  %1603 = vmatmul.bf16.gmra.mxu0 %v1040
  %v1604 = vpop.f32.mrf.mxu0
  %v1605 = vadd.f32 %v1436, %v1604
  %v1606 = vpop.f32.mrf.mxu0
  %v1607 = vadd.f32 %v1438, %v1606
  %1608 = vmatmul.bf16.gmra.mxu0 %v1043
  %v1609 = vpop.f32.mrf.mxu0
  %v1610 = vadd.f32 %v1441, %v1609
  %v1611 = vpop.f32.mrf.mxu0
  %v1612 = vadd.f32 %v1443, %v1611
  %1613 = vmatmul.bf16.gmra.mxu0 %v1046
  %v1614 = vpop.f32.mrf.mxu0
  %v1615 = vadd.f32 %v1446, %v1614
  %v1616 = vpop.f32.mrf.mxu0
  %v1617 = vadd.f32 %v1448, %v1616
  %1618 = vmatmul.bf16.gmra.mxu0 %v1049
  %v1619 = vpop.f32.mrf.mxu0
  %v1620 = vadd.f32 %v1451, %v1619
  %v1621 = vpop.f32.mrf.mxu0
  %v1622 = vadd.f32 %v1453, %v1621
  %1623 = vmatmul.bf16.gmra.mxu0 %v1052
  %v1624 = vpop.f32.mrf.mxu0
  %v1625 = vadd.f32 %v1456, %v1624
  %v1626 = vpop.f32.mrf.mxu0
  %v1627 = vadd.f32 %v1458, %v1626
  %1628 = vmatmul.bf16.gmra.mxu0 %v1055
  %v1629 = vpop.f32.mrf.mxu0
  %v1630 = vadd.f32 %v1461, %v1629
  %v1631 = vpop.f32.mrf.mxu0
  %v1632 = vadd.f32 %v1463, %v1631
  %1633 = vmatmul.bf16.gmra.mxu0 %v1058
  %v1634 = vpop.f32.mrf.mxu0
  %v1635 = vadd.f32 %v1466, %v1634
  %v1636 = vpop.f32.mrf.mxu0
  %v1637 = vadd.f32 %v1468, %v1636
  %1638 = vmatmul.bf16.gmra.mxu0 %v1061
  %v1639 = vpop.f32.mrf.mxu0
  %v1640 = vadd.f32 %v1471, %v1639
  %v1641 = vpop.f32.mrf.mxu0
  %v1642 = vadd.f32 %v1473, %v1641
  %1643 = vmatmul.bf16.gmra.mxu0 %v1064
  %v1644 = vpop.f32.mrf.mxu0
  %v1645 = vadd.f32 %v1476, %v1644
  %v1646 = vpop.f32.mrf.mxu0
  %v1647 = vadd.f32 %v1478, %v1646
  %1648 = vmatmul.bf16.gmra.mxu0 %v1067
  %v1649 = vpop.f32.mrf.mxu0
  %v1650 = vadd.f32 %v1481, %v1649
  %v1651 = vpop.f32.mrf.mxu0
  %v1652 = vadd.f32 %v1483, %v1651
  %1653 = vmatmul.bf16.gmra.mxu0 %v1070
  %v1654 = vpop.f32.mrf.mxu0
  %v1655 = vadd.f32 %v1486, %v1654
  %v1656 = vpop.f32.mrf.mxu0
  %v1657 = vadd.f32 %v1488, %v1656
  %1658 = vmatmul.bf16.gmra.mxu0 %v1073
  %v1659 = vpop.f32.mrf.mxu0
  %v1660 = vadd.f32 %v1491, %v1659
  %v1661 = vpop.f32.mrf.mxu0
  %v1662 = vadd.f32 %v1493, %v1661
  %1663 = vmatmul.bf16.gmra.mxu0 %v1076
  %v1664 = vpop.f32.mrf.mxu0
  %v1665 = vadd.f32 %v1496, %v1664
  %v1666 = vpop.f32.mrf.mxu0
  %v1667 = vadd.f32 %v1498, %v1666
  %1668 = vmatmul.bf16.gmra.mxu0 %v1079
  %v1669 = vpop.f32.mrf.mxu0
  %v1670 = vadd.f32 %v1501, %v1669
  %v1671 = vpop.f32.mrf.mxu0
  %v1672 = vadd.f32 %v1503, %v1671
  %1673 = vmatmul.bf16.gmra.mxu0 %v1082
  %v1674 = vpop.f32.mrf.mxu0
  %v1675 = vadd.f32 %v1506, %v1674
  %v1676 = vpop.f32.mrf.mxu0
  %v1677 = vadd.f32 %v1508, %v1676
  %1678 = vmatmul.bf16.gmra.mxu0 %v1085
  %v1679 = vpop.f32.mrf.mxu0
  %v1680 = vadd.f32 %v1511, %v1679
  %v1681 = vpop.f32.mrf.mxu0
  %v1682 = vadd.f32 %v1513, %v1681
  %1683 = vmatmul.bf16.gmra.mxu0 %v1088
  %v1684 = vpop.f32.mrf.mxu0
  %v1685 = vadd.f32 %v1516, %v1684
  %v1686 = vpop.f32.mrf.mxu0
  %v1687 = vadd.f32 %v1518, %v1686
  %1688 = vmatmul.bf16.gmra.mxu0 %v1091
  %v1689 = vpop.f32.mrf.mxu0
  %v1690 = vadd.f32 %v1521, %v1689
  %v1691 = vpop.f32.mrf.mxu0
  %v1692 = vadd.f32 %v1523, %v1691
  %1693 = vmatmul.bf16.gmra.mxu0 %v1094
  %v1694 = vpop.f32.mrf.mxu0
  %v1695 = vadd.f32 %v1526, %v1694
  %v1696 = vpop.f32.mrf.mxu0
  %v1697 = vadd.f32 %v1528, %v1696
  %1698 = vmatmul.bf16.gmra.mxu0 %v1097
  %v1699 = vpop.f32.mrf.mxu0
  %v1700 = vadd.f32 %v1531, %v1699
  %v1701 = vpop.f32.mrf.mxu0
  %v1702 = vadd.f32 %v1533, %v1701
  %1703 = vmatmul.bf16.gmra.mxu0 %v1100
  %v1704 = vpop.f32.mrf.mxu0
  %v1705 = vadd.f32 %v1536, %v1704
  %v1706 = vpop.f32.mrf.mxu0
  %v1707 = vadd.f32 %v1538, %v1706
  %1708 = vdwg.mxu0
  %1709 = vmatpush.bf16.msra.mxu0 0
  %1710 = vmatpush.bf16.msra.mxu0 0
  %1711 = vmatpush.bf16.msra.mxu0 0
  %1712 = vmatpush.bf16.msra.mxu0 0
  %1713 = vmatpush.bf16.msra.mxu0 0
  %1714 = vmatpush.bf16.msra.mxu0 0
  %1715 = vmatpush.bf16.msra.mxu0 %v1255
  %1716 = vmatpush.bf16.msra.mxu0 %v1254
  %1717 = vmatmul.bf16.gmra.mxu0 %v1276
  %v1718 = vpop.f32.mrf.mxu0
  %v1719 = vadd.f32 %v1550, %v1718
  %v1720 = vpop.f32.mrf.mxu0
  %v1721 = vadd.f32 %v1552, %v1720
  %1722 = vmatmul.bf16.gmra.mxu0 %v1279
  %v1723 = vpop.f32.mrf.mxu0
  %v1724 = vadd.f32 %v1555, %v1723
  %v1725 = vpop.f32.mrf.mxu0
  %v1726 = vadd.f32 %v1557, %v1725
  %1727 = vmatmul.bf16.gmra.mxu0 %v1282
  %v1728 = vpop.f32.mrf.mxu0
  %v1729 = vadd.f32 %v1560, %v1728
  %v1730 = vpop.f32.mrf.mxu0
  %v1731 = vadd.f32 %v1562, %v1730
  %1732 = vmatmul.bf16.gmra.mxu0 %v1285
  %v1733 = vpop.f32.mrf.mxu0
  %v1734 = vadd.f32 %v1565, %v1733
  %v1735 = vpop.f32.mrf.mxu0
  %v1736 = vadd.f32 %v1567, %v1735
  %1737 = vmatmul.bf16.gmra.mxu0 %v1288
  %v1738 = vpop.f32.mrf.mxu0
  %v1739 = vadd.f32 %v1570, %v1738
  %v1740 = vpop.f32.mrf.mxu0
  %v1741 = vadd.f32 %v1572, %v1740
  %1742 = vmatmul.bf16.gmra.mxu0 %v1291
  %v1743 = vpop.f32.mrf.mxu0
  %v1744 = vadd.f32 %v1575, %v1743
  %v1745 = vpop.f32.mrf.mxu0
  %v1746 = vadd.f32 %v1577, %v1745
  %1747 = vmatmul.bf16.gmra.mxu0 %v1294
  %v1748 = vpop.f32.mrf.mxu0
  %v1749 = vadd.f32 %v1580, %v1748
  %v1750 = vpop.f32.mrf.mxu0
  %v1751 = vadd.f32 %v1582, %v1750
  %1752 = vmatmul.bf16.gmra.mxu0 %v1297
  %v1753 = vpop.f32.mrf.mxu0
  %v1754 = vadd.f32 %v1585, %v1753
  %v1755 = vpop.f32.mrf.mxu0
  %v1756 = vadd.f32 %v1587, %v1755
  %1757 = vmatmul.bf16.gmra.mxu0 %v1300
  %v1758 = vpop.f32.mrf.mxu0
  %v1759 = vadd.f32 %v1590, %v1758
  %v1760 = vpop.f32.mrf.mxu0
  %v1761 = vadd.f32 %v1592, %v1760
  %1762 = vmatmul.bf16.gmra.mxu0 %v1303
  %v1763 = vpop.f32.mrf.mxu0
  %v1764 = vadd.f32 %v1595, %v1763
  %v1765 = vpop.f32.mrf.mxu0
  %v1766 = vadd.f32 %v1597, %v1765
  %1767 = vmatmul.bf16.gmra.mxu0 %v1306
  %v1768 = vpop.f32.mrf.mxu0
  %v1769 = vadd.f32 %v1600, %v1768
  %v1770 = vpop.f32.mrf.mxu0
  %v1771 = vadd.f32 %v1602, %v1770
  %1772 = vmatmul.bf16.gmra.mxu0 %v1309
  %v1773 = vpop.f32.mrf.mxu0
  %v1774 = vadd.f32 %v1605, %v1773
  %v1775 = vpop.f32.mrf.mxu0
  %v1776 = vadd.f32 %v1607, %v1775
  %1777 = vmatmul.bf16.gmra.mxu0 %v1312
  %v1778 = vpop.f32.mrf.mxu0
  %v1779 = vadd.f32 %v1610, %v1778
  %v1780 = vpop.f32.mrf.mxu0
  %v1781 = vadd.f32 %v1612, %v1780
  %1782 = vmatmul.bf16.gmra.mxu0 %v1315
  %v1783 = vpop.f32.mrf.mxu0
  %v1784 = vadd.f32 %v1615, %v1783
  %v1785 = vpop.f32.mrf.mxu0
  %v1786 = vadd.f32 %v1617, %v1785
  %1787 = vmatmul.bf16.gmra.mxu0 %v1318
  %v1788 = vpop.f32.mrf.mxu0
  %v1789 = vadd.f32 %v1620, %v1788
  %v1790 = vpop.f32.mrf.mxu0
  %v1791 = vadd.f32 %v1622, %v1790
  %1792 = vmatmul.bf16.gmra.mxu0 %v1321
  %v1793 = vpop.f32.mrf.mxu0
  %v1794 = vadd.f32 %v1625, %v1793
  %v1795 = vpop.f32.mrf.mxu0
  %v1796 = vadd.f32 %v1627, %v1795
  %1797 = vmatmul.bf16.gmra.mxu0 %v1324
  %v1798 = vpop.f32.mrf.mxu0
  %v1799 = vadd.f32 %v1630, %v1798
  %v1800 = vpop.f32.mrf.mxu0
  %v1801 = vadd.f32 %v1632, %v1800
  %1802 = vmatmul.bf16.gmra.mxu0 %v1327
  %v1803 = vpop.f32.mrf.mxu0
  %v1804 = vadd.f32 %v1635, %v1803
  %v1805 = vpop.f32.mrf.mxu0
  %v1806 = vadd.f32 %v1637, %v1805
  %1807 = vmatmul.bf16.gmra.mxu0 %v1330
  %v1808 = vpop.f32.mrf.mxu0
  %v1809 = vadd.f32 %v1640, %v1808
  %v1810 = vpop.f32.mrf.mxu0
  %v1811 = vadd.f32 %v1642, %v1810
  %1812 = vmatmul.bf16.gmra.mxu0 %v1333
  %v1813 = vpop.f32.mrf.mxu0
  %v1814 = vadd.f32 %v1645, %v1813
  %v1815 = vpop.f32.mrf.mxu0
  %v1816 = vadd.f32 %v1647, %v1815
  %1817 = vmatmul.bf16.gmra.mxu0 %v1336
  %v1818 = vpop.f32.mrf.mxu0
  %v1819 = vadd.f32 %v1650, %v1818
  %v1820 = vpop.f32.mrf.mxu0
  %v1821 = vadd.f32 %v1652, %v1820
  %1822 = vmatmul.bf16.gmra.mxu0 %v1339
  %v1823 = vpop.f32.mrf.mxu0
  %v1824 = vadd.f32 %v1655, %v1823
  %v1825 = vpop.f32.mrf.mxu0
  %v1826 = vadd.f32 %v1657, %v1825
  %1827 = vmatmul.bf16.gmra.mxu0 %v1342
  %v1828 = vpop.f32.mrf.mxu0
  %v1829 = vadd.f32 %v1660, %v1828
  %v1830 = vpop.f32.mrf.mxu0
  %v1831 = vadd.f32 %v1662, %v1830
  %1832 = vmatmul.bf16.gmra.mxu0 %v1345
  %v1833 = vpop.f32.mrf.mxu0
  %v1834 = vadd.f32 %v1665, %v1833
  %v1835 = vpop.f32.mrf.mxu0
  %v1836 = vadd.f32 %v1667, %v1835
  %1837 = vmatmul.bf16.gmra.mxu0 %v1348
  %v1838 = vpop.f32.mrf.mxu0
  %v1839 = vadd.f32 %v1670, %v1838
  %v1840 = vpop.f32.mrf.mxu0
  %v1841 = vadd.f32 %v1672, %v1840
  %1842 = vmatmul.bf16.gmra.mxu0 %v1351
  %v1843 = vpop.f32.mrf.mxu0
  %v1844 = vadd.f32 %v1675, %v1843
  %v1845 = vpop.f32.mrf.mxu0
  %v1846 = vadd.f32 %v1677, %v1845
  %1847 = vmatmul.bf16.gmra.mxu0 %v1354
  %v1848 = vpop.f32.mrf.mxu0
  %v1849 = vadd.f32 %v1680, %v1848
  %v1850 = vpop.f32.mrf.mxu0
  %v1851 = vadd.f32 %v1682, %v1850
  %1852 = vmatmul.bf16.gmra.mxu0 %v1357
  %v1853 = vpop.f32.mrf.mxu0
  %v1854 = vadd.f32 %v1685, %v1853
  %v1855 = vpop.f32.mrf.mxu0
  %v1856 = vadd.f32 %v1687, %v1855
  %1857 = vmatmul.bf16.gmra.mxu0 %v1360
  %v1858 = vpop.f32.mrf.mxu0
  %v1859 = vadd.f32 %v1690, %v1858
  %v1860 = vpop.f32.mrf.mxu0
  %v1861 = vadd.f32 %v1692, %v1860
  %1862 = vmatmul.bf16.gmra.mxu0 %v1363
  %v1863 = vpop.f32.mrf.mxu0
  %v1864 = vadd.f32 %v1695, %v1863
  %v1865 = vpop.f32.mrf.mxu0
  %v1866 = vadd.f32 %v1697, %v1865
  %1867 = vmatmul.bf16.gmra.mxu0 %v1366
  %v1868 = vpop.f32.mrf.mxu0
  %v1869 = vadd.f32 %v1700, %v1868
  %v1870 = vpop.f32.mrf.mxu0
  %v1871 = vadd.f32 %v1702, %v1870
  %1872 = vmatmul.bf16.gmra.mxu0 %v1369
  %v1873 = vpop.f32.mrf.mxu0
  %v1874 = vadd.f32 %v1705, %v1873
  %v1875 = vpop.f32.mrf.mxu0
  %v1876 = vadd.f32 %v1707, %v1875
  %1877 = vdwg.mxu0
  %v1878 = vld [vmem:[%s4] sm:$0x1]
  %v1880 = vperm.slane %v1878, 0
  %v1882 = vmul.f32 %v1719, %v1880
  %v1883 = vmul.f32 %v1721, %v1880
  %v1884 = vmul.f32 %v1724, %v1880
  %v1885 = vmul.f32 %v1726, %v1880
  %v1886 = vmul.f32 %v1729, %v1880
  %v1887 = vmul.f32 %v1731, %v1880
  %v1888 = vmul.f32 %v1734, %v1880
  %v1889 = vmul.f32 %v1736, %v1880
  %v1890 = vmul.f32 %v1739, %v1880
  %v1891 = vmul.f32 %v1741, %v1880
  %v1892 = vmul.f32 %v1744, %v1880
  %v1893 = vmul.f32 %v1746, %v1880
  %v1894 = vmul.f32 %v1749, %v1880
  %v1895 = vmul.f32 %v1751, %v1880
  %v1896 = vmul.f32 %v1754, %v1880
  %v1897 = vmul.f32 %v1756, %v1880
  %v1898 = vmul.f32 %v1759, %v1880
  %v1899 = vmul.f32 %v1761, %v1880
  %v1900 = vmul.f32 %v1764, %v1880
  %v1901 = vmul.f32 %v1766, %v1880
  %v1902 = vmul.f32 %v1769, %v1880
  %v1903 = vmul.f32 %v1771, %v1880
  %v1904 = vmul.f32 %v1774, %v1880
  %v1905 = vmul.f32 %v1776, %v1880
  %v1906 = vmul.f32 %v1779, %v1880
  %v1907 = vmul.f32 %v1781, %v1880
  %v1908 = vmul.f32 %v1784, %v1880
  %v1909 = vmul.f32 %v1786, %v1880
  %v1910 = vmul.f32 %v1789, %v1880
  %v1911 = vmul.f32 %v1791, %v1880
  %v1912 = vmul.f32 %v1794, %v1880
  %v1913 = vmul.f32 %v1796, %v1880
  %v1914 = vmul.f32 %v1799, %v1880
  %v1915 = vmul.f32 %v1801, %v1880
  %v1916 = vmul.f32 %v1804, %v1880
  %v1917 = vmul.f32 %v1806, %v1880
  %v1918 = vmul.f32 %v1809, %v1880
  %v1919 = vmul.f32 %v1811, %v1880
  %v1920 = vmul.f32 %v1814, %v1880
  %v1921 = vmul.f32 %v1816, %v1880
  %v1922 = vmul.f32 %v1819, %v1880
  %v1923 = vmul.f32 %v1821, %v1880
  %v1924 = vmul.f32 %v1824, %v1880
  %v1925 = vmul.f32 %v1826, %v1880
  %v1926 = vmul.f32 %v1829, %v1880
  %v1927 = vmul.f32 %v1831, %v1880
  %v1928 = vmul.f32 %v1834, %v1880
  %v1929 = vmul.f32 %v1836, %v1880
  %v1930 = vmul.f32 %v1839, %v1880
  %v1931 = vmul.f32 %v1841, %v1880
  %v1932 = vmul.f32 %v1844, %v1880
  %v1933 = vmul.f32 %v1846, %v1880
  %v1934 = vmul.f32 %v1849, %v1880
  %v1935 = vmul.f32 %v1851, %v1880
  %v1936 = vmul.f32 %v1854, %v1880
  %v1937 = vmul.f32 %v1856, %v1880
  %v1938 = vmul.f32 %v1859, %v1880
  %v1939 = vmul.f32 %v1861, %v1880
  %v1940 = vmul.f32 %v1864, %v1880
  %v1941 = vmul.f32 %v1866, %v1880
  %v1942 = vmul.f32 %v1869, %v1880
  %v1943 = vmul.f32 %v1871, %v1880
  %v1944 = vmul.f32 %v1874, %v1880
  %v1945 = vmul.f32 %v1876, %v1880
  %v1946 = vld [vmem:[%s5] sm:$0x1]
  %v1948 = vperm.slane %v1946, 0
  %v1950 = vadd.f32 %v1882, %v1948
  %v1951 = vadd.f32 %v1883, %v1948
  %v1952 = vadd.f32 %v1884, %v1948
  %v1953 = vadd.f32 %v1885, %v1948
  %v1954 = vadd.f32 %v1886, %v1948
  %v1955 = vadd.f32 %v1887, %v1948
  %v1956 = vadd.f32 %v1888, %v1948
  %v1957 = vadd.f32 %v1889, %v1948
  %v1958 = vadd.f32 %v1890, %v1948
  %v1959 = vadd.f32 %v1891, %v1948
  %v1960 = vadd.f32 %v1892, %v1948
  %v1961 = vadd.f32 %v1893, %v1948
  %v1962 = vadd.f32 %v1894, %v1948
  %v1963 = vadd.f32 %v1895, %v1948
  %v1964 = vadd.f32 %v1896, %v1948
  %v1965 = vadd.f32 %v1897, %v1948
  %v1966 = vadd.f32 %v1898, %v1948
  %v1967 = vadd.f32 %v1899, %v1948
  %v1968 = vadd.f32 %v1900, %v1948
  %v1969 = vadd.f32 %v1901, %v1948
  %v1970 = vadd.f32 %v1902, %v1948
  %v1971 = vadd.f32 %v1903, %v1948
  %v1972 = vadd.f32 %v1904, %v1948
  %v1973 = vadd.f32 %v1905, %v1948
  %v1974 = vadd.f32 %v1906, %v1948
  %v1975 = vadd.f32 %v1907, %v1948
  %v1976 = vadd.f32 %v1908, %v1948
  %v1977 = vadd.f32 %v1909, %v1948
  %v1978 = vadd.f32 %v1910, %v1948
  %v1979 = vadd.f32 %v1911, %v1948
  %v1980 = vadd.f32 %v1912, %v1948
  %v1981 = vadd.f32 %v1913, %v1948
  %v1982 = vadd.f32 %v1914, %v1948
  %v1983 = vadd.f32 %v1915, %v1948
  %v1984 = vadd.f32 %v1916, %v1948
  %v1985 = vadd.f32 %v1917, %v1948
  %v1986 = vadd.f32 %v1918, %v1948
  %v1987 = vadd.f32 %v1919, %v1948
  %v1988 = vadd.f32 %v1920, %v1948
  %v1989 = vadd.f32 %v1921, %v1948
  %v1990 = vadd.f32 %v1922, %v1948
  %v1991 = vadd.f32 %v1923, %v1948
  %v1992 = vadd.f32 %v1924, %v1948
  %v1993 = vadd.f32 %v1925, %v1948
  %v1994 = vadd.f32 %v1926, %v1948
  %v1995 = vadd.f32 %v1927, %v1948
  %v1996 = vadd.f32 %v1928, %v1948
  %v1997 = vadd.f32 %v1929, %v1948
  %v1998 = vadd.f32 %v1930, %v1948
  %v1999 = vadd.f32 %v1931, %v1948
  %v2000 = vadd.f32 %v1932, %v1948
  %v2001 = vadd.f32 %v1933, %v1948
  %v2002 = vadd.f32 %v1934, %v1948
  %v2003 = vadd.f32 %v1935, %v1948
  %v2004 = vadd.f32 %v1936, %v1948
  %v2005 = vadd.f32 %v1937, %v1948
  %v2006 = vadd.f32 %v1938, %v1948
  %v2007 = vadd.f32 %v1939, %v1948
  %v2008 = vadd.f32 %v1940, %v1948
  %v2009 = vadd.f32 %v1941, %v1948
  %v2010 = vadd.f32 %v1942, %v1948
  %v2011 = vadd.f32 %v1943, %v1948
  %v2012 = vadd.f32 %v1944, %v1948
  %v2013 = vadd.f32 %v1945, %v1948
  %vm2014 = vcmp.ge.f32.partialorder %v1950, 0.0
  %vm2015 = vcmp.ge.f32.partialorder %v1951, 0.0
  %vm2016 = vcmp.ge.f32.partialorder %v1952, 0.0
  %vm2017 = vcmp.ge.f32.partialorder %v1953, 0.0
  %vm2018 = vcmp.ge.f32.partialorder %v1954, 0.0
  %vm2019 = vcmp.ge.f32.partialorder %v1955, 0.0
  %vm2020 = vcmp.ge.f32.partialorder %v1956, 0.0
  %vm2021 = vcmp.ge.f32.partialorder %v1957, 0.0
  %vm2022 = vcmp.ge.f32.partialorder %v1958, 0.0
  %vm2023 = vcmp.ge.f32.partialorder %v1959, 0.0
  %vm2024 = vcmp.ge.f32.partialorder %v1960, 0.0
  %vm2025 = vcmp.ge.f32.partialorder %v1961, 0.0
  %vm2026 = vcmp.ge.f32.partialorder %v1962, 0.0
  %vm2027 = vcmp.ge.f32.partialorder %v1963, 0.0
  %vm2028 = vcmp.ge.f32.partialorder %v1964, 0.0
  %vm2029 = vcmp.ge.f32.partialorder %v1965, 0.0
  %vm2030 = vcmp.ge.f32.partialorder %v1966, 0.0
  %vm2031 = vcmp.ge.f32.partialorder %v1967, 0.0
  %vm2032 = vcmp.ge.f32.partialorder %v1968, 0.0
  %vm2033 = vcmp.ge.f32.partialorder %v1969, 0.0
  %vm2034 = vcmp.ge.f32.partialorder %v1970, 0.0
  %vm2035 = vcmp.ge.f32.partialorder %v1971, 0.0
  %vm2036 = vcmp.ge.f32.partialorder %v1972, 0.0
  %vm2037 = vcmp.ge.f32.partialorder %v1973, 0.0
  %vm2038 = vcmp.ge.f32.partialorder %v1974, 0.0
  %vm2039 = vcmp.ge.f32.partialorder %v1975, 0.0
  %vm2040 = vcmp.ge.f32.partialorder %v1976, 0.0
  %vm2041 = vcmp.ge.f32.partialorder %v1977, 0.0
  %vm2042 = vcmp.ge.f32.partialorder %v1978, 0.0
  %vm2043 = vcmp.ge.f32.partialorder %v1979, 0.0
  %vm2044 = vcmp.ge.f32.partialorder %v1980, 0.0
  %vm2045 = vcmp.ge.f32.partialorder %v1981, 0.0
  %vm2046 = vcmp.ge.f32.partialorder %v1982, 0.0
  %vm2047 = vcmp.ge.f32.partialorder %v1983, 0.0
  %vm2048 = vcmp.ge.f32.partialorder %v1984, 0.0
  %vm2049 = vcmp.ge.f32.partialorder %v1985, 0.0
  %vm2050 = vcmp.ge.f32.partialorder %v1986, 0.0
  %vm2051 = vcmp.ge.f32.partialorder %v1987, 0.0
  %vm2052 = vcmp.ge.f32.partialorder %v1988, 0.0
  %vm2053 = vcmp.ge.f32.partialorder %v1989, 0.0
  %vm2054 = vcmp.ge.f32.partialorder %v1990, 0.0
  %vm2055 = vcmp.ge.f32.partialorder %v1991, 0.0
  %vm2056 = vcmp.ge.f32.partialorder %v1992, 0.0
  %vm2057 = vcmp.ge.f32.partialorder %v1993, 0.0
  %vm2058 = vcmp.ge.f32.partialorder %v1994, 0.0
  %vm2059 = vcmp.ge.f32.partialorder %v1995, 0.0
  %vm2060 = vcmp.ge.f32.partialorder %v1996, 0.0
  %vm2061 = vcmp.ge.f32.partialorder %v1997, 0.0
  %vm2062 = vcmp.ge.f32.partialorder %v1998, 0.0
  %vm2063 = vcmp.ge.f32.partialorder %v1999, 0.0
  %vm2064 = vcmp.ge.f32.partialorder %v2000, 0.0
  %vm2065 = vcmp.ge.f32.partialorder %v2001, 0.0
  %vm2066 = vcmp.ge.f32.partialorder %v2002, 0.0
  %vm2067 = vcmp.ge.f32.partialorder %v2003, 0.0
  %vm2068 = vcmp.ge.f32.partialorder %v2004, 0.0
  %vm2069 = vcmp.ge.f32.partialorder %v2005, 0.0
  %vm2070 = vcmp.ge.f32.partialorder %v2006, 0.0
  %vm2071 = vcmp.ge.f32.partialorder %v2007, 0.0
  %vm2072 = vcmp.ge.f32.partialorder %v2008, 0.0
  %vm2073 = vcmp.ge.f32.partialorder %v2009, 0.0
  %vm2074 = vcmp.ge.f32.partialorder %v2010, 0.0
  %vm2075 = vcmp.ge.f32.partialorder %v2011, 0.0
  %vm2076 = vcmp.ge.f32.partialorder %v2012, 0.0
  %vm2077 = vcmp.ge.f32.partialorder %v2013, 0.0
  %v2078 = vmul.f32 %v1950, 0.0
  %v2079 = vmul.f32 %v1951, 0.0
  %v2080 = vmul.f32 %v1952, 0.0
  %v2081 = vmul.f32 %v1953, 0.0
  %v2082 = vmul.f32 %v1954, 0.0
  %v2083 = vmul.f32 %v1955, 0.0
  %v2084 = vmul.f32 %v1956, 0.0
  %v2085 = vmul.f32 %v1957, 0.0
  %v2086 = vmul.f32 %v1958, 0.0
  %v2087 = vmul.f32 %v1959, 0.0
  %v2088 = vmul.f32 %v1960, 0.0
  %v2089 = vmul.f32 %v1961, 0.0
  %v2090 = vmul.f32 %v1962, 0.0
  %v2091 = vmul.f32 %v1963, 0.0
  %v2092 = vmul.f32 %v1964, 0.0
  %v2093 = vmul.f32 %v1965, 0.0
  %v2094 = vmul.f32 %v1966, 0.0
  %v2095 = vmul.f32 %v1967, 0.0
  %v2096 = vmul.f32 %v1968, 0.0
  %v2097 = vmul.f32 %v1969, 0.0
  %v2098 = vmul.f32 %v1970, 0.0
  %v2099 = vmul.f32 %v1971, 0.0
  %v2100 = vmul.f32 %v1972, 0.0
  %v2101 = vmul.f32 %v1973, 0.0
  %v2102 = vmul.f32 %v1974, 0.0
  %v2103 = vmul.f32 %v1975, 0.0
  %v2104 = vmul.f32 %v1976, 0.0
  %v2105 = vmul.f32 %v1977, 0.0
  %v2106 = vmul.f32 %v1978, 0.0
  %v2107 = vmul.f32 %v1979, 0.0
  %v2108 = vmul.f32 %v1980, 0.0
  %v2109 = vmul.f32 %v1981, 0.0
  %v2110 = vmul.f32 %v1982, 0.0
  %v2111 = vmul.f32 %v1983, 0.0
  %v2112 = vmul.f32 %v1984, 0.0
  %v2113 = vmul.f32 %v1985, 0.0
  %v2114 = vmul.f32 %v1986, 0.0
  %v2115 = vmul.f32 %v1987, 0.0
  %v2116 = vmul.f32 %v1988, 0.0
  %v2117 = vmul.f32 %v1989, 0.0
  %v2118 = vmul.f32 %v1990, 0.0
  %v2119 = vmul.f32 %v1991, 0.0
  %v2120 = vmul.f32 %v1992, 0.0
  %v2121 = vmul.f32 %v1993, 0.0
  %v2122 = vmul.f32 %v1994, 0.0
  %v2123 = vmul.f32 %v1995, 0.0
  %v2124 = vmul.f32 %v1996, 0.0
  %v2125 = vmul.f32 %v1997, 0.0
  %v2126 = vmul.f32 %v1998, 0.0
  %v2127 = vmul.f32 %v1999, 0.0
  %v2128 = vmul.f32 %v2000, 0.0
  %v2129 = vmul.f32 %v2001, 0.0
  %v2130 = vmul.f32 %v2002, 0.0
  %v2131 = vmul.f32 %v2003, 0.0
  %v2132 = vmul.f32 %v2004, 0.0
  %v2133 = vmul.f32 %v2005, 0.0
  %v2134 = vmul.f32 %v2006, 0.0
  %v2135 = vmul.f32 %v2007, 0.0
  %v2136 = vmul.f32 %v2008, 0.0
  %v2137 = vmul.f32 %v2009, 0.0
  %v2138 = vmul.f32 %v2010, 0.0
  %v2139 = vmul.f32 %v2011, 0.0
  %v2140 = vmul.f32 %v2012, 0.0
  %v2141 = vmul.f32 %v2013, 0.0
  %v2142 = vsel %vm2014, %v1950, %v2078
  %v2143 = vsel %vm2015, %v1951, %v2079
  %v2144 = vsel %vm2016, %v1952, %v2080
  %v2145 = vsel %vm2017, %v1953, %v2081
  %v2146 = vsel %vm2018, %v1954, %v2082
  %v2147 = vsel %vm2019, %v1955, %v2083
  %v2148 = vsel %vm2020, %v1956, %v2084
  %v2149 = vsel %vm2021, %v1957, %v2085
  %v2150 = vsel %vm2022, %v1958, %v2086
  %v2151 = vsel %vm2023, %v1959, %v2087
  %v2152 = vsel %vm2024, %v1960, %v2088
  %v2153 = vsel %vm2025, %v1961, %v2089
  %v2154 = vsel %vm2026, %v1962, %v2090
  %v2155 = vsel %vm2027, %v1963, %v2091
  %v2156 = vsel %vm2028, %v1964, %v2092
  %v2157 = vsel %vm2029, %v1965, %v2093
  %v2158 = vsel %vm2030, %v1966, %v2094
  %v2159 = vsel %vm2031, %v1967, %v2095
  %v2160 = vsel %vm2032, %v1968, %v2096
  %v2161 = vsel %vm2033, %v1969, %v2097
  %v2162 = vsel %vm2034, %v1970, %v2098
  %v2163 = vsel %vm2035, %v1971, %v2099
  %v2164 = vsel %vm2036, %v1972, %v2100
  %v2165 = vsel %vm2037, %v1973, %v2101
  %v2166 = vsel %vm2038, %v1974, %v2102
  %v2167 = vsel %vm2039, %v1975, %v2103
  %v2168 = vsel %vm2040, %v1976, %v2104
  %v2169 = vsel %vm2041, %v1977, %v2105
  %v2170 = vsel %vm2042, %v1978, %v2106
  %v2171 = vsel %vm2043, %v1979, %v2107
  %v2172 = vsel %vm2044, %v1980, %v2108
  %v2173 = vsel %vm2045, %v1981, %v2109
  %v2174 = vsel %vm2046, %v1982, %v2110
  %v2175 = vsel %vm2047, %v1983, %v2111
  %v2176 = vsel %vm2048, %v1984, %v2112
  %v2177 = vsel %vm2049, %v1985, %v2113
  %v2178 = vsel %vm2050, %v1986, %v2114
  %v2179 = vsel %vm2051, %v1987, %v2115
  %v2180 = vsel %vm2052, %v1988, %v2116
  %v2181 = vsel %vm2053, %v1989, %v2117
  %v2182 = vsel %vm2054, %v1990, %v2118
  %v2183 = vsel %vm2055, %v1991, %v2119
  %v2184 = vsel %vm2056, %v1992, %v2120
  %v2185 = vsel %vm2057, %v1993, %v2121
  %v2186 = vsel %vm2058, %v1994, %v2122
  %v2187 = vsel %vm2059, %v1995, %v2123
  %v2188 = vsel %vm2060, %v1996, %v2124
  %v2189 = vsel %vm2061, %v1997, %v2125
  %v2190 = vsel %vm2062, %v1998, %v2126
  %v2191 = vsel %vm2063, %v1999, %v2127
  %v2192 = vsel %vm2064, %v2000, %v2128
  %v2193 = vsel %vm2065, %v2001, %v2129
  %v2194 = vsel %vm2066, %v2002, %v2130
  %v2195 = vsel %vm2067, %v2003, %v2131
  %v2196 = vsel %vm2068, %v2004, %v2132
  %v2197 = vsel %vm2069, %v2005, %v2133
  %v2198 = vsel %vm2070, %v2006, %v2134
  %v2199 = vsel %vm2071, %v2007, %v2135
  %v2200 = vsel %vm2072, %v2008, %v2136
  %v2201 = vsel %vm2073, %v2009, %v2137
  %v2202 = vsel %vm2074, %v2010, %v2138
  %v2203 = vsel %vm2075, %v2011, %v2139
  %v2204 = vsel %vm2076, %v2012, %v2140
  %v2205 = vsel %vm2077, %v2013, %v2141
  %2206 = vst.msk [vmem:[%s6] sm:$0xff] %vm1274, %v2142
  %2207 = vst.msk [vmem:[%s6 + $0x8] sm:$0xff] %vm1274, %v2143
  %2208 = vst.msk [vmem:[%s6 + $0x10] sm:$0xff] %vm1274, %v2144
  %2209 = vst.msk [vmem:[%s6 + $0x18] sm:$0xff] %vm1274, %v2145
  %2210 = vst.msk [vmem:[%s6 + $0x20] sm:$0xff] %vm1274, %v2146
  %2211 = vst.msk [vmem:[%s6 + $0x28] sm:$0xff] %vm1274, %v2147
  %2212 = vst.msk [vmem:[%s6 + $0x30] sm:$0xff] %vm1274, %v2148
  %2213 = vst.msk [vmem:[%s6 + $0x38] sm:$0xff] %vm1274, %v2149
  %2214 = vst.msk [vmem:[%s6 + $0x40] sm:$0xff] %vm1274, %v2150
  %2215 = vst.msk [vmem:[%s6 + $0x48] sm:$0xff] %vm1274, %v2151
  %2216 = vst.msk [vmem:[%s6 + $0x50] sm:$0xff] %vm1274, %v2152
  %2217 = vst.msk [vmem:[%s6 + $0x58] sm:$0xff] %vm1274, %v2153
  %2218 = vst.msk [vmem:[%s6 + $0x60] sm:$0xff] %vm1274, %v2154
  %2219 = vst.msk [vmem:[%s6 + $0x68] sm:$0xff] %vm1274, %v2155
  %2220 = vst.msk [vmem:[%s6 + $0x70] sm:$0xff] %vm1274, %v2156
  %2221 = vst.msk [vmem:[%s6 + $0x78] sm:$0xff] %vm1274, %v2157
  %2222 = vst.msk [vmem:[%s6 + $0x80] sm:$0xff] %vm1274, %v2158
  %2223 = vst.msk [vmem:[%s6 + $0x88] sm:$0xff] %vm1274, %v2159
  %2224 = vst.msk [vmem:[%s6 + $0x90] sm:$0xff] %vm1274, %v2160
  %2225 = vst.msk [vmem:[%s6 + $0x98] sm:$0xff] %vm1274, %v2161
  %2226 = vst.msk [vmem:[%s6 + $0xa0] sm:$0xff] %vm1274, %v2162
  %2227 = vst.msk [vmem:[%s6 + $0xa8] sm:$0xff] %vm1274, %v2163
  %2228 = vst.msk [vmem:[%s6 + $0xb0] sm:$0xff] %vm1274, %v2164
  %2229 = vst.msk [vmem:[%s6 + $0xb8] sm:$0xff] %vm1274, %v2165
  %2230 = vst.msk [vmem:[%s6 + $0xc0] sm:$0xff] %vm1274, %v2166
  %2231 = vst.msk [vmem:[%s6 + $0xc8] sm:$0xff] %vm1274, %v2167
  %2232 = vst.msk [vmem:[%s6 + $0xd0] sm:$0xff] %vm1274, %v2168
  %2233 = vst.msk [vmem:[%s6 + $0xd8] sm:$0xff] %vm1274, %v2169
  %2234 = vst.msk [vmem:[%s6 + $0xe0] sm:$0xff] %vm1274, %v2170
  %2235 = vst.msk [vmem:[%s6 + $0xe8] sm:$0xff] %vm1274, %v2171
  %2236 = vst.msk [vmem:[%s6 + $0xf0] sm:$0xff] %vm1274, %v2172
  %2237 = vst.msk [vmem:[%s6 + $0xf8] sm:$0xff] %vm1274, %v2173
  %2238 = vst.msk [vmem:[%s6 + $0x100] sm:$0xff] %vm1274, %v2174
  %2239 = vst.msk [vmem:[%s6 + $0x108] sm:$0xff] %vm1274, %v2175
  %2240 = vst.msk [vmem:[%s6 + $0x110] sm:$0xff] %vm1274, %v2176
  %2241 = vst.msk [vmem:[%s6 + $0x118] sm:$0xff] %vm1274, %v2177
  %2242 = vst.msk [vmem:[%s6 + $0x120] sm:$0xff] %vm1274, %v2178
  %2243 = vst.msk [vmem:[%s6 + $0x128] sm:$0xff] %vm1274, %v2179
  %2244 = vst.msk [vmem:[%s6 + $0x130] sm:$0xff] %vm1274, %v2180
  %2245 = vst.msk [vmem:[%s6 + $0x138] sm:$0xff] %vm1274, %v2181
  %2246 = vst.msk [vmem:[%s6 + $0x140] sm:$0xff] %vm1274, %v2182
  %2247 = vst.msk [vmem:[%s6 + $0x148] sm:$0xff] %vm1274, %v2183
  %2248 = vst.msk [vmem:[%s6 + $0x150] sm:$0xff] %vm1274, %v2184
  %2249 = vst.msk [vmem:[%s6 + $0x158] sm:$0xff] %vm1274, %v2185
  %2250 = vst.msk [vmem:[%s6 + $0x160] sm:$0xff] %vm1274, %v2186
  %2251 = vst.msk [vmem:[%s6 + $0x168] sm:$0xff] %vm1274, %v2187
  %2252 = vst.msk [vmem:[%s6 + $0x170] sm:$0xff] %vm1274, %v2188
  %2253 = vst.msk [vmem:[%s6 + $0x178] sm:$0xff] %vm1274, %v2189
  %2254 = vst.msk [vmem:[%s6 + $0x180] sm:$0xff] %vm1274, %v2190
  %2255 = vst.msk [vmem:[%s6 + $0x188] sm:$0xff] %vm1274, %v2191
  %2256 = vst.msk [vmem:[%s6 + $0x190] sm:$0xff] %vm1274, %v2192
  %2257 = vst.msk [vmem:[%s6 + $0x198] sm:$0xff] %vm1274, %v2193
  %2258 = vst.msk [vmem:[%s6 + $0x1a0] sm:$0xff] %vm1274, %v2194
  %2259 = vst.msk [vmem:[%s6 + $0x1a8] sm:$0xff] %vm1274, %v2195
  %2260 = vst.msk [vmem:[%s6 + $0x1b0] sm:$0xff] %vm1274, %v2196
  %2261 = vst.msk [vmem:[%s6 + $0x1b8] sm:$0xff] %vm1274, %v2197
  %2262 = vst.msk [vmem:[%s6 + $0x1c0] sm:$0xff] %vm1274, %v2198
  %2263 = vst.msk [vmem:[%s6 + $0x1c8] sm:$0xff] %vm1274, %v2199
  %2264 = vst.msk [vmem:[%s6 + $0x1d0] sm:$0xff] %vm1274, %v2200
  %2265 = vst.msk [vmem:[%s6 + $0x1d8] sm:$0xff] %vm1274, %v2201
  %2266 = vst.msk [vmem:[%s6 + $0x1e0] sm:$0xff] %vm1274, %v2202
  %2267 = vst.msk [vmem:[%s6 + $0x1e8] sm:$0xff] %vm1274, %v2203
  %2268 = vst.msk [vmem:[%s6 + $0x1f0] sm:$0xff] %vm1274, %v2204
  %2269 = vst.msk [vmem:[%s6 + $0x1f8] sm:$0xff] %vm1274, %v2205
  // Predicated region
  $region26: #{wide_resnet_forward.12} parent=0 // pred_check
    _
  $region27: #{wide_resnet_forward.12} parent=0 // pred_check_branch
    %2271 = sbr.rel (0) target = $region29
  $region28: #{wide_resnet_forward.12} parent=0 // pred_region
    _
  $region29: #{wide_resnet_forward.12} parent=0 // pred_fallthru
    _
  // Predicated region
  $region30: #{wide_resnet_forward.12} parent=0 // pred_check
    _
  $region31: #{wide_resnet_forward.12} parent=0 // pred_check_branch
    %2273 = sbr.rel (0) target = $region33
  $region32: #{wide_resnet_forward.12} parent=0 // pred_region
    _
  $region33: #{wide_resnet_forward.12} parent=0 // pred_fallthru
    _

// kernel: wide_resnet_forward.14
$region0: #{wide_resnet_forward.14}
  #allocation0 [shape = 'u32[]', space=smem, size = 0x4, offset = 0x4, fixed_abs, tag = 'smem constant byte address 0x4 - core index']
  #allocation1 [shape = 'u32[72,128]{1,0:T(1,128)}', space=vmem, size = 0x9000, scoped, tag = 'internal scratch']
  %s0 = inlined_call_operand.vmem [shape: bf16[128,576], index: 0, kind: input, shape index: {}]
  %s1 = inlined_call_operand.vmem [shape: bf16[576,64], index: 1, kind: input, shape index: {}]
  %s2 = inlined_call_operand.vmem [shape: bf16[128,32], index: 2, kind: input, shape index: {}]
  %s3 = inlined_call_operand.vmem [shape: bf16[32,64], index: 3, kind: input, shape index: {}]
  %s4 = inlined_call_operand.vmem [shape: f32[1,64], index: 4, kind: input, shape index: {}]
  %s5 = inlined_call_operand.vmem [shape: f32[1,64], index: 5, kind: input, shape index: {}]
  %s6 = inlined_call_operand.vmem [shape: f32[128,64], index: 6, kind: output, shape index: {}]
  %s7 = sld [smem:[#allocation0]]
  $region34: #{wide_resnet_forward.14} parent=0
    _
  %s9 = ssub.s32 1, %s7
  %s10 = scalar_select 0, %s9, %s7
  // Predicated region
  $region2: #{wide_resnet_forward.14} parent=0 // pred_check
    _
  $region3: #{wide_resnet_forward.14} parent=0 // pred_check_branch
    %12 = sbr.rel (0) target = $region5
  $region4: #{wide_resnet_forward.14} parent=0 // pred_region
    _
  $region5: #{wide_resnet_forward.14} parent=0 // pred_fallthru
    _
  // Predicated region
  $region6: #{wide_resnet_forward.14} parent=0 // pred_check
    _
  $region7: #{wide_resnet_forward.14} parent=0 // pred_check_branch
    %14 = sbr.rel (0) target = $region9
  $region8: #{wide_resnet_forward.14} parent=0 // pred_region
    _
  $region9: #{wide_resnet_forward.14} parent=0 // pred_fallthru
    _
  // Predicated region
  $region10: #{wide_resnet_forward.14} parent=0 // pred_check
    _
  $region11: #{wide_resnet_forward.14} parent=0 // pred_check_branch
    %16 = sbr.rel (0) target = $region13
  $region12: #{wide_resnet_forward.14} parent=0 // pred_region
    _
  $region13: #{wide_resnet_forward.14} parent=0 // pred_fallthru
    _
  // Predicated region
  $region14: #{wide_resnet_forward.14} parent=0 // pred_check
    _
  $region15: #{wide_resnet_forward.14} parent=0 // pred_check_branch
    %18 = sbr.rel (0) target = $region17
  $region16: #{wide_resnet_forward.14} parent=0 // pred_region
    _
  $region17: #{wide_resnet_forward.14} parent=0 // pred_fallthru
    _
  // Predicated region
  $region18: #{wide_resnet_forward.14} parent=0 // pred_check
    _
  $region19: #{wide_resnet_forward.14} parent=0 // pred_check_branch
    %20 = sbr.rel (0) target = $region21
  $region20: #{wide_resnet_forward.14} parent=0 // pred_region
    _
  $region21: #{wide_resnet_forward.14} parent=0 // pred_fallthru
    _
  // Predicated region
  $region22: #{wide_resnet_forward.14} parent=0 // pred_check
    _
  $region23: #{wide_resnet_forward.14} parent=0 // pred_check_branch
    %22 = sbr.rel (0) target = $region25
  $region24: #{wide_resnet_forward.14} parent=0 // pred_region
    _
  $region25: #{wide_resnet_forward.14} parent=0 // pred_fallthru
    _
  %v24 = vld [vmem:[%s0] sm:$0xff]
  %v25 = vld [vmem:[%s0 + $0x8] sm:$0xff]
  %v26 = vld [vmem:[%s0 + $0x10] sm:$0xf]
  %v27 = vld [vmem:[%s0 + $0x14] sm:$0xff]
  %v28 = vld [vmem:[%s0 + $0x1c] sm:$0xff]
  %v29 = vld [vmem:[%s0 + $0x24] sm:$0xf]
  %v30 = vld [vmem:[%s0 + $0x28] sm:$0xff]
  %v31 = vld [vmem:[%s0 + $0x30] sm:$0xff]
  %v32 = vld [vmem:[%s0 + $0x38] sm:$0xf]
  %v33 = vld [vmem:[%s0 + $0x3c] sm:$0xff]
  %v34 = vld [vmem:[%s0 + $0x44] sm:$0xff]
  %v35 = vld [vmem:[%s0 + $0x4c] sm:$0xf]
  %v36 = vld [vmem:[%s0 + $0x50] sm:$0xff]
  %v37 = vld [vmem:[%s0 + $0x58] sm:$0xff]
  %v38 = vld [vmem:[%s0 + $0x60] sm:$0xf]
  %v39 = vld [vmem:[%s0 + $0x64] sm:$0xff]
  %v40 = vld [vmem:[%s0 + $0x6c] sm:$0xff]
  %v41 = vld [vmem:[%s0 + $0x74] sm:$0xf]
  %v42 = vld [vmem:[%s0 + $0x78] sm:$0xff]
  %v43 = vld [vmem:[%s0 + $0x80] sm:$0xff]
  %v44 = vld [vmem:[%s0 + $0x88] sm:$0xf]
  %v45 = vld [vmem:[%s0 + $0x8c] sm:$0xff]
  %v46 = vld [vmem:[%s0 + $0x94] sm:$0xff]
  %v47 = vld [vmem:[%s0 + $0x9c] sm:$0xf]
  %v48 = vld [vmem:[%s0 + $0xa0] sm:$0xff]
  %v49 = vld [vmem:[%s0 + $0xa8] sm:$0xff]
  %v50 = vld [vmem:[%s0 + $0xb0] sm:$0xf]
  %v51 = vld [vmem:[%s0 + $0xb4] sm:$0xff]
  %v52 = vld [vmem:[%s0 + $0xbc] sm:$0xff]
  %v53 = vld [vmem:[%s0 + $0xc4] sm:$0xf]
  %v54 = vld [vmem:[%s0 + $0xc8] sm:$0xff]
  %v55 = vld [vmem:[%s0 + $0xd0] sm:$0xff]
  %v56 = vld [vmem:[%s0 + $0xd8] sm:$0xf]
  %v57 = vld [vmem:[%s0 + $0xdc] sm:$0xff]
  %v58 = vld [vmem:[%s0 + $0xe4] sm:$0xff]
  %v59 = vld [vmem:[%s0 + $0xec] sm:$0xf]
  %v60 = vld [vmem:[%s0 + $0xf0] sm:$0xff]
  %v61 = vld [vmem:[%s0 + $0xf8] sm:$0xff]
  %v62 = vld [vmem:[%s0 + $0x100] sm:$0xf]
  %v63 = vld [vmem:[%s0 + $0x104] sm:$0xff]
  %v64 = vld [vmem:[%s0 + $0x10c] sm:$0xff]
  %v65 = vld [vmem:[%s0 + $0x114] sm:$0xf]
  %v66 = vld [vmem:[%s0 + $0x118] sm:$0xff]
  %v67 = vld [vmem:[%s0 + $0x120] sm:$0xff]
  %v68 = vld [vmem:[%s0 + $0x128] sm:$0xf]
  %v69 = vld [vmem:[%s0 + $0x12c] sm:$0xff]
  %v70 = vld [vmem:[%s0 + $0x134] sm:$0xff]
  %v71 = vld [vmem:[%s0 + $0x13c] sm:$0xf]
  %v72 = vld [vmem:[%s1] sm:$0xf]
  %v73 = vld [vmem:[%s1 + $0x4] sm:$0xf]
  %v74 = vld [vmem:[%s1 + $0x8] sm:$0xf]
  %v75 = vld [vmem:[%s1 + $0xc] sm:$0xf]
  %v76 = vld [vmem:[%s1 + $0x10] sm:$0xf]
  %v77 = vld [vmem:[%s1 + $0x14] sm:$0xf]
  %v78 = vld [vmem:[%s1 + $0x18] sm:$0xf]
  %v79 = vld [vmem:[%s1 + $0x1c] sm:$0xf]
  %v80 = vld [vmem:[%s1 + $0x20] sm:$0xf]
  %v81 = vld [vmem:[%s1 + $0x24] sm:$0xf]
  %v82 = vld [vmem:[%s1 + $0x28] sm:$0xf]
  %v83 = vld [vmem:[%s1 + $0x2c] sm:$0xf]
  %v84 = vld [vmem:[%s1 + $0x30] sm:$0xf]
  %v85 = vld [vmem:[%s1 + $0x34] sm:$0xf]
  %v86 = vld [vmem:[%s1 + $0x38] sm:$0xf]
  %v87 = vld [vmem:[%s1 + $0x3c] sm:$0xf]
  %v88 = vld [vmem:[%s1 + $0x40] sm:$0xf]
  %v89 = vld [vmem:[%s1 + $0x44] sm:$0xf]
  %v90 = vld [vmem:[%s1 + $0x48] sm:$0xf]
  %v91 = vld [vmem:[%s1 + $0x4c] sm:$0xf]
  %v92 = vld [vmem:[%s1 + $0x50] sm:$0xf]
  %v93 = vld [vmem:[%s1 + $0x54] sm:$0xf]
  %v94 = vld [vmem:[%s1 + $0x58] sm:$0xf]
  %v95 = vld [vmem:[%s1 + $0x5c] sm:$0xf]
  %v96 = vld [vmem:[%s1 + $0x60] sm:$0xf]
  %v97 = vld [vmem:[%s1 + $0x64] sm:$0xf]
  %v98 = vld [vmem:[%s1 + $0x68] sm:$0xf]
  %v99 = vld [vmem:[%s1 + $0x6c] sm:$0xf]
  %v100 = vld [vmem:[%s1 + $0x70] sm:$0xf]
  %v101 = vld [vmem:[%s1 + $0x74] sm:$0xf]
  %v102 = vld [vmem:[%s1 + $0x78] sm:$0xf]
  %v103 = vld [vmem:[%s1 + $0x7c] sm:$0xf]
  %v104 = vld [vmem:[%s1 + $0x80] sm:$0xf]
  %v105 = vld [vmem:[%s1 + $0x84] sm:$0xf]
  %v106 = vld [vmem:[%s1 + $0x88] sm:$0xf]
  %v107 = vld [vmem:[%s1 + $0x8c] sm:$0xf]
  %v108 = vld [vmem:[%s1 + $0x90] sm:$0xf]
  %v109 = vld [vmem:[%s1 + $0x94] sm:$0xf]
  %v110 = vld [vmem:[%s1 + $0x98] sm:$0xf]
  %v111 = vld [vmem:[%s1 + $0x9c] sm:$0xf]
  %v112 = vld [vmem:[%s1 + $0xa0] sm:$0xf]
  %v113 = vld [vmem:[%s1 + $0xa4] sm:$0xf]
  %v114 = vld [vmem:[%s1 + $0xa8] sm:$0xf]
  %v115 = vld [vmem:[%s1 + $0xac] sm:$0xf]
  %v116 = vld [vmem:[%s1 + $0xb0] sm:$0xf]
  %v117 = vld [vmem:[%s1 + $0xb4] sm:$0xf]
  %v118 = vld [vmem:[%s1 + $0xb8] sm:$0xf]
  %v119 = vld [vmem:[%s1 + $0xbc] sm:$0xf]
  %v120 = vld [vmem:[%s1 + $0xc0] sm:$0xf]
  %v121 = vld [vmem:[%s1 + $0xc4] sm:$0xf]
  %v122 = vld [vmem:[%s1 + $0xc8] sm:$0xf]
  %v123 = vld [vmem:[%s1 + $0xcc] sm:$0xf]
  %v124 = vld [vmem:[%s1 + $0xd0] sm:$0xf]
  %v125 = vld [vmem:[%s1 + $0xd4] sm:$0xf]
  %v126 = vld [vmem:[%s1 + $0xd8] sm:$0xf]
  %v127 = vld [vmem:[%s1 + $0xdc] sm:$0xf]
  %v128 = vld [vmem:[%s1 + $0xe0] sm:$0xf]
  %v129 = vld [vmem:[%s1 + $0xe4] sm:$0xf]
  %v130 = vld [vmem:[%s1 + $0xe8] sm:$0xf]
  %v131 = vld [vmem:[%s1 + $0xec] sm:$0xf]
  %v132 = vld [vmem:[%s1 + $0xf0] sm:$0xf]
  %v133 = vld [vmem:[%s1 + $0xf4] sm:$0xf]
  %v134 = vld [vmem:[%s1 + $0xf8] sm:$0xf]
  %v135 = vld [vmem:[%s1 + $0xfc] sm:$0xf]
  %v136 = vld [vmem:[%s1 + $0x100] sm:$0xf]
  %v137 = vld [vmem:[%s1 + $0x104] sm:$0xf]
  %v138 = vld [vmem:[%s1 + $0x108] sm:$0xf]
  %v139 = vld [vmem:[%s1 + $0x10c] sm:$0xf]
  %v140 = vld [vmem:[%s1 + $0x110] sm:$0xf]
  %v141 = vld [vmem:[%s1 + $0x114] sm:$0xf]
  %v142 = vld [vmem:[%s1 + $0x118] sm:$0xf]
  %v143 = vld [vmem:[%s1 + $0x11c] sm:$0xf]
  %v144 = vld [vmem:[%s2] sm:$0xf]
  %v145 = vld [vmem:[%s2 + $0x4] sm:$0xf]
  %v146 = vld [vmem:[%s2 + $0x8] sm:$0xf]
  %v147 = vld [vmem:[%s2 + $0xc] sm:$0xf]
  %v148 = vld [vmem:[%s2 + $0x10] sm:$0xf]
  %v149 = vld [vmem:[%s2 + $0x14] sm:$0xf]
  %v150 = vld [vmem:[%s2 + $0x18] sm:$0xf]
  %v151 = vld [vmem:[%s2 + $0x1c] sm:$0xf]
  %v152 = vld [vmem:[%s2 + $0x20] sm:$0xf]
  %v153 = vld [vmem:[%s2 + $0x24] sm:$0xf]
  %v154 = vld [vmem:[%s2 + $0x28] sm:$0xf]
  %v155 = vld [vmem:[%s2 + $0x2c] sm:$0xf]
  %v156 = vld [vmem:[%s2 + $0x30] sm:$0xf]
  %v157 = vld [vmem:[%s2 + $0x34] sm:$0xf]
  %v158 = vld [vmem:[%s2 + $0x38] sm:$0xf]
  %v159 = vld [vmem:[%s2 + $0x3c] sm:$0xf]
  %v160 = vld [vmem:[%s3] sm:$0xf]
  %v161 = vld [vmem:[%s3 + $0x4] sm:$0xf]
  %v162 = vld [vmem:[%s3 + $0x8] sm:$0xf]
  %v163 = vld [vmem:[%s3 + $0xc] sm:$0xf]
  %v180 = vunpack.c.l.b16 %v144
  %v181 = vunpack.c.l.b16 %v145
  %v182 = vunpack.c.l.b16 %v146
  %v183 = vunpack.c.l.b16 %v147
  %v184 = vunpack.c.l.b16 %v148
  %v185 = vunpack.c.l.b16 %v149
  %v186 = vunpack.c.l.b16 %v150
  %v187 = vunpack.c.l.b16 %v151
  %v188 = vunpack.c.l.b16 %v152
  %v189 = vunpack.c.l.b16 %v153
  %v190 = vunpack.c.l.b16 %v154
  %v191 = vunpack.c.l.b16 %v155
  %v192 = vunpack.c.l.b16 %v156
  %v193 = vunpack.c.l.b16 %v157
  %v194 = vunpack.c.l.b16 %v158
  %v195 = vunpack.c.l.b16 %v159
  %v196 = vpack.c.b16 %v181, %v180
  %v197 = vpack.c.b16 %v183, %v182
  %v198 = vpack.c.b16 %v185, %v184
  %v199 = vpack.c.b16 %v187, %v186
  %v200 = vpack.c.b16 %v189, %v188
  %v201 = vpack.c.b16 %v191, %v190
  %v202 = vpack.c.b16 %v193, %v192
  %v203 = vpack.c.b16 %v195, %v194
  %v208 = vunpack.c.l.b16 %v160
  %v209 = vunpack.c.l.b16 %v161
  %v210 = vunpack.c.l.b16 %v162
  %v211 = vunpack.c.l.b16 %v163
  %v212 = vpack.c.b16 %v209, %v208
  %v213 = vpack.c.b16 %v211, %v210
  %vm216 = vcmask 261120
  %v218 = vsel %vm216, %v196, 0
  %v221 = vsel %vm216, %v197, 0
  %v224 = vsel %vm216, %v198, 0
  %v227 = vsel %vm216, %v199, 0
  %v230 = vsel %vm216, %v200, 0
  %v233 = vsel %vm216, %v201, 0
  %v236 = vsel %vm216, %v202, 0
  %v239 = vsel %vm216, %v203, 0
  %241 = vmatpush.bf16.msra.mxu0 0
  %242 = vmatpush.bf16.msra.mxu0 0
  %243 = vmatpush.bf16.msra.mxu0 0
  %244 = vmatpush.bf16.msra.mxu0 0
  %245 = vmatpush.bf16.msra.mxu0 0
  %246 = vmatpush.bf16.msra.mxu0 0
  %247 = vmatpush.bf16.msra.mxu0 %v213
  %248 = vmatpush.bf16.msra.mxu0 %v212
  %249 = vmatmul.bf16.gmra.mxu0 %v218
  %v250 = vpop.f32.mrf.mxu0
  %v251 = vadd.f32 0.0, %v250
  %v252 = vpop.f32.mrf.mxu0
  %v253 = vadd.f32 0.0, %v252
  %254 = vmatmul.bf16.gmra.mxu0 %v221
  %v255 = vpop.f32.mrf.mxu0
  %v256 = vadd.f32 0.0, %v255
  %v257 = vpop.f32.mrf.mxu0
  %v258 = vadd.f32 0.0, %v257
  %259 = vmatmul.bf16.gmra.mxu0 %v224
  %v260 = vpop.f32.mrf.mxu0
  %v261 = vadd.f32 0.0, %v260
  %v262 = vpop.f32.mrf.mxu0
  %v263 = vadd.f32 0.0, %v262
  %264 = vmatmul.bf16.gmra.mxu0 %v227
  %v265 = vpop.f32.mrf.mxu0
  %v266 = vadd.f32 0.0, %v265
  %v267 = vpop.f32.mrf.mxu0
  %v268 = vadd.f32 0.0, %v267
  %269 = vmatmul.bf16.gmra.mxu0 %v230
  %v270 = vpop.f32.mrf.mxu0
  %v271 = vadd.f32 0.0, %v270
  %v272 = vpop.f32.mrf.mxu0
  %v273 = vadd.f32 0.0, %v272
  %274 = vmatmul.bf16.gmra.mxu0 %v233
  %v275 = vpop.f32.mrf.mxu0
  %v276 = vadd.f32 0.0, %v275
  %v277 = vpop.f32.mrf.mxu0
  %v278 = vadd.f32 0.0, %v277
  %279 = vmatmul.bf16.gmra.mxu0 %v236
  %v280 = vpop.f32.mrf.mxu0
  %v281 = vadd.f32 0.0, %v280
  %v282 = vpop.f32.mrf.mxu0
  %v283 = vadd.f32 0.0, %v282
  %284 = vmatmul.bf16.gmra.mxu0 %v239
  %v285 = vpop.f32.mrf.mxu0
  %v286 = vadd.f32 0.0, %v285
  %v287 = vpop.f32.mrf.mxu0
  %v288 = vadd.f32 0.0, %v287
  %289 = vdwg.mxu0
  %v338 = vunpack.c.l.b16 %v24
  %v339 = vunpack.c.h.b16 %v24
  %v340 = vunpack.c.l.b16 %v25
  %v341 = vunpack.c.h.b16 %v25
  %v342 = vunpack.c.l.b16 %v26
  %v343 = vunpack.c.l.b16 %v27
  %v344 = vunpack.c.h.b16 %v27
  %v345 = vunpack.c.l.b16 %v28
  %v346 = vunpack.c.h.b16 %v28
  %v347 = vunpack.c.l.b16 %v29
  %v348 = vunpack.c.l.b16 %v30
  %v349 = vunpack.c.h.b16 %v30
  %v350 = vunpack.c.l.b16 %v31
  %v351 = vunpack.c.h.b16 %v31
  %v352 = vunpack.c.l.b16 %v32
  %v353 = vunpack.c.l.b16 %v33
  %v354 = vunpack.c.h.b16 %v33
  %v355 = vunpack.c.l.b16 %v34
  %v356 = vunpack.c.h.b16 %v34
  %v357 = vunpack.c.l.b16 %v35
  %v358 = vunpack.c.l.b16 %v36
  %v359 = vunpack.c.h.b16 %v36
  %v360 = vunpack.c.l.b16 %v37
  %v361 = vunpack.c.h.b16 %v37
  %v362 = vunpack.c.l.b16 %v38
  %v363 = vunpack.c.l.b16 %v39
  %v364 = vunpack.c.h.b16 %v39
  %v365 = vunpack.c.l.b16 %v40
  %v366 = vunpack.c.h.b16 %v40
  %v367 = vunpack.c.l.b16 %v41
  %v368 = vunpack.c.l.b16 %v42
  %v369 = vunpack.c.h.b16 %v42
  %v370 = vunpack.c.l.b16 %v43
  %v371 = vunpack.c.h.b16 %v43
  %v372 = vunpack.c.l.b16 %v44
  %v373 = vunpack.c.l.b16 %v45
  %v374 = vunpack.c.h.b16 %v45
  %v375 = vunpack.c.l.b16 %v46
  %v376 = vunpack.c.h.b16 %v46
  %v377 = vunpack.c.l.b16 %v47
  %v378 = vunpack.c.l.b16 %v48
  %v379 = vunpack.c.h.b16 %v48
  %v380 = vunpack.c.l.b16 %v49
  %v381 = vunpack.c.h.b16 %v49
  %v382 = vunpack.c.l.b16 %v50
  %v383 = vunpack.c.l.b16 %v51
  %v384 = vunpack.c.h.b16 %v51
  %v385 = vunpack.c.l.b16 %v52
  %v386 = vunpack.c.h.b16 %v52
  %v387 = vunpack.c.l.b16 %v53
  %v388 = vunpack.c.l.b16 %v54
  %v389 = vunpack.c.h.b16 %v54
  %v390 = vunpack.c.l.b16 %v55
  %v391 = vunpack.c.h.b16 %v55
  %v392 = vunpack.c.l.b16 %v56
  %v393 = vunpack.c.l.b16 %v57
  %v394 = vunpack.c.h.b16 %v57
  %v395 = vunpack.c.l.b16 %v58
  %v396 = vunpack.c.h.b16 %v58
  %v397 = vunpack.c.l.b16 %v59
  %v398 = vunpack.c.l.b16 %v60
  %v399 = vunpack.c.h.b16 %v60
  %v400 = vunpack.c.l.b16 %v61
  %v401 = vunpack.c.h.b16 %v61
  %v402 = vunpack.c.l.b16 %v62
  %v403 = vunpack.c.l.b16 %v63
  %v404 = vunpack.c.h.b16 %v63
  %v405 = vunpack.c.l.b16 %v64
  %v406 = vunpack.c.h.b16 %v64
  %v407 = vunpack.c.l.b16 %v65
  %v408 = vunpack.c.l.b16 %v66
  %v409 = vunpack.c.h.b16 %v66
  %v410 = vunpack.c.l.b16 %v67
  %v411 = vunpack.c.h.b16 %v67
  %v412 = vunpack.c.l.b16 %v68
  %v413 = vunpack.c.l.b16 %v69
  %v414 = vunpack.c.h.b16 %v69
  %v415 = vunpack.c.l.b16 %v70
  %v416 = vunpack.c.h.b16 %v70
  %v417 = vunpack.c.l.b16 %v71
  %v418 = vpack.c.b16 %v343, %v338
  %v419 = vpack.c.b16 %v344, %v339
  %v420 = vpack.c.b16 %v345, %v340
  %v421 = vpack.c.b16 %v346, %v341
  %v422 = vpack.c.b16 %v347, %v342
  %v423 = vpack.c.b16 %v353, %v348
  %v424 = vpack.c.b16 %v354, %v349
  %v425 = vpack.c.b16 %v355, %v350
  %v426 = vpack.c.b16 %v356, %v351
  %v427 = vpack.c.b16 %v357, %v352
  %v428 = vpack.c.b16 %v363, %v358
  %v429 = vpack.c.b16 %v364, %v359
  %v430 = vpack.c.b16 %v365, %v360
  %v431 = vpack.c.b16 %v366, %v361
  %v432 = vpack.c.b16 %v367, %v362
  %v433 = vpack.c.b16 %v373, %v368
  %v434 = vpack.c.b16 %v374, %v369
  %v435 = vpack.c.b16 %v375, %v370
  %v436 = vpack.c.b16 %v376, %v371
  %v437 = vpack.c.b16 %v377, %v372
  %v438 = vpack.c.b16 %v383, %v378
  %v439 = vpack.c.b16 %v384, %v379
  %v440 = vpack.c.b16 %v385, %v380
  %v441 = vpack.c.b16 %v386, %v381
  %v442 = vpack.c.b16 %v387, %v382
  %v443 = vpack.c.b16 %v393, %v388
  %v444 = vpack.c.b16 %v394, %v389
  %v445 = vpack.c.b16 %v395, %v390
  %v446 = vpack.c.b16 %v396, %v391
  %v447 = vpack.c.b16 %v397, %v392
  %v448 = vpack.c.b16 %v403, %v398
  %v449 = vpack.c.b16 %v404, %v399
  %v450 = vpack.c.b16 %v405, %v400
  %v451 = vpack.c.b16 %v406, %v401
  %v452 = vpack.c.b16 %v407, %v402
  %v453 = vpack.c.b16 %v413, %v408
  %v454 = vpack.c.b16 %v414, %v409
  %v455 = vpack.c.b16 %v415, %v410
  %v456 = vpack.c.b16 %v416, %v411
  %v457 = vpack.c.b16 %v417, %v412
  %v562 = vunpack.c.l.b16 %v72
  %v563 = vunpack.c.l.b16 %v73
  %v564 = vunpack.c.l.b16 %v74
  %v565 = vunpack.c.l.b16 %v75
  %v566 = vunpack.c.l.b16 %v76
  %v567 = vunpack.c.l.b16 %v77
  %v568 = vunpack.c.l.b16 %v78
  %v569 = vunpack.c.l.b16 %v79
  %v570 = vunpack.c.l.b16 %v80
  %v571 = vunpack.c.l.b16 %v81
  %v572 = vunpack.c.l.b16 %v82
  %v573 = vunpack.c.l.b16 %v83
  %v574 = vunpack.c.l.b16 %v84
  %v575 = vunpack.c.l.b16 %v85
  %v576 = vunpack.c.l.b16 %v86
  %v577 = vunpack.c.l.b16 %v87
  %v578 = vunpack.c.l.b16 %v88
  %v579 = vunpack.c.l.b16 %v89
  %v580 = vunpack.c.l.b16 %v90
  %v581 = vunpack.c.l.b16 %v91
  %v582 = vunpack.c.l.b16 %v92
  %v583 = vunpack.c.l.b16 %v93
  %v584 = vunpack.c.l.b16 %v94
  %v585 = vunpack.c.l.b16 %v95
  %v586 = vunpack.c.l.b16 %v96
  %v587 = vunpack.c.l.b16 %v97
  %v588 = vunpack.c.l.b16 %v98
  %v589 = vunpack.c.l.b16 %v99
  %v590 = vunpack.c.l.b16 %v100
  %v591 = vunpack.c.l.b16 %v101
  %v592 = vunpack.c.l.b16 %v102
  %v593 = vunpack.c.l.b16 %v103
  %v594 = vunpack.c.l.b16 %v104
  %v595 = vunpack.c.l.b16 %v105
  %v596 = vunpack.c.l.b16 %v106
  %v597 = vunpack.c.l.b16 %v107
  %v598 = vunpack.c.l.b16 %v108
  %v599 = vunpack.c.l.b16 %v109
  %v600 = vunpack.c.l.b16 %v110
  %v601 = vunpack.c.l.b16 %v111
  %v602 = vunpack.c.l.b16 %v112
  %v603 = vunpack.c.l.b16 %v113
  %v604 = vunpack.c.l.b16 %v114
  %v605 = vunpack.c.l.b16 %v115
  %v606 = vunpack.c.l.b16 %v116
  %v607 = vunpack.c.l.b16 %v117
  %v608 = vunpack.c.l.b16 %v118
  %v609 = vunpack.c.l.b16 %v119
  %v610 = vunpack.c.l.b16 %v120
  %v611 = vunpack.c.l.b16 %v121
  %v612 = vunpack.c.l.b16 %v122
  %v613 = vunpack.c.l.b16 %v123
  %v614 = vunpack.c.l.b16 %v124
  %v615 = vunpack.c.l.b16 %v125
  %v616 = vunpack.c.l.b16 %v126
  %v617 = vunpack.c.l.b16 %v127
  %v618 = vunpack.c.l.b16 %v128
  %v619 = vunpack.c.l.b16 %v129
  %v620 = vunpack.c.l.b16 %v130
  %v621 = vunpack.c.l.b16 %v131
  %v622 = vunpack.c.l.b16 %v132
  %v623 = vunpack.c.l.b16 %v133
  %v624 = vunpack.c.l.b16 %v134
  %v625 = vunpack.c.l.b16 %v135
  %v626 = vunpack.c.l.b16 %v136
  %v627 = vunpack.c.l.b16 %v137
  %v628 = vunpack.c.l.b16 %v138
  %v629 = vunpack.c.l.b16 %v139
  %v630 = vunpack.c.l.b16 %v140
  %v631 = vunpack.c.l.b16 %v141
  %v632 = vunpack.c.l.b16 %v142
  %v633 = vunpack.c.l.b16 %v143
  %v634 = vpack.c.b16 %v563, %v562
  %v635 = vpack.c.b16 %v565, %v564
  %v636 = vpack.c.b16 %v567, %v566
  %v637 = vpack.c.b16 %v569, %v568
  %v638 = vpack.c.b16 %v571, %v570
  %v639 = vpack.c.b16 %v573, %v572
  %v640 = vpack.c.b16 %v575, %v574
  %v641 = vpack.c.b16 %v577, %v576
  %v642 = vpack.c.b16 %v579, %v578
  %v643 = vpack.c.b16 %v581, %v580
  %v644 = vpack.c.b16 %v583, %v582
  %v645 = vpack.c.b16 %v585, %v584
  %v646 = vpack.c.b16 %v587, %v586
  %v647 = vpack.c.b16 %v589, %v588
  %v648 = vpack.c.b16 %v591, %v590
  %v649 = vpack.c.b16 %v593, %v592
  %v650 = vpack.c.b16 %v595, %v594
  %v651 = vpack.c.b16 %v597, %v596
  %v652 = vpack.c.b16 %v599, %v598
  %v653 = vpack.c.b16 %v601, %v600
  %v654 = vpack.c.b16 %v603, %v602
  %v655 = vpack.c.b16 %v605, %v604
  %v656 = vpack.c.b16 %v607, %v606
  %v657 = vpack.c.b16 %v609, %v608
  %v658 = vpack.c.b16 %v611, %v610
  %v659 = vpack.c.b16 %v613, %v612
  %v660 = vpack.c.b16 %v615, %v614
  %v661 = vpack.c.b16 %v617, %v616
  %v662 = vpack.c.b16 %v619, %v618
  %v663 = vpack.c.b16 %v621, %v620
  %v664 = vpack.c.b16 %v623, %v622
  %v665 = vpack.c.b16 %v625, %v624
  %v666 = vpack.c.b16 %v627, %v626
  %v667 = vpack.c.b16 %v629, %v628
  %v668 = vpack.c.b16 %v631, %v630
  %v669 = vpack.c.b16 %v633, %v632
  %vm706 = vcmask 523264
  %v708 = vsel %vm706, %v422, 0
  %v711 = vsel %vm706, %v427, 0
  %v714 = vsel %vm706, %v432, 0
  %v717 = vsel %vm706, %v437, 0
  %v720 = vsel %vm706, %v442, 0
  %v723 = vsel %vm706, %v447, 0
  %v726 = vsel %vm706, %v452, 0
  %v729 = vsel %vm706, %v457, 0
  %731 = vmatpush.bf16.msra.mxu0 %v641
  %732 = vmatpush.bf16.msra.mxu0 %v640
  %733 = vmatpush.bf16.msra.mxu0 %v639
  %734 = vmatpush.bf16.msra.mxu0 %v638
  %735 = vmatpush.bf16.msra.mxu0 %v637
  %736 = vmatpush.bf16.msra.mxu0 %v636
  %737 = vmatpush.bf16.msra.mxu0 %v635
  %738 = vmatpush.bf16.msra.mxu0 %v634
  %739 = vmatmul.bf16.gmra.mxu0 %v418
  %v740 = vpop.f32.mrf.mxu0
  %v741 = vadd.f32 %v251, %v740
  %v742 = vpop.f32.mrf.mxu0
  %v743 = vadd.f32 %v253, %v742
  %744 = vmatmul.bf16.gmra.mxu0 %v423
  %v745 = vpop.f32.mrf.mxu0
  %v746 = vadd.f32 %v256, %v745
  %v747 = vpop.f32.mrf.mxu0
  %v748 = vadd.f32 %v258, %v747
  %749 = vmatmul.bf16.gmra.mxu0 %v428
  %v750 = vpop.f32.mrf.mxu0
  %v751 = vadd.f32 %v261, %v750
  %v752 = vpop.f32.mrf.mxu0
  %v753 = vadd.f32 %v263, %v752
  %754 = vmatmul.bf16.gmra.mxu0 %v433
  %v755 = vpop.f32.mrf.mxu0
  %v756 = vadd.f32 %v266, %v755
  %v757 = vpop.f32.mrf.mxu0
  %v758 = vadd.f32 %v268, %v757
  %759 = vmatmul.bf16.gmra.mxu0 %v438
  %v760 = vpop.f32.mrf.mxu0
  %v761 = vadd.f32 %v271, %v760
  %v762 = vpop.f32.mrf.mxu0
  %v763 = vadd.f32 %v273, %v762
  %764 = vmatmul.bf16.gmra.mxu0 %v443
  %v765 = vpop.f32.mrf.mxu0
  %v766 = vadd.f32 %v276, %v765
  %v767 = vpop.f32.mrf.mxu0
  %v768 = vadd.f32 %v278, %v767
  %769 = vmatmul.bf16.gmra.mxu0 %v448
  %v770 = vpop.f32.mrf.mxu0
  %v771 = vadd.f32 %v281, %v770
  %v772 = vpop.f32.mrf.mxu0
  %v773 = vadd.f32 %v283, %v772
  %774 = vmatmul.bf16.gmra.mxu0 %v453
  %v775 = vpop.f32.mrf.mxu0
  %v776 = vadd.f32 %v286, %v775
  %v777 = vpop.f32.mrf.mxu0
  %v778 = vadd.f32 %v288, %v777
  %779 = vdwg.mxu0
  %780 = vmatpush.bf16.msra.mxu0 %v649
  %781 = vmatpush.bf16.msra.mxu0 %v648
  %782 = vmatpush.bf16.msra.mxu0 %v647
  %783 = vmatpush.bf16.msra.mxu0 %v646
  %784 = vmatpush.bf16.msra.mxu0 %v645
  %785 = vmatpush.bf16.msra.mxu0 %v644
  %786 = vmatpush.bf16.msra.mxu0 %v643
  %787 = vmatpush.bf16.msra.mxu0 %v642
  %788 = vmatmul.bf16.gmra.mxu0 %v419
  %v789 = vpop.f32.mrf.mxu0
  %v790 = vadd.f32 %v741, %v789
  %v791 = vpop.f32.mrf.mxu0
  %v792 = vadd.f32 %v743, %v791
  %793 = vmatmul.bf16.gmra.mxu0 %v424
  %v794 = vpop.f32.mrf.mxu0
  %v795 = vadd.f32 %v746, %v794
  %v796 = vpop.f32.mrf.mxu0
  %v797 = vadd.f32 %v748, %v796
  %798 = vmatmul.bf16.gmra.mxu0 %v429
  %v799 = vpop.f32.mrf.mxu0
  %v800 = vadd.f32 %v751, %v799
  %v801 = vpop.f32.mrf.mxu0
  %v802 = vadd.f32 %v753, %v801
  %803 = vmatmul.bf16.gmra.mxu0 %v434
  %v804 = vpop.f32.mrf.mxu0
  %v805 = vadd.f32 %v756, %v804
  %v806 = vpop.f32.mrf.mxu0
  %v807 = vadd.f32 %v758, %v806
  %808 = vmatmul.bf16.gmra.mxu0 %v439
  %v809 = vpop.f32.mrf.mxu0
  %v810 = vadd.f32 %v761, %v809
  %v811 = vpop.f32.mrf.mxu0
  %v812 = vadd.f32 %v763, %v811
  %813 = vmatmul.bf16.gmra.mxu0 %v444
  %v814 = vpop.f32.mrf.mxu0
  %v815 = vadd.f32 %v766, %v814
  %v816 = vpop.f32.mrf.mxu0
  %v817 = vadd.f32 %v768, %v816
  %818 = vmatmul.bf16.gmra.mxu0 %v449
  %v819 = vpop.f32.mrf.mxu0
  %v820 = vadd.f32 %v771, %v819
  %v821 = vpop.f32.mrf.mxu0
  %v822 = vadd.f32 %v773, %v821
  %823 = vmatmul.bf16.gmra.mxu0 %v454
  %v824 = vpop.f32.mrf.mxu0
  %v825 = vadd.f32 %v776, %v824
  %v826 = vpop.f32.mrf.mxu0
  %v827 = vadd.f32 %v778, %v826
  %828 = vdwg.mxu0
  %829 = vmatpush.bf16.msra.mxu0 %v657
  %830 = vmatpush.bf16.msra.mxu0 %v656
  %831 = vmatpush.bf16.msra.mxu0 %v655
  %832 = vmatpush.bf16.msra.mxu0 %v654
  %833 = vmatpush.bf16.msra.mxu0 %v653
  %834 = vmatpush.bf16.msra.mxu0 %v652
  %835 = vmatpush.bf16.msra.mxu0 %v651
  %836 = vmatpush.bf16.msra.mxu0 %v650
  %837 = vmatmul.bf16.gmra.mxu0 %v420
  %v838 = vpop.f32.mrf.mxu0
  %v839 = vadd.f32 %v790, %v838
  %v840 = vpop.f32.mrf.mxu0
  %v841 = vadd.f32 %v792, %v840
  %842 = vmatmul.bf16.gmra.mxu0 %v425
  %v843 = vpop.f32.mrf.mxu0
  %v844 = vadd.f32 %v795, %v843
  %v845 = vpop.f32.mrf.mxu0
  %v846 = vadd.f32 %v797, %v845
  %847 = vmatmul.bf16.gmra.mxu0 %v430
  %v848 = vpop.f32.mrf.mxu0
  %v849 = vadd.f32 %v800, %v848
  %v850 = vpop.f32.mrf.mxu0
  %v851 = vadd.f32 %v802, %v850
  %852 = vmatmul.bf16.gmra.mxu0 %v435
  %v853 = vpop.f32.mrf.mxu0
  %v854 = vadd.f32 %v805, %v853
  %v855 = vpop.f32.mrf.mxu0
  %v856 = vadd.f32 %v807, %v855
  %857 = vmatmul.bf16.gmra.mxu0 %v440
  %v858 = vpop.f32.mrf.mxu0
  %v859 = vadd.f32 %v810, %v858
  %v860 = vpop.f32.mrf.mxu0
  %v861 = vadd.f32 %v812, %v860
  %862 = vmatmul.bf16.gmra.mxu0 %v445
  %v863 = vpop.f32.mrf.mxu0
  %v864 = vadd.f32 %v815, %v863
  %v865 = vpop.f32.mrf.mxu0
  %v866 = vadd.f32 %v817, %v865
  %867 = vmatmul.bf16.gmra.mxu0 %v450
  %v868 = vpop.f32.mrf.mxu0
  %v869 = vadd.f32 %v820, %v868
  %v870 = vpop.f32.mrf.mxu0
  %v871 = vadd.f32 %v822, %v870
  %872 = vmatmul.bf16.gmra.mxu0 %v455
  %v873 = vpop.f32.mrf.mxu0
  %v874 = vadd.f32 %v825, %v873
  %v875 = vpop.f32.mrf.mxu0
  %v876 = vadd.f32 %v827, %v875
  %877 = vdwg.mxu0
  %878 = vmatpush.bf16.msra.mxu0 %v665
  %879 = vmatpush.bf16.msra.mxu0 %v664
  %880 = vmatpush.bf16.msra.mxu0 %v663
  %881 = vmatpush.bf16.msra.mxu0 %v662
  %882 = vmatpush.bf16.msra.mxu0 %v661
  %883 = vmatpush.bf16.msra.mxu0 %v660
  %884 = vmatpush.bf16.msra.mxu0 %v659
  %885 = vmatpush.bf16.msra.mxu0 %v658
  %886 = vmatmul.bf16.gmra.mxu0 %v421
  %v887 = vpop.f32.mrf.mxu0
  %v888 = vadd.f32 %v839, %v887
  %v889 = vpop.f32.mrf.mxu0
  %v890 = vadd.f32 %v841, %v889
  %891 = vmatmul.bf16.gmra.mxu0 %v426
  %v892 = vpop.f32.mrf.mxu0
  %v893 = vadd.f32 %v844, %v892
  %v894 = vpop.f32.mrf.mxu0
  %v895 = vadd.f32 %v846, %v894
  %896 = vmatmul.bf16.gmra.mxu0 %v431
  %v897 = vpop.f32.mrf.mxu0
  %v898 = vadd.f32 %v849, %v897
  %v899 = vpop.f32.mrf.mxu0
  %v900 = vadd.f32 %v851, %v899
  %901 = vmatmul.bf16.gmra.mxu0 %v436
  %v902 = vpop.f32.mrf.mxu0
  %v903 = vadd.f32 %v854, %v902
  %v904 = vpop.f32.mrf.mxu0
  %v905 = vadd.f32 %v856, %v904
  %906 = vmatmul.bf16.gmra.mxu0 %v441
  %v907 = vpop.f32.mrf.mxu0
  %v908 = vadd.f32 %v859, %v907
  %v909 = vpop.f32.mrf.mxu0
  %v910 = vadd.f32 %v861, %v909
  %911 = vmatmul.bf16.gmra.mxu0 %v446
  %v912 = vpop.f32.mrf.mxu0
  %v913 = vadd.f32 %v864, %v912
  %v914 = vpop.f32.mrf.mxu0
  %v915 = vadd.f32 %v866, %v914
  %916 = vmatmul.bf16.gmra.mxu0 %v451
  %v917 = vpop.f32.mrf.mxu0
  %v918 = vadd.f32 %v869, %v917
  %v919 = vpop.f32.mrf.mxu0
  %v920 = vadd.f32 %v871, %v919
  %921 = vmatmul.bf16.gmra.mxu0 %v456
  %v922 = vpop.f32.mrf.mxu0
  %v923 = vadd.f32 %v874, %v922
  %v924 = vpop.f32.mrf.mxu0
  %v925 = vadd.f32 %v876, %v924
  %926 = vdwg.mxu0
  %927 = vmatpush.bf16.msra.mxu0 0
  %928 = vmatpush.bf16.msra.mxu0 0
  %929 = vmatpush.bf16.msra.mxu0 0
  %930 = vmatpush.bf16.msra.mxu0 0
  %931 = vmatpush.bf16.msra.mxu0 %v669
  %932 = vmatpush.bf16.msra.mxu0 %v668
  %933 = vmatpush.bf16.msra.mxu0 %v667
  %934 = vmatpush.bf16.msra.mxu0 %v666
  %935 = vmatmul.bf16.gmra.mxu0 %v708
  %v936 = vpop.f32.mrf.mxu0
  %v937 = vadd.f32 %v888, %v936
  %v938 = vpop.f32.mrf.mxu0
  %v939 = vadd.f32 %v890, %v938
  %940 = vmatmul.bf16.gmra.mxu0 %v711
  %v941 = vpop.f32.mrf.mxu0
  %v942 = vadd.f32 %v893, %v941
  %v943 = vpop.f32.mrf.mxu0
  %v944 = vadd.f32 %v895, %v943
  %945 = vmatmul.bf16.gmra.mxu0 %v714
  %v946 = vpop.f32.mrf.mxu0
  %v947 = vadd.f32 %v898, %v946
  %v948 = vpop.f32.mrf.mxu0
  %v949 = vadd.f32 %v900, %v948
  %950 = vmatmul.bf16.gmra.mxu0 %v717
  %v951 = vpop.f32.mrf.mxu0
  %v952 = vadd.f32 %v903, %v951
  %v953 = vpop.f32.mrf.mxu0
  %v954 = vadd.f32 %v905, %v953
  %955 = vmatmul.bf16.gmra.mxu0 %v720
  %v956 = vpop.f32.mrf.mxu0
  %v957 = vadd.f32 %v908, %v956
  %v958 = vpop.f32.mrf.mxu0
  %v959 = vadd.f32 %v910, %v958
  %960 = vmatmul.bf16.gmra.mxu0 %v723
  %v961 = vpop.f32.mrf.mxu0
  %v962 = vadd.f32 %v913, %v961
  %v963 = vpop.f32.mrf.mxu0
  %v964 = vadd.f32 %v915, %v963
  %965 = vmatmul.bf16.gmra.mxu0 %v726
  %v966 = vpop.f32.mrf.mxu0
  %v967 = vadd.f32 %v918, %v966
  %v968 = vpop.f32.mrf.mxu0
  %v969 = vadd.f32 %v920, %v968
  %970 = vmatmul.bf16.gmra.mxu0 %v729
  %v971 = vpop.f32.mrf.mxu0
  %v972 = vadd.f32 %v923, %v971
  %v973 = vpop.f32.mrf.mxu0
  %v974 = vadd.f32 %v925, %v973
  %975 = vdwg.mxu0
  %v976 = vld [vmem:[%s4] sm:$0x1]
  %v978 = vperm.slane %v976, 0
  %v980 = vmul.f32 %v937, %v978
  %v981 = vmul.f32 %v939, %v978
  %v982 = vmul.f32 %v942, %v978
  %v983 = vmul.f32 %v944, %v978
  %v984 = vmul.f32 %v947, %v978
  %v985 = vmul.f32 %v949, %v978
  %v986 = vmul.f32 %v952, %v978
  %v987 = vmul.f32 %v954, %v978
  %v988 = vmul.f32 %v957, %v978
  %v989 = vmul.f32 %v959, %v978
  %v990 = vmul.f32 %v962, %v978
  %v991 = vmul.f32 %v964, %v978
  %v992 = vmul.f32 %v967, %v978
  %v993 = vmul.f32 %v969, %v978
  %v994 = vmul.f32 %v972, %v978
  %v995 = vmul.f32 %v974, %v978
  %v996 = vld [vmem:[%s5] sm:$0x1]
  %v998 = vperm.slane %v996, 0
  %v1000 = vadd.f32 %v980, %v998
  %v1001 = vadd.f32 %v981, %v998
  %v1002 = vadd.f32 %v982, %v998
  %v1003 = vadd.f32 %v983, %v998
  %v1004 = vadd.f32 %v984, %v998
  %v1005 = vadd.f32 %v985, %v998
  %v1006 = vadd.f32 %v986, %v998
  %v1007 = vadd.f32 %v987, %v998
  %v1008 = vadd.f32 %v988, %v998
  %v1009 = vadd.f32 %v989, %v998
  %v1010 = vadd.f32 %v990, %v998
  %v1011 = vadd.f32 %v991, %v998
  %v1012 = vadd.f32 %v992, %v998
  %v1013 = vadd.f32 %v993, %v998
  %v1014 = vadd.f32 %v994, %v998
  %v1015 = vadd.f32 %v995, %v998
  %vm1016 = vcmp.ge.f32.partialorder %v1000, 0.0
  %vm1017 = vcmp.ge.f32.partialorder %v1001, 0.0
  %vm1018 = vcmp.ge.f32.partialorder %v1002, 0.0
  %vm1019 = vcmp.ge.f32.partialorder %v1003, 0.0
  %vm1020 = vcmp.ge.f32.partialorder %v1004, 0.0
  %vm1021 = vcmp.ge.f32.partialorder %v1005, 0.0
  %vm1022 = vcmp.ge.f32.partialorder %v1006, 0.0
  %vm1023 = vcmp.ge.f32.partialorder %v1007, 0.0
  %vm1024 = vcmp.ge.f32.partialorder %v1008, 0.0
  %vm1025 = vcmp.ge.f32.partialorder %v1009, 0.0
  %vm1026 = vcmp.ge.f32.partialorder %v1010, 0.0
  %vm1027 = vcmp.ge.f32.partialorder %v1011, 0.0
  %vm1028 = vcmp.ge.f32.partialorder %v1012, 0.0
  %vm1029 = vcmp.ge.f32.partialorder %v1013, 0.0
  %vm1030 = vcmp.ge.f32.partialorder %v1014, 0.0
  %vm1031 = vcmp.ge.f32.partialorder %v1015, 0.0
  %v1032 = vmul.f32 %v1000, 0.0
  %v1033 = vmul.f32 %v1001, 0.0
  %v1034 = vmul.f32 %v1002, 0.0
  %v1035 = vmul.f32 %v1003, 0.0
  %v1036 = vmul.f32 %v1004, 0.0
  %v1037 = vmul.f32 %v1005, 0.0
  %v1038 = vmul.f32 %v1006, 0.0
  %v1039 = vmul.f32 %v1007, 0.0
  %v1040 = vmul.f32 %v1008, 0.0
  %v1041 = vmul.f32 %v1009, 0.0
  %v1042 = vmul.f32 %v1010, 0.0
  %v1043 = vmul.f32 %v1011, 0.0
  %v1044 = vmul.f32 %v1012, 0.0
  %v1045 = vmul.f32 %v1013, 0.0
  %v1046 = vmul.f32 %v1014, 0.0
  %v1047 = vmul.f32 %v1015, 0.0
  %v1048 = vsel %vm1016, %v1000, %v1032
  %v1049 = vsel %vm1017, %v1001, %v1033
  %v1050 = vsel %vm1018, %v1002, %v1034
  %v1051 = vsel %vm1019, %v1003, %v1035
  %v1052 = vsel %vm1020, %v1004, %v1036
  %v1053 = vsel %vm1021, %v1005, %v1037
  %v1054 = vsel %vm1022, %v1006, %v1038
  %v1055 = vsel %vm1023, %v1007, %v1039
  %v1056 = vsel %vm1024, %v1008, %v1040
  %v1057 = vsel %vm1025, %v1009, %v1041
  %v1058 = vsel %vm1026, %v1010, %v1042
  %v1059 = vsel %vm1027, %v1011, %v1043
  %v1060 = vsel %vm1028, %v1012, %v1044
  %v1061 = vsel %vm1029, %v1013, %v1045
  %v1062 = vsel %vm1030, %v1014, %v1046
  %v1063 = vsel %vm1031, %v1015, %v1047
  %1064 = vst.msk [vmem:[%s6] sm:$0xff] %vm706, %v1048
  %1065 = vst.msk [vmem:[%s6 + $0x8] sm:$0xff] %vm706, %v1049
  %1066 = vst.msk [vmem:[%s6 + $0x10] sm:$0xff] %vm706, %v1050
  %1067 = vst.msk [vmem:[%s6 + $0x18] sm:$0xff] %vm706, %v1051
  %1068 = vst.msk [vmem:[%s6 + $0x20] sm:$0xff] %vm706, %v1052
  %1069 = vst.msk [vmem:[%s6 + $0x28] sm:$0xff] %vm706, %v1053
  %1070 = vst.msk [vmem:[%s6 + $0x30] sm:$0xff] %vm706, %v1054
  %1071 = vst.msk [vmem:[%s6 + $0x38] sm:$0xff] %vm706, %v1055
  %1072 = vst.msk [vmem:[%s6 + $0x40] sm:$0xff] %vm706, %v1056
  %1073 = vst.msk [vmem:[%s6 + $0x48] sm:$0xff] %vm706, %v1057
  %1074 = vst.msk [vmem:[%s6 + $0x50] sm:$0xff] %vm706, %v1058
  %1075 = vst.msk [vmem:[%s6 + $0x58] sm:$0xff] %vm706, %v1059
  %1076 = vst.msk [vmem:[%s6 + $0x60] sm:$0xff] %vm706, %v1060
  %1077 = vst.msk [vmem:[%s6 + $0x68] sm:$0xff] %vm706, %v1061
  %1078 = vst.msk [vmem:[%s6 + $0x70] sm:$0xff] %vm706, %v1062
  %1079 = vst.msk [vmem:[%s6 + $0x78] sm:$0xff] %vm706, %v1063
  // Predicated region
  $region26: #{wide_resnet_forward.14} parent=0 // pred_check
    _
  $region27: #{wide_resnet_forward.14} parent=0 // pred_check_branch
    %1081 = sbr.rel (0) target = $region29
  $region28: #{wide_resnet_forward.14} parent=0 // pred_region
    _
  $region29: #{wide_resnet_forward.14} parent=0 // pred_fallthru
    _
  // Predicated region
  $region30: #{wide_resnet_forward.14} parent=0 // pred_check
    _
  $region31: #{wide_resnet_forward.14} parent=0 // pred_check_branch
    %1083 = sbr.rel (0) target = $region33
  $region32: #{wide_resnet_forward.14} parent=0 // pred_region
    _
  $region33: #{wide_resnet_forward.14} parent=0 // pred_fallthru
    _

// kernel: wide_resnet_forward.15
$region0: #{wide_resnet_forward.15}
  #allocation0 [shape = 'u32[]', space=smem, size = 0x4, offset = 0x4, fixed_abs, tag = 'smem constant byte address 0x4 - core index']
  #allocation1 [shape = 'u32[72,128]{1,0:T(1,128)}', space=vmem, size = 0x9000, scoped, tag = 'internal scratch']
  %s0 = inlined_call_operand.smem [shape: u32[45], index: -1, kind: input, shape index: {}]
  %s1 = sld [smem:[%s0]]
  %s2 = scalar_lea.smem %s0, 1
  %s3 = sld [smem:[%s2]]
  %s4 = scalar_lea.smem %s0, 2
  %s5 = sld [smem:[%s4]]
  %s6 = scalar_lea.smem %s0, 3
  %s7 = sld [smem:[%s6]]
  %s8 = scalar_lea.smem %s0, 4
  %s9 = sld [smem:[%s8]]
  %s10 = scalar_lea.smem %s0, 5
  %s11 = sld [smem:[%s10]]
  %s12 = scalar_lea.smem %s0, 6
  %s13 = sld [smem:[%s12]]
  %s14 = scalar_lea.smem %s0, 7
  %s15 = sld [smem:[%s14]]
  %s16 = scalar_lea.smem %s0, 8
  %s17 = sld [smem:[%s16]]
  %s18 = scalar_lea.smem %s0, 9
  %s19 = sld [smem:[%s18]]
  %s20 = scalar_lea.smem %s0, 10
  %s21 = sld [smem:[%s20]]
  %s22 = scalar_lea.smem %s0, 11
  %s23 = sld [smem:[%s22]]
  %s24 = scalar_lea.smem %s0, 12
  %s25 = sld [smem:[%s24]]
  %s26 = scalar_lea.smem %s0, 13
  %s27 = sld [smem:[%s26]]
  %s28 = scalar_lea.smem %s0, 14
  %s29 = sld [smem:[%s28]]
  %s30 = scalar_lea.smem %s0, 15
  %s31 = sld [smem:[%s30]]
  %s32 = scalar_lea.smem %s0, 16
  %s33 = sld [smem:[%s32]]
  %s34 = scalar_lea.smem %s0, 17
  %s35 = sld [smem:[%s34]]
  %s36 = scalar_lea.smem %s0, 18
  %s37 = sld [smem:[%s36]]
  %s38 = scalar_lea.smem %s0, 19
  %s39 = sld [smem:[%s38]]
  %s40 = scalar_lea.smem %s0, 20
  %s41 = sld [smem:[%s40]]
  %s42 = scalar_lea.smem %s0, 21
  %s43 = sld [smem:[%s42]]
  %s44 = scalar_lea.smem %s0, 22
  %s45 = sld [smem:[%s44]]
  %s46 = scalar_lea.smem %s0, 23
  %s47 = sld [smem:[%s46]]
  %s48 = scalar_lea.smem %s0, 24
  %s49 = sld [smem:[%s48]]
  %s50 = scalar_lea.smem %s0, 25
  %s51 = sld [smem:[%s50]]
  %s52 = scalar_lea.smem %s0, 26
  %s53 = sld [smem:[%s52]]
  %s54 = scalar_lea.smem %s0, 27
  %s55 = sld [smem:[%s54]]
  %s56 = scalar_lea.smem %s0, 28
  %s57 = sld [smem:[%s56]]
  %s58 = scalar_lea.smem %s0, 29
  %s59 = sld [smem:[%s58]]
  %s60 = scalar_lea.smem %s0, 30
  %s61 = sld [smem:[%s60]]
  %s62 = scalar_lea.smem %s0, 31
  %s63 = sld [smem:[%s62]]
  %s64 = scalar_lea.smem %s0, 32
  %s65 = sld [smem:[%s64]]
  %s66 = scalar_lea.smem %s0, 33
  %s67 = sld [smem:[%s66]]
  %s68 = scalar_lea.smem %s0, 34
  %s69 = sld [smem:[%s68]]
  %s70 = scalar_lea.smem %s0, 35
  %s71 = sld [smem:[%s70]]
  %s72 = scalar_lea.smem %s0, 36
  %s73 = sld [smem:[%s72]]
  %s74 = scalar_lea.smem %s0, 37
  %s75 = sld [smem:[%s74]]
  %s76 = scalar_lea.smem %s0, 38
  %s77 = sld [smem:[%s76]]
  %s78 = scalar_lea.smem %s0, 39
  %s79 = sld [smem:[%s78]]
  %s80 = scalar_lea.smem %s0, 40
  %s81 = sld [smem:[%s80]]
  %s82 = scalar_lea.smem %s0, 41
  %s83 = sld [smem:[%s82]]
  %s84 = scalar_lea.smem %s0, 42
  %s85 = sld [smem:[%s84]]
  %s86 = scalar_lea.smem %s0, 43
  %s87 = sld [smem:[%s86]]
  %s88 = scalar_lea.smem %s0, 44
  %s89 = sld [smem:[%s88]]
  %s90 = sld [smem:[#allocation0]]
  $region242: #{wide_resnet_forward.15} parent=0
    _
  %s92 = ssub.s32 1, %s90
  %s93 = scalar_select 0, %s92, %s90
  $region1: #{wide_resnet_forward.15} parent=0
    #allocation2 [shape = 'u8[1024]{0}', space=vmem, size = 0x400, scoped, tag = 'input window, operand 2, single buffered']
    #allocation3 [shape = 's32[1]{0}', space=sflag, size = 0x4, scoped, tag = 'scoped memory for wide_resnet_forward.15']
    #allocation4 [shape = 's32[1]{0}', space=sflag, size = 0x4, scoped, tag = 'scoped memory for wide_resnet_forward.15']
    #allocation5 [shape = 'u8[4096]{0}', space=vmem, size = 0x1000, scoped, tag = 'input window, operand 5, single buffered']
    #allocation6 [shape = 's32[1]{0}', space=sflag, size = 0x4, scoped, tag = 'scoped memory for wide_resnet_forward.15']
    #allocation7 [shape = 'u8[512]{0}', space=vmem, size = 0x400, scoped, tag = 'input window, operand 6, single buffered']
    #allocation8 [shape = 'u8[8192]{0}', space=vmem, size = 0x2000, scoped, tag = 'input window, operand 9, single buffered']
    #allocation9 [shape = 's32[1]{0}', space=sflag, size = 0x4, scoped, tag = 'scoped memory for wide_resnet_forward.15']
    #allocation10 [shape = 'u8[512]{0}', space=vmem, size = 0x400, scoped, tag = 'input window, operand 10, single buffered']
    #allocation11 [shape = 'u8[8192]{0}', space=vmem, size = 0x2000, scoped, tag = 'input window, operand 13, single buffered']
    #allocation12 [shape = 's32[1]{0}', space=sflag, size = 0x4, scoped, tag = 'scoped memory for wide_resnet_forward.15']
    #allocation13 [shape = 'u8[512]{0}', space=vmem, size = 0x400, scoped, tag = 'input window, operand 14, single buffered']
    #allocation14 [shape = 'u8[512]{0}', space=vmem, size = 0x400, scoped, tag = 'input window, operand 21, single buffered']
    #allocation15 [shape = 's32[1]{0}', space=sflag, size = 0x4, scoped, tag = 'scoped memory for wide_resnet_forward.15']
    #allocation16 [shape = 'u8[8192]{0}', space=vmem, size = 0x2000, scoped, tag = 'input window, operand 24, single buffered']
    #allocation17 [shape = 'u8[512]{0}', space=vmem, size = 0x400, scoped, tag = 'input window, operand 25, single buffered']
    #allocation18 [shape = 's32[1]{0}', space=sflag, size = 0x4, scoped, tag = 'scoped memory for wide_resnet_forward.15']
    #allocation19 [shape = 'u8[512]{0}', space=vmem, size = 0x400, scoped, tag = 'input window, operand 35, single buffered']
    #allocation20 [shape = 'u8[8192]{0}', space=vmem, size = 0x2000, scoped, tag = 'input window, operand 38, single buffered']
    #allocation21 [shape = 's32[1]{0}', space=sflag, size = 0x4, scoped, tag = 'scoped memory for wide_resnet_forward.15']
    #allocation22 [shape = 'u8[512]{0}', space=vmem, size = 0x400, scoped, tag = 'input window, operand 39, single buffered']
    #allocation23 [shape = 'u8[512]{0}', space=vmem, size = 0x400, scoped, tag = 'input window, operand 43, single buffered']
    #allocation24 [shape = 's32[1]{0}', space=sflag, size = 0x4, scoped, tag = 'scoped memory for wide_resnet_forward.15']
    #allocation25 [shape = 'u8[1024]{0}', space=vmem, size = 0x400, scoped, tag = 'output window, operand 0, single buffered']
    %94 = vsyncpa [#allocation3], 0
    %95 = vsyncpa [#allocation6], 0
    %96 = vsyncpa [#allocation9], 0
    %97 = vsyncpa [#allocation12], 0
    %98 = vsyncpa [#allocation15], 0
    %99 = vsyncpa [#allocation18], 0
    %100 = vsyncpa [#allocation21], 0
    %101 = vsyncpa [#allocation24], 0
    %102 = vsyncpa [#allocation4], 0
    // Predicated region
    $region2: #{wide_resnet_forward.15} parent=1 // pred_check
      _
    $region3: #{wide_resnet_forward.15} parent=1 // pred_check_branch
      %104 = sbr.rel (0) target = $region5
    $region4: #{wide_resnet_forward.15} parent=1 // pred_region
      _
    $region5: #{wide_resnet_forward.15} parent=1 // pred_fallthru
      _
    // Predicated region
    $region6: #{wide_resnet_forward.15} parent=1 // pred_check
      _
    $region7: #{wide_resnet_forward.15} parent=1 // pred_check_branch
      %106 = sbr.rel (0) target = $region9
    $region8: #{wide_resnet_forward.15} parent=1 // pred_region
      _
    $region9: #{wide_resnet_forward.15} parent=1 // pred_fallthru
      _
    // Predicated region
    $region10: #{wide_resnet_forward.15} parent=1 // pred_check
      _
    $region11: #{wide_resnet_forward.15} parent=1 // pred_check_branch
      %108 = sbr.rel (0) target = $region13
    $region12: #{wide_resnet_forward.15} parent=1 // pred_region
      %110 = vsyncadd [#allocation3], 0
      %s112 = sshll.u32 %s5, 4
      %s113 = int_to_ptr.hbm [resolvable:$true] %s112
      %s114 = sshll.u32 [#allocation2], 4
      %s115 = int_to_ptr.vmem [resolvable:$true] %s114
      %117 = dma.hbm_to_vmem [thread:$0]  %s113, 32, %s115, [#allocation3]
    $region13: #{wide_resnet_forward.15} parent=1 // pred_fallthru
      _
    // Predicated region
    $region14: #{wide_resnet_forward.15} parent=1 // pred_check
      _
    $region15: #{wide_resnet_forward.15} parent=1 // pred_check_branch
      %119 = sbr.rel (0) target = $region17
    $region16: #{wide_resnet_forward.15} parent=1 // pred_region
      _
    $region17: #{wide_resnet_forward.15} parent=1 // pred_fallthru
      _
    // Predicated region
    $region18: #{wide_resnet_forward.15} parent=1 // pred_check
      _
    $region19: #{wide_resnet_forward.15} parent=1 // pred_check_branch
      %121 = sbr.rel (0) target = $region21
    $region20: #{wide_resnet_forward.15} parent=1 // pred_region
      _
    $region21: #{wide_resnet_forward.15} parent=1 // pred_fallthru
      _
    // Predicated region
    $region22: #{wide_resnet_forward.15} parent=1 // pred_check
      _
    $region23: #{wide_resnet_forward.15} parent=1 // pred_check_branch
      %123 = sbr.rel (0) target = $region25
    $region24: #{wide_resnet_forward.15} parent=1 // pred_region
      %125 = vsyncadd [#allocation6], 0
      %s127 = sshll.u32 %s11, 4
      %s128 = int_to_ptr.hbm [resolvable:$true] %s127
      %s129 = sshll.u32 [#allocation5], 4
      %s130 = int_to_ptr.vmem [resolvable:$true] %s129
      %132 = dma.hbm_to_vmem [thread:$0]  %s128, 128, %s130, [#allocation6]
    $region25: #{wide_resnet_forward.15} parent=1 // pred_fallthru
      _
    // Predicated region
    $region26: #{wide_resnet_forward.15} parent=1 // pred_check
      _
    $region27: #{wide_resnet_forward.15} parent=1 // pred_check_branch
      %134 = sbr.rel (0) target = $region29
    $region28: #{wide_resnet_forward.15} parent=1 // pred_region
      %136 = vsyncadd [#allocation6], 0
      %s138 = sshll.u32 %s13, 4
      %s139 = int_to_ptr.hbm [resolvable:$true] %s138
      %s140 = sshll.u32 [#allocation7], 4
      %s141 = int_to_ptr.vmem [resolvable:$true] %s140
      %143 = dma.hbm_to_vmem [thread:$0]  %s139, 16, %s141, [#allocation6]
    $region29: #{wide_resnet_forward.15} parent=1 // pred_fallthru
      _
    // Predicated region
    $region30: #{wide_resnet_forward.15} parent=1 // pred_check
      _
    $region31: #{wide_resnet_forward.15} parent=1 // pred_check_branch
      %145 = sbr.rel (0) target = $region33
    $region32: #{wide_resnet_forward.15} parent=1 // pred_region
      _
    $region33: #{wide_resnet_forward.15} parent=1 // pred_fallthru
      _
    // Predicated region
    $region34: #{wide_resnet_forward.15} parent=1 // pred_check
      _
    $region35: #{wide_resnet_forward.15} parent=1 // pred_check_branch
      %147 = sbr.rel (0) target = $region37
    $region36: #{wide_resnet_forward.15} parent=1 // pred_region
      _
    $region37: #{wide_resnet_forward.15} parent=1 // pred_fallthru
      _
    // Predicated region
    $region38: #{wide_resnet_forward.15} parent=1 // pred_check
      _
    $region39: #{wide_resnet_forward.15} parent=1 // pred_check_branch
      %149 = sbr.rel (0) target = $region41
    $region40: #{wide_resnet_forward.15} parent=1 // pred_region
      %151 = vsyncadd [#allocation9], 0
      %s152 = sshll.u32 %s19, 4
      %s153 = int_to_ptr.hbm [resolvable:$true] %s152
      %s154 = sshll.u32 [#allocation8], 4
      %s155 = int_to_ptr.vmem [resolvable:$true] %s154
      %160 = dma.hbm_to_vmem [thread:$0]  %s153, 256, %s155, [#allocation9], 128, 128, 8
    $region41: #{wide_resnet_forward.15} parent=1 // pred_fallthru
      _
    // Predicated region
    $region42: #{wide_resnet_forward.15} parent=1 // pred_check
      _
    $region43: #{wide_resnet_forward.15} parent=1 // pred_check_branch
      %162 = sbr.rel (0) target = $region45
    $region44: #{wide_resnet_forward.15} parent=1 // pred_region
      %164 = vsyncadd [#allocation9], 0
      %s166 = sshll.u32 %s21, 4
      %s167 = int_to_ptr.hbm [resolvable:$true] %s166
      %s168 = sshll.u32 [#allocation10], 4
      %s169 = int_to_ptr.vmem [resolvable:$true] %s168
      %171 = dma.hbm_to_vmem [thread:$0]  %s167, 16, %s169, [#allocation9]
    $region45: #{wide_resnet_forward.15} parent=1 // pred_fallthru
      _
    // Predicated region
    $region46: #{wide_resnet_forward.15} parent=1 // pred_check
      _
    $region47: #{wide_resnet_forward.15} parent=1 // pred_check_branch
      %173 = sbr.rel (0) target = $region49
    $region48: #{wide_resnet_forward.15} parent=1 // pred_region
      _
    $region49: #{wide_resnet_forward.15} parent=1 // pred_fallthru
      _
    // Predicated region
    $region50: #{wide_resnet_forward.15} parent=1 // pred_check
      _
    $region51: #{wide_resnet_forward.15} parent=1 // pred_check_branch
      %175 = sbr.rel (0) target = $region53
    $region52: #{wide_resnet_forward.15} parent=1 // pred_region
      _
    $region53: #{wide_resnet_forward.15} parent=1 // pred_fallthru
      _
    // Predicated region
    $region54: #{wide_resnet_forward.15} parent=1 // pred_check
      _
    $region55: #{wide_resnet_forward.15} parent=1 // pred_check_branch
      %177 = sbr.rel (0) target = $region57
    $region56: #{wide_resnet_forward.15} parent=1 // pred_region
      %179 = vsyncadd [#allocation12], 0
      %s180 = sshll.u32 %s27, 4
      %s181 = int_to_ptr.hbm [resolvable:$true] %s180
      %s182 = sshll.u32 [#allocation11], 4
      %s183 = int_to_ptr.vmem [resolvable:$true] %s182
      %188 = dma.hbm_to_vmem [thread:$0]  %s181, 256, %s183, [#allocation12], 128, 128, 8
    $region57: #{wide_resnet_forward.15} parent=1 // pred_fallthru
      _
    // Predicated region
    $region58: #{wide_resnet_forward.15} parent=1 // pred_check
      _
    $region59: #{wide_resnet_forward.15} parent=1 // pred_check_branch
      %190 = sbr.rel (0) target = $region61
    $region60: #{wide_resnet_forward.15} parent=1 // pred_region
      %192 = vsyncadd [#allocation12], 0
      %s194 = sshll.u32 %s29, 4
      %s195 = int_to_ptr.hbm [resolvable:$true] %s194
      %s196 = sshll.u32 [#allocation13], 4
      %s197 = int_to_ptr.vmem [resolvable:$true] %s196
      %199 = dma.hbm_to_vmem [thread:$0]  %s195, 16, %s197, [#allocation12]
    $region61: #{wide_resnet_forward.15} parent=1 // pred_fallthru
      _
    // Predicated region
    $region62: #{wide_resnet_forward.15} parent=1 // pred_check
      _
    $region63: #{wide_resnet_forward.15} parent=1 // pred_check_branch
      %201 = sbr.rel (0) target = $region65
    $region64: #{wide_resnet_forward.15} parent=1 // pred_region
      _
    $region65: #{wide_resnet_forward.15} parent=1 // pred_fallthru
      _
    // Predicated region
    $region66: #{wide_resnet_forward.15} parent=1 // pred_check
      _
    $region67: #{wide_resnet_forward.15} parent=1 // pred_check_branch
      %203 = sbr.rel (0) target = $region69
    $region68: #{wide_resnet_forward.15} parent=1 // pred_region
      _
    $region69: #{wide_resnet_forward.15} parent=1 // pred_fallthru
      _
    // Predicated region
    $region70: #{wide_resnet_forward.15} parent=1 // pred_check
      _
    $region71: #{wide_resnet_forward.15} parent=1 // pred_check_branch
      %205 = sbr.rel (0) target = $region73
    $region72: #{wide_resnet_forward.15} parent=1 // pred_region
      _
    $region73: #{wide_resnet_forward.15} parent=1 // pred_fallthru
      _
    // Predicated region
    $region74: #{wide_resnet_forward.15} parent=1 // pred_check
      _
    $region75: #{wide_resnet_forward.15} parent=1 // pred_check_branch
      %207 = sbr.rel (0) target = $region77
    $region76: #{wide_resnet_forward.15} parent=1 // pred_region
      _
    $region77: #{wide_resnet_forward.15} parent=1 // pred_fallthru
      _
    // Predicated region
    $region78: #{wide_resnet_forward.15} parent=1 // pred_check
      _
    $region79: #{wide_resnet_forward.15} parent=1 // pred_check_branch
      %209 = sbr.rel (0) target = $region81
    $region80: #{wide_resnet_forward.15} parent=1 // pred_region
      _
    $region81: #{wide_resnet_forward.15} parent=1 // pred_fallthru
      _
    // Predicated region
    $region82: #{wide_resnet_forward.15} parent=1 // pred_check
      _
    $region83: #{wide_resnet_forward.15} parent=1 // pred_check_branch
      %211 = sbr.rel (0) target = $region85
    $region84: #{wide_resnet_forward.15} parent=1 // pred_region
      _
    $region85: #{wide_resnet_forward.15} parent=1 // pred_fallthru
      _
    // Predicated region
    $region86: #{wide_resnet_forward.15} parent=1 // pred_check
      _
    $region87: #{wide_resnet_forward.15} parent=1 // pred_check_branch
      %213 = sbr.rel (0) target = $region89
    $region88: #{wide_resnet_forward.15} parent=1 // pred_region
      %215 = vsyncadd [#allocation15], 0
      %s217 = sshll.u32 %s43, 4
      %s218 = int_to_ptr.hbm [resolvable:$true] %s217
      %s219 = sshll.u32 [#allocation14], 4
      %s220 = int_to_ptr.vmem [resolvable:$true] %s219
      %222 = dma.hbm_to_vmem [thread:$0]  %s218, 16, %s220, [#allocation15]
    $region89: #{wide_resnet_forward.15} parent=1 // pred_fallthru
      _
    // Predicated region
    $region90: #{wide_resnet_forward.15} parent=1 // pred_check
      _
    $region91: #{wide_resnet_forward.15} parent=1 // pred_check_branch
      %224 = sbr.rel (0) target = $region93
    $region92: #{wide_resnet_forward.15} parent=1 // pred_region
      _
    $region93: #{wide_resnet_forward.15} parent=1 // pred_fallthru
      _
    // Predicated region
    $region94: #{wide_resnet_forward.15} parent=1 // pred_check
      _
    $region95: #{wide_resnet_forward.15} parent=1 // pred_check_branch
      %226 = sbr.rel (0) target = $region97
    $region96: #{wide_resnet_forward.15} parent=1 // pred_region
      _
    $region97: #{wide_resnet_forward.15} parent=1 // pred_fallthru
      _
    // Predicated region
    $region98: #{wide_resnet_forward.15} parent=1 // pred_check
      _
    $region99: #{wide_resnet_forward.15} parent=1 // pred_check_branch
      %228 = sbr.rel (0) target = $region101
    $region100: #{wide_resnet_forward.15} parent=1 // pred_region
      %230 = vsyncadd [#allocation15], 0
      %s231 = sshll.u32 %s49, 4
      %s232 = int_to_ptr.hbm [resolvable:$true] %s231
      %s233 = sshll.u32 [#allocation16], 4
      %s234 = int_to_ptr.vmem [resolvable:$true] %s233
      %239 = dma.hbm_to_vmem [thread:$0]  %s232, 256, %s234, [#allocation15], 128, 128, 8
    $region101: #{wide_resnet_forward.15} parent=1 // pred_fallthru
      _
    // Predicated region
    $region102: #{wide_resnet_forward.15} parent=1 // pred_check
      _
    $region103: #{wide_resnet_forward.15} parent=1 // pred_check_branch
      %241 = sbr.rel (0) target = $region105
    $region104: #{wide_resnet_forward.15} parent=1 // pred_region
      %243 = vsyncadd [#allocation18], 0
      %s245 = sshll.u32 %s51, 4
      %s246 = int_to_ptr.hbm [resolvable:$true] %s245
      %s247 = sshll.u32 [#allocation17], 4
      %s248 = int_to_ptr.vmem [resolvable:$true] %s247
      %250 = dma.hbm_to_vmem [thread:$0]  %s246, 16, %s248, [#allocation18]
    $region105: #{wide_resnet_forward.15} parent=1 // pred_fallthru
      _
    // Predicated region
    $region106: #{wide_resnet_forward.15} parent=1 // pred_check
      _
    $region107: #{wide_resnet_forward.15} parent=1 // pred_check_branch
      %252 = sbr.rel (0) target = $region109
    $region108: #{wide_resnet_forward.15} parent=1 // pred_region
      _
    $region109: #{wide_resnet_forward.15} parent=1 // pred_fallthru
      _
    // Predicated region
    $region110: #{wide_resnet_forward.15} parent=1 // pred_check
      _
    $region111: #{wide_resnet_forward.15} parent=1 // pred_check_branch
      %254 = sbr.rel (0) target = $region113
    $region112: #{wide_resnet_forward.15} parent=1 // pred_region
      _
    $region113: #{wide_resnet_forward.15} parent=1 // pred_fallthru
      _
    // Predicated region
    $region114: #{wide_resnet_forward.15} parent=1 // pred_check
      _
    $region115: #{wide_resnet_forward.15} parent=1 // pred_check_branch
      %256 = sbr.rel (0) target = $region117
    $region116: #{wide_resnet_forward.15} parent=1 // pred_region
      _
    $region117: #{wide_resnet_forward.15} parent=1 // pred_fallthru
      _
    // Predicated region
    $region118: #{wide_resnet_forward.15} parent=1 // pred_check
      _
    $region119: #{wide_resnet_forward.15} parent=1 // pred_check_branch
      %258 = sbr.rel (0) target = $region121
    $region120: #{wide_resnet_forward.15} parent=1 // pred_region
      _
    $region121: #{wide_resnet_forward.15} parent=1 // pred_fallthru
      _
    // Predicated region
    $region122: #{wide_resnet_forward.15} parent=1 // pred_check
      _
    $region123: #{wide_resnet_forward.15} parent=1 // pred_check_branch
      %260 = sbr.rel (0) target = $region125
    $region124: #{wide_resnet_forward.15} parent=1 // pred_region
      _
    $region125: #{wide_resnet_forward.15} parent=1 // pred_fallthru
      _
    // Predicated region
    $region126: #{wide_resnet_forward.15} parent=1 // pred_check
      _
    $region127: #{wide_resnet_forward.15} parent=1 // pred_check_branch
      %262 = sbr.rel (0) target = $region129
    $region128: #{wide_resnet_forward.15} parent=1 // pred_region
      _
    $region129: #{wide_resnet_forward.15} parent=1 // pred_fallthru
      _
    // Predicated region
    $region130: #{wide_resnet_forward.15} parent=1 // pred_check
      _
    $region131: #{wide_resnet_forward.15} parent=1 // pred_check_branch
      %264 = sbr.rel (0) target = $region133
    $region132: #{wide_resnet_forward.15} parent=1 // pred_region
      _
    $region133: #{wide_resnet_forward.15} parent=1 // pred_fallthru
      _
    // Predicated region
    $region134: #{wide_resnet_forward.15} parent=1 // pred_check
      _
    $region135: #{wide_resnet_forward.15} parent=1 // pred_check_branch
      %266 = sbr.rel (0) target = $region137
    $region136: #{wide_resnet_forward.15} parent=1 // pred_region
      _
    $region137: #{wide_resnet_forward.15} parent=1 // pred_fallthru
      _
    // Predicated region
    $region138: #{wide_resnet_forward.15} parent=1 // pred_check
      _
    $region139: #{wide_resnet_forward.15} parent=1 // pred_check_branch
      %268 = sbr.rel (0) target = $region141
    $region140: #{wide_resnet_forward.15} parent=1 // pred_region
      _
    $region141: #{wide_resnet_forward.15} parent=1 // pred_fallthru
      _
    // Predicated region
    $region142: #{wide_resnet_forward.15} parent=1 // pred_check
      _
    $region143: #{wide_resnet_forward.15} parent=1 // pred_check_branch
      %270 = sbr.rel (0) target = $region145
    $region144: #{wide_resnet_forward.15} parent=1 // pred_region
      %272 = vsyncadd [#allocation18], 0
      %s274 = sshll.u32 %s71, 4
      %s275 = int_to_ptr.hbm [resolvable:$true] %s274
      %s276 = sshll.u32 [#allocation19], 4
      %s277 = int_to_ptr.vmem [resolvable:$true] %s276
      %279 = dma.hbm_to_vmem [thread:$0]  %s275, 16, %s277, [#allocation18]
    $region145: #{wide_resnet_forward.15} parent=1 // pred_fallthru
      _
    // Predicated region
    $region146: #{wide_resnet_forward.15} parent=1 // pred_check
      _
    $region147: #{wide_resnet_forward.15} parent=1 // pred_check_branch
      %281 = sbr.rel (0) target = $region149
    $region148: #{wide_resnet_forward.15} parent=1 // pred_region
      _
    $region149: #{wide_resnet_forward.15} parent=1 // pred_fallthru
      _
    // Predicated region
    $region150: #{wide_resnet_forward.15} parent=1 // pred_check
      _
    $region151: #{wide_resnet_forward.15} parent=1 // pred_check_branch
      %283 = sbr.rel (0) target = $region153
    $region152: #{wide_resnet_forward.15} parent=1 // pred_region
      _
    $region153: #{wide_resnet_forward.15} parent=1 // pred_fallthru
      _
    // Predicated region
    $region154: #{wide_resnet_forward.15} parent=1 // pred_check
      _
    $region155: #{wide_resnet_forward.15} parent=1 // pred_check_branch
      %285 = sbr.rel (0) target = $region157
    $region156: #{wide_resnet_forward.15} parent=1 // pred_region
      %287 = vsyncadd [#allocation21], 0
      %s288 = sshll.u32 %s77, 4
      %s289 = int_to_ptr.hbm [resolvable:$true] %s288
      %s290 = sshll.u32 [#allocation20], 4
      %s291 = int_to_ptr.vmem [resolvable:$true] %s290
      %296 = dma.hbm_to_vmem [thread:$0]  %s289, 256, %s291, [#allocation21], 128, 128, 8
    $region157: #{wide_resnet_forward.15} parent=1 // pred_fallthru
      _
    // Predicated region
    $region158: #{wide_resnet_forward.15} parent=1 // pred_check
      _
    $region159: #{wide_resnet_forward.15} parent=1 // pred_check_branch
      %298 = sbr.rel (0) target = $region161
    $region160: #{wide_resnet_forward.15} parent=1 // pred_region
      %300 = vsyncadd [#allocation21], 0
      %s302 = sshll.u32 %s79, 4
      %s303 = int_to_ptr.hbm [resolvable:$true] %s302
      %s304 = sshll.u32 [#allocation22], 4
      %s305 = int_to_ptr.vmem [resolvable:$true] %s304
      %307 = dma.hbm_to_vmem [thread:$0]  %s303, 16, %s305, [#allocation21]
    $region161: #{wide_resnet_forward.15} parent=1 // pred_fallthru
      _
    // Predicated region
    $region162: #{wide_resnet_forward.15} parent=1 // pred_check
      _
    $region163: #{wide_resnet_forward.15} parent=1 // pred_check_branch
      %309 = sbr.rel (0) target = $region165
    $region164: #{wide_resnet_forward.15} parent=1 // pred_region
      _
    $region165: #{wide_resnet_forward.15} parent=1 // pred_fallthru
      _
    // Predicated region
    $region166: #{wide_resnet_forward.15} parent=1 // pred_check
      _
    $region167: #{wide_resnet_forward.15} parent=1 // pred_check_branch
      %311 = sbr.rel (0) target = $region169
    $region168: #{wide_resnet_forward.15} parent=1 // pred_region
      _
    $region169: #{wide_resnet_forward.15} parent=1 // pred_fallthru
      _
    // Predicated region
    $region170: #{wide_resnet_forward.15} parent=1 // pred_check
      _
    $region171: #{wide_resnet_forward.15} parent=1 // pred_check_branch
      %313 = sbr.rel (0) target = $region173
    $region172: #{wide_resnet_forward.15} parent=1 // pred_region
      _
    $region173: #{wide_resnet_forward.15} parent=1 // pred_fallthru
      _
    // Predicated region
    $region174: #{wide_resnet_forward.15} parent=1 // pred_check
      _
    $region175: #{wide_resnet_forward.15} parent=1 // pred_check_branch
      %315 = sbr.rel (0) target = $region177
    $region176: #{wide_resnet_forward.15} parent=1 // pred_region
      %317 = vsyncadd [#allocation24], 0
      %s319 = sshll.u32 %s87, 4
      %s320 = int_to_ptr.hbm [resolvable:$true] %s319
      %s321 = sshll.u32 [#allocation23], 4
      %s322 = int_to_ptr.vmem [resolvable:$true] %s321
      %324 = dma.hbm_to_vmem [thread:$0]  %s320, 16, %s322, [#allocation24]
    $region177: #{wide_resnet_forward.15} parent=1 // pred_fallthru
      _
    // Predicated region
    $region178: #{wide_resnet_forward.15} parent=1 // pred_check
      _
    $region179: #{wide_resnet_forward.15} parent=1 // pred_check_branch
      %326 = sbr.rel (0) target = $region181
    $region180: #{wide_resnet_forward.15} parent=1 // pred_region
      %328 = dma.done [#allocation3], 32
    $region181: #{wide_resnet_forward.15} parent=1 // pred_fallthru
      _
    // Predicated region
    $region182: #{wide_resnet_forward.15} parent=1 // pred_check
      _
    $region183: #{wide_resnet_forward.15} parent=1 // pred_check_branch
      %330 = sbr.rel (0) target = $region185
    $region184: #{wide_resnet_forward.15} parent=1 // pred_region
      %332 = dma.done [#allocation6], 128
    $region185: #{wide_resnet_forward.15} parent=1 // pred_fallthru
      _
    // Predicated region
    $region186: #{wide_resnet_forward.15} parent=1 // pred_check
      _
    $region187: #{wide_resnet_forward.15} parent=1 // pred_check_branch
      %334 = sbr.rel (0) target = $region189
    $region188: #{wide_resnet_forward.15} parent=1 // pred_region
      %336 = dma.done [#allocation6], 16
    $region189: #{wide_resnet_forward.15} parent=1 // pred_fallthru
      _
    // Predicated region
    $region190: #{wide_resnet_forward.15} parent=1 // pred_check
      _
    $region191: #{wide_resnet_forward.15} parent=1 // pred_check_branch
      %338 = sbr.rel (0) target = $region193
    $region192: #{wide_resnet_forward.15} parent=1 // pred_region
      %340 = dma.done [#allocation9], 256
    $region193: #{wide_resnet_forward.15} parent=1 // pred_fallthru
      _
    // Predicated region
    $region194: #{wide_resnet_forward.15} parent=1 // pred_check
      _
    $region195: #{wide_resnet_forward.15} parent=1 // pred_check_branch
      %342 = sbr.rel (0) target = $region197
    $region196: #{wide_resnet_forward.15} parent=1 // pred_region
      %344 = dma.done [#allocation9], 16
    $region197: #{wide_resnet_forward.15} parent=1 // pred_fallthru
      _
    // Predicated region
    $region198: #{wide_resnet_forward.15} parent=1 // pred_check
      _
    $region199: #{wide_resnet_forward.15} parent=1 // pred_check_branch
      %346 = sbr.rel (0) target = $region201
    $region200: #{wide_resnet_forward.15} parent=1 // pred_region
      %348 = dma.done [#allocation12], 256
    $region201: #{wide_resnet_forward.15} parent=1 // pred_fallthru
      _
    // Predicated region
    $region202: #{wide_resnet_forward.15} parent=1 // pred_check
      _
    $region203: #{wide_resnet_forward.15} parent=1 // pred_check_branch
      %350 = sbr.rel (0) target = $region205
    $region204: #{wide_resnet_forward.15} parent=1 // pred_region
      %352 = dma.done [#allocation12], 16
    $region205: #{wide_resnet_forward.15} parent=1 // pred_fallthru
      _
    // Predicated region
    $region206: #{wide_resnet_forward.15} parent=1 // pred_check
      _
    $region207: #{wide_resnet_forward.15} parent=1 // pred_check_branch
      %354 = sbr.rel (0) target = $region209
    $region208: #{wide_resnet_forward.15} parent=1 // pred_region
      %356 = dma.done [#allocation15], 16
    $region209: #{wide_resnet_forward.15} parent=1 // pred_fallthru
      _
    // Predicated region
    $region210: #{wide_resnet_forward.15} parent=1 // pred_check
      _
    $region211: #{wide_resnet_forward.15} parent=1 // pred_check_branch
      %358 = sbr.rel (0) target = $region213
    $region212: #{wide_resnet_forward.15} parent=1 // pred_region
      %360 = dma.done [#allocation15], 256
    $region213: #{wide_resnet_forward.15} parent=1 // pred_fallthru
      _
    // Predicated region
    $region214: #{wide_resnet_forward.15} parent=1 // pred_check
      _
    $region215: #{wide_resnet_forward.15} parent=1 // pred_check_branch
      %362 = sbr.rel (0) target = $region217
    $region216: #{wide_resnet_forward.15} parent=1 // pred_region
      %364 = dma.done [#allocation18], 16
    $region217: #{wide_resnet_forward.15} parent=1 // pred_fallthru
      _
    // Predicated region
    $region218: #{wide_resnet_forward.15} parent=1 // pred_check
      _
    $region219: #{wide_resnet_forward.15} parent=1 // pred_check_branch
      %366 = sbr.rel (0) target = $region221
    $region220: #{wide_resnet_forward.15} parent=1 // pred_region
      %368 = dma.done [#allocation18], 16
    $region221: #{wide_resnet_forward.15} parent=1 // pred_fallthru
      _
    // Predicated region
    $region222: #{wide_resnet_forward.15} parent=1 // pred_check
      _
    $region223: #{wide_resnet_forward.15} parent=1 // pred_check_branch
      %370 = sbr.rel (0) target = $region225
    $region224: #{wide_resnet_forward.15} parent=1 // pred_region
      %372 = dma.done [#allocation21], 256
    $region225: #{wide_resnet_forward.15} parent=1 // pred_fallthru
      _
    // Predicated region
    $region226: #{wide_resnet_forward.15} parent=1 // pred_check
      _
    $region227: #{wide_resnet_forward.15} parent=1 // pred_check_branch
      %374 = sbr.rel (0) target = $region229
    $region228: #{wide_resnet_forward.15} parent=1 // pred_region
      %376 = dma.done [#allocation21], 16
    $region229: #{wide_resnet_forward.15} parent=1 // pred_fallthru
      _
    // Predicated region
    $region230: #{wide_resnet_forward.15} parent=1 // pred_check
      _
    $region231: #{wide_resnet_forward.15} parent=1 // pred_check_branch
      %378 = sbr.rel (0) target = $region233
    $region232: #{wide_resnet_forward.15} parent=1 // pred_region
      %380 = dma.done [#allocation24], 16
    $region233: #{wide_resnet_forward.15} parent=1 // pred_fallthru
      _
    %v381 = vld [vmem:[%s3] sm:$0x3]
    %v382 = vld [vmem:[%s1] sm:$0xff]
    %v383 = vld [vmem:[%s1 + $0x8] sm:$0xff]
    %v384 = vld [vmem:[%s1 + $0x10] sm:$0xff]
    %v385 = vld [vmem:[%s1 + $0x18] sm:$0xff]
    %v386 = vld [vmem:[%s1 + $0x20] sm:$0xff]
    %v387 = vld [vmem:[%s1 + $0x28] sm:$0xff]
    %v388 = vld [vmem:[%s1 + $0x30] sm:$0xff]
    %v389 = vld [vmem:[%s1 + $0x38] sm:$0xff]
    %v390 = vld [vmem:[%s1 + $0x40] sm:$0xff]
    %v391 = vld [vmem:[%s1 + $0x48] sm:$0xff]
    %v392 = vld [vmem:[%s1 + $0x50] sm:$0xff]
    %v393 = vld [vmem:[%s1 + $0x58] sm:$0xff]
    %v394 = vld [vmem:[%s1 + $0x60] sm:$0xff]
    %v395 = vld [vmem:[%s1 + $0x68] sm:$0xff]
    %v396 = vld [vmem:[%s1 + $0x70] sm:$0xff]
    %v397 = vld [vmem:[%s1 + $0x78] sm:$0xff]
    %398 = vmatpush.msra.mxu0 %v397
    %399 = vmatpush.msra.mxu0 %v396
    %400 = vmatpush.msra.mxu0 %v395
    %401 = vmatpush.msra.mxu0 %v394
    %402 = vmatpush.msra.mxu0 %v393
    %403 = vmatpush.msra.mxu0 %v392
    %404 = vmatpush.msra.mxu0 %v391
    %405 = vmatpush.msra.mxu0 %v390
    %406 = vmatpush.msra.mxu0 %v389
    %407 = vmatpush.msra.mxu0 %v388
    %408 = vmatpush.msra.mxu0 %v387
    %409 = vmatpush.msra.mxu0 %v386
    %410 = vmatpush.msra.mxu0 %v385
    %411 = vmatpush.msra.mxu0 %v384
    %412 = vmatpush.msra.mxu0 %v383
    %413 = vmatpush.msra.mxu0 %v382
    %414 = vmatmul.f32.gmra.mxu0 %v381
    %v415 = vpop.f32.mrf.mxu0
    %v416 = vadd.f32 0.0, %v415
    %417 = vdwg.mxu0
    %v418 = vld [vmem:[%s7] sm:$0xff]
    %v419 = vld [vmem:[%s7 + $0x8] sm:$0xff]
    %v420 = vld [vmem:[%s7 + $0x10] sm:$0xff]
    %v421 = vld [vmem:[%s7 + $0x18] sm:$0xff]
    %v422 = vld [vmem:[%s7 + $0x20] sm:$0xff]
    %v423 = vld [vmem:[%s7 + $0x28] sm:$0xff]
    %v424 = vld [vmem:[%s7 + $0x30] sm:$0xff]
    %v425 = vld [vmem:[%s7 + $0x38] sm:$0xff]
    %v426 = vld [vmem:[%s9] sm:$0x1]
    %v428 = vperm.slane %v426, 0
    %vm430 = vcmask 523264
    %v432 = vsel %vm430, %v416, 0
    %434 = vmatpush.msra.mxu0 0.0
    %435 = vmatpush.msra.mxu0 0.0
    %436 = vmatpush.msra.mxu0 0.0
    %437 = vmatpush.msra.mxu0 0.0
    %438 = vmatpush.msra.mxu0 0.0
    %439 = vmatpush.msra.mxu0 0.0
    %440 = vmatpush.msra.mxu0 0.0
    %441 = vmatpush.msra.mxu0 0.0
    %442 = vmatpush.msra.mxu0 %v425
    %443 = vmatpush.msra.mxu0 %v424
    %444 = vmatpush.msra.mxu0 %v423
    %445 = vmatpush.msra.mxu0 %v422
    %446 = vmatpush.msra.mxu0 %v421
    %447 = vmatpush.msra.mxu0 %v420
    %448 = vmatpush.msra.mxu0 %v419
    %449 = vmatpush.msra.mxu0 %v418
    %450 = vmatmul.f32.gmra.mxu0 %v432
    %v451 = vpop.f32.mrf.mxu0
    %v452 = vadd.f32 %v428, %v451
    %453 = vdwg.mxu0
    %v454 = vld [vmem:[#allocation2] sm:$0x3]
    %v455 = vld [vmem:[#allocation5] sm:$0xff]
    %v456 = vld [vmem:[#allocation7] sm:$0x1]
    %v458 = vperm.slane %v456, 0
    %vm460 = vcmask 64512
    %v462 = vsel %vm460, %v454, 0
    %464 = vmatpush.msra.mxu0 0.0
    %465 = vmatpush.msra.mxu0 0.0
    %466 = vmatpush.msra.mxu0 0.0
    %467 = vmatpush.msra.mxu0 0.0
    %468 = vmatpush.msra.mxu0 0.0
    %469 = vmatpush.msra.mxu0 0.0
    %470 = vmatpush.msra.mxu0 0.0
    %471 = vmatpush.msra.mxu0 0.0
    %472 = vmatpush.msra.mxu0 0.0
    %473 = vmatpush.msra.mxu0 0.0
    %474 = vmatpush.msra.mxu0 0.0
    %475 = vmatpush.msra.mxu0 0.0
    %476 = vmatpush.msra.mxu0 0.0
    %477 = vmatpush.msra.mxu0 0.0
    %478 = vmatpush.msra.mxu0 0.0
    %479 = vmatpush.msra.mxu0 %v455
    %480 = vmatmul.f32.gmra.mxu0 %v462
    %v481 = vpop.f32.mrf.mxu0
    %v482 = vadd.f32 %v458, %v481
    %483 = vdwg.mxu0
    %v484 = vld [vmem:[%s15] sm:$0x1]
    %v486 = vperm.slane %v484, 0
    %v488 = vmul.f32 %v482, %v486
    %v489 = vld [vmem:[%s17] sm:$0x1]
    %v491 = vperm.slane %v489, 0
    %v493 = vadd.f32 %v488, %v491
    %vm494 = vcmp.ge.f32.partialorder %v493, 0.0
    %v495 = vmul.f32 %v493, 0.01
    %v496 = vsel %vm494, %v493, %v495
    %v497 = vld [vmem:[#allocation8] sm:$0xff]
    %v498 = vld [vmem:[#allocation8 + $0x8] sm:$0x7f]
    %v499 = vld [vmem:[#allocation10] sm:$0x1]
    %v501 = vperm.slane %v499, 0
    %vm503 = vcmask 121856
    %v505 = vsel %vm503, %v496, 0
    %vm507 = vcmask 1046528
    %v509 = vsel %vm507, %v498, 0
    %511 = vmatpush.msra.mxu0 0.0
    %512 = vmatpush.msra.mxu0 0.0
    %513 = vmatpush.msra.mxu0 0.0
    %514 = vmatpush.msra.mxu0 0.0
    %515 = vmatpush.msra.mxu0 0.0
    %516 = vmatpush.msra.mxu0 0.0
    %517 = vmatpush.msra.mxu0 0.0
    %518 = vmatpush.msra.mxu0 0.0
    %519 = vmatpush.msra.mxu0 0.0
    %520 = vmatpush.msra.mxu0 0.0
    %521 = vmatpush.msra.mxu0 0.0
    %522 = vmatpush.msra.mxu0 0.0
    %523 = vmatpush.msra.mxu0 0.0
    %524 = vmatpush.msra.mxu0 0.0
    %525 = vmatpush.msra.mxu0 %v509
    %526 = vmatpush.msra.mxu0 %v497
    %527 = vmatmul.f32.gmra.mxu0 %v505
    %v528 = vpop.f32.mrf.mxu0
    %v529 = vadd.f32 %v501, %v528
    %530 = vdwg.mxu0
    %v531 = vld [vmem:[%s23] sm:$0x1]
    %v533 = vperm.slane %v531, 0
    %v535 = vmul.f32 %v529, %v533
    %v536 = vld [vmem:[%s25] sm:$0x1]
    %v538 = vperm.slane %v536, 0
    %v540 = vadd.f32 %v535, %v538
    %vm541 = vcmp.ge.f32.partialorder %v540, 0.0
    %v542 = vmul.f32 %v540, 0.01
    %v543 = vsel %vm541, %v540, %v542
    %v544 = vld [vmem:[#allocation11] sm:$0xff]
    %v545 = vld [vmem:[#allocation11 + $0x8] sm:$0x3]
    %v546 = vld [vmem:[#allocation13] sm:$0x1]
    %v548 = vperm.slane %v546, 0
    %vm550 = vcmask 80896
    %v552 = vsel %vm550, %v543, 0
    %vm554 = vcmask 1041408
    %v556 = vsel %vm554, %v545, 0
    %558 = vmatpush.msra.mxu0 0.0
    %559 = vmatpush.msra.mxu0 0.0
    %560 = vmatpush.msra.mxu0 0.0
    %561 = vmatpush.msra.mxu0 0.0
    %562 = vmatpush.msra.mxu0 0.0
    %563 = vmatpush.msra.mxu0 0.0
    %564 = vmatpush.msra.mxu0 0.0
    %565 = vmatpush.msra.mxu0 0.0
    %566 = vmatpush.msra.mxu0 0.0
    %567 = vmatpush.msra.mxu0 0.0
    %568 = vmatpush.msra.mxu0 0.0
    %569 = vmatpush.msra.mxu0 0.0
    %570 = vmatpush.msra.mxu0 0.0
    %571 = vmatpush.msra.mxu0 0.0
    %572 = vmatpush.msra.mxu0 %v556
    %573 = vmatpush.msra.mxu0 %v544
    %574 = vmatmul.f32.gmra.mxu0 %v552
    %v575 = vpop.f32.mrf.mxu0
    %v576 = vadd.f32 %v548, %v575
    %577 = vdwg.mxu0
    %v578 = vld [vmem:[%s31] sm:$0x1]
    %v580 = vperm.slane %v578, 0
    %v582 = vmul.f32 %v452, %v580
    %v583 = vld [vmem:[%s33] sm:$0x1]
    %v585 = vperm.slane %v583, 0
    %v587 = vadd.f32 %v582, %v585
    %vm588 = vcmp.ge.f32.partialorder %v587, 0.0
    %v589 = vmul.f32 %v587, 0.01
    %v590 = vsel %vm588, %v587, %v589
    %v591 = vld [vmem:[%s35] sm:$0x1]
    %v593 = vperm.slane %v591, 0
    %v595 = vmul.f32 %v576, %v593
    %v596 = vld [vmem:[%s37] sm:$0x1]
    %v598 = vperm.slane %v596, 0
    %v600 = vadd.f32 %v595, %v598
    %vm601 = vcmp.ge.f32.partialorder %v600, 0.0
    %v602 = vmul.f32 %v600, 0.01
    %v603 = vsel %vm601, %v600, %v602
    %v604 = vld [vmem:[%s39] sm:$0xff]
    %v605 = vld [vmem:[%s39 + $0x8] sm:$0x7f]
    %v606 = vld [vmem:[%s41] sm:$0xff]
    %v607 = vld [vmem:[%s41 + $0x8] sm:$0x3]
    %v609 = vsel %vm550, %v603, 0
    %v612 = vsel %vm554, %v607, 0
    %614 = vmatpush.msra.mxu0 0.0
    %615 = vmatpush.msra.mxu0 0.0
    %616 = vmatpush.msra.mxu0 0.0
    %617 = vmatpush.msra.mxu0 0.0
    %618 = vmatpush.msra.mxu0 0.0
    %619 = vmatpush.msra.mxu0 0.0
    %620 = vmatpush.msra.mxu0 0.0
    %621 = vmatpush.msra.mxu0 0.0
    %622 = vmatpush.msra.mxu0 0.0
    %623 = vmatpush.msra.mxu0 0.0
    %624 = vmatpush.msra.mxu0 0.0
    %625 = vmatpush.msra.mxu0 0.0
    %626 = vmatpush.msra.mxu0 0.0
    %627 = vmatpush.msra.mxu0 0.0
    %628 = vmatpush.msra.mxu0 %v612
    %629 = vmatpush.msra.mxu0 %v606
    %630 = vmatmul.f32.gmra.mxu0 %v609
    %v631 = vpop.f32.mrf.mxu0
    %v632 = vadd.f32 0.0, %v631
    %633 = vdwg.mxu0
    %v635 = vsel %vm503, %v590, 0
    %v638 = vsel %vm507, %v605, 0
    %640 = vmatpush.msra.mxu0 0.0
    %641 = vmatpush.msra.mxu0 0.0
    %642 = vmatpush.msra.mxu0 0.0
    %643 = vmatpush.msra.mxu0 0.0
    %644 = vmatpush.msra.mxu0 0.0
    %645 = vmatpush.msra.mxu0 0.0
    %646 = vmatpush.msra.mxu0 0.0
    %647 = vmatpush.msra.mxu0 0.0
    %648 = vmatpush.msra.mxu0 0.0
    %649 = vmatpush.msra.mxu0 0.0
    %650 = vmatpush.msra.mxu0 0.0
    %651 = vmatpush.msra.mxu0 0.0
    %652 = vmatpush.msra.mxu0 0.0
    %653 = vmatpush.msra.mxu0 0.0
    %654 = vmatpush.msra.mxu0 %v638
    %655 = vmatpush.msra.mxu0 %v604
    %656 = vmatmul.f32.gmra.mxu0 %v635
    %v657 = vpop.f32.mrf.mxu0
    %v658 = vadd.f32 %v632, %v657
    %659 = vdwg.mxu0
    %v660 = vld [vmem:[#allocation14] sm:$0x1]
    %v662 = vperm.slane %v660, 0
    %v664 = vadd.f32 %v658, %v662
    %v665 = vld [vmem:[%s45] sm:$0x1]
    %v667 = vperm.slane %v665, 0
    %v669 = vmul.f32 %v664, %v667
    %v670 = vld [vmem:[%s47] sm:$0x1]
    %v672 = vperm.slane %v670, 0
    %v674 = vadd.f32 %v669, %v672
    %vm675 = vcmp.ge.f32.partialorder %v674, 0.0
    %v676 = vmul.f32 %v674, 0.01
    %v677 = vsel %vm675, %v674, %v676
    %v678 = vld [vmem:[#allocation16] sm:$0xff]
    %v679 = vld [vmem:[#allocation16 + $0x8] sm:$0x3]
    %v680 = vld [vmem:[#allocation17] sm:$0x1]
    %v682 = vperm.slane %v680, 0
    %v685 = vsel %vm550, %v677, 0
    %v688 = vsel %vm554, %v679, 0
    %690 = vmatpush.msra.mxu0 0.0
    %691 = vmatpush.msra.mxu0 0.0
    %692 = vmatpush.msra.mxu0 0.0
    %693 = vmatpush.msra.mxu0 0.0
    %694 = vmatpush.msra.mxu0 0.0
    %695 = vmatpush.msra.mxu0 0.0
    %696 = vmatpush.msra.mxu0 0.0
    %697 = vmatpush.msra.mxu0 0.0
    %698 = vmatpush.msra.mxu0 0.0
    %699 = vmatpush.msra.mxu0 0.0
    %700 = vmatpush.msra.mxu0 0.0
    %701 = vmatpush.msra.mxu0 0.0
    %702 = vmatpush.msra.mxu0 0.0
    %703 = vmatpush.msra.mxu0 0.0
    %704 = vmatpush.msra.mxu0 %v688
    %705 = vmatpush.msra.mxu0 %v678
    %706 = vmatmul.f32.gmra.mxu0 %v685
    %v707 = vpop.f32.mrf.mxu0
    %v708 = vadd.f32 %v682, %v707
    %709 = vdwg.mxu0
    %v710 = vld [vmem:[%s53] sm:$0x1]
    %v712 = vperm.slane %v710, 0
    %v714 = vmul.f32 %v452, %v712
    %v715 = vld [vmem:[%s55] sm:$0x1]
    %v717 = vperm.slane %v715, 0
    %v719 = vadd.f32 %v714, %v717
    %vm720 = vcmp.ge.f32.partialorder %v719, 0.0
    %v721 = vmul.f32 %v719, 0.01
    %v722 = vsel %vm720, %v719, %v721
    %v723 = vld [vmem:[%s57] sm:$0x1]
    %v725 = vperm.slane %v723, 0
    %v727 = vmul.f32 %v576, %v725
    %v728 = vld [vmem:[%s59] sm:$0x1]
    %v730 = vperm.slane %v728, 0
    %v732 = vadd.f32 %v727, %v730
    %vm733 = vcmp.ge.f32.partialorder %v732, 0.0
    %v734 = vmul.f32 %v732, 0.01
    %v735 = vsel %vm733, %v732, %v734
    %v736 = vld [vmem:[%s61] sm:$0x1]
    %v738 = vperm.slane %v736, 0
    %v740 = vmul.f32 %v708, %v738
    %v741 = vld [vmem:[%s63] sm:$0x1]
    %v743 = vperm.slane %v741, 0
    %v745 = vadd.f32 %v740, %v743
    %vm746 = vcmp.ge.f32.partialorder %v745, 0.0
    %v747 = vmul.f32 %v745, 0.01
    %v748 = vsel %vm746, %v745, %v747
    %v749 = vld [vmem:[%s65] sm:$0xff]
    %v750 = vld [vmem:[%s65 + $0x8] sm:$0x7f]
    %v751 = vld [vmem:[%s67] sm:$0xff]
    %v752 = vld [vmem:[%s67 + $0x8] sm:$0x3]
    %v754 = vsel %vm550, %v735, 0
    %v757 = vsel %vm554, %v752, 0
    %759 = vmatpush.msra.mxu0 0.0
    %760 = vmatpush.msra.mxu0 0.0
    %761 = vmatpush.msra.mxu0 0.0
    %762 = vmatpush.msra.mxu0 0.0
    %763 = vmatpush.msra.mxu0 0.0
    %764 = vmatpush.msra.mxu0 0.0
    %765 = vmatpush.msra.mxu0 0.0
    %766 = vmatpush.msra.mxu0 0.0
    %767 = vmatpush.msra.mxu0 0.0
    %768 = vmatpush.msra.mxu0 0.0
    %769 = vmatpush.msra.mxu0 0.0
    %770 = vmatpush.msra.mxu0 0.0
    %771 = vmatpush.msra.mxu0 0.0
    %772 = vmatpush.msra.mxu0 0.0
    %773 = vmatpush.msra.mxu0 %v757
    %774 = vmatpush.msra.mxu0 %v751
    %775 = vmatmul.f32.gmra.mxu0 %v754
    %v776 = vpop.f32.mrf.mxu0
    %v777 = vadd.f32 0.0, %v776
    %778 = vdwg.mxu0
    %v780 = vsel %vm503, %v722, 0
    %v783 = vsel %vm507, %v750, 0
    %785 = vmatpush.msra.mxu0 0.0
    %786 = vmatpush.msra.mxu0 0.0
    %787 = vmatpush.msra.mxu0 0.0
    %788 = vmatpush.msra.mxu0 0.0
    %789 = vmatpush.msra.mxu0 0.0
    %790 = vmatpush.msra.mxu0 0.0
    %791 = vmatpush.msra.mxu0 0.0
    %792 = vmatpush.msra.mxu0 0.0
    %793 = vmatpush.msra.mxu0 0.0
    %794 = vmatpush.msra.mxu0 0.0
    %795 = vmatpush.msra.mxu0 0.0
    %796 = vmatpush.msra.mxu0 0.0
    %797 = vmatpush.msra.mxu0 0.0
    %798 = vmatpush.msra.mxu0 0.0
    %799 = vmatpush.msra.mxu0 %v783
    %800 = vmatpush.msra.mxu0 %v749
    %801 = vmatmul.f32.gmra.mxu0 %v780
    %v802 = vpop.f32.mrf.mxu0
    %v803 = vadd.f32 %v777, %v802
    %804 = vdwg.mxu0
    %v805 = vld [vmem:[%s69] sm:$0xff]
    %v806 = vld [vmem:[%s69 + $0x8] sm:$0x3]
    %v808 = vsel %vm550, %v748, 0
    %v811 = vsel %vm554, %v806, 0
    %813 = vmatpush.msra.mxu0 0.0
    %814 = vmatpush.msra.mxu0 0.0
    %815 = vmatpush.msra.mxu0 0.0
    %816 = vmatpush.msra.mxu0 0.0
    %817 = vmatpush.msra.mxu0 0.0
    %818 = vmatpush.msra.mxu0 0.0
    %819 = vmatpush.msra.mxu0 0.0
    %820 = vmatpush.msra.mxu0 0.0
    %821 = vmatpush.msra.mxu0 0.0
    %822 = vmatpush.msra.mxu0 0.0
    %823 = vmatpush.msra.mxu0 0.0
    %824 = vmatpush.msra.mxu0 0.0
    %825 = vmatpush.msra.mxu0 0.0
    %826 = vmatpush.msra.mxu0 0.0
    %827 = vmatpush.msra.mxu0 %v811
    %828 = vmatpush.msra.mxu0 %v805
    %829 = vmatmul.f32.gmra.mxu0 %v808
    %v830 = vpop.f32.mrf.mxu0
    %v831 = vadd.f32 0.0, %v830
    %832 = vdwg.mxu0
    %v833 = vadd.f32 %v803, %v831
    %v834 = vld [vmem:[#allocation19] sm:$0x1]
    %v836 = vperm.slane %v834, 0
    %v838 = vadd.f32 %v833, %v836
    %v839 = vld [vmem:[%s73] sm:$0x1]
    %v841 = vperm.slane %v839, 0
    %v843 = vmul.f32 %v838, %v841
    %v844 = vld [vmem:[%s75] sm:$0x1]
    %v846 = vperm.slane %v844, 0
    %v848 = vadd.f32 %v843, %v846
    %vm849 = vcmp.ge.f32.partialorder %v848, 0.0
    %v850 = vmul.f32 %v848, 0.01
    %v851 = vsel %vm849, %v848, %v850
    %v852 = vld [vmem:[#allocation20] sm:$0xff]
    %v853 = vld [vmem:[#allocation20 + $0x8] sm:$0x3]
    %v854 = vld [vmem:[#allocation22] sm:$0x1]
    %v856 = vperm.slane %v854, 0
    %v859 = vsel %vm550, %v851, 0
    %v862 = vsel %vm554, %v853, 0
    %864 = vmatpush.msra.mxu0 0.0
    %865 = vmatpush.msra.mxu0 0.0
    %866 = vmatpush.msra.mxu0 0.0
    %867 = vmatpush.msra.mxu0 0.0
    %868 = vmatpush.msra.mxu0 0.0
    %869 = vmatpush.msra.mxu0 0.0
    %870 = vmatpush.msra.mxu0 0.0
    %871 = vmatpush.msra.mxu0 0.0
    %872 = vmatpush.msra.mxu0 0.0
    %873 = vmatpush.msra.mxu0 0.0
    %874 = vmatpush.msra.mxu0 0.0
    %875 = vmatpush.msra.mxu0 0.0
    %876 = vmatpush.msra.mxu0 0.0
    %877 = vmatpush.msra.mxu0 0.0
    %878 = vmatpush.msra.mxu0 %v862
    %879 = vmatpush.msra.mxu0 %v852
    %880 = vmatmul.f32.gmra.mxu0 %v859
    %v881 = vpop.f32.mrf.mxu0
    %v882 = vadd.f32 %v856, %v881
    %883 = vdwg.mxu0
    %v884 = vld [vmem:[%s81] sm:$0x1]
    %v886 = vperm.slane %v884, 0
    %v888 = vmul.f32 %v882, %v886
    %v889 = vld [vmem:[%s83] sm:$0x1]
    %v891 = vperm.slane %v889, 0
    %v893 = vadd.f32 %v888, %v891
    %vm894 = vcmp.ge.f32.partialorder %v893, 0.0
    %v895 = vmul.f32 %v893, 0.2
    %v896 = vsel %vm894, %v893, %v895
    %v897 = vld [vmem:[%s85] sm:$0xff]
    %v898 = vld [vmem:[%s85 + $0x8] sm:$0x3]
    %v899 = vld [vmem:[#allocation23] sm:$0x1]
    %v901 = vperm.slane %v899, 0
    %v904 = vsel %vm550, %v896, 0
    %v907 = vsel %vm554, %v898, 0
    %909 = vmatpush.msra.mxu0 0.0
    %910 = vmatpush.msra.mxu0 0.0
    %911 = vmatpush.msra.mxu0 0.0
    %912 = vmatpush.msra.mxu0 0.0
    %913 = vmatpush.msra.mxu0 0.0
    %914 = vmatpush.msra.mxu0 0.0
    %915 = vmatpush.msra.mxu0 0.0
    %916 = vmatpush.msra.mxu0 0.0
    %917 = vmatpush.msra.mxu0 0.0
    %918 = vmatpush.msra.mxu0 0.0
    %919 = vmatpush.msra.mxu0 0.0
    %920 = vmatpush.msra.mxu0 0.0
    %921 = vmatpush.msra.mxu0 0.0
    %922 = vmatpush.msra.mxu0 0.0
    %923 = vmatpush.msra.mxu0 %v907
    %924 = vmatpush.msra.mxu0 %v897
    %925 = vmatmul.f32.gmra.mxu0 %v904
    %v926 = vpop.f32.mrf.mxu0
    %v927 = vadd.f32 %v901, %v926
    %928 = vdwg.mxu0
    %vm929 = vcmask 25600
    %930 = vst.msk [vmem:[#allocation25] sm:$0x3] %vm929, %v927
    // Predicated region
    $region234: #{wide_resnet_forward.15} parent=1 // pred_check
      _
    $region235: #{wide_resnet_forward.15} parent=1 // pred_check_branch
      %932 = sbr.rel (0) target = $region237
    $region236: #{wide_resnet_forward.15} parent=1 // pred_region
      %934 = vsyncadd [#allocation4], 0
      %s936 = sshll.u32 [#allocation25], 4
      %s937 = int_to_ptr.vmem [resolvable:$true] %s936
      %s938 = sshll.u32 %s89, 4
      %s939 = int_to_ptr.hbm [resolvable:$true] %s938
      %941 = dma.vmem_to_hbm [thread:$0]  %s937, 32, %s939, [#allocation4]
    $region237: #{wide_resnet_forward.15} parent=1 // pred_fallthru
      _
    // Predicated region
    $region238: #{wide_resnet_forward.15} parent=1 // pred_check
      _
    $region239: #{wide_resnet_forward.15} parent=1 // pred_check_branch
      %943 = sbr.rel (0) target = $region241
    $region240: #{wide_resnet_forward.15} parent=1 // pred_region
      %945 = dma.done [#allocation4], 32
    $region241: #{wide_resnet_forward.15} parent=1 // pred_fallthru
      _
    %946 = vsyncpa [#allocation3], 1
    %947 = vsyncpa [#allocation6], 1
    %948 = vsyncpa [#allocation9], 1
    %949 = vsyncpa [#allocation12], 1
    %950 = vsyncpa [#allocation15], 1
    %951 = vsyncpa [#allocation18], 1
    %952 = vsyncpa [#allocation21], 1
    %953 = vsyncpa [#allocation24], 1
    %954 = vsyncpa [#allocation4], 1

</llo_original>
